<compile_context>
chip_gen: v7x
topology: tpu7x:2x2x1
jax: 0.10.0
libtpu: 0.0.40
codegen_flags: <defaults>
</compile_context>

<pallas_src>
import functools

import jax
import jax.numpy as jnp
from jax.experimental import pallas as pl
from jax.experimental.pallas import tpu as pltpu


# --------------------- fused conv + maxpool(2x2/2) + tanh ---------------------

def _conv_pool_tanh_kernel(p00_ref, p01_ref, p10_ref, p11_ref, w_ref, b_ref,
                           o_ref, *, ng):
    w = w_ref[...]                                      # (OC, K)   bf16
    b = b_ref[...]                                      # (OC, 1)   f32
    for n in range(ng):                                 # static unroll over images
        y = jnp.maximum(
            jnp.maximum(
                jnp.dot(w, p00_ref[n], preferred_element_type=jnp.float32),
                jnp.dot(w, p01_ref[n], preferred_element_type=jnp.float32)),
            jnp.maximum(
                jnp.dot(w, p10_ref[n], preferred_element_type=jnp.float32),
                jnp.dot(w, p11_ref[n], preferred_element_type=jnp.float32)))
        o_ref[n] = jnp.tanh(y + b)                      # (OC, OH2*OW2)


def _image_group(n):
    for d in (4, 3, 2):
        if n % d == 0:
            return d
    return 1


def conv_pool_tanh(x, w, b):
    """tanh(maxpool2x2(conv_valid(x, w) + b)).  x: (N, C, H, W) f32 NCHW."""
    N, C, H, W = x.shape
    OC, _, KH, KW = w.shape
    OH, OW = H - KH + 1, W - KW + 1
    assert OH % 2 == 0 and OW % 2 == 0
    OH2, OW2 = OH // 2, OW // 2
    K, M = C * KH * KW, OH2 * OW2

    # im2col, split by 2x2 pool phase; patch-row order (c, kh, kw) matches the
    # PyTorch weight flatten.  All slicing is cheap XLA glue feeding bf16 tiles.
    # TODO(synk): stream shifted input windows inside the kernel (grid over
    # kh,kw) to avoid the KxK im2col HBM amplification; kept in glue at this size.
    pats = []
    for i in range(2):
        for j in range(2):
            ps = [x[:, :, kh + i: kh + i + 2 * OH2: 2, kw + j: kw + j + 2 * OW2: 2]
                  for kh in range(KH) for kw in range(KW)]
            p = jnp.stack(ps, axis=2).reshape(N, K, M)
            pats.append(p.astype(jnp.bfloat16))
    wm = w.reshape(OC, K).astype(jnp.bfloat16)
    bm = b.reshape(OC, 1).astype(jnp.float32)

    ng = _image_group(N)
    pat_spec = pl.BlockSpec((ng, K, M), lambda g: (g, 0, 0))
    out = pl.pallas_call(
        functools.partial(_conv_pool_tanh_kernel, ng=ng),
        out_shape=jax.ShapeDtypeStruct((N, OC, M), jnp.float32),
        grid=(N // ng,),
        in_specs=[pat_spec, pat_spec, pat_spec, pat_spec,
                  pl.BlockSpec((OC, K), lambda g: (0, 0)),
                  pl.BlockSpec((OC, 1), lambda g: (0, 0))],
        out_specs=pl.BlockSpec((ng, OC, M), lambda g: (g, 0, 0)),
        compiler_params=pltpu.CompilerParams(
            dimension_semantics=("parallel",)),
    )(*pats, wm, bm)
    return out.reshape(N, OC, OH2, OW2)                 # pooled + tanh'd, NCHW


# ------- fused conv3 + RNN(+mean) + fc/fc2 + embedding-comparison MLP --------

def _tail_kernel(x3_ref, w3_ref, b3_ref, wih_ref, whh_ref, brnn_ref,
                 feats_ref, fcwa_ref, fcwb_ref, fcb_ref, fc2w_ref, fc2b_ref,
                 t1_ref, t2_ref, w1a_ref, w1t_ref, w1b_ref, b1_ref,
                 w2_ref, b2_ref, emb_ref, out_ref, h_scr, acc_scr,
                 *, seq_len, batch):
    t = pl.program_id(0)

    @pl.when(t == 0)
    def _():
        h_scr[...] = jnp.zeros_like(h_scr)
        acc_scr[...] = jnp.zeros_like(acc_scr)

    # conv3 (5x5 kernel over a 5x5 map -> plain matmul) + nn.Flatten.
    rep = (jnp.dot(x3_ref[0], w3_ref[...], preferred_element_type=jnp.float32)
           + b3_ref[...])                                            # (2B, 32)
    # Elman RNN step: h_t = tanh(x W_ih^T + b_ih + b_hh + h_{t-1} W_hh^T), h0=0.
    xp = (jnp.dot(rep, wih_ref[...], preferred_element_type=jnp.float32)
          + brnn_ref[...])
    h = jnp.tanh(xp + jnp.dot(h_scr[...], whh_ref[...],
                              preferred_element_type=jnp.float32))
    h_scr[...] = h
    acc_scr[...] = acc_scr[...] + h

    @pl.when(t == seq_len - 1)
    def _():
        seq_rep = acc_scr[...] * (1.0 / seq_len)                     # temporal mean
        # fc(cat[seq_rep, feats]) -> fc2   (concat via split weights; no act
        # between fc and fc2, matching the reference module).
        hfc = (jnp.dot(seq_rep, fcwa_ref[...], preferred_element_type=jnp.float32)
               + jnp.dot(feats_ref[...], fcwb_ref[...],
                         preferred_element_type=jnp.float32)
               + fcb_ref[...])
        emb = (jnp.dot(hfc, fc2w_ref[...], preferred_element_type=jnp.float32)
               + fc2b_ref[...])                                      # (2B, E)
        emb_ref[...] = emb
        # comparison MLP on cat[q1, |t1 - t2|, q2] (time column as rank-1 term).
        q1 = emb[:batch]
        q2 = emb[batch:]
        dt = jnp.abs(t1_ref[...] - t2_ref[...])                      # (B, 1)
        hc = jax.nn.sigmoid(
            jnp.dot(q1, w1a_ref[...], preferred_element_type=jnp.float32)
            + dt * w1t_ref[...]
            + jnp.dot(q2, w1b_ref[...], preferred_element_type=jnp.float32)
            + b1_ref[...])
        out_ref[...] = jax.nn.sigmoid(
            jnp.dot(hc, w2_ref[...], preferred_element_type=jnp.float32)
            + b2_ref[...])


def _tail_fused(p, x3, feats, t1, t2, batch):
    T, B2, K3 = x3.shape
    C3 = p["c3_wm"].shape[1]
    HP = p["W_hh_T"].shape[0]
    F = feats.shape[1]
    E = p["fc2_w"].shape[1]
    const = lambda t: (0, 0)
    return pl.pallas_call(
        functools.partial(_tail_kernel, seq_len=T, batch=batch),
        out_shape=(jax.ShapeDtypeStruct((B2, E), jnp.float32),
                   jax.ShapeDtypeStruct((batch, 1), jnp.float32)),
        grid=(T,),
        in_specs=[pl.BlockSpec((1, B2, K3), lambda t: (t, 0, 0)),
                  pl.BlockSpec((K3, C3), const),
                  pl.BlockSpec((1, C3), const),
                  pl.BlockSpec((C3, HP), const),
                  pl.BlockSpec((HP, HP), const),
                  pl.BlockSpec((1, HP), const),
                  pl.BlockSpec((B2, F), const),
                  pl.BlockSpec((HP, 128), const),
                  pl.BlockSpec((F, 128), const),
                  pl.BlockSpec((1, 128), const),
                  pl.BlockSpec((128, E), const),
                  pl.BlockSpec((1, E), const),
                  pl.BlockSpec((batch, 1), const),
                  pl.BlockSpec((batch, 1), const),
                  pl.BlockSpec((E, 64), const),
                  pl.BlockSpec((1, 64), const),
                  pl.BlockSpec((E, 64), const),
                  pl.BlockSpec((1, 64), const),
                  pl.BlockSpec((64, 1), const),
                  pl.BlockSpec((1, 1), const)],
        out_specs=(pl.BlockSpec((B2, E), const),
                   pl.BlockSpec((batch, 1), const)),
        scratch_shapes=[pltpu.VMEM((B2, HP), jnp.float32),
                        pltpu.VMEM((B2, HP), jnp.float32)],
        compiler_params=pltpu.CompilerParams(
            dimension_semantics=("arbitrary",)),
    )(x3, p["c3_wm"], p["c3_b"], p["W_ih_T"], p["W_hh_T"], p["b_rnn"],
      feats, p["fc_wa"], p["fc_wb"], p["fc_b"], p["fc2_w"], p["fc2_b"],
      t1, t2, p["cmp_w1a"], p["cmp_w1t"], p["cmp_w1b"], p["cmp_b1"],
      p["cmp_w2"], p["cmp_b2"])


# ----------------------------- full forward pass -----------------------------

def siamese_forward(p, img1, feat1, img2, feat2):
    B, T = img1.shape[0], img1.shape[1]
    t1, f1 = feat1[:, 0:1], feat1[:, 1:]
    t2, f2 = feat2[:, 0:1], feat2[:, 1:]

    # Fold (branch, batch, time) into one image batch, time-major so the CNN
    # features reshape straight into the RNN's (T, 2B, ...) layout.
    imgs = jnp.concatenate([img1, img2], axis=0)          # (2B, T, C, H, W)
    imgs = jnp.transpose(imgs, (1, 0, 2, 3, 4))           # (T, 2B, C, H, W)
    x = imgs.reshape((T * 2 * B,) + imgs.shape[2:])

    x = conv_pool_tanh(x, p["c1_w"], p["c1_b"])           # (N, 16, 14, 14)
    x = conv_pool_tanh(x, p["c2_w"], p["c2_b"])           # (N, 32,  5,  5)
    x3 = x.reshape(T, 2 * B, -1)                          # (T, 2B, 800) = conv3 patches

    feats = jnp.concatenate([f1, f2], axis=0)             # (2B, F)
    emb, out = _tail_fused(p, x3, feats, t1, t2, B)
    return emb[:B], emb[B:], out


# ----------------------------- parameter init -----------------------------

def init_params(key, seq_shape, handcraft_feat_len, embed_len):
    T, C, H, W = seq_shape
    hidden = 500            # nn.RNN hidden size in the reference model
    hp = 512                # zero-padded to a lane-aligned width (math unchanged)
    h1, w1 = (H - 4) // 2, (W - 4) // 2
    h2, w2 = (h1 - 4) // 2, (w1 - 4) // 2
    h3, w3 = h2 - 4, w2 - 4
    # The fused conv3 path assumes conv3's 5x5 kernel covers its whole input
    # feature map (true for the classic 32x32 LeNet geometry used below).
    assert h3 == 1 and w3 == 1, "expected 32x32-style inputs (conv3 output 1x1)"
    cnn_out = 32 * h3 * w3

    keys = jax.random.split(key, 20)

    def nrm(k, shape, fan_in):
        return (jax.random.normal(k, shape, jnp.float32)
                / jnp.sqrt(jnp.float32(fan_in)))

    p = {}
    p["c1_w"] = nrm(keys[0], (16, C, 5, 5), C * 25)
    p["c1_b"] = nrm(keys[1], (16,), C * 25)
    p["c2_w"] = nrm(keys[2], (32, 16, 5, 5), 16 * 25)
    p["c2_b"] = nrm(keys[3], (32,), 16 * 25)
    # conv3 stored as a (C*KH*KW, OC) matmul operand + (1, OC) bias.
    p["c3_wm"] = nrm(keys[4], (32, 32 * 5 * 5), 32 * 25).T
    p["c3_b"] = nrm(keys[5], (1, 32), 32 * 25)
    # nn.RNN(cnn_out, 500): stored pre-transposed, b_ih + b_hh folded into b_rnn,
    # zero-padded 500 -> 512 (padded units stay exactly 0 and contribute 0).
    p["W_ih_T"] = jnp.pad(nrm(keys[6], (cnn_out, hidden), cnn_out),
                          ((0, 0), (0, hp - hidden)))
    p["W_hh_T"] = jnp.pad(nrm(keys[7], (hidden, hidden), hidden),
                          ((0, hp - hidden), (0, hp - hidden)))
    p["b_rnn"] = jnp.pad(nrm(keys[8], (1, hidden), hidden),
                         ((0, 0), (0, hp - hidden)))
    # fc: Linear(hidden + handcraft_feat_len, 128), split over the concat axis.
    fan_fc = hidden + handcraft_feat_len
    p["fc_wa"] = jnp.pad(nrm(keys[9], (hidden, 128), fan_fc),
                         ((0, hp - hidden), (0, 0)))
    p["fc_wb"] = nrm(keys[10], (handcraft_feat_len, 128), fan_fc)
    p["fc_b"] = nrm(keys[11], (1, 128), fan_fc)
    # fc2: Linear(128, embed_len)  (no activation between fc and fc2, per spec)
    p["fc2_w"] = nrm(keys[12], (128, embed_len), 128)
    p["fc2_b"] = nrm(keys[13], (1, embed_len), 128)
    # compare: Linear(2E+1, 64) split over [q1 | |t1-t2| | q2], then Linear(64, 1)
    fan_c = 2 * embed_len + 1
    p["cmp_w1a"] = nrm(keys[14], (embed_len, 64), fan_c)
    p["cmp_w1t"] = nrm(keys[15], (1, 64), fan_c)
    p["cmp_w1b"] = nrm(keys[16], (embed_len, 64), fan_c)
    p["cmp_b1"] = nrm(keys[17], (1, 64), fan_c)
    p["cmp_w2"] = nrm(keys[18], (64, 1), 64)
    p["cmp_b2"] = nrm(keys[19], (1, 1), 64)
    return p


# ----------------------------- main -----------------------------

if __name__ == "__main__":
    B, T, C, H, W = 2, 3, 1, 32, 32           # 32x32 is the smallest LeNet-valid size
    handcraft_feat_len = 6                    # feat inputs carry 1 extra time column
    embed_len = 16
    seq_shape = (T, C, H, W)

    key = jax.random.PRNGKey(0)
    pkey, k1, k2, k3, k4 = jax.random.split(key, 5)
    params = init_params(pkey, seq_shape, handcraft_feat_len, embed_len)

    img1 = jax.random.normal(k1, (B, T, C, H, W), jnp.float32)
    img2 = jax.random.normal(k2, (B, T, C, H, W), jnp.float32)
    feat1 = jax.random.normal(k3, (B, handcraft_feat_len + 1), jnp.float32)
    feat2 = jax.random.normal(k4, (B, handcraft_feat_len + 1), jnp.float32)

    fwd = jax.jit(siamese_forward)
    q1, q2, out = fwd(params, img1, feat1, img2, feat2)
    jax.block_until_ready((q1, q2, out))

    assert q1.shape == (B, embed_len)
    assert q2.shape == (B, embed_len)
    assert out.shape == (B, 1)
    assert bool(jnp.all(jnp.isfinite(q1))) and bool(jnp.all(jnp.isfinite(out)))
    print("KERNEL_OK")
</pallas_src>

<mosaic_0001>
module attributes {stable_mosaic.version = 11 : i64} {
  func.func @_conv_pool_tanh_kernel(%arg0: i32, %arg1: memref<4x25x196xbf16, #tpu.memory_space<vmem>>, %arg2: memref<4x25x196xbf16, #tpu.memory_space<vmem>>, %arg3: memref<4x25x196xbf16, #tpu.memory_space<vmem>>, %arg4: memref<4x25x196xbf16, #tpu.memory_space<vmem>>, %arg5: memref<16x25xbf16, #tpu.memory_space<vmem>>, %arg6: memref<16x1xf32, #tpu.memory_space<vmem>>, %arg7: memref<4x16x196xf32, #tpu.memory_space<vmem>>) attributes {dimension_semantics = [#tpu.dimension_semantics<parallel>], iteration_bounds = array<i64: 3>, scalar_prefetch = 0 : i64, scratch_operands = 0 : i64, tpu.core_type = #tpu.core_type<tc>, window_params = [{transform_indices = @transform_0, window_bounds = array<i64: 4, 25, 196>}, {transform_indices = @transform_1, window_bounds = array<i64: 4, 25, 196>}, {transform_indices = @transform_2, window_bounds = array<i64: 4, 25, 196>}, {transform_indices = @transform_3, window_bounds = array<i64: 4, 25, 196>}, {pipeline_mode = #tpu.pipeline_mode<synchronous>, transform_indices = @transform_4, window_bounds = array<i64: 16, 25>}, {pipeline_mode = #tpu.pipeline_mode<synchronous>, transform_indices = @transform_5, window_bounds = array<i64: 16, 1>}, {transform_indices = @transform_6, window_bounds = array<i64: 4, 16, 196>}]} {
    %c0 = arith.constant 0 : index
    %c0_0 = arith.constant 0 : index
    %0 = vector.load %arg5[%c0, %c0_0] : memref<16x25xbf16, #tpu.memory_space<vmem>>, vector<16x25xbf16>
    %c0_1 = arith.constant 0 : index
    %c0_2 = arith.constant 0 : index
    %1 = vector.load %arg6[%c0_1, %c0_2] : memref<16x1xf32, #tpu.memory_space<vmem>>, vector<16x1xf32>
    %c0_3 = arith.constant 0 : index
    %c0_4 = arith.constant 0 : index
    %c0_5 = arith.constant 0 : index
    %2 = vector.load %arg1[%c0_3, %c0_4, %c0_5] : memref<4x25x196xbf16, #tpu.memory_space<vmem>>, vector<1x25x196xbf16>
    %3 = vector.shape_cast %2 : vector<1x25x196xbf16> to vector<25x196xbf16>
    %cst = arith.constant dense<0.000000e+00> : vector<16x196xf32>
    %4 = tpu.matmul %0, %3, %cst {dimension_numbers = #tpu.dot_dimension_numbers<[1], [0], [0], [1], [0, 0, 1, 1], [], []>} : vector<16x25xbf16>, vector<25x196xbf16>, vector<16x196xf32> -> vector<16x196xf32>
    %c0_6 = arith.constant 0 : index
    %c0_7 = arith.constant 0 : index
    %c0_8 = arith.constant 0 : index
    %5 = vector.load %arg2[%c0_6, %c0_7, %c0_8] : memref<4x25x196xbf16, #tpu.memory_space<vmem>>, vector<1x25x196xbf16>
    %6 = vector.shape_cast %5 : vector<1x25x196xbf16> to vector<25x196xbf16>
    %cst_9 = arith.constant dense<0.000000e+00> : vector<16x196xf32>
    %7 = tpu.matmul %0, %6, %cst_9 {dimension_numbers = #tpu.dot_dimension_numbers<[1], [0], [0], [1], [0, 0, 1, 1], [], []>} : vector<16x25xbf16>, vector<25x196xbf16>, vector<16x196xf32> -> vector<16x196xf32>
    %8 = arith.maximumf %4, %7 : vector<16x196xf32>
    %c0_10 = arith.constant 0 : index
    %c0_11 = arith.constant 0 : index
    %c0_12 = arith.constant 0 : index
    %9 = vector.load %arg3[%c0_10, %c0_11, %c0_12] : memref<4x25x196xbf16, #tpu.memory_space<vmem>>, vector<1x25x196xbf16>
    %10 = vector.shape_cast %9 : vector<1x25x196xbf16> to vector<25x196xbf16>
    %cst_13 = arith.constant dense<0.000000e+00> : vector<16x196xf32>
    %11 = tpu.matmul %0, %10, %cst_13 {dimension_numbers = #tpu.dot_dimension_numbers<[1], [0], [0], [1], [0, 0, 1, 1], [], []>} : vector<16x25xbf16>, vector<25x196xbf16>, vector<16x196xf32> -> vector<16x196xf32>
    %c0_14 = arith.constant 0 : index
    %c0_15 = arith.constant 0 : index
    %c0_16 = arith.constant 0 : index
    %12 = vector.load %arg4[%c0_14, %c0_15, %c0_16] : memref<4x25x196xbf16, #tpu.memory_space<vmem>>, vector<1x25x196xbf16>
    %13 = vector.shape_cast %12 : vector<1x25x196xbf16> to vector<25x196xbf16>
    %cst_17 = arith.constant dense<0.000000e+00> : vector<16x196xf32>
    %14 = tpu.matmul %0, %13, %cst_17 {dimension_numbers = #tpu.dot_dimension_numbers<[1], [0], [0], [1], [0, 0, 1, 1], [], []>} : vector<16x25xbf16>, vector<25x196xbf16>, vector<16x196xf32> -> vector<16x196xf32>
    %15 = arith.maximumf %11, %14 : vector<16x196xf32>
    %16 = arith.maximumf %8, %15 : vector<16x196xf32>
    %17 = vector.broadcast %1 : vector<16x1xf32> to vector<16x196xf32>
    %18 = arith.addf %16, %17 : vector<16x196xf32>
    %19 = math.tanh %18 : vector<16x196xf32>
    %c0_18 = arith.constant 0 : index
    %c0_19 = arith.constant 0 : index
    %c0_20 = arith.constant 0 : index
    %20 = vector.load %arg7[%c0_18, %c0_19, %c0_20] : memref<4x16x196xf32, #tpu.memory_space<vmem>>, vector<1x16x196xf32>
    %21 = vector.shape_cast %20 : vector<1x16x196xf32> to vector<16x196xf32>
    %22 = vector.shape_cast %19 : vector<16x196xf32> to vector<1x16x196xf32>
    tpu.vector_store %arg7[%c0_18, %c0_19, %c0_20], %22 {strides = array<i32>} : memref<4x16x196xf32, #tpu.memory_space<vmem>>, vector<1x16x196xf32>,
    %c1 = arith.constant 1 : index
    %c0_21 = arith.constant 0 : index
    %c0_22 = arith.constant 0 : index
    %23 = vector.load %arg1[%c1, %c0_21, %c0_22] : memref<4x25x196xbf16, #tpu.memory_space<vmem>>, vector<1x25x196xbf16>
    %24 = vector.shape_cast %23 : vector<1x25x196xbf16> to vector<25x196xbf16>
    %cst_23 = arith.constant dense<0.000000e+00> : vector<16x196xf32>
    %25 = tpu.matmul %0, %24, %cst_23 {dimension_numbers = #tpu.dot_dimension_numbers<[1], [0], [0], [1], [0, 0, 1, 1], [], []>} : vector<16x25xbf16>, vector<25x196xbf16>, vector<16x196xf32> -> vector<16x196xf32>
    %c1_24 = arith.constant 1 : index
    %c0_25 = arith.constant 0 : index
    %c0_26 = arith.constant 0 : index
    %26 = vector.load %arg2[%c1_24, %c0_25, %c0_26] : memref<4x25x196xbf16, #tpu.memory_space<vmem>>, vector<1x25x196xbf16>
    %27 = vector.shape_cast %26 : vector<1x25x196xbf16> to vector<25x196xbf16>
    %cst_27 = arith.constant dense<0.000000e+00> : vector<16x196xf32>
    %28 = tpu.matmul %0, %27, %cst_27 {dimension_numbers = #tpu.dot_dimension_numbers<[1], [0], [0], [1], [0, 0, 1, 1], [], []>} : vector<16x25xbf16>, vector<25x196xbf16>, vector<16x196xf32> -> vector<16x196xf32>
    %29 = arith.maximumf %25, %28 : vector<16x196xf32>
    %c1_28 = arith.constant 1 : index
    %c0_29 = arith.constant 0 : index
    %c0_30 = arith.constant 0 : index
    %30 = vector.load %arg3[%c1_28, %c0_29, %c0_30] : memref<4x25x196xbf16, #tpu.memory_space<vmem>>, vector<1x25x196xbf16>
    %31 = vector.shape_cast %30 : vector<1x25x196xbf16> to vector<25x196xbf16>
    %cst_31 = arith.constant dense<0.000000e+00> : vector<16x196xf32>
    %32 = tpu.matmul %0, %31, %cst_31 {dimension_numbers = #tpu.dot_dimension_numbers<[1], [0], [0], [1], [0, 0, 1, 1], [], []>} : vector<16x25xbf16>, vector<25x196xbf16>, vector<16x196xf32> -> vector<16x196xf32>
    %c1_32 = arith.constant 1 : index
    %c0_33 = arith.constant 0 : index
    %c0_34 = arith.constant 0 : index
    %33 = vector.load %arg4[%c1_32, %c0_33, %c0_34] : memref<4x25x196xbf16, #tpu.memory_space<vmem>>, vector<1x25x196xbf16>
    %34 = vector.shape_cast %33 : vector<1x25x196xbf16> to vector<25x196xbf16>
    %cst_35 = arith.constant dense<0.000000e+00> : vector<16x196xf32>
    %35 = tpu.matmul %0, %34, %cst_35 {dimension_numbers = #tpu.dot_dimension_numbers<[1], [0], [0], [1], [0, 0, 1, 1], [], []>} : vector<16x25xbf16>, vector<25x196xbf16>, vector<16x196xf32> -> vector<16x196xf32>
    %36 = arith.maximumf %32, %35 : vector<16x196xf32>
    %37 = arith.maximumf %29, %36 : vector<16x196xf32>
    %38 = vector.broadcast %1 : vector<16x1xf32> to vector<16x196xf32>
    %39 = arith.addf %37, %38 : vector<16x196xf32>
    %40 = math.tanh %39 : vector<16x196xf32>
    %c1_36 = arith.constant 1 : index
    %c0_37 = arith.constant 0 : index
    %c0_38 = arith.constant 0 : index
    %41 = vector.load %arg7[%c1_36, %c0_37, %c0_38] : memref<4x16x196xf32, #tpu.memory_space<vmem>>, vector<1x16x196xf32>
    %42 = vector.shape_cast %41 : vector<1x16x196xf32> to vector<16x196xf32>
    %43 = vector.shape_cast %40 : vector<16x196xf32> to vector<1x16x196xf32>
    tpu.vector_store %arg7[%c1_36, %c0_37, %c0_38], %43 {strides = array<i32>} : memref<4x16x196xf32, #tpu.memory_space<vmem>>, vector<1x16x196xf32>,
    %c2 = arith.constant 2 : index
    %c0_39 = arith.constant 0 : index
    %c0_40 = arith.constant 0 : index
    %44 = vector.load %arg1[%c2, %c0_39, %c0_40] : memref<4x25x196xbf16, #tpu.memory_space<vmem>>, vector<1x25x196xbf16>
    %45 = vector.shape_cast %44 : vector<1x25x196xbf16> to vector<25x196xbf16>
    %cst_41 = arith.constant dense<0.000000e+00> : vector<16x196xf32>
    %46 = tpu.matmul %0, %45, %cst_41 {dimension_numbers = #tpu.dot_dimension_numbers<[1], [0], [0], [1], [0, 0, 1, 1], [], []>} : vector<16x25xbf16>, vector<25x196xbf16>, vector<16x196xf32> -> vector<16x196xf32>
    %c2_42 = arith.constant 2 : index
    %c0_43 = arith.constant 0 : index
    %c0_44 = arith.constant 0 : index
    %47 = vector.load %arg2[%c2_42, %c0_43, %c0_44] : memref<4x25x196xbf16, #tpu.memory_space<vmem>>, vector<1x25x196xbf16>
    %48 = vector.shape_cast %47 : vector<1x25x196xbf16> to vector<25x196xbf16>
    %cst_45 = arith.constant dense<0.000000e+00> : vector<16x196xf32>
    %49 = tpu.matmul %0, %48, %cst_45 {dimension_numbers = #tpu.dot_dimension_numbers<[1], [0], [0], [1], [0, 0, 1, 1], [], []>} : vector<16x25xbf16>, vector<25x196xbf16>, vector<16x196xf32> -> vector<16x196xf32>
    %50 = arith.maximumf %46, %49 : vector<16x196xf32>
    %c2_46 = arith.constant 2 : index
    %c0_47 = arith.constant 0 : index
    %c0_48 = arith.constant 0 : index
    %51 = vector.load %arg3[%c2_46, %c0_47, %c0_48] : memref<4x25x196xbf16, #tpu.memory_space<vmem>>, vector<1x25x196xbf16>
    %52 = vector.shape_cast %51 : vector<1x25x196xbf16> to vector<25x196xbf16>
    %cst_49 = arith.constant dense<0.000000e+00> : vector<16x196xf32>
    %53 = tpu.matmul %0, %52, %cst_49 {dimension_numbers = #tpu.dot_dimension_numbers<[1], [0], [0], [1], [0, 0, 1, 1], [], []>} : vector<16x25xbf16>, vector<25x196xbf16>, vector<16x196xf32> -> vector<16x196xf32>
    %c2_50 = arith.constant 2 : index
    %c0_51 = arith.constant 0 : index
    %c0_52 = arith.constant 0 : index
    %54 = vector.load %arg4[%c2_50, %c0_51, %c0_52] : memref<4x25x196xbf16, #tpu.memory_space<vmem>>, vector<1x25x196xbf16>
    %55 = vector.shape_cast %54 : vector<1x25x196xbf16> to vector<25x196xbf16>
    %cst_53 = arith.constant dense<0.000000e+00> : vector<16x196xf32>
    %56 = tpu.matmul %0, %55, %cst_53 {dimension_numbers = #tpu.dot_dimension_numbers<[1], [0], [0], [1], [0, 0, 1, 1], [], []>} : vector<16x25xbf16>, vector<25x196xbf16>, vector<16x196xf32> -> vector<16x196xf32>
    %57 = arith.maximumf %53, %56 : vector<16x196xf32>
    %58 = arith.maximumf %50, %57 : vector<16x196xf32>
    %59 = vector.broadcast %1 : vector<16x1xf32> to vector<16x196xf32>
    %60 = arith.addf %58, %59 : vector<16x196xf32>
    %61 = math.tanh %60 : vector<16x196xf32>
    %c2_54 = arith.constant 2 : index
    %c0_55 = arith.constant 0 : index
    %c0_56 = arith.constant 0 : index
    %62 = vector.load %arg7[%c2_54, %c0_55, %c0_56] : memref<4x16x196xf32, #tpu.memory_space<vmem>>, vector<1x16x196xf32>
    %63 = vector.shape_cast %62 : vector<1x16x196xf32> to vector<16x196xf32>
    %64 = vector.shape_cast %61 : vector<16x196xf32> to vector<1x16x196xf32>
    tpu.vector_store %arg7[%c2_54, %c0_55, %c0_56], %64 {strides = array<i32>} : memref<4x16x196xf32, #tpu.memory_space<vmem>>, vector<1x16x196xf32>,
    %c3 = arith.constant 3 : index
    %c0_57 = arith.constant 0 : index
    %c0_58 = arith.constant 0 : index
    %65 = vector.load %arg1[%c3, %c0_57, %c0_58] : memref<4x25x196xbf16, #tpu.memory_space<vmem>>, vector<1x25x196xbf16>
    %66 = vector.shape_cast %65 : vector<1x25x196xbf16> to vector<25x196xbf16>
    %cst_59 = arith.constant dense<0.000000e+00> : vector<16x196xf32>
    %67 = tpu.matmul %0, %66, %cst_59 {dimension_numbers = #tpu.dot_dimension_numbers<[1], [0], [0], [1], [0, 0, 1, 1], [], []>} : vector<16x25xbf16>, vector<25x196xbf16>, vector<16x196xf32> -> vector<16x196xf32>
    %c3_60 = arith.constant 3 : index
    %c0_61 = arith.constant 0 : index
    %c0_62 = arith.constant 0 : index
    %68 = vector.load %arg2[%c3_60, %c0_61, %c0_62] : memref<4x25x196xbf16, #tpu.memory_space<vmem>>, vector<1x25x196xbf16>
    %69 = vector.shape_cast %68 : vector<1x25x196xbf16> to vector<25x196xbf16>
    %cst_63 = arith.constant dense<0.000000e+00> : vector<16x196xf32>
    %70 = tpu.matmul %0, %69, %cst_63 {dimension_numbers = #tpu.dot_dimension_numbers<[1], [0], [0], [1], [0, 0, 1, 1], [], []>} : vector<16x25xbf16>, vector<25x196xbf16>, vector<16x196xf32> -> vector<16x196xf32>
    %71 = arith.maximumf %67, %70 : vector<16x196xf32>
    %c3_64 = arith.constant 3 : index
    %c0_65 = arith.constant 0 : index
    %c0_66 = arith.constant 0 : index
    %72 = vector.load %arg3[%c3_64, %c0_65, %c0_66] : memref<4x25x196xbf16, #tpu.memory_space<vmem>>, vector<1x25x196xbf16>
    %73 = vector.shape_cast %72 : vector<1x25x196xbf16> to vector<25x196xbf16>
    %cst_67 = arith.constant dense<0.000000e+00> : vector<16x196xf32>
    %74 = tpu.matmul %0, %73, %cst_67 {dimension_numbers = #tpu.dot_dimension_numbers<[1], [0], [0], [1], [0, 0, 1, 1], [], []>} : vector<16x25xbf16>, vector<25x196xbf16>, vector<16x196xf32> -> vector<16x196xf32>
    %c3_68 = arith.constant 3 : index
    %c0_69 = arith.constant 0 : index
    %c0_70 = arith.constant 0 : index
    %75 = vector.load %arg4[%c3_68, %c0_69, %c0_70] : memref<4x25x196xbf16, #tpu.memory_space<vmem>>, vector<1x25x196xbf16>
    %76 = vector.shape_cast %75 : vector<1x25x196xbf16> to vector<25x196xbf16>
    %cst_71 = arith.constant dense<0.000000e+00> : vector<16x196xf32>
    %77 = tpu.matmul %0, %76, %cst_71 {dimension_numbers = #tpu.dot_dimension_numbers<[1], [0], [0], [1], [0, 0, 1, 1], [], []>} : vector<16x25xbf16>, vector<25x196xbf16>, vector<16x196xf32> -> vector<16x196xf32>
    %78 = arith.maximumf %74, %77 : vector<16x196xf32>
    %79 = arith.maximumf %71, %78 : vector<16x196xf32>
    %80 = vector.broadcast %1 : vector<16x1xf32> to vector<16x196xf32>
    %81 = arith.addf %79, %80 : vector<16x196xf32>
    %82 = math.tanh %81 : vector<16x196xf32>
    %c3_72 = arith.constant 3 : index
    %c0_73 = arith.constant 0 : index
    %c0_74 = arith.constant 0 : index
    %83 = vector.load %arg7[%c3_72, %c0_73, %c0_74] : memref<4x16x196xf32, #tpu.memory_space<vmem>>, vector<1x16x196xf32>
    %84 = vector.shape_cast %83 : vector<1x16x196xf32> to vector<16x196xf32>
    %85 = vector.shape_cast %82 : vector<16x196xf32> to vector<1x16x196xf32>
    tpu.vector_store %arg7[%c3_72, %c0_73, %c0_74], %85 {strides = array<i32>} : memref<4x16x196xf32, #tpu.memory_space<vmem>>, vector<1x16x196xf32>,
    return
  }
  func.func @transform_0(%arg0: i32) -> (i32, i32, i32) {
    %c0_i32 = arith.constant 0 : i32
    %c0_i32_0 = arith.constant 0 : i32
    %c0_i32_1 = arith.constant 0 : i32
    return %arg0, %c0_i32, %c0_i32_0 : i32, i32, i32
  }
  func.func @transform_1(%arg0: i32) -> (i32, i32, i32) {
    %c0_i32 = arith.constant 0 : i32
    %c0_i32_0 = arith.constant 0 : i32
    %c0_i32_1 = arith.constant 0 : i32
    return %arg0, %c0_i32, %c0_i32_0 : i32, i32, i32
  }
  func.func @transform_2(%arg0: i32) -> (i32, i32, i32) {
    %c0_i32 = arith.constant 0 : i32
    %c0_i32_0 = arith.constant 0 : i32
    %c0_i32_1 = arith.constant 0 : i32
    return %arg0, %c0_i32, %c0_i32_0 : i32, i32, i32
  }
  func.func @transform_3(%arg0: i32) -> (i32, i32, i32) {
    %c0_i32 = arith.constant 0 : i32
    %c0_i32_0 = arith.constant 0 : i32
    %c0_i32_1 = arith.constant 0 : i32
    return %arg0, %c0_i32, %c0_i32_0 : i32, i32, i32
  }
  func.func @transform_4(%arg0: i32) -> (i32, i32) {
    %c0_i32 = arith.constant 0 : i32
    %c0_i32_0 = arith.constant 0 : i32
    %c0_i32_1 = arith.constant 0 : i32
    return %c0_i32, %c0_i32_0 : i32, i32
  }
  func.func @transform_5(%arg0: i32) -> (i32, i32) {
    %c0_i32 = arith.constant 0 : i32
    %c0_i32_0 = arith.constant 0 : i32
    %c0_i32_1 = arith.constant 0 : i32
    return %c0_i32, %c0_i32_0 : i32, i32
  }
  func.func @transform_6(%arg0: i32) -> (i32, i32, i32) {
    %c0_i32 = arith.constant 0 : i32
    %c0_i32_0 = arith.constant 0 : i32
    %c0_i32_1 = arith.constant 0 : i32
    return %arg0, %c0_i32, %c0_i32_0 : i32, i32, i32
  }
}

module attributes {stable_mosaic.version = 11 : i64} {
  func.func @_conv_pool_tanh_kernel(%arg0: i32, %arg1: memref<4x400x25xbf16, #tpu.memory_space<vmem>>, %arg2: memref<4x400x25xbf16, #tpu.memory_space<vmem>>, %arg3: memref<4x400x25xbf16, #tpu.memory_space<vmem>>, %arg4: memref<4x400x25xbf16, #tpu.memory_space<vmem>>, %arg5: memref<32x400xbf16, #tpu.memory_space<vmem>>, %arg6: memref<32x1xf32, #tpu.memory_space<vmem>>, %arg7: memref<4x32x25xf32, #tpu.memory_space<vmem>>) attributes {dimension_semantics = [#tpu.dimension_semantics<parallel>], iteration_bounds = array<i64: 3>, scalar_prefetch = 0 : i64, scratch_operands = 0 : i64, tpu.core_type = #tpu.core_type<tc>, window_params = [{transform_indices = @transform_0, window_bounds = array<i64: 4, 400, 25>}, {transform_indices = @transform_1, window_bounds = array<i64: 4, 400, 25>}, {transform_indices = @transform_2, window_bounds = array<i64: 4, 400, 25>}, {transform_indices = @transform_3, window_bounds = array<i64: 4, 400, 25>}, {pipeline_mode = #tpu.pipeline_mode<synchronous>, transform_indices = @transform_4, window_bounds = array<i64: 32, 400>}, {pipeline_mode = #tpu.pipeline_mode<synchronous>, transform_indices = @transform_5, window_bounds = array<i64: 32, 1>}, {transform_indices = @transform_6, window_bounds = array<i64: 4, 32, 25>}]} {
    %c0 = arith.constant 0 : index
    %c0_0 = arith.constant 0 : index
    %0 = vector.load %arg5[%c0, %c0_0] : memref<32x400xbf16, #tpu.memory_space<vmem>>, vector<32x400xbf16>
    %c0_1 = arith.constant 0 : index
    %c0_2 = arith.constant 0 : index
    %1 = vector.load %arg6[%c0_1, %c0_2] : memref<32x1xf32, #tpu.memory_space<vmem>>, vector<32x1xf32>
    %c0_3 = arith.constant 0 : index
    %c0_4 = arith.constant 0 : index
    %c0_5 = arith.constant 0 : index
    %2 = vector.load %arg1[%c0_3, %c0_4, %c0_5] : memref<4x400x25xbf16, #tpu.memory_space<vmem>>, vector<1x400x25xbf16>
    %3 = vector.shape_cast %2 : vector<1x400x25xbf16> to vector<400x25xbf16>
    %cst = arith.constant dense<0.000000e+00> : vector<32x25xf32>
    %4 = tpu.matmul %0, %3, %cst {dimension_numbers = #tpu.dot_dimension_numbers<[1], [0], [0], [1], [0, 0, 1, 1], [], []>} : vector<32x400xbf16>, vector<400x25xbf16>, vector<32x25xf32> -> vector<32x25xf32>
    %c0_6 = arith.constant 0 : index
    %c0_7 = arith.constant 0 : index
    %c0_8 = arith.constant 0 : index
    %5 = vector.load %arg2[%c0_6, %c0_7, %c0_8] : memref<4x400x25xbf16, #tpu.memory_space<vmem>>, vector<1x400x25xbf16>
    %6 = vector.shape_cast %5 : vector<1x400x25xbf16> to vector<400x25xbf16>
    %cst_9 = arith.constant dense<0.000000e+00> : vector<32x25xf32>
    %7 = tpu.matmul %0, %6, %cst_9 {dimension_numbers = #tpu.dot_dimension_numbers<[1], [0], [0], [1], [0, 0, 1, 1], [], []>} : vector<32x400xbf16>, vector<400x25xbf16>, vector<32x25xf32> -> vector<32x25xf32>
    %8 = arith.maximumf %4, %7 : vector<32x25xf32>
    %c0_10 = arith.constant 0 : index
    %c0_11 = arith.constant 0 : index
    %c0_12 = arith.constant 0 : index
    %9 = vector.load %arg3[%c0_10, %c0_11, %c0_12] : memref<4x400x25xbf16, #tpu.memory_space<vmem>>, vector<1x400x25xbf16>
    %10 = vector.shape_cast %9 : vector<1x400x25xbf16> to vector<400x25xbf16>
    %cst_13 = arith.constant dense<0.000000e+00> : vector<32x25xf32>
    %11 = tpu.matmul %0, %10, %cst_13 {dimension_numbers = #tpu.dot_dimension_numbers<[1], [0], [0], [1], [0, 0, 1, 1], [], []>} : vector<32x400xbf16>, vector<400x25xbf16>, vector<32x25xf32> -> vector<32x25xf32>
    %c0_14 = arith.constant 0 : index
    %c0_15 = arith.constant 0 : index
    %c0_16 = arith.constant 0 : index
    %12 = vector.load %arg4[%c0_14, %c0_15, %c0_16] : memref<4x400x25xbf16, #tpu.memory_space<vmem>>, vector<1x400x25xbf16>
    %13 = vector.shape_cast %12 : vector<1x400x25xbf16> to vector<400x25xbf16>
    %cst_17 = arith.constant dense<0.000000e+00> : vector<32x25xf32>
    %14 = tpu.matmul %0, %13, %cst_17 {dimension_numbers = #tpu.dot_dimension_numbers<[1], [0], [0], [1], [0, 0, 1, 1], [], []>} : vector<32x400xbf16>, vector<400x25xbf16>, vector<32x25xf32> -> vector<32x25xf32>
    %15 = arith.maximumf %11, %14 : vector<32x25xf32>
    %16 = arith.maximumf %8, %15 : vector<32x25xf32>
    %17 = vector.broadcast %1 : vector<32x1xf32> to vector<32x25xf32>
    %18 = arith.addf %16, %17 : vector<32x25xf32>
    %19 = math.tanh %18 : vector<32x25xf32>
    %c0_18 = arith.constant 0 : index
    %c0_19 = arith.constant 0 : index
    %c0_20 = arith.constant 0 : index
    %20 = vector.load %arg7[%c0_18, %c0_19, %c0_20] : memref<4x32x25xf32, #tpu.memory_space<vmem>>, vector<1x32x25xf32>
    %21 = vector.shape_cast %20 : vector<1x32x25xf32> to vector<32x25xf32>
    %22 = vector.shape_cast %19 : vector<32x25xf32> to vector<1x32x25xf32>
    tpu.vector_store %arg7[%c0_18, %c0_19, %c0_20], %22 {strides = array<i32>} : memref<4x32x25xf32, #tpu.memory_space<vmem>>, vector<1x32x25xf32>,
    %c1 = arith.constant 1 : index
    %c0_21 = arith.constant 0 : index
    %c0_22 = arith.constant 0 : index
    %23 = vector.load %arg1[%c1, %c0_21, %c0_22] : memref<4x400x25xbf16, #tpu.memory_space<vmem>>, vector<1x400x25xbf16>
    %24 = vector.shape_cast %23 : vector<1x400x25xbf16> to vector<400x25xbf16>
    %cst_23 = arith.constant dense<0.000000e+00> : vector<32x25xf32>
    %25 = tpu.matmul %0, %24, %cst_23 {dimension_numbers = #tpu.dot_dimension_numbers<[1], [0], [0], [1], [0, 0, 1, 1], [], []>} : vector<32x400xbf16>, vector<400x25xbf16>, vector<32x25xf32> -> vector<32x25xf32>
    %c1_24 = arith.constant 1 : index
    %c0_25 = arith.constant 0 : index
    %c0_26 = arith.constant 0 : index
    %26 = vector.load %arg2[%c1_24, %c0_25, %c0_26] : memref<4x400x25xbf16, #tpu.memory_space<vmem>>, vector<1x400x25xbf16>
    %27 = vector.shape_cast %26 : vector<1x400x25xbf16> to vector<400x25xbf16>
    %cst_27 = arith.constant dense<0.000000e+00> : vector<32x25xf32>
    %28 = tpu.matmul %0, %27, %cst_27 {dimension_numbers = #tpu.dot_dimension_numbers<[1], [0], [0], [1], [0, 0, 1, 1], [], []>} : vector<32x400xbf16>, vector<400x25xbf16>, vector<32x25xf32> -> vector<32x25xf32>
    %29 = arith.maximumf %25, %28 : vector<32x25xf32>
    %c1_28 = arith.constant 1 : index
    %c0_29 = arith.constant 0 : index
    %c0_30 = arith.constant 0 : index
    %30 = vector.load %arg3[%c1_28, %c0_29, %c0_30] : memref<4x400x25xbf16, #tpu.memory_space<vmem>>, vector<1x400x25xbf16>
    %31 = vector.shape_cast %30 : vector<1x400x25xbf16> to vector<400x25xbf16>
    %cst_31 = arith.constant dense<0.000000e+00> : vector<32x25xf32>
    %32 = tpu.matmul %0, %31, %cst_31 {dimension_numbers = #tpu.dot_dimension_numbers<[1], [0], [0], [1], [0, 0, 1, 1], [], []>} : vector<32x400xbf16>, vector<400x25xbf16>, vector<32x25xf32> -> vector<32x25xf32>
    %c1_32 = arith.constant 1 : index
    %c0_33 = arith.constant 0 : index
    %c0_34 = arith.constant 0 : index
    %33 = vector.load %arg4[%c1_32, %c0_33, %c0_34] : memref<4x400x25xbf16, #tpu.memory_space<vmem>>, vector<1x400x25xbf16>
    %34 = vector.shape_cast %33 : vector<1x400x25xbf16> to vector<400x25xbf16>
    %cst_35 = arith.constant dense<0.000000e+00> : vector<32x25xf32>
    %35 = tpu.matmul %0, %34, %cst_35 {dimension_numbers = #tpu.dot_dimension_numbers<[1], [0], [0], [1], [0, 0, 1, 1], [], []>} : vector<32x400xbf16>, vector<400x25xbf16>, vector<32x25xf32> -> vector<32x25xf32>
    %36 = arith.maximumf %32, %35 : vector<32x25xf32>
    %37 = arith.maximumf %29, %36 : vector<32x25xf32>
    %38 = vector.broadcast %1 : vector<32x1xf32> to vector<32x25xf32>
    %39 = arith.addf %37, %38 : vector<32x25xf32>
    %40 = math.tanh %39 : vector<32x25xf32>
    %c1_36 = arith.constant 1 : index
    %c0_37 = arith.constant 0 : index
    %c0_38 = arith.constant 0 : index
    %41 = vector.load %arg7[%c1_36, %c0_37, %c0_38] : memref<4x32x25xf32, #tpu.memory_space<vmem>>, vector<1x32x25xf32>
    %42 = vector.shape_cast %41 : vector<1x32x25xf32> to vector<32x25xf32>
    %43 = vector.shape_cast %40 : vector<32x25xf32> to vector<1x32x25xf32>
    tpu.vector_store %arg7[%c1_36, %c0_37, %c0_38], %43 {strides = array<i32>} : memref<4x32x25xf32, #tpu.memory_space<vmem>>, vector<1x32x25xf32>,
    %c2 = arith.constant 2 : index
    %c0_39 = arith.constant 0 : index
    %c0_40 = arith.constant 0 : index
    %44 = vector.load %arg1[%c2, %c0_39, %c0_40] : memref<4x400x25xbf16, #tpu.memory_space<vmem>>, vector<1x400x25xbf16>
    %45 = vector.shape_cast %44 : vector<1x400x25xbf16> to vector<400x25xbf16>
    %cst_41 = arith.constant dense<0.000000e+00> : vector<32x25xf32>
    %46 = tpu.matmul %0, %45, %cst_41 {dimension_numbers = #tpu.dot_dimension_numbers<[1], [0], [0], [1], [0, 0, 1, 1], [], []>} : vector<32x400xbf16>, vector<400x25xbf16>, vector<32x25xf32> -> vector<32x25xf32>
    %c2_42 = arith.constant 2 : index
    %c0_43 = arith.constant 0 : index
    %c0_44 = arith.constant 0 : index
    %47 = vector.load %arg2[%c2_42, %c0_43, %c0_44] : memref<4x400x25xbf16, #tpu.memory_space<vmem>>, vector<1x400x25xbf16>
    %48 = vector.shape_cast %47 : vector<1x400x25xbf16> to vector<400x25xbf16>
    %cst_45 = arith.constant dense<0.000000e+00> : vector<32x25xf32>
    %49 = tpu.matmul %0, %48, %cst_45 {dimension_numbers = #tpu.dot_dimension_numbers<[1], [0], [0], [1], [0, 0, 1, 1], [], []>} : vector<32x400xbf16>, vector<400x25xbf16>, vector<32x25xf32> -> vector<32x25xf32>
    %50 = arith.maximumf %46, %49 : vector<32x25xf32>
    %c2_46 = arith.constant 2 : index
    %c0_47 = arith.constant 0 : index
    %c0_48 = arith.constant 0 : index
    %51 = vector.load %arg3[%c2_46, %c0_47, %c0_48] : memref<4x400x25xbf16, #tpu.memory_space<vmem>>, vector<1x400x25xbf16>
    %52 = vector.shape_cast %51 : vector<1x400x25xbf16> to vector<400x25xbf16>
    %cst_49 = arith.constant dense<0.000000e+00> : vector<32x25xf32>
    %53 = tpu.matmul %0, %52, %cst_49 {dimension_numbers = #tpu.dot_dimension_numbers<[1], [0], [0], [1], [0, 0, 1, 1], [], []>} : vector<32x400xbf16>, vector<400x25xbf16>, vector<32x25xf32> -> vector<32x25xf32>
    %c2_50 = arith.constant 2 : index
    %c0_51 = arith.constant 0 : index
    %c0_52 = arith.constant 0 : index
    %54 = vector.load %arg4[%c2_50, %c0_51, %c0_52] : memref<4x400x25xbf16, #tpu.memory_space<vmem>>, vector<1x400x25xbf16>
    %55 = vector.shape_cast %54 : vector<1x400x25xbf16> to vector<400x25xbf16>
    %cst_53 = arith.constant dense<0.000000e+00> : vector<32x25xf32>
    %56 = tpu.matmul %0, %55, %cst_53 {dimension_numbers = #tpu.dot_dimension_numbers<[1], [0], [0], [1], [0, 0, 1, 1], [], []>} : vector<32x400xbf16>, vector<400x25xbf16>, vector<32x25xf32> -> vector<32x25xf32>
    %57 = arith.maximumf %53, %56 : vector<32x25xf32>
    %58 = arith.maximumf %50, %57 : vector<32x25xf32>
    %59 = vector.broadcast %1 : vector<32x1xf32> to vector<32x25xf32>
    %60 = arith.addf %58, %59 : vector<32x25xf32>
    %61 = math.tanh %60 : vector<32x25xf32>
    %c2_54 = arith.constant 2 : index
    %c0_55 = arith.constant 0 : index
    %c0_56 = arith.constant 0 : index
    %62 = vector.load %arg7[%c2_54, %c0_55, %c0_56] : memref<4x32x25xf32, #tpu.memory_space<vmem>>, vector<1x32x25xf32>
    %63 = vector.shape_cast %62 : vector<1x32x25xf32> to vector<32x25xf32>
    %64 = vector.shape_cast %61 : vector<32x25xf32> to vector<1x32x25xf32>
    tpu.vector_store %arg7[%c2_54, %c0_55, %c0_56], %64 {strides = array<i32>} : memref<4x32x25xf32, #tpu.memory_space<vmem>>, vector<1x32x25xf32>,
    %c3 = arith.constant 3 : index
    %c0_57 = arith.constant 0 : index
    %c0_58 = arith.constant 0 : index
    %65 = vector.load %arg1[%c3, %c0_57, %c0_58] : memref<4x400x25xbf16, #tpu.memory_space<vmem>>, vector<1x400x25xbf16>
    %66 = vector.shape_cast %65 : vector<1x400x25xbf16> to vector<400x25xbf16>
    %cst_59 = arith.constant dense<0.000000e+00> : vector<32x25xf32>
    %67 = tpu.matmul %0, %66, %cst_59 {dimension_numbers = #tpu.dot_dimension_numbers<[1], [0], [0], [1], [0, 0, 1, 1], [], []>} : vector<32x400xbf16>, vector<400x25xbf16>, vector<32x25xf32> -> vector<32x25xf32>
    %c3_60 = arith.constant 3 : index
    %c0_61 = arith.constant 0 : index
    %c0_62 = arith.constant 0 : index
    %68 = vector.load %arg2[%c3_60, %c0_61, %c0_62] : memref<4x400x25xbf16, #tpu.memory_space<vmem>>, vector<1x400x25xbf16>
    %69 = vector.shape_cast %68 : vector<1x400x25xbf16> to vector<400x25xbf16>
    %cst_63 = arith.constant dense<0.000000e+00> : vector<32x25xf32>
    %70 = tpu.matmul %0, %69, %cst_63 {dimension_numbers = #tpu.dot_dimension_numbers<[1], [0], [0], [1], [0, 0, 1, 1], [], []>} : vector<32x400xbf16>, vector<400x25xbf16>, vector<32x25xf32> -> vector<32x25xf32>
    %71 = arith.maximumf %67, %70 : vector<32x25xf32>
    %c3_64 = arith.constant 3 : index
    %c0_65 = arith.constant 0 : index
    %c0_66 = arith.constant 0 : index
    %72 = vector.load %arg3[%c3_64, %c0_65, %c0_66] : memref<4x400x25xbf16, #tpu.memory_space<vmem>>, vector<1x400x25xbf16>
    %73 = vector.shape_cast %72 : vector<1x400x25xbf16> to vector<400x25xbf16>
    %cst_67 = arith.constant dense<0.000000e+00> : vector<32x25xf32>
    %74 = tpu.matmul %0, %73, %cst_67 {dimension_numbers = #tpu.dot_dimension_numbers<[1], [0], [0], [1], [0, 0, 1, 1], [], []>} : vector<32x400xbf16>, vector<400x25xbf16>, vector<32x25xf32> -> vector<32x25xf32>
    %c3_68 = arith.constant 3 : index
    %c0_69 = arith.constant 0 : index
    %c0_70 = arith.constant 0 : index
    %75 = vector.load %arg4[%c3_68, %c0_69, %c0_70] : memref<4x400x25xbf16, #tpu.memory_space<vmem>>, vector<1x400x25xbf16>
    %76 = vector.shape_cast %75 : vector<1x400x25xbf16> to vector<400x25xbf16>
    %cst_71 = arith.constant dense<0.000000e+00> : vector<32x25xf32>
    %77 = tpu.matmul %0, %76, %cst_71 {dimension_numbers = #tpu.dot_dimension_numbers<[1], [0], [0], [1], [0, 0, 1, 1], [], []>} : vector<32x400xbf16>, vector<400x25xbf16>, vector<32x25xf32> -> vector<32x25xf32>
    %78 = arith.maximumf %74, %77 : vector<32x25xf32>
    %79 = arith.maximumf %71, %78 : vector<32x25xf32>
    %80 = vector.broadcast %1 : vector<32x1xf32> to vector<32x25xf32>
    %81 = arith.addf %79, %80 : vector<32x25xf32>
    %82 = math.tanh %81 : vector<32x25xf32>
    %c3_72 = arith.constant 3 : index
    %c0_73 = arith.constant 0 : index
    %c0_74 = arith.constant 0 : index
    %83 = vector.load %arg7[%c3_72, %c0_73, %c0_74] : memref<4x32x25xf32, #tpu.memory_space<vmem>>, vector<1x32x25xf32>
    %84 = vector.shape_cast %83 : vector<1x32x25xf32> to vector<32x25xf32>
    %85 = vector.shape_cast %82 : vector<32x25xf32> to vector<1x32x25xf32>
    tpu.vector_store %arg7[%c3_72, %c0_73, %c0_74], %85 {strides = array<i32>} : memref<4x32x25xf32, #tpu.memory_space<vmem>>, vector<1x32x25xf32>,
    return
  }
  func.func @transform_0(%arg0: i32) -> (i32, i32, i32) {
    %c0_i32 = arith.constant 0 : i32
    %c0_i32_0 = arith.constant 0 : i32
    %c0_i32_1 = arith.constant 0 : i32
    return %arg0, %c0_i32, %c0_i32_0 : i32, i32, i32
  }
  func.func @transform_1(%arg0: i32) -> (i32, i32, i32) {
    %c0_i32 = arith.constant 0 : i32
    %c0_i32_0 = arith.constant 0 : i32
    %c0_i32_1 = arith.constant 0 : i32
    return %arg0, %c0_i32, %c0_i32_0 : i32, i32, i32
  }
  func.func @transform_2(%arg0: i32) -> (i32, i32, i32) {
    %c0_i32 = arith.constant 0 : i32
    %c0_i32_0 = arith.constant 0 : i32
    %c0_i32_1 = arith.constant 0 : i32
    return %arg0, %c0_i32, %c0_i32_0 : i32, i32, i32
  }
  func.func @transform_3(%arg0: i32) -> (i32, i32, i32) {
    %c0_i32 = arith.constant 0 : i32
    %c0_i32_0 = arith.constant 0 : i32
    %c0_i32_1 = arith.constant 0 : i32
    return %arg0, %c0_i32, %c0_i32_0 : i32, i32, i32
  }
  func.func @transform_4(%arg0: i32) -> (i32, i32) {
    %c0_i32 = arith.constant 0 : i32
    %c0_i32_0 = arith.constant 0 : i32
    %c0_i32_1 = arith.constant 0 : i32
    return %c0_i32, %c0_i32_0 : i32, i32
  }
  func.func @transform_5(%arg0: i32) -> (i32, i32) {
    %c0_i32 = arith.constant 0 : i32
    %c0_i32_0 = arith.constant 0 : i32
    %c0_i32_1 = arith.constant 0 : i32
    return %c0_i32, %c0_i32_0 : i32, i32
  }
  func.func @transform_6(%arg0: i32) -> (i32, i32, i32) {
    %c0_i32 = arith.constant 0 : i32
    %c0_i32_0 = arith.constant 0 : i32
    %c0_i32_1 = arith.constant 0 : i32
    return %arg0, %c0_i32, %c0_i32_0 : i32, i32, i32
  }
}

module attributes {stable_mosaic.version = 11 : i64} {
  func.func @_tail_kernel(%arg0: i32, %arg1: memref<1x4x800xf32, #tpu.memory_space<vmem>>, %arg2: memref<800x32xf32, #tpu.memory_space<vmem>>, %arg3: memref<1x32xf32, #tpu.memory_space<vmem>>, %arg4: memref<32x512xf32, #tpu.memory_space<vmem>>, %arg5: memref<512x512xf32, #tpu.memory_space<vmem>>, %arg6: memref<1x512xf32, #tpu.memory_space<vmem>>, %arg7: memref<4x6xf32, #tpu.memory_space<vmem>>, %arg8: memref<512x128xf32, #tpu.memory_space<vmem>>, %arg9: memref<6x128xf32, #tpu.memory_space<vmem>>, %arg10: memref<1x128xf32, #tpu.memory_space<vmem>>, %arg11: memref<128x16xf32, #tpu.memory_space<vmem>>, %arg12: memref<1x16xf32, #tpu.memory_space<vmem>>, %arg13: memref<2x1xf32, #tpu.memory_space<vmem>>, %arg14: memref<2x1xf32, #tpu.memory_space<vmem>>, %arg15: memref<16x64xf32, #tpu.memory_space<vmem>>, %arg16: memref<1x64xf32, #tpu.memory_space<vmem>>, %arg17: memref<16x64xf32, #tpu.memory_space<vmem>>, %arg18: memref<1x64xf32, #tpu.memory_space<vmem>>, %arg19: memref<64x1xf32, #tpu.memory_space<vmem>>, %arg20: memref<1x1xf32, #tpu.memory_space<vmem>>, %arg21: memref<4x16xf32, #tpu.memory_space<vmem>>, %arg22: memref<2x1xf32, #tpu.memory_space<vmem>>, %arg23: memref<4x512xf32, #tpu.memory_space<vmem>>, %arg24: memref<4x512xf32, #tpu.memory_space<vmem>>) attributes {dimension_semantics = [#tpu.dimension_semantics<arbitrary>], iteration_bounds = array<i64: 3>, scalar_prefetch = 0 : i64, scratch_operands = 2 : i64, tpu.core_type = #tpu.core_type<tc>, window_params = [{transform_indices = @transform_0, window_bounds = array<i64: 1, 4, 800>}, {pipeline_mode = #tpu.pipeline_mode<synchronous>, transform_indices = @transform_1, window_bounds = array<i64: 800, 32>}, {pipeline_mode = #tpu.pipeline_mode<synchronous>, transform_indices = @transform_2, window_bounds = array<i64: 1, 32>}, {pipeline_mode = #tpu.pipeline_mode<synchronous>, transform_indices = @transform_3, window_bounds = array<i64: 32, 512>}, {pipeline_mode = #tpu.pipeline_mode<synchronous>, transform_indices = @transform_4, window_bounds = array<i64: 512, 512>}, {pipeline_mode = #tpu.pipeline_mode<synchronous>, transform_indices = @transform_5, window_bounds = array<i64: 1, 512>}, {pipeline_mode = #tpu.pipeline_mode<synchronous>, transform_indices = @transform_6, window_bounds = array<i64: 4, 6>}, {pipeline_mode = #tpu.pipeline_mode<synchronous>, transform_indices = @transform_7, window_bounds = array<i64: 512, 128>}, {pipeline_mode = #tpu.pipeline_mode<synchronous>, transform_indices = @transform_8, window_bounds = array<i64: 6, 128>}, {pipeline_mode = #tpu.pipeline_mode<synchronous>, transform_indices = @transform_9, window_bounds = array<i64: 1, 128>}, {pipeline_mode = #tpu.pipeline_mode<synchronous>, transform_indices = @transform_10, window_bounds = array<i64: 128, 16>}, {pipeline_mode = #tpu.pipeline_mode<synchronous>, transform_indices = @transform_11, window_bounds = array<i64: 1, 16>}, {pipeline_mode = #tpu.pipeline_mode<synchronous>, transform_indices = @transform_12, window_bounds = array<i64: 2, 1>}, {pipeline_mode = #tpu.pipeline_mode<synchronous>, transform_indices = @transform_13, window_bounds = array<i64: 2, 1>}, {pipeline_mode = #tpu.pipeline_mode<synchronous>, transform_indices = @transform_14, window_bounds = array<i64: 16, 64>}, {pipeline_mode = #tpu.pipeline_mode<synchronous>, transform_indices = @transform_15, window_bounds = array<i64: 1, 64>}, {pipeline_mode = #tpu.pipeline_mode<synchronous>, transform_indices = @transform_16, window_bounds = array<i64: 16, 64>}, {pipeline_mode = #tpu.pipeline_mode<synchronous>, transform_indices = @transform_17, window_bounds = array<i64: 1, 64>}, {pipeline_mode = #tpu.pipeline_mode<synchronous>, transform_indices = @transform_18, window_bounds = array<i64: 64, 1>}, {pipeline_mode = #tpu.pipeline_mode<synchronous>, transform_indices = @transform_19, window_bounds = array<i64: 1, 1>}, {pipeline_mode = #tpu.pipeline_mode<synchronous>, transform_indices = @transform_20, window_bounds = array<i64: 4, 16>}, {pipeline_mode = #tpu.pipeline_mode<synchronous>, transform_indices = @transform_21, window_bounds = array<i64: 2, 1>}]} {
    %c0_i32 = arith.constant 0 : i32
    %0 = arith.cmpi eq, %arg0, %c0_i32 : i32
    %1 = arith.extui %0 : i1 to i32
    %c0_i32_0 = arith.constant 0 : i32
    %2 = arith.cmpi ne, %1, %c0_i32_0 : i32
    scf.if %2 {
      %cst_24 = arith.constant 0.000000e+00 : f32
      %27 = vector.broadcast %cst_24 : f32 to vector<4x512xf32>
      %c0_25 = arith.constant 0 : index
      %c0_26 = arith.constant 0 : index
      %28 = vector.load %arg23[%c0_25, %c0_26] : memref<4x512xf32, #tpu.memory_space<vmem>>, vector<4x512xf32>
      tpu.vector_store %arg23[%c0_25, %c0_26], %27 {strides = array<i32>} : memref<4x512xf32, #tpu.memory_space<vmem>>, vector<4x512xf32>,
      %cst_27 = arith.constant 0.000000e+00 : f32
      %29 = vector.broadcast %cst_27 : f32 to vector<4x512xf32>
      %c0_28 = arith.constant 0 : index
      %c0_29 = arith.constant 0 : index
      %30 = vector.load %arg24[%c0_28, %c0_29] : memref<4x512xf32, #tpu.memory_space<vmem>>, vector<4x512xf32>
      tpu.vector_store %arg24[%c0_28, %c0_29], %29 {strides = array<i32>} : memref<4x512xf32, #tpu.memory_space<vmem>>, vector<4x512xf32>,
    } else {
    }
    %c0 = arith.constant 0 : index
    %c0_1 = arith.constant 0 : index
    %c0_2 = arith.constant 0 : index
    %3 = vector.load %arg1[%c0, %c0_1, %c0_2] : memref<1x4x800xf32, #tpu.memory_space<vmem>>, vector<1x4x800xf32>
    %4 = vector.shape_cast %3 : vector<1x4x800xf32> to vector<4x800xf32>
    %c0_3 = arith.constant 0 : index
    %c0_4 = arith.constant 0 : index
    %5 = vector.load %arg2[%c0_3, %c0_4] : memref<800x32xf32, #tpu.memory_space<vmem>>, vector<800x32xf32>
    %cst = arith.constant dense<0.000000e+00> : vector<4x32xf32>
    %6 = tpu.matmul %4, %5, %cst {dimension_numbers = #tpu.dot_dimension_numbers<[1], [0], [0], [1], [0, 0, 1, 1], [], []>} : vector<4x800xf32>, vector<800x32xf32>, vector<4x32xf32> -> vector<4x32xf32>
    %c0_5 = arith.constant 0 : index
    %c0_6 = arith.constant 0 : index
    %7 = vector.load %arg3[%c0_5, %c0_6] : memref<1x32xf32, #tpu.memory_space<vmem>>, vector<1x32xf32>
    %8 = vector.broadcast %7 : vector<1x32xf32> to vector<4x32xf32>
    %9 = arith.addf %6, %8 : vector<4x32xf32>
    %c0_7 = arith.constant 0 : index
    %c0_8 = arith.constant 0 : index
    %10 = vector.load %arg4[%c0_7, %c0_8] : memref<32x512xf32, #tpu.memory_space<vmem>>, vector<32x512xf32>
    %cst_9 = arith.constant dense<0.000000e+00> : vector<4x512xf32>
    %11 = tpu.matmul %9, %10, %cst_9 {dimension_numbers = #tpu.dot_dimension_numbers<[1], [0], [0], [1], [0, 0, 1, 1], [], []>} : vector<4x32xf32>, vector<32x512xf32>, vector<4x512xf32> -> vector<4x512xf32>
    %c0_10 = arith.constant 0 : index
    %c0_11 = arith.constant 0 : index
    %12 = vector.load %arg6[%c0_10, %c0_11] : memref<1x512xf32, #tpu.memory_space<vmem>>, vector<1x512xf32>
    %13 = vector.broadcast %12 : vector<1x512xf32> to vector<4x512xf32>
    %14 = arith.addf %11, %13 : vector<4x512xf32>
    %c0_12 = arith.constant 0 : index
    %c0_13 = arith.constant 0 : index
    %15 = vector.load %arg23[%c0_12, %c0_13] : memref<4x512xf32, #tpu.memory_space<vmem>>, vector<4x512xf32>
    %c0_14 = arith.constant 0 : index
    %c0_15 = arith.constant 0 : index
    %16 = vector.load %arg5[%c0_14, %c0_15] : memref<512x512xf32, #tpu.memory_space<vmem>>, vector<512x512xf32>
    %cst_16 = arith.constant dense<0.000000e+00> : vector<4x512xf32>
    %17 = tpu.matmul %15, %16, %cst_16 {dimension_numbers = #tpu.dot_dimension_numbers<[1], [0], [0], [1], [0, 0, 1, 1], [], []>} : vector<4x512xf32>, vector<512x512xf32>, vector<4x512xf32> -> vector<4x512xf32>
    %18 = arith.addf %14, %17 : vector<4x512xf32>
    %19 = math.tanh %18 : vector<4x512xf32>
    %c0_17 = arith.constant 0 : index
    %c0_18 = arith.constant 0 : index
    %20 = vector.load %arg23[%c0_17, %c0_18] : memref<4x512xf32, #tpu.memory_space<vmem>>, vector<4x512xf32>
    tpu.vector_store %arg23[%c0_17, %c0_18], %19 {strides = array<i32>} : memref<4x512xf32, #tpu.memory_space<vmem>>, vector<4x512xf32>,
    %c0_19 = arith.constant 0 : index
    %c0_20 = arith.constant 0 : index
    %21 = vector.load %arg24[%c0_19, %c0_20] : memref<4x512xf32, #tpu.memory_space<vmem>>, vector<4x512xf32>
    %22 = arith.addf %21, %19 : vector<4x512xf32>
    %c0_21 = arith.constant 0 : index
    %c0_22 = arith.constant 0 : index
    %23 = vector.load %arg24[%c0_21, %c0_22] : memref<4x512xf32, #tpu.memory_space<vmem>>, vector<4x512xf32>
    tpu.vector_store %arg24[%c0_21, %c0_22], %22 {strides = array<i32>} : memref<4x512xf32, #tpu.memory_space<vmem>>, vector<4x512xf32>,
    %c2_i32 = arith.constant 2 : i32
    %24 = arith.cmpi eq, %arg0, %c2_i32 : i32
    %25 = arith.extui %24 : i1 to i32
    %c0_i32_23 = arith.constant 0 : i32
    %26 = arith.cmpi ne, %25, %c0_i32_23 : i32
    scf.if %26 {
      %c0_24 = arith.constant 0 : index
      %c0_25 = arith.constant 0 : index
      %27 = vector.load %arg24[%c0_24, %c0_25] : memref<4x512xf32, #tpu.memory_space<vmem>>, vector<4x512xf32>
      %cst_26 = arith.constant 0.333333343 : f32
      %28 = vector.broadcast %cst_26 : f32 to vector<4x512xf32>
      %29 = arith.mulf %27, %28 : vector<4x512xf32>
      %c0_27 = arith.constant 0 : index
      %c0_28 = arith.constant 0 : index
      %30 = vector.load %arg8[%c0_27, %c0_28] : memref<512x128xf32, #tpu.memory_space<vmem>>, vector<512x128xf32>
      %cst_29 = arith.constant dense<0.000000e+00> : vector<4x128xf32>
      %31 = tpu.matmul %29, %30, %cst_29 {dimension_numbers = #tpu.dot_dimension_numbers<[1], [0], [0], [1], [0, 0, 1, 1], [], []>} : vector<4x512xf32>, vector<512x128xf32>, vector<4x128xf32> -> vector<4x128xf32>
      %c0_30 = arith.constant 0 : index
      %c0_31 = arith.constant 0 : index
      %32 = vector.load %arg7[%c0_30, %c0_31] : memref<4x6xf32, #tpu.memory_space<vmem>>, vector<4x6xf32>
      %c0_32 = arith.constant 0 : index
      %c0_33 = arith.constant 0 : index
      %33 = vector.load %arg9[%c0_32, %c0_33] : memref<6x128xf32, #tpu.memory_space<vmem>>, vector<6x128xf32>
      %cst_34 = arith.constant dense<0.000000e+00> : vector<4x128xf32>
      %34 = tpu.matmul %32, %33, %cst_34 {dimension_numbers = #tpu.dot_dimension_numbers<[1], [0], [0], [1], [0, 0, 1, 1], [], []>} : vector<4x6xf32>, vector<6x128xf32>, vector<4x128xf32> -> vector<4x128xf32>
      %35 = arith.addf %31, %34 : vector<4x128xf32>
      %c0_35 = arith.constant 0 : index
      %c0_36 = arith.constant 0 : index
      %36 = vector.load %arg10[%c0_35, %c0_36] : memref<1x128xf32, #tpu.memory_space<vmem>>, vector<1x128xf32>
      %37 = vector.broadcast %36 : vector<1x128xf32> to vector<4x128xf32>
      %38 = arith.addf %35, %37 : vector<4x128xf32>
      %c0_37 = arith.constant 0 : index
      %c0_38 = arith.constant 0 : index
      %39 = vector.load %arg11[%c0_37, %c0_38] : memref<128x16xf32, #tpu.memory_space<vmem>>, vector<128x16xf32>
      %cst_39 = arith.constant dense<0.000000e+00> : vector<4x16xf32>
      %40 = tpu.matmul %38, %39, %cst_39 {dimension_numbers = #tpu.dot_dimension_numbers<[1], [0], [0], [1], [0, 0, 1, 1], [], []>} : vector<4x128xf32>, vector<128x16xf32>, vector<4x16xf32> -> vector<4x16xf32>
      %c0_40 = arith.constant 0 : index
      %c0_41 = arith.constant 0 : index
      %41 = vector.load %arg12[%c0_40, %c0_41] : memref<1x16xf32, #tpu.memory_space<vmem>>, vector<1x16xf32>
      %42 = vector.broadcast %41 : vector<1x16xf32> to vector<4x16xf32>
      %43 = arith.addf %40, %42 : vector<4x16xf32>
      %c0_42 = arith.constant 0 : index
      %c0_43 = arith.constant 0 : index
      %44 = vector.load %arg21[%c0_42, %c0_43] : memref<4x16xf32, #tpu.memory_space<vmem>>, vector<4x16xf32>
      tpu.vector_store %arg21[%c0_42, %c0_43], %43 {strides = array<i32>} : memref<4x16xf32, #tpu.memory_space<vmem>>, vector<4x16xf32>,
      %45 = vector.extract_strided_slice %43 {offsets = [0, 0], sizes = [2, 16], strides = [1, 1]} : vector<4x16xf32> to vector<2x16xf32>
      %46 = vector.extract_strided_slice %43 {offsets = [2, 0], sizes = [2, 16], strides = [1, 1]} : vector<4x16xf32> to vector<2x16xf32>
      %c0_44 = arith.constant 0 : index
      %c0_45 = arith.constant 0 : index
      %47 = vector.load %arg13[%c0_44, %c0_45] : memref<2x1xf32, #tpu.memory_space<vmem>>, vector<2x1xf32>
      %c0_46 = arith.constant 0 : index
      %c0_47 = arith.constant 0 : index
      %48 = vector.load %arg14[%c0_46, %c0_47] : memref<2x1xf32, #tpu.memory_space<vmem>>, vector<2x1xf32>
      %49 = arith.subf %47, %48 : vector<2x1xf32>
      %50 = math.absf %49 : vector<2x1xf32>
      %c0_48 = arith.constant 0 : index
      %c0_49 = arith.constant 0 : index
      %51 = vector.load %arg15[%c0_48, %c0_49] : memref<16x64xf32, #tpu.memory_space<vmem>>, vector<16x64xf32>
      %cst_50 = arith.constant dense<0.000000e+00> : vector<2x64xf32>
      %52 = tpu.matmul %45, %51, %cst_50 {dimension_numbers = #tpu.dot_dimension_numbers<[1], [0], [0], [1], [0, 0, 1, 1], [], []>} : vector<2x16xf32>, vector<16x64xf32>, vector<2x64xf32> -> vector<2x64xf32>
      %c0_51 = arith.constant 0 : index
      %c0_52 = arith.constant 0 : index
      %53 = vector.load %arg16[%c0_51, %c0_52] : memref<1x64xf32, #tpu.memory_space<vmem>>, vector<1x64xf32>
      %54 = vector.broadcast %50 : vector<2x1xf32> to vector<2x64xf32>
      %55 = vector.broadcast %53 : vector<1x64xf32> to vector<2x64xf32>
      %56 = arith.mulf %54, %55 : vector<2x64xf32>
      %57 = arith.addf %52, %56 : vector<2x64xf32>
      %c0_53 = arith.constant 0 : index
      %c0_54 = arith.constant 0 : index
      %58 = vector.load %arg17[%c0_53, %c0_54] : memref<16x64xf32, #tpu.memory_space<vmem>>, vector<16x64xf32>
      %cst_55 = arith.constant dense<0.000000e+00> : vector<2x64xf32>
      %59 = tpu.matmul %46, %58, %cst_55 {dimension_numbers = #tpu.dot_dimension_numbers<[1], [0], [0], [1], [0, 0, 1, 1], [], []>} : vector<2x16xf32>, vector<16x64xf32>, vector<2x64xf32> -> vector<2x64xf32>
      %60 = arith.addf %57, %59 : vector<2x64xf32>
      %c0_56 = arith.constant 0 : index
      %c0_57 = arith.constant 0 : index
      %61 = vector.load %arg18[%c0_56, %c0_57] : memref<1x64xf32, #tpu.memory_space<vmem>>, vector<1x64xf32>
      %62 = vector.broadcast %61 : vector<1x64xf32> to vector<2x64xf32>
      %63 = arith.addf %60, %62 : vector<2x64xf32>
      %64 = arith.negf %63 : vector<2x64xf32>
      %65 = math.exp %64 : vector<2x64xf32>
      %cst_58 = arith.constant 1.000000e+00 : f32
      %66 = vector.broadcast %cst_58 : f32 to vector<2x64xf32>
      %67 = arith.addf %66, %65 : vector<2x64xf32>
      %68 = arith.divf %66, %67 : vector<2x64xf32>
      %c0_59 = arith.constant 0 : index
      %c0_60 = arith.constant 0 : index
      %69 = vector.load %arg19[%c0_59, %c0_60] : memref<64x1xf32, #tpu.memory_space<vmem>>, vector<64x1xf32>
      %cst_61 = arith.constant dense<0.000000e+00> : vector<2x1xf32>
      %70 = tpu.matmul %68, %69, %cst_61 {dimension_numbers = #tpu.dot_dimension_numbers<[1], [0], [0], [1], [0, 0, 1, 1], [], []>} : vector<2x64xf32>, vector<64x1xf32>, vector<2x1xf32> -> vector<2x1xf32>
      %c0_62 = arith.constant 0 : index
      %c0_63 = arith.constant 0 : index
      %71 = vector.load %arg20[%c0_62, %c0_63] : memref<1x1xf32, #tpu.memory_space<vmem>>, vector<1x1xf32>
      %72 = vector.broadcast %71 : vector<1x1xf32> to vector<2x1xf32>
      %73 = arith.addf %70, %72 : vector<2x1xf32>
      %74 = arith.negf %73 : vector<2x1xf32>
      %75 = math.exp %74 : vector<2x1xf32>
      %cst_64 = arith.constant 1.000000e+00 : f32
      %76 = vector.broadcast %cst_64 : f32 to vector<2x1xf32>
      %77 = arith.addf %76, %75 : vector<2x1xf32>
      %78 = arith.divf %76, %77 : vector<2x1xf32>
      %c0_65 = arith.constant 0 : index
      %c0_66 = arith.constant 0 : index
      %79 = vector.load %arg22[%c0_65, %c0_66] : memref<2x1xf32, #tpu.memory_space<vmem>>, vector<2x1xf32>
      tpu.vector_store %arg22[%c0_65, %c0_66], %78 {strides = array<i32>} : memref<2x1xf32, #tpu.memory_space<vmem>>, vector<2x1xf32>,
    } else {
    }
    return
  }
  func.func @transform_0(%arg0: i32) -> (i32, i32, i32) {
    %c0_i32 = arith.constant 0 : i32
    %c0_i32_0 = arith.constant 0 : i32
    %c0_i32_1 = arith.constant 0 : i32
    return %arg0, %c0_i32, %c0_i32_0 : i32, i32, i32
  }
  func.func @transform_1(%arg0: i32) -> (i32, i32) {
    %c0_i32 = arith.constant 0 : i32
    %c0_i32_0 = arith.constant 0 : i32
    %c0_i32_1 = arith.constant 0 : i32
    return %c0_i32, %c0_i32_0 : i32, i32
  }
  func.func @transform_2(%arg0: i32) -> (i32, i32) {
    %c0_i32 = arith.constant 0 : i32
    %c0_i32_0 = arith.constant 0 : i32
    %c0_i32_1 = arith.constant 0 : i32
    return %c0_i32, %c0_i32_0 : i32, i32
  }
  func.func @transform_3(%arg0: i32) -> (i32, i32) {
    %c0_i32 = arith.constant 0 : i32
    %c0_i32_0 = arith.constant 0 : i32
    %c0_i32_1 = arith.constant 0 : i32
    return %c0_i32, %c0_i32_0 : i32, i32
  }
  func.func @transform_4(%arg0: i32) -> (i32, i32) {
    %c0_i32 = arith.constant 0 : i32
    %c0_i32_0 = arith.constant 0 : i32
    %c0_i32_1 = arith.constant 0 : i32
    return %c0_i32, %c0_i32_0 : i32, i32
  }
  func.func @transform_5(%arg0: i32) -> (i32, i32) {
    %c0_i32 = arith.constant 0 : i32
    %c0_i32_0 = arith.constant 0 : i32
    %c0_i32_1 = arith.constant 0 : i32
    return %c0_i32, %c0_i32_0 : i32, i32
  }
  func.func @transform_6(%arg0: i32) -> (i32, i32) {
    %c0_i32 = arith.constant 0 : i32
    %c0_i32_0 = arith.constant 0 : i32
    %c0_i32_1 = arith.constant 0 : i32
    return %c0_i32, %c0_i32_0 : i32, i32
  }
  func.func @transform_7(%arg0: i32) -> (i32, i32) {
    %c0_i32 = arith.constant 0 : i32
    %c0_i32_0 = arith.constant 0 : i32
    %c0_i32_1 = arith.constant 0 : i32
    return %c0_i32, %c0_i32_0 : i32, i32
  }
  func.func @transform_8(%arg0: i32) -> (i32, i32) {
    %c0_i32 = arith.constant 0 : i32
    %c0_i32_0 = arith.constant 0 : i32
    %c0_i32_1 = arith.constant 0 : i32
    return %c0_i32, %c0_i32_0 : i32, i32
  }
  func.func @transform_9(%arg0: i32) -> (i32, i32) {
    %c0_i32 = arith.constant 0 : i32
    %c0_i32_0 = arith.constant 0 : i32
    %c0_i32_1 = arith.constant 0 : i32
    return %c0_i32, %c0_i32_0 : i32, i32
  }
  func.func @transform_10(%arg0: i32) -> (i32, i32) {
    %c0_i32 = arith.constant 0 : i32
    %c0_i32_0 = arith.constant 0 : i32
    %c0_i32_1 = arith.constant 0 : i32
    return %c0_i32, %c0_i32_0 : i32, i32
  }
  func.func @transform_11(%arg0: i32) -> (i32, i32) {
    %c0_i32 = arith.constant 0 : i32
    %c0_i32_0 = arith.constant 0 : i32
    %c0_i32_1 = arith.constant 0 : i32
    return %c0_i32, %c0_i32_0 : i32, i32
  }
  func.func @transform_12(%arg0: i32) -> (i32, i32) {
    %c0_i32 = arith.constant 0 : i32
    %c0_i32_0 = arith.constant 0 : i32
    %c0_i32_1 = arith.constant 0 : i32
    return %c0_i32, %c0_i32_0 : i32, i32
  }
  func.func @transform_13(%arg0: i32) -> (i32, i32) {
    %c0_i32 = arith.constant 0 : i32
    %c0_i32_0 = arith.constant 0 : i32
    %c0_i32_1 = arith.constant 0 : i32
    return %c0_i32, %c0_i32_0 : i32, i32
  }
  func.func @transform_14(%arg0: i32) -> (i32, i32) {
    %c0_i32 = arith.constant 0 : i32
    %c0_i32_0 = arith.constant 0 : i32
    %c0_i32_1 = arith.constant 0 : i32
    return %c0_i32, %c0_i32_0 : i32, i32
  }
  func.func @transform_15(%arg0: i32) -> (i32, i32) {
    %c0_i32 = arith.constant 0 : i32
    %c0_i32_0 = arith.constant 0 : i32
    %c0_i32_1 = arith.constant 0 : i32
    return %c0_i32, %c0_i32_0 : i32, i32
  }
  func.func @transform_16(%arg0: i32) -> (i32, i32) {
    %c0_i32 = arith.constant 0 : i32
    %c0_i32_0 = arith.constant 0 : i32
    %c0_i32_1 = arith.constant 0 : i32
    return %c0_i32, %c0_i32_0 : i32, i32
  }
  func.func @transform_17(%arg0: i32) -> (i32, i32) {
    %c0_i32 = arith.constant 0 : i32
    %c0_i32_0 = arith.constant 0 : i32
    %c0_i32_1 = arith.constant 0 : i32
    return %c0_i32, %c0_i32_0 : i32, i32
  }
  func.func @transform_18(%arg0: i32) -> (i32, i32) {
    %c0_i32 = arith.constant 0 : i32
    %c0_i32_0 = arith.constant 0 : i32
    %c0_i32_1 = arith.constant 0 : i32
    return %c0_i32, %c0_i32_0 : i32, i32
  }
  func.func @transform_19(%arg0: i32) -> (i32, i32) {
    %c0_i32 = arith.constant 0 : i32
    %c0_i32_0 = arith.constant 0 : i32
    %c0_i32_1 = arith.constant 0 : i32
    return %c0_i32, %c0_i32_0 : i32, i32
  }
  func.func @transform_20(%arg0: i32) -> (i32, i32) {
    %c0_i32 = arith.constant 0 : i32
    %c0_i32_0 = arith.constant 0 : i32
    %c0_i32_1 = arith.constant 0 : i32
    return %c0_i32, %c0_i32_0 : i32, i32
  }
  func.func @transform_21(%arg0: i32) -> (i32, i32) {
    %c0_i32 = arith.constant 0 : i32
    %c0_i32_0 = arith.constant 0 : i32
    %c0_i32_1 = arith.constant 0 : i32
    return %c0_i32, %c0_i32_0 : i32, i32
  }
}

</mosaic_0001>

<llo_original>
// kernel: siamese_forward.3
$region0: #{siamese_forward.3}
  #allocation0 [shape = 'u32[]', space=smem, size = 0x4, offset = 0x4, fixed_abs, tag = 'smem constant byte address 0x4 - core index']
  #allocation1 [shape = 'u32[144,128]{1,0:T(1,128)}', space=vmem, size = 0x12000, scoped, tag = 'internal scratch']
  %s0 = inlined_call_operand.vmem [shape: bf16[12,25,196], index: 0, kind: input, shape index: {}]
  %s1 = inlined_call_operand.vmem [shape: bf16[12,25,196], index: 1, kind: input, shape index: {}]
  %s2 = inlined_call_operand.vmem [shape: bf16[12,25,196], index: 2, kind: input, shape index: {}]
  %s3 = inlined_call_operand.vmem [shape: bf16[12,25,196], index: 3, kind: input, shape index: {}]
  %s4 = inlined_call_operand.vmem [shape: bf16[16,25], index: 4, kind: input, shape index: {}]
  %s5 = inlined_call_operand.vmem [shape: f32[16,1], index: 5, kind: input, shape index: {}]
  %s6 = inlined_call_operand.vmem [shape: f32[12,16,196], index: 6, kind: output, shape index: {}]
  %s7 = sld [smem:[#allocation0]]
  $region57: #{siamese_forward.3} parent=0
    _
  %s9 = ssub.s32 1, %s7
  %s10 = scalar_select 0, %s9, %s7
  loop: start=0, step=1, limit=5
  $region2: #{siamese_forward.3} parent=0 // loop_pre_header
    _
  $region3: #{siamese_forward.3} parent=0 // loop_header
    %s12 = sphi 0, %s16
    %p13 = scmp.ge.s32.totalorder %s12, 5
    %s22 = sphi 0, %s24
    %s25 = sphi 0, %s22
    %s26 = sphi 0, %s25
    %s42 = sphi 0, %s26
    %s48 = sphi 0, %s50
    %s51 = sphi 0, %s48
    %s52 = sphi 0, %s51
    %s68 = sphi 0, %s52
    %s74 = sphi 0, %s76
    %s77 = sphi 0, %s74
    %s78 = sphi 0, %s77
    %s94 = sphi 0, %s78
    %s100 = sphi 0, %s102
    %s103 = sphi 0, %s100
    %s104 = sphi 0, %s103
    %s120 = sphi 0, %s104
    %s124 = sphi 0, %s124
    %s126 = sphi 0, %s124
    %s127 = sphi 0, %s126
    %s141 = sphi 0, %s127
    %s145 = sphi 0, %s145
    %s147 = sphi 0, %s145
    %s148 = sphi 0, %s147
    %s162 = sphi 0, %s148
    %s168 = sphi 0, %s170
    %s171 = sphi 0, %s168
    %s172 = sphi 0, %s171
    %s188 = sphi 0, %s172
  $region4: #{siamese_forward.3} parent=0 // loop_header_branch
    %15 = sbr.rel (%p13) target = $region8
  $region5: #{siamese_forward.3} parent=0 // loop_body
    %s17 = ssub.s32 %s12, 1
    %s18 = ssub.s32 %s12, 2
    %s19 = sadd.s32 %s12, 1
    %s20 = ssub.s32 %s12, %s19
    %p21 = scmp.eq.s32.totalorder %s20, 0
    %s23 = sadd.s32 %s22, 1
    %s24 = scalar_select %p21, %s22, %s23
    %p27 = pneg %p21
    %p28 = scmp.eq.s32.totalorder %s12, 2
    %p29 = por %p27, %p28
    %p30 = scmp.ne.s32.totalorder %s22, %s25
    %p31 = scmp.eq.s32.totalorder %s12, 0
    %p32 = por %p30, %p31
    %p33 = scmp.ne.s32.totalorder %s22, %s25
    %p34 = scmp.eq.s32.totalorder %s17, 2
    %p35 = por %p33, %p34
    %p36 = scmp.ne.s32.totalorder %s25, %s26
    %p37 = scmp.eq.s32.totalorder %s17, 0
    %p38 = por %p36, %p37
    %p39 = scmp.ne.s32.totalorder %s25, %s26
    %p40 = scmp.eq.s32.totalorder %s18, 2
    %p41 = por %p39, %p40
    %p43 = scmp.ne.s32.totalorder %s26, %s42
    %p44 = scmp.eq.s32.totalorder %s18, 0
    %p45 = por %p43, %p44
    %s46 = ssub.s32 %s12, %s19
    %p47 = scmp.eq.s32.totalorder %s46, 0
    %s49 = sadd.s32 %s48, 1
    %s50 = scalar_select %p47, %s48, %s49
    %p53 = pneg %p47
    %p54 = scmp.eq.s32.totalorder %s12, 2
    %p55 = por %p53, %p54
    %p56 = scmp.ne.s32.totalorder %s48, %s51
    %p57 = scmp.eq.s32.totalorder %s12, 0
    %p58 = por %p56, %p57
    %p59 = scmp.ne.s32.totalorder %s48, %s51
    %p60 = scmp.eq.s32.totalorder %s17, 2
    %p61 = por %p59, %p60
    %p62 = scmp.ne.s32.totalorder %s51, %s52
    %p63 = scmp.eq.s32.totalorder %s17, 0
    %p64 = por %p62, %p63
    %p65 = scmp.ne.s32.totalorder %s51, %s52
    %p66 = scmp.eq.s32.totalorder %s18, 2
    %p67 = por %p65, %p66
    %p69 = scmp.ne.s32.totalorder %s52, %s68
    %p70 = scmp.eq.s32.totalorder %s18, 0
    %p71 = por %p69, %p70
    %s72 = ssub.s32 %s12, %s19
    %p73 = scmp.eq.s32.totalorder %s72, 0
    %s75 = sadd.s32 %s74, 1
    %s76 = scalar_select %p73, %s74, %s75
    %p79 = pneg %p73
    %p80 = scmp.eq.s32.totalorder %s12, 2
    %p81 = por %p79, %p80
    %p82 = scmp.ne.s32.totalorder %s74, %s77
    %p83 = scmp.eq.s32.totalorder %s12, 0
    %p84 = por %p82, %p83
    %p85 = scmp.ne.s32.totalorder %s74, %s77
    %p86 = scmp.eq.s32.totalorder %s17, 2
    %p87 = por %p85, %p86
    %p88 = scmp.ne.s32.totalorder %s77, %s78
    %p89 = scmp.eq.s32.totalorder %s17, 0
    %p90 = por %p88, %p89
    %p91 = scmp.ne.s32.totalorder %s77, %s78
    %p92 = scmp.eq.s32.totalorder %s18, 2
    %p93 = por %p91, %p92
    %p95 = scmp.ne.s32.totalorder %s78, %s94
    %p96 = scmp.eq.s32.totalorder %s18, 0
    %p97 = por %p95, %p96
    %s98 = ssub.s32 %s12, %s19
    %p99 = scmp.eq.s32.totalorder %s98, 0
    %s101 = sadd.s32 %s100, 1
    %s102 = scalar_select %p99, %s100, %s101
    %p105 = pneg %p99
    %p106 = scmp.eq.s32.totalorder %s12, 2
    %p107 = por %p105, %p106
    %p108 = scmp.ne.s32.totalorder %s100, %s103
    %p109 = scmp.eq.s32.totalorder %s12, 0
    %p110 = por %p108, %p109
    %p111 = scmp.ne.s32.totalorder %s100, %s103
    %p112 = scmp.eq.s32.totalorder %s17, 2
    %p113 = por %p111, %p112
    %p114 = scmp.ne.s32.totalorder %s103, %s104
    %p115 = scmp.eq.s32.totalorder %s17, 0
    %p116 = por %p114, %p115
    %p117 = scmp.ne.s32.totalorder %s103, %s104
    %p118 = scmp.eq.s32.totalorder %s18, 2
    %p119 = por %p117, %p118
    %p121 = scmp.ne.s32.totalorder %s104, %s120
    %p122 = scmp.eq.s32.totalorder %s18, 0
    %p123 = por %p121, %p122
    %s125 = sadd.s32 %s124, 1
    %p128 = scmp.eq.s32.totalorder %s12, 2
    %p129 = scmp.ne.s32.totalorder %s124, %s126
    %p130 = scmp.eq.s32.totalorder %s12, 0
    %p131 = por %p129, %p130
    %p132 = scmp.ne.s32.totalorder %s124, %s126
    %p133 = scmp.eq.s32.totalorder %s17, 2
    %p134 = por %p132, %p133
    %p135 = scmp.ne.s32.totalorder %s126, %s127
    %p136 = scmp.eq.s32.totalorder %s17, 0
    %p137 = por %p135, %p136
    %p138 = scmp.ne.s32.totalorder %s126, %s127
    %p139 = scmp.eq.s32.totalorder %s18, 2
    %p140 = por %p138, %p139
    %p142 = scmp.ne.s32.totalorder %s127, %s141
    %p143 = scmp.eq.s32.totalorder %s18, 0
    %p144 = por %p142, %p143
    %s146 = sadd.s32 %s145, 1
    %p149 = scmp.eq.s32.totalorder %s12, 2
    %p150 = scmp.ne.s32.totalorder %s145, %s147
    %p151 = scmp.eq.s32.totalorder %s12, 0
    %p152 = por %p150, %p151
    %p153 = scmp.ne.s32.totalorder %s145, %s147
    %p154 = scmp.eq.s32.totalorder %s17, 2
    %p155 = por %p153, %p154
    %p156 = scmp.ne.s32.totalorder %s147, %s148
    %p157 = scmp.eq.s32.totalorder %s17, 0
    %p158 = por %p156, %p157
    %p159 = scmp.ne.s32.totalorder %s147, %s148
    %p160 = scmp.eq.s32.totalorder %s18, 2
    %p161 = por %p159, %p160
    %p163 = scmp.ne.s32.totalorder %s148, %s162
    %p164 = scmp.eq.s32.totalorder %s18, 0
    %p165 = por %p163, %p164
    %s166 = ssub.s32 %s12, %s19
    %p167 = scmp.eq.s32.totalorder %s166, 0
    %s169 = sadd.s32 %s168, 1
    %s170 = scalar_select %p167, %s168, %s169
    %p173 = pneg %p167
    %p174 = scmp.eq.s32.totalorder %s12, 2
    %p175 = por %p173, %p174
    %p176 = scmp.ne.s32.totalorder %s168, %s171
    %p177 = scmp.eq.s32.totalorder %s12, 0
    %p178 = por %p176, %p177
    %p179 = scmp.ne.s32.totalorder %s168, %s171
    %p180 = scmp.eq.s32.totalorder %s17, 2
    %p181 = por %p179, %p180
    %p182 = scmp.ne.s32.totalorder %s171, %s172
    %p183 = scmp.eq.s32.totalorder %s17, 0
    %p184 = por %p182, %p183
    %p185 = scmp.ne.s32.totalorder %s171, %s172
    %p186 = scmp.eq.s32.totalorder %s18, 2
    %p187 = por %p185, %p186
    %p189 = scmp.ne.s32.totalorder %s172, %s188
    %p190 = scmp.eq.s32.totalorder %s18, 0
    %p191 = por %p189, %p190
    %p192 = scmp.le.s32.totalorder 1, %s12
    %p193 = scmp.lt.s32.totalorder %s12, 4
    %p194 = pnand %p192, %p193
    %p195 = pneg %p194
    // Predicated region
    $region9: #{siamese_forward.3} parent=5 // pred_check
      _
    $region10: #{siamese_forward.3} parent=5 // pred_check_branch
      %197 = sbr.rel (%p194) target = $region12
    $region11: #{siamese_forward.3} parent=5 // pred_region
      %s198 = ssub.s32 %s12, 1
      // Predicated region
      $region13: #{siamese_forward.3} parent=11 // pred_check
        %p199 = pneg %p137
      $region14: #{siamese_forward.3} parent=11 // pred_check_branch
        %201 = sbr.rel (%p199) target = $region16
      $region15: #{siamese_forward.3} parent=11 // pred_region
        _
      $region16: #{siamese_forward.3} parent=11 // pred_fallthru
        _
      // Predicated region
      $region17: #{siamese_forward.3} parent=11 // pred_check
        %p202 = pneg %p158
      $region18: #{siamese_forward.3} parent=11 // pred_check_branch
        %204 = sbr.rel (%p202) target = $region20
      $region19: #{siamese_forward.3} parent=11 // pred_region
        _
      $region20: #{siamese_forward.3} parent=11 // pred_fallthru
        _
    $region12: #{siamese_forward.3} parent=5 // pred_fallthru
      _
    %p205 = scmp.lt.s32.totalorder %s12, 3
    // Predicated region
    $region21: #{siamese_forward.3} parent=5 // pred_check
      %p206 = pneg %p205
    $region22: #{siamese_forward.3} parent=5 // pred_check_branch
      %208 = sbr.rel (%p206) target = $region24
    $region23: #{siamese_forward.3} parent=5 // pred_region
      // Predicated region
      $region25: #{siamese_forward.3} parent=23 // pred_check
        %p209 = pneg %p32
      $region26: #{siamese_forward.3} parent=23 // pred_check_branch
        %211 = sbr.rel (%p209) target = $region28
      $region27: #{siamese_forward.3} parent=23 // pred_region
        %s212 = smul.u32 4, %s12
        %p213 = scmp.lt.s32.totalorder %s212, 11
        %s214 = scalar_select %p213, %s212, 11
        %s215 = smul.addr %s214, 8
        %s216 = smul.addr %s215, 4
        %s217 = scalar_lea.vmem %s0, %s216
        %s218 = smul.u32 4, %s12
      $region28: #{siamese_forward.3} parent=23 // pred_fallthru
        _
      // Predicated region
      $region29: #{siamese_forward.3} parent=23 // pred_check
        %p219 = pneg %p58
      $region30: #{siamese_forward.3} parent=23 // pred_check_branch
        %221 = sbr.rel (%p219) target = $region32
      $region31: #{siamese_forward.3} parent=23 // pred_region
        %s222 = smul.u32 4, %s12
        %p223 = scmp.lt.s32.totalorder %s222, 11
        %s224 = scalar_select %p223, %s222, 11
        %s225 = smul.addr %s224, 8
        %s226 = smul.addr %s225, 4
        %s227 = scalar_lea.vmem %s1, %s226
        %s228 = smul.u32 4, %s12
      $region32: #{siamese_forward.3} parent=23 // pred_fallthru
        _
      // Predicated region
      $region33: #{siamese_forward.3} parent=23 // pred_check
        %p229 = pneg %p84
      $region34: #{siamese_forward.3} parent=23 // pred_check_branch
        %231 = sbr.rel (%p229) target = $region36
      $region35: #{siamese_forward.3} parent=23 // pred_region
        %s232 = smul.u32 4, %s12
        %p233 = scmp.lt.s32.totalorder %s232, 11
        %s234 = scalar_select %p233, %s232, 11
        %s235 = smul.addr %s234, 8
        %s236 = smul.addr %s235, 4
        %s237 = scalar_lea.vmem %s2, %s236
        %s238 = smul.u32 4, %s12
      $region36: #{siamese_forward.3} parent=23 // pred_fallthru
        _
      // Predicated region
      $region37: #{siamese_forward.3} parent=23 // pred_check
        %p239 = pneg %p110
      $region38: #{siamese_forward.3} parent=23 // pred_check_branch
        %241 = sbr.rel (%p239) target = $region40
      $region39: #{siamese_forward.3} parent=23 // pred_region
        %s242 = smul.u32 4, %s12
        %p243 = scmp.lt.s32.totalorder %s242, 11
        %s244 = scalar_select %p243, %s242, 11
        %s245 = smul.addr %s244, 8
        %s246 = smul.addr %s245, 4
        %s247 = scalar_lea.vmem %s3, %s246
        %s248 = smul.u32 4, %s12
      $region40: #{siamese_forward.3} parent=23 // pred_fallthru
        _
    $region24: #{siamese_forward.3} parent=5 // pred_fallthru
      _
    %p249 = scmp.le.s32.totalorder 1, %s12
    %p250 = scmp.lt.s32.totalorder %s12, 4
    %p251 = pnand %p249, %p250
    %p252 = pneg %p251
    // Predicated region
    $region41: #{siamese_forward.3} parent=5 // pred_check
      _
    $region42: #{siamese_forward.3} parent=5 // pred_check_branch
      %254 = sbr.rel (%p251) target = $region44
    $region43: #{siamese_forward.3} parent=5 // pred_region
      %s255 = ssub.s32 %s12, 1
      %s256 = smul.u32 4, %s17
      %p257 = scmp.lt.s32.totalorder %s256, 11
      %s258 = scalar_select %p257, %s256, 11
      %s259 = smul.addr %s258, 8
      %s260 = smul.addr %s259, 4
      %s261 = scalar_lea.vmem %s0, %s260
      %p262 = pneg %p38
      %p263 = pneg %p35
      %s264 = smul.u32 4, %s17
      %p265 = scmp.lt.s32.totalorder %s264, 11
      %s266 = scalar_select %p265, %s264, 11
      %s267 = smul.addr %s266, 8
      %s268 = smul.addr %s267, 4
      %s269 = scalar_lea.vmem %s1, %s268
      %p270 = pneg %p64
      %p271 = pneg %p61
      %s272 = smul.u32 4, %s17
      %p273 = scmp.lt.s32.totalorder %s272, 11
      %s274 = scalar_select %p273, %s272, 11
      %s275 = smul.addr %s274, 8
      %s276 = smul.addr %s275, 4
      %s277 = scalar_lea.vmem %s2, %s276
      %p278 = pneg %p90
      %p279 = pneg %p87
      %s280 = smul.u32 4, %s17
      %p281 = scmp.lt.s32.totalorder %s280, 11
      %s282 = scalar_select %p281, %s280, 11
      %s283 = smul.addr %s282, 8
      %s284 = smul.addr %s283, 4
      %s285 = scalar_lea.vmem %s3, %s284
      %p286 = pneg %p116
      %p287 = pneg %p113
      %p288 = pneg %p137
      %p289 = pneg %p134
      %p290 = pneg %p158
      %p291 = pneg %p155
      %p292 = pneg %p184
      %p293 = pneg %p181
      %s294 = smul.u32 4, %s17
      %p295 = scmp.lt.s32.totalorder %s294, 11
      %s296 = scalar_select %p295, %s294, 11
      %s297 = smul.addr %s296, 4
      %s298 = smul.addr %s297, 8
      %s299 = scalar_lea.vmem %s6, %s298
      %s300 = smul.u32 4, %s17
      %p301 = scmp.lt.s32.totalorder %s300, 11
      %s302 = scalar_select %p301, %s300, 11
      %s303 = smul.addr %s302, 8
      %s304 = smul.addr %s303, 4
      %s305 = scalar_lea.vmem %s0, %s304
      %s306 = smul.u32 4, %s17
      %s307 = smul.u32 4, %s17
      %p308 = scmp.lt.s32.totalorder %s307, 11
      %s309 = scalar_select %p308, %s307, 11
      %s310 = smul.addr %s309, 8
      %s311 = smul.addr %s310, 4
      %s312 = scalar_lea.vmem %s1, %s311
      %s313 = smul.u32 4, %s17
      %s314 = smul.u32 4, %s17
      %p315 = scmp.lt.s32.totalorder %s314, 11
      %s316 = scalar_select %p315, %s314, 11
      %s317 = smul.addr %s316, 8
      %s318 = smul.addr %s317, 4
      %s319 = scalar_lea.vmem %s2, %s318
      %s320 = smul.u32 4, %s17
      %s321 = smul.u32 4, %s17
      %p322 = scmp.lt.s32.totalorder %s321, 11
      %s323 = scalar_select %p322, %s321, 11
      %s324 = smul.addr %s323, 8
      %s325 = smul.addr %s324, 4
      %s326 = scalar_lea.vmem %s3, %s325
      %s327 = smul.u32 4, %s17
      %s328 = smul.u32 4, %s17
      %p329 = scmp.lt.s32.totalorder %s328, 11
      %s330 = scalar_select %p329, %s328, 11
      %s331 = smul.addr %s330, 4
      %s332 = smul.addr %s331, 8
      %s333 = scalar_lea.vmem %s6, %s332
      %s334 = smul.u32 4, %s17
      %v336 = vld [vmem:[%s4] sm:$0xf]
      %v337 = vld [vmem:[%s4 + $0x4] sm:$0xf]
      %v338 = vld [vmem:[%s5] sm:$0xff]
      %v339 = vld [vmem:[%s5 + $0x8] sm:$0xff]
      %v340 = vld [vmem:[%s305] sm:$0xff]
      %v341 = vld [vmem:[%s305 + $0x8] sm:$0xff]
      %v342 = vld [vmem:[%s305 + $0x10] sm:$0xff]
      %v343 = vld [vmem:[%s305 + $0x18] sm:$0x11]
      %v346 = vunpack.c.l.b16 %v336
      %v347 = vunpack.c.l.b16 %v337
      %v348 = vpack.c.b16 %v347, %v346
      %v353 = vunpack.c.l.b16 %v340
      %v354 = vunpack.c.h.b16 %v340
      %v355 = vunpack.c.l.b16 %v341
      %v356 = vunpack.c.h.b16 %v341
      %v357 = vunpack.c.l.b16 %v342
      %v358 = vunpack.c.h.b16 %v342
      %v359 = vunpack.c.l.b16 %v343
      %v360 = vunpack.c.h.b16 %v343
      %v361 = vpack.c.b16 %v355, %v353
      %v362 = vpack.c.b16 %v356, %v354
      %v363 = vpack.c.b16 %v359, %v357
      %v364 = vpack.c.b16 %v360, %v358
      %vm367 = vcmask 203776
      %v369 = vsel %vm367, %v348, 0
      %vm371 = vcmask 1043456
      %vm372 = vcmask 1044480
      %v373 = vsel %vm371, 4294967295, 65535
      %v374 = vsel %vm372, %v373, 0
      %v376 = vand.u32 %v363, %v374
      %v379 = vand.u32 %v364, %v374
      %381 = vmatprep.subr.bf16.mxu0 %v362
      %382 = vmatpush1.bf16.msra.mxu0 %v361
      %383 = vmatprep.subr.bf16.mxu0 %v379
      %384 = vmatpush1.bf16.msra.mxu0 %v376
      %385 = vmatprep.subr.bf16.mxu0 0
      %386 = vmatpush1.bf16.msra.mxu0 0
      %387 = vmatprep.subr.bf16.mxu0 0
      %388 = vmatpush1.bf16.msra.mxu0 0
      %389 = vmatprep.subr.bf16.mxu0 0
      %390 = vmatpush1.bf16.msra.mxu0 0
      %391 = vmatprep.subr.bf16.mxu0 0
      %392 = vmatpush1.bf16.msra.mxu0 0
      %393 = vmatprep.subr.bf16.mxu0 0
      %394 = vmatpush1.bf16.msra.mxu0 0
      %395 = vmatprep.subr.bf16.mxu0 0
      %396 = vmatpush1.bf16.msra.mxu0 0
      %397 = vmatprep.subr.bf16.mxu0 0
      %398 = vmatpush1.bf16.msra.mxu0 0
      %399 = vmatprep.subr.bf16.mxu0 0
      %400 = vmatpush1.bf16.msra.mxu0 0
      %401 = vmatprep.subr.bf16.mxu0 0
      %402 = vmatpush1.bf16.msra.mxu0 0
      %403 = vmatprep.subr.bf16.mxu0 0
      %404 = vmatpush1.bf16.msra.mxu0 0
      %405 = vmatprep.subr.bf16.mxu0 0
      %406 = vmatpush1.bf16.msra.mxu0 0
      %407 = vmatprep.subr.bf16.mxu0 0
      %408 = vmatpush1.bf16.msra.mxu0 0
      %409 = vmatprep.subr.bf16.mxu0 0
      %410 = vmatpush1.bf16.msra.mxu0 0
      %411 = vmatprep.subr.bf16.mxu0 0
      %412 = vmatpush1.bf16.msra.mxu0 0
      %413 = vmatprep.mubr.bf16.mxu0 0
      %414 = vmatmul.mubr.bf16.gmra.mrb[0].mxu0 %v369
      %v415 = vpop.f32.mrb[0].mxu0
      %v416 = vadd.f32 0.0, %v415
      %v417 = vpop.f32.mrb[0].mxu0
      %v418 = vadd.f32 0.0, %v417
      %v419 = vpop.f32.mrb[0].mxu0
      %v420 = vadd.f32 0.0, %v419
      %v421 = vpop.f32.mrb[0].mxu0
      %v422 = vadd.f32 0.0, %v421
      %423 = vdwg.mxu0
      %v424 = vld [vmem:[%s312] sm:$0xff]
      %v425 = vld [vmem:[%s312 + $0x8] sm:$0xff]
      %v426 = vld [vmem:[%s312 + $0x10] sm:$0xff]
      %v427 = vld [vmem:[%s312 + $0x18] sm:$0x11]
      %v432 = vunpack.c.l.b16 %v424
      %v433 = vunpack.c.h.b16 %v424
      %v434 = vunpack.c.l.b16 %v425
      %v435 = vunpack.c.h.b16 %v425
      %v436 = vunpack.c.l.b16 %v426
      %v437 = vunpack.c.h.b16 %v426
      %v438 = vunpack.c.l.b16 %v427
      %v439 = vunpack.c.h.b16 %v427
      %v440 = vpack.c.b16 %v434, %v432
      %v441 = vpack.c.b16 %v435, %v433
      %v442 = vpack.c.b16 %v438, %v436
      %v443 = vpack.c.b16 %v439, %v437
      %v447 = vand.u32 %v442, %v374
      %v450 = vand.u32 %v443, %v374
      %452 = vmatprep.subr.bf16.mxu0 %v441
      %453 = vmatpush1.bf16.msra.mxu0 %v440
      %454 = vmatprep.subr.bf16.mxu0 %v450
      %455 = vmatpush1.bf16.msra.mxu0 %v447
      %456 = vmatprep.subr.bf16.mxu0 0
      %457 = vmatpush1.bf16.msra.mxu0 0
      %458 = vmatprep.subr.bf16.mxu0 0
      %459 = vmatpush1.bf16.msra.mxu0 0
      %460 = vmatprep.subr.bf16.mxu0 0
      %461 = vmatpush1.bf16.msra.mxu0 0
      %462 = vmatprep.subr.bf16.mxu0 0
      %463 = vmatpush1.bf16.msra.mxu0 0
      %464 = vmatprep.subr.bf16.mxu0 0
      %465 = vmatpush1.bf16.msra.mxu0 0
      %466 = vmatprep.subr.bf16.mxu0 0
      %467 = vmatpush1.bf16.msra.mxu0 0
      %468 = vmatprep.subr.bf16.mxu0 0
      %469 = vmatpush1.bf16.msra.mxu0 0
      %470 = vmatprep.subr.bf16.mxu0 0
      %471 = vmatpush1.bf16.msra.mxu0 0
      %472 = vmatprep.subr.bf16.mxu0 0
      %473 = vmatpush1.bf16.msra.mxu0 0
      %474 = vmatprep.subr.bf16.mxu0 0
      %475 = vmatpush1.bf16.msra.mxu0 0
      %476 = vmatprep.subr.bf16.mxu0 0
      %477 = vmatpush1.bf16.msra.mxu0 0
      %478 = vmatprep.subr.bf16.mxu0 0
      %479 = vmatpush1.bf16.msra.mxu0 0
      %480 = vmatprep.subr.bf16.mxu0 0
      %481 = vmatpush1.bf16.msra.mxu0 0
      %482 = vmatprep.subr.bf16.mxu0 0
      %483 = vmatpush1.bf16.msra.mxu0 0
      %484 = vmatprep.mubr.bf16.mxu0 0
      %485 = vmatmul.mubr.bf16.gmra.mrb[0].mxu0 %v369
      %v486 = vpop.f32.mrb[0].mxu0
      %v487 = vadd.f32 0.0, %v486
      %v488 = vpop.f32.mrb[0].mxu0
      %v489 = vadd.f32 0.0, %v488
      %v490 = vpop.f32.mrb[0].mxu0
      %v491 = vadd.f32 0.0, %v490
      %v492 = vpop.f32.mrb[0].mxu0
      %v493 = vadd.f32 0.0, %v492
      %494 = vdwg.mxu0
      %v495 = vmax.f32 %v416, %v487
      %v496 = vmax.f32 %v418, %v489
      %v497 = vmax.f32 %v420, %v491
      %v498 = vmax.f32 %v422, %v493
      %v499 = vld [vmem:[%s319] sm:$0xff]
      %v500 = vld [vmem:[%s319 + $0x8] sm:$0xff]
      %v501 = vld [vmem:[%s319 + $0x10] sm:$0xff]
      %v502 = vld [vmem:[%s319 + $0x18] sm:$0x11]
      %v507 = vunpack.c.l.b16 %v499
      %v508 = vunpack.c.h.b16 %v499
      %v509 = vunpack.c.l.b16 %v500
      %v510 = vunpack.c.h.b16 %v500
      %v511 = vunpack.c.l.b16 %v501
      %v512 = vunpack.c.h.b16 %v501
      %v513 = vunpack.c.l.b16 %v502
      %v514 = vunpack.c.h.b16 %v502
      %v515 = vpack.c.b16 %v509, %v507
      %v516 = vpack.c.b16 %v510, %v508
      %v517 = vpack.c.b16 %v513, %v511
      %v518 = vpack.c.b16 %v514, %v512
      %v522 = vand.u32 %v517, %v374
      %v525 = vand.u32 %v518, %v374
      %527 = vmatprep.subr.bf16.mxu0 %v516
      %528 = vmatpush1.bf16.msra.mxu0 %v515
      %529 = vmatprep.subr.bf16.mxu0 %v525
      %530 = vmatpush1.bf16.msra.mxu0 %v522
      %531 = vmatprep.subr.bf16.mxu0 0
      %532 = vmatpush1.bf16.msra.mxu0 0
      %533 = vmatprep.subr.bf16.mxu0 0
      %534 = vmatpush1.bf16.msra.mxu0 0
      %535 = vmatprep.subr.bf16.mxu0 0
      %536 = vmatpush1.bf16.msra.mxu0 0
      %537 = vmatprep.subr.bf16.mxu0 0
      %538 = vmatpush1.bf16.msra.mxu0 0
      %539 = vmatprep.subr.bf16.mxu0 0
      %540 = vmatpush1.bf16.msra.mxu0 0
      %541 = vmatprep.subr.bf16.mxu0 0
      %542 = vmatpush1.bf16.msra.mxu0 0
      %543 = vmatprep.subr.bf16.mxu0 0
      %544 = vmatpush1.bf16.msra.mxu0 0
      %545 = vmatprep.subr.bf16.mxu0 0
      %546 = vmatpush1.bf16.msra.mxu0 0
      %547 = vmatprep.subr.bf16.mxu0 0
      %548 = vmatpush1.bf16.msra.mxu0 0
      %549 = vmatprep.subr.bf16.mxu0 0
      %550 = vmatpush1.bf16.msra.mxu0 0
      %551 = vmatprep.subr.bf16.mxu0 0
      %552 = vmatpush1.bf16.msra.mxu0 0
      %553 = vmatprep.subr.bf16.mxu0 0
      %554 = vmatpush1.bf16.msra.mxu0 0
      %555 = vmatprep.subr.bf16.mxu0 0
      %556 = vmatpush1.bf16.msra.mxu0 0
      %557 = vmatprep.subr.bf16.mxu0 0
      %558 = vmatpush1.bf16.msra.mxu0 0
      %559 = vmatprep.mubr.bf16.mxu0 0
      %560 = vmatmul.mubr.bf16.gmra.mrb[0].mxu0 %v369
      %v561 = vpop.f32.mrb[0].mxu0
      %v562 = vadd.f32 0.0, %v561
      %v563 = vpop.f32.mrb[0].mxu0
      %v564 = vadd.f32 0.0, %v563
      %v565 = vpop.f32.mrb[0].mxu0
      %v566 = vadd.f32 0.0, %v565
      %v567 = vpop.f32.mrb[0].mxu0
      %v568 = vadd.f32 0.0, %v567
      %569 = vdwg.mxu0
      %v570 = vld [vmem:[%s326] sm:$0xff]
      %v571 = vld [vmem:[%s326 + $0x8] sm:$0xff]
      %v572 = vld [vmem:[%s326 + $0x10] sm:$0xff]
      %v573 = vld [vmem:[%s326 + $0x18] sm:$0x11]
      %v578 = vunpack.c.l.b16 %v570
      %v579 = vunpack.c.h.b16 %v570
      %v580 = vunpack.c.l.b16 %v571
      %v581 = vunpack.c.h.b16 %v571
      %v582 = vunpack.c.l.b16 %v572
      %v583 = vunpack.c.h.b16 %v572
      %v584 = vunpack.c.l.b16 %v573
      %v585 = vunpack.c.h.b16 %v573
      %v586 = vpack.c.b16 %v580, %v578
      %v587 = vpack.c.b16 %v581, %v579
      %v588 = vpack.c.b16 %v584, %v582
      %v589 = vpack.c.b16 %v585, %v583
      %v593 = vand.u32 %v588, %v374
      %v596 = vand.u32 %v589, %v374
      %598 = vmatprep.subr.bf16.mxu0 %v587
      %599 = vmatpush1.bf16.msra.mxu0 %v586
      %600 = vmatprep.subr.bf16.mxu0 %v596
      %601 = vmatpush1.bf16.msra.mxu0 %v593
      %602 = vmatprep.subr.bf16.mxu0 0
      %603 = vmatpush1.bf16.msra.mxu0 0
      %604 = vmatprep.subr.bf16.mxu0 0
      %605 = vmatpush1.bf16.msra.mxu0 0
      %606 = vmatprep.subr.bf16.mxu0 0
      %607 = vmatpush1.bf16.msra.mxu0 0
      %608 = vmatprep.subr.bf16.mxu0 0
      %609 = vmatpush1.bf16.msra.mxu0 0
      %610 = vmatprep.subr.bf16.mxu0 0
      %611 = vmatpush1.bf16.msra.mxu0 0
      %612 = vmatprep.subr.bf16.mxu0 0
      %613 = vmatpush1.bf16.msra.mxu0 0
      %614 = vmatprep.subr.bf16.mxu0 0
      %615 = vmatpush1.bf16.msra.mxu0 0
      %616 = vmatprep.subr.bf16.mxu0 0
      %617 = vmatpush1.bf16.msra.mxu0 0
      %618 = vmatprep.subr.bf16.mxu0 0
      %619 = vmatpush1.bf16.msra.mxu0 0
      %620 = vmatprep.subr.bf16.mxu0 0
      %621 = vmatpush1.bf16.msra.mxu0 0
      %622 = vmatprep.subr.bf16.mxu0 0
      %623 = vmatpush1.bf16.msra.mxu0 0
      %624 = vmatprep.subr.bf16.mxu0 0
      %625 = vmatpush1.bf16.msra.mxu0 0
      %626 = vmatprep.subr.bf16.mxu0 0
      %627 = vmatpush1.bf16.msra.mxu0 0
      %628 = vmatprep.subr.bf16.mxu0 0
      %629 = vmatpush1.bf16.msra.mxu0 0
      %630 = vmatprep.mubr.bf16.mxu0 0
      %631 = vmatmul.mubr.bf16.gmra.mrb[0].mxu0 %v369
      %v632 = vpop.f32.mrb[0].mxu0
      %v633 = vadd.f32 0.0, %v632
      %v634 = vpop.f32.mrb[0].mxu0
      %v635 = vadd.f32 0.0, %v634
      %v636 = vpop.f32.mrb[0].mxu0
      %v637 = vadd.f32 0.0, %v636
      %v638 = vpop.f32.mrb[0].mxu0
      %v639 = vadd.f32 0.0, %v638
      %640 = vdwg.mxu0
      %v641 = vmax.f32 %v562, %v633
      %v642 = vmax.f32 %v564, %v635
      %v643 = vmax.f32 %v566, %v637
      %v644 = vmax.f32 %v568, %v639
      %v645 = vmax.f32 %v495, %v641
      %v646 = vmax.f32 %v496, %v642
      %v647 = vmax.f32 %v497, %v643
      %v648 = vmax.f32 %v498, %v644
      %650 = vset.pattern.permute.xlu0 0
      %651 = vperm.xlu0 %650, %v338
      %v652 = vpop.permute.xlu0 %651
      %655 = vset.pattern.permute.xlu0 0
      %656 = vperm.xlu0 %655, %v339
      %v657 = vpop.permute.xlu0 %656
      %v659 = vadd.f32 %v645, %v652
      %v660 = vadd.f32 %v646, %v652
      %v661 = vadd.f32 %v647, %v657
      %v662 = vadd.f32 %v648, %v657
      %v663 = vtanh.pop %v659
      %v664 = vtanh.pop %v660
      %v665 = vtanh.pop %v661
      %v666 = vtanh.pop %v662
      %667 = vst [vmem:[%s333] sm:$0xff] %v663
      %vm668 = vcmask 556032
      %669 = vst.msk [vmem:[%s333 + $0x8] sm:$0xff] %vm668, %v664
      %670 = vst [vmem:[%s333 + $0x10] sm:$0xff] %v665
      %671 = vst.msk [vmem:[%s333 + $0x18] sm:$0xff] %vm668, %v666
      %s672 = scalar_lea.vmem %s305, 32
      %v673 = vld [vmem:[%s672] sm:$0xff]
      %v674 = vld [vmem:[%s672 + $0x8] sm:$0xff]
      %v675 = vld [vmem:[%s672 + $0x10] sm:$0xff]
      %v676 = vld [vmem:[%s672 + $0x18] sm:$0x11]
      %v681 = vunpack.c.l.b16 %v673
      %v682 = vunpack.c.h.b16 %v673
      %v683 = vunpack.c.l.b16 %v674
      %v684 = vunpack.c.h.b16 %v674
      %v685 = vunpack.c.l.b16 %v675
      %v686 = vunpack.c.h.b16 %v675
      %v687 = vunpack.c.l.b16 %v676
      %v688 = vunpack.c.h.b16 %v676
      %v689 = vpack.c.b16 %v683, %v681
      %v690 = vpack.c.b16 %v684, %v682
      %v691 = vpack.c.b16 %v687, %v685
      %v692 = vpack.c.b16 %v688, %v686
      %v696 = vand.u32 %v691, %v374
      %v699 = vand.u32 %v692, %v374
      %701 = vmatprep.subr.bf16.mxu0 %v690
      %702 = vmatpush1.bf16.msra.mxu0 %v689
      %703 = vmatprep.subr.bf16.mxu0 %v699
      %704 = vmatpush1.bf16.msra.mxu0 %v696
      %705 = vmatprep.subr.bf16.mxu0 0
      %706 = vmatpush1.bf16.msra.mxu0 0
      %707 = vmatprep.subr.bf16.mxu0 0
      %708 = vmatpush1.bf16.msra.mxu0 0
      %709 = vmatprep.subr.bf16.mxu0 0
      %710 = vmatpush1.bf16.msra.mxu0 0
      %711 = vmatprep.subr.bf16.mxu0 0
      %712 = vmatpush1.bf16.msra.mxu0 0
      %713 = vmatprep.subr.bf16.mxu0 0
      %714 = vmatpush1.bf16.msra.mxu0 0
      %715 = vmatprep.subr.bf16.mxu0 0
      %716 = vmatpush1.bf16.msra.mxu0 0
      %717 = vmatprep.subr.bf16.mxu0 0
      %718 = vmatpush1.bf16.msra.mxu0 0
      %719 = vmatprep.subr.bf16.mxu0 0
      %720 = vmatpush1.bf16.msra.mxu0 0
      %721 = vmatprep.subr.bf16.mxu0 0
      %722 = vmatpush1.bf16.msra.mxu0 0
      %723 = vmatprep.subr.bf16.mxu0 0
      %724 = vmatpush1.bf16.msra.mxu0 0
      %725 = vmatprep.subr.bf16.mxu0 0
      %726 = vmatpush1.bf16.msra.mxu0 0
      %727 = vmatprep.subr.bf16.mxu0 0
      %728 = vmatpush1.bf16.msra.mxu0 0
      %729 = vmatprep.subr.bf16.mxu0 0
      %730 = vmatpush1.bf16.msra.mxu0 0
      %731 = vmatprep.subr.bf16.mxu0 0
      %732 = vmatpush1.bf16.msra.mxu0 0
      %733 = vmatprep.mubr.bf16.mxu0 0
      %734 = vmatmul.mubr.bf16.gmra.mrb[0].mxu0 %v369
      %v735 = vpop.f32.mrb[0].mxu0
      %v736 = vadd.f32 0.0, %v735
      %v737 = vpop.f32.mrb[0].mxu0
      %v738 = vadd.f32 0.0, %v737
      %v739 = vpop.f32.mrb[0].mxu0
      %v740 = vadd.f32 0.0, %v739
      %v741 = vpop.f32.mrb[0].mxu0
      %v742 = vadd.f32 0.0, %v741
      %743 = vdwg.mxu0
      %s744 = scalar_lea.vmem %s312, 32
      %v745 = vld [vmem:[%s744] sm:$0xff]
      %v746 = vld [vmem:[%s744 + $0x8] sm:$0xff]
      %v747 = vld [vmem:[%s744 + $0x10] sm:$0xff]
      %v748 = vld [vmem:[%s744 + $0x18] sm:$0x11]
      %v753 = vunpack.c.l.b16 %v745
      %v754 = vunpack.c.h.b16 %v745
      %v755 = vunpack.c.l.b16 %v746
      %v756 = vunpack.c.h.b16 %v746
      %v757 = vunpack.c.l.b16 %v747
      %v758 = vunpack.c.h.b16 %v747
      %v759 = vunpack.c.l.b16 %v748
      %v760 = vunpack.c.h.b16 %v748
      %v761 = vpack.c.b16 %v755, %v753
      %v762 = vpack.c.b16 %v756, %v754
      %v763 = vpack.c.b16 %v759, %v757
      %v764 = vpack.c.b16 %v760, %v758
      %v768 = vand.u32 %v763, %v374
      %v771 = vand.u32 %v764, %v374
      %773 = vmatprep.subr.bf16.mxu0 %v762
      %774 = vmatpush1.bf16.msra.mxu0 %v761
      %775 = vmatprep.subr.bf16.mxu0 %v771
      %776 = vmatpush1.bf16.msra.mxu0 %v768
      %777 = vmatprep.subr.bf16.mxu0 0
      %778 = vmatpush1.bf16.msra.mxu0 0
      %779 = vmatprep.subr.bf16.mxu0 0
      %780 = vmatpush1.bf16.msra.mxu0 0
      %781 = vmatprep.subr.bf16.mxu0 0
      %782 = vmatpush1.bf16.msra.mxu0 0
      %783 = vmatprep.subr.bf16.mxu0 0
      %784 = vmatpush1.bf16.msra.mxu0 0
      %785 = vmatprep.subr.bf16.mxu0 0
      %786 = vmatpush1.bf16.msra.mxu0 0
      %787 = vmatprep.subr.bf16.mxu0 0
      %788 = vmatpush1.bf16.msra.mxu0 0
      %789 = vmatprep.subr.bf16.mxu0 0
      %790 = vmatpush1.bf16.msra.mxu0 0
      %791 = vmatprep.subr.bf16.mxu0 0
      %792 = vmatpush1.bf16.msra.mxu0 0
      %793 = vmatprep.subr.bf16.mxu0 0
      %794 = vmatpush1.bf16.msra.mxu0 0
      %795 = vmatprep.subr.bf16.mxu0 0
      %796 = vmatpush1.bf16.msra.mxu0 0
      %797 = vmatprep.subr.bf16.mxu0 0
      %798 = vmatpush1.bf16.msra.mxu0 0
      %799 = vmatprep.subr.bf16.mxu0 0
      %800 = vmatpush1.bf16.msra.mxu0 0
      %801 = vmatprep.subr.bf16.mxu0 0
      %802 = vmatpush1.bf16.msra.mxu0 0
      %803 = vmatprep.subr.bf16.mxu0 0
      %804 = vmatpush1.bf16.msra.mxu0 0
      %805 = vmatprep.mubr.bf16.mxu0 0
      %806 = vmatmul.mubr.bf16.gmra.mrb[0].mxu0 %v369
      %v807 = vpop.f32.mrb[0].mxu0
      %v808 = vadd.f32 0.0, %v807
      %v809 = vpop.f32.mrb[0].mxu0
      %v810 = vadd.f32 0.0, %v809
      %v811 = vpop.f32.mrb[0].mxu0
      %v812 = vadd.f32 0.0, %v811
      %v813 = vpop.f32.mrb[0].mxu0
      %v814 = vadd.f32 0.0, %v813
      %815 = vdwg.mxu0
      %v816 = vmax.f32 %v736, %v808
      %v817 = vmax.f32 %v738, %v810
      %v818 = vmax.f32 %v740, %v812
      %v819 = vmax.f32 %v742, %v814
      %s820 = scalar_lea.vmem %s319, 32
      %v821 = vld [vmem:[%s820] sm:$0xff]
      %v822 = vld [vmem:[%s820 + $0x8] sm:$0xff]
      %v823 = vld [vmem:[%s820 + $0x10] sm:$0xff]
      %v824 = vld [vmem:[%s820 + $0x18] sm:$0x11]
      %v829 = vunpack.c.l.b16 %v821
      %v830 = vunpack.c.h.b16 %v821
      %v831 = vunpack.c.l.b16 %v822
      %v832 = vunpack.c.h.b16 %v822
      %v833 = vunpack.c.l.b16 %v823
      %v834 = vunpack.c.h.b16 %v823
      %v835 = vunpack.c.l.b16 %v824
      %v836 = vunpack.c.h.b16 %v824
      %v837 = vpack.c.b16 %v831, %v829
      %v838 = vpack.c.b16 %v832, %v830
      %v839 = vpack.c.b16 %v835, %v833
      %v840 = vpack.c.b16 %v836, %v834
      %v844 = vand.u32 %v839, %v374
      %v847 = vand.u32 %v840, %v374
      %849 = vmatprep.subr.bf16.mxu0 %v838
      %850 = vmatpush1.bf16.msra.mxu0 %v837
      %851 = vmatprep.subr.bf16.mxu0 %v847
      %852 = vmatpush1.bf16.msra.mxu0 %v844
      %853 = vmatprep.subr.bf16.mxu0 0
      %854 = vmatpush1.bf16.msra.mxu0 0
      %855 = vmatprep.subr.bf16.mxu0 0
      %856 = vmatpush1.bf16.msra.mxu0 0
      %857 = vmatprep.subr.bf16.mxu0 0
      %858 = vmatpush1.bf16.msra.mxu0 0
      %859 = vmatprep.subr.bf16.mxu0 0
      %860 = vmatpush1.bf16.msra.mxu0 0
      %861 = vmatprep.subr.bf16.mxu0 0
      %862 = vmatpush1.bf16.msra.mxu0 0
      %863 = vmatprep.subr.bf16.mxu0 0
      %864 = vmatpush1.bf16.msra.mxu0 0
      %865 = vmatprep.subr.bf16.mxu0 0
      %866 = vmatpush1.bf16.msra.mxu0 0
      %867 = vmatprep.subr.bf16.mxu0 0
      %868 = vmatpush1.bf16.msra.mxu0 0
      %869 = vmatprep.subr.bf16.mxu0 0
      %870 = vmatpush1.bf16.msra.mxu0 0
      %871 = vmatprep.subr.bf16.mxu0 0
      %872 = vmatpush1.bf16.msra.mxu0 0
      %873 = vmatprep.subr.bf16.mxu0 0
      %874 = vmatpush1.bf16.msra.mxu0 0
      %875 = vmatprep.subr.bf16.mxu0 0
      %876 = vmatpush1.bf16.msra.mxu0 0
      %877 = vmatprep.subr.bf16.mxu0 0
      %878 = vmatpush1.bf16.msra.mxu0 0
      %879 = vmatprep.subr.bf16.mxu0 0
      %880 = vmatpush1.bf16.msra.mxu0 0
      %881 = vmatprep.mubr.bf16.mxu0 0
      %882 = vmatmul.mubr.bf16.gmra.mrb[0].mxu0 %v369
      %v883 = vpop.f32.mrb[0].mxu0
      %v884 = vadd.f32 0.0, %v883
      %v885 = vpop.f32.mrb[0].mxu0
      %v886 = vadd.f32 0.0, %v885
      %v887 = vpop.f32.mrb[0].mxu0
      %v888 = vadd.f32 0.0, %v887
      %v889 = vpop.f32.mrb[0].mxu0
      %v890 = vadd.f32 0.0, %v889
      %891 = vdwg.mxu0
      %s892 = scalar_lea.vmem %s326, 32
      %v893 = vld [vmem:[%s892] sm:$0xff]
      %v894 = vld [vmem:[%s892 + $0x8] sm:$0xff]
      %v895 = vld [vmem:[%s892 + $0x10] sm:$0xff]
      %v896 = vld [vmem:[%s892 + $0x18] sm:$0x11]
      %v901 = vunpack.c.l.b16 %v893
      %v902 = vunpack.c.h.b16 %v893
      %v903 = vunpack.c.l.b16 %v894
      %v904 = vunpack.c.h.b16 %v894
      %v905 = vunpack.c.l.b16 %v895
      %v906 = vunpack.c.h.b16 %v895
      %v907 = vunpack.c.l.b16 %v896
      %v908 = vunpack.c.h.b16 %v896
      %v909 = vpack.c.b16 %v903, %v901
      %v910 = vpack.c.b16 %v904, %v902
      %v911 = vpack.c.b16 %v907, %v905
      %v912 = vpack.c.b16 %v908, %v906
      %v916 = vand.u32 %v911, %v374
      %v919 = vand.u32 %v912, %v374
      %921 = vmatprep.subr.bf16.mxu0 %v910
      %922 = vmatpush1.bf16.msra.mxu0 %v909
      %923 = vmatprep.subr.bf16.mxu0 %v919
      %924 = vmatpush1.bf16.msra.mxu0 %v916
      %925 = vmatprep.subr.bf16.mxu0 0
      %926 = vmatpush1.bf16.msra.mxu0 0
      %927 = vmatprep.subr.bf16.mxu0 0
      %928 = vmatpush1.bf16.msra.mxu0 0
      %929 = vmatprep.subr.bf16.mxu0 0
      %930 = vmatpush1.bf16.msra.mxu0 0
      %931 = vmatprep.subr.bf16.mxu0 0
      %932 = vmatpush1.bf16.msra.mxu0 0
      %933 = vmatprep.subr.bf16.mxu0 0
      %934 = vmatpush1.bf16.msra.mxu0 0
      %935 = vmatprep.subr.bf16.mxu0 0
      %936 = vmatpush1.bf16.msra.mxu0 0
      %937 = vmatprep.subr.bf16.mxu0 0
      %938 = vmatpush1.bf16.msra.mxu0 0
      %939 = vmatprep.subr.bf16.mxu0 0
      %940 = vmatpush1.bf16.msra.mxu0 0
      %941 = vmatprep.subr.bf16.mxu0 0
      %942 = vmatpush1.bf16.msra.mxu0 0
      %943 = vmatprep.subr.bf16.mxu0 0
      %944 = vmatpush1.bf16.msra.mxu0 0
      %945 = vmatprep.subr.bf16.mxu0 0
      %946 = vmatpush1.bf16.msra.mxu0 0
      %947 = vmatprep.subr.bf16.mxu0 0
      %948 = vmatpush1.bf16.msra.mxu0 0
      %949 = vmatprep.subr.bf16.mxu0 0
      %950 = vmatpush1.bf16.msra.mxu0 0
      %951 = vmatprep.subr.bf16.mxu0 0
      %952 = vmatpush1.bf16.msra.mxu0 0
      %953 = vmatprep.mubr.bf16.mxu0 0
      %954 = vmatmul.mubr.bf16.gmra.mrb[0].mxu0 %v369
      %v955 = vpop.f32.mrb[0].mxu0
      %v956 = vadd.f32 0.0, %v955
      %v957 = vpop.f32.mrb[0].mxu0
      %v958 = vadd.f32 0.0, %v957
      %v959 = vpop.f32.mrb[0].mxu0
      %v960 = vadd.f32 0.0, %v959
      %v961 = vpop.f32.mrb[0].mxu0
      %v962 = vadd.f32 0.0, %v961
      %963 = vdwg.mxu0
      %v964 = vmax.f32 %v884, %v956
      %v965 = vmax.f32 %v886, %v958
      %v966 = vmax.f32 %v888, %v960
      %v967 = vmax.f32 %v890, %v962
      %v968 = vmax.f32 %v816, %v964
      %v969 = vmax.f32 %v817, %v965
      %v970 = vmax.f32 %v818, %v966
      %v971 = vmax.f32 %v819, %v967
      %v972 = vadd.f32 %v968, %v652
      %v973 = vadd.f32 %v969, %v652
      %v974 = vadd.f32 %v970, %v657
      %v975 = vadd.f32 %v971, %v657
      %v976 = vtanh.pop %v972
      %v977 = vtanh.pop %v973
      %v978 = vtanh.pop %v974
      %v979 = vtanh.pop %v975
      %s980 = scalar_lea.vmem %s333, 32
      %981 = vst [vmem:[%s980] sm:$0xff] %v976
      %982 = vst.msk [vmem:[%s980 + $0x8] sm:$0xff] %vm668, %v977
      %983 = vst [vmem:[%s980 + $0x10] sm:$0xff] %v978
      %984 = vst.msk [vmem:[%s980 + $0x18] sm:$0xff] %vm668, %v979
      %s985 = scalar_lea.vmem %s305, 64
      %v986 = vld [vmem:[%s985] sm:$0xff]
      %v987 = vld [vmem:[%s985 + $0x8] sm:$0xff]
      %v988 = vld [vmem:[%s985 + $0x10] sm:$0xff]
      %v989 = vld [vmem:[%s985 + $0x18] sm:$0x11]
      %v994 = vunpack.c.l.b16 %v986
      %v995 = vunpack.c.h.b16 %v986
      %v996 = vunpack.c.l.b16 %v987
      %v997 = vunpack.c.h.b16 %v987
      %v998 = vunpack.c.l.b16 %v988
      %v999 = vunpack.c.h.b16 %v988
      %v1000 = vunpack.c.l.b16 %v989
      %v1001 = vunpack.c.h.b16 %v989
      %v1002 = vpack.c.b16 %v996, %v994
      %v1003 = vpack.c.b16 %v997, %v995
      %v1004 = vpack.c.b16 %v1000, %v998
      %v1005 = vpack.c.b16 %v1001, %v999
      %v1009 = vand.u32 %v1004, %v374
      %v1012 = vand.u32 %v1005, %v374
      %1014 = vmatprep.subr.bf16.mxu0 %v1003
      %1015 = vmatpush1.bf16.msra.mxu0 %v1002
      %1016 = vmatprep.subr.bf16.mxu0 %v1012
      %1017 = vmatpush1.bf16.msra.mxu0 %v1009
      %1018 = vmatprep.subr.bf16.mxu0 0
      %1019 = vmatpush1.bf16.msra.mxu0 0
      %1020 = vmatprep.subr.bf16.mxu0 0
      %1021 = vmatpush1.bf16.msra.mxu0 0
      %1022 = vmatprep.subr.bf16.mxu0 0
      %1023 = vmatpush1.bf16.msra.mxu0 0
      %1024 = vmatprep.subr.bf16.mxu0 0
      %1025 = vmatpush1.bf16.msra.mxu0 0
      %1026 = vmatprep.subr.bf16.mxu0 0
      %1027 = vmatpush1.bf16.msra.mxu0 0
      %1028 = vmatprep.subr.bf16.mxu0 0
      %1029 = vmatpush1.bf16.msra.mxu0 0
      %1030 = vmatprep.subr.bf16.mxu0 0
      %1031 = vmatpush1.bf16.msra.mxu0 0
      %1032 = vmatprep.subr.bf16.mxu0 0
      %1033 = vmatpush1.bf16.msra.mxu0 0
      %1034 = vmatprep.subr.bf16.mxu0 0
      %1035 = vmatpush1.bf16.msra.mxu0 0
      %1036 = vmatprep.subr.bf16.mxu0 0
      %1037 = vmatpush1.bf16.msra.mxu0 0
      %1038 = vmatprep.subr.bf16.mxu0 0
      %1039 = vmatpush1.bf16.msra.mxu0 0
      %1040 = vmatprep.subr.bf16.mxu0 0
      %1041 = vmatpush1.bf16.msra.mxu0 0
      %1042 = vmatprep.subr.bf16.mxu0 0
      %1043 = vmatpush1.bf16.msra.mxu0 0
      %1044 = vmatprep.subr.bf16.mxu0 0
      %1045 = vmatpush1.bf16.msra.mxu0 0
      %1046 = vmatprep.mubr.bf16.mxu0 0
      %1047 = vmatmul.mubr.bf16.gmra.mrb[0].mxu0 %v369
      %v1048 = vpop.f32.mrb[0].mxu0
      %v1049 = vadd.f32 0.0, %v1048
      %v1050 = vpop.f32.mrb[0].mxu0
      %v1051 = vadd.f32 0.0, %v1050
      %v1052 = vpop.f32.mrb[0].mxu0
      %v1053 = vadd.f32 0.0, %v1052
      %v1054 = vpop.f32.mrb[0].mxu0
      %v1055 = vadd.f32 0.0, %v1054
      %1056 = vdwg.mxu0
      %s1057 = scalar_lea.vmem %s312, 64
      %v1058 = vld [vmem:[%s1057] sm:$0xff]
      %v1059 = vld [vmem:[%s1057 + $0x8] sm:$0xff]
      %v1060 = vld [vmem:[%s1057 + $0x10] sm:$0xff]
      %v1061 = vld [vmem:[%s1057 + $0x18] sm:$0x11]
      %v1066 = vunpack.c.l.b16 %v1058
      %v1067 = vunpack.c.h.b16 %v1058
      %v1068 = vunpack.c.l.b16 %v1059
      %v1069 = vunpack.c.h.b16 %v1059
      %v1070 = vunpack.c.l.b16 %v1060
      %v1071 = vunpack.c.h.b16 %v1060
      %v1072 = vunpack.c.l.b16 %v1061
      %v1073 = vunpack.c.h.b16 %v1061
      %v1074 = vpack.c.b16 %v1068, %v1066
      %v1075 = vpack.c.b16 %v1069, %v1067
      %v1076 = vpack.c.b16 %v1072, %v1070
      %v1077 = vpack.c.b16 %v1073, %v1071
      %v1081 = vand.u32 %v1076, %v374
      %v1084 = vand.u32 %v1077, %v374
      %1086 = vmatprep.subr.bf16.mxu0 %v1075
      %1087 = vmatpush1.bf16.msra.mxu0 %v1074
      %1088 = vmatprep.subr.bf16.mxu0 %v1084
      %1089 = vmatpush1.bf16.msra.mxu0 %v1081
      %1090 = vmatprep.subr.bf16.mxu0 0
      %1091 = vmatpush1.bf16.msra.mxu0 0
      %1092 = vmatprep.subr.bf16.mxu0 0
      %1093 = vmatpush1.bf16.msra.mxu0 0
      %1094 = vmatprep.subr.bf16.mxu0 0
      %1095 = vmatpush1.bf16.msra.mxu0 0
      %1096 = vmatprep.subr.bf16.mxu0 0
      %1097 = vmatpush1.bf16.msra.mxu0 0
      %1098 = vmatprep.subr.bf16.mxu0 0
      %1099 = vmatpush1.bf16.msra.mxu0 0
      %1100 = vmatprep.subr.bf16.mxu0 0
      %1101 = vmatpush1.bf16.msra.mxu0 0
      %1102 = vmatprep.subr.bf16.mxu0 0
      %1103 = vmatpush1.bf16.msra.mxu0 0
      %1104 = vmatprep.subr.bf16.mxu0 0
      %1105 = vmatpush1.bf16.msra.mxu0 0
      %1106 = vmatprep.subr.bf16.mxu0 0
      %1107 = vmatpush1.bf16.msra.mxu0 0
      %1108 = vmatprep.subr.bf16.mxu0 0
      %1109 = vmatpush1.bf16.msra.mxu0 0
      %1110 = vmatprep.subr.bf16.mxu0 0
      %1111 = vmatpush1.bf16.msra.mxu0 0
      %1112 = vmatprep.subr.bf16.mxu0 0
      %1113 = vmatpush1.bf16.msra.mxu0 0
      %1114 = vmatprep.subr.bf16.mxu0 0
      %1115 = vmatpush1.bf16.msra.mxu0 0
      %1116 = vmatprep.subr.bf16.mxu0 0
      %1117 = vmatpush1.bf16.msra.mxu0 0
      %1118 = vmatprep.mubr.bf16.mxu0 0
      %1119 = vmatmul.mubr.bf16.gmra.mrb[0].mxu0 %v369
      %v1120 = vpop.f32.mrb[0].mxu0
      %v1121 = vadd.f32 0.0, %v1120
      %v1122 = vpop.f32.mrb[0].mxu0
      %v1123 = vadd.f32 0.0, %v1122
      %v1124 = vpop.f32.mrb[0].mxu0
      %v1125 = vadd.f32 0.0, %v1124
      %v1126 = vpop.f32.mrb[0].mxu0
      %v1127 = vadd.f32 0.0, %v1126
      %1128 = vdwg.mxu0
      %v1129 = vmax.f32 %v1049, %v1121
      %v1130 = vmax.f32 %v1051, %v1123
      %v1131 = vmax.f32 %v1053, %v1125
      %v1132 = vmax.f32 %v1055, %v1127
      %s1133 = scalar_lea.vmem %s319, 64
      %v1134 = vld [vmem:[%s1133] sm:$0xff]
      %v1135 = vld [vmem:[%s1133 + $0x8] sm:$0xff]
      %v1136 = vld [vmem:[%s1133 + $0x10] sm:$0xff]
      %v1137 = vld [vmem:[%s1133 + $0x18] sm:$0x11]
      %v1142 = vunpack.c.l.b16 %v1134
      %v1143 = vunpack.c.h.b16 %v1134
      %v1144 = vunpack.c.l.b16 %v1135
      %v1145 = vunpack.c.h.b16 %v1135
      %v1146 = vunpack.c.l.b16 %v1136
      %v1147 = vunpack.c.h.b16 %v1136
      %v1148 = vunpack.c.l.b16 %v1137
      %v1149 = vunpack.c.h.b16 %v1137
      %v1150 = vpack.c.b16 %v1144, %v1142
      %v1151 = vpack.c.b16 %v1145, %v1143
      %v1152 = vpack.c.b16 %v1148, %v1146
      %v1153 = vpack.c.b16 %v1149, %v1147
      %v1157 = vand.u32 %v1152, %v374
      %v1160 = vand.u32 %v1153, %v374
      %1162 = vmatprep.subr.bf16.mxu0 %v1151
      %1163 = vmatpush1.bf16.msra.mxu0 %v1150
      %1164 = vmatprep.subr.bf16.mxu0 %v1160
      %1165 = vmatpush1.bf16.msra.mxu0 %v1157
      %1166 = vmatprep.subr.bf16.mxu0 0
      %1167 = vmatpush1.bf16.msra.mxu0 0
      %1168 = vmatprep.subr.bf16.mxu0 0
      %1169 = vmatpush1.bf16.msra.mxu0 0
      %1170 = vmatprep.subr.bf16.mxu0 0
      %1171 = vmatpush1.bf16.msra.mxu0 0
      %1172 = vmatprep.subr.bf16.mxu0 0
      %1173 = vmatpush1.bf16.msra.mxu0 0
      %1174 = vmatprep.subr.bf16.mxu0 0
      %1175 = vmatpush1.bf16.msra.mxu0 0
      %1176 = vmatprep.subr.bf16.mxu0 0
      %1177 = vmatpush1.bf16.msra.mxu0 0
      %1178 = vmatprep.subr.bf16.mxu0 0
      %1179 = vmatpush1.bf16.msra.mxu0 0
      %1180 = vmatprep.subr.bf16.mxu0 0
      %1181 = vmatpush1.bf16.msra.mxu0 0
      %1182 = vmatprep.subr.bf16.mxu0 0
      %1183 = vmatpush1.bf16.msra.mxu0 0
      %1184 = vmatprep.subr.bf16.mxu0 0
      %1185 = vmatpush1.bf16.msra.mxu0 0
      %1186 = vmatprep.subr.bf16.mxu0 0
      %1187 = vmatpush1.bf16.msra.mxu0 0
      %1188 = vmatprep.subr.bf16.mxu0 0
      %1189 = vmatpush1.bf16.msra.mxu0 0
      %1190 = vmatprep.subr.bf16.mxu0 0
      %1191 = vmatpush1.bf16.msra.mxu0 0
      %1192 = vmatprep.subr.bf16.mxu0 0
      %1193 = vmatpush1.bf16.msra.mxu0 0
      %1194 = vmatprep.mubr.bf16.mxu0 0
      %1195 = vmatmul.mubr.bf16.gmra.mrb[0].mxu0 %v369
      %v1196 = vpop.f32.mrb[0].mxu0
      %v1197 = vadd.f32 0.0, %v1196
      %v1198 = vpop.f32.mrb[0].mxu0
      %v1199 = vadd.f32 0.0, %v1198
      %v1200 = vpop.f32.mrb[0].mxu0
      %v1201 = vadd.f32 0.0, %v1200
      %v1202 = vpop.f32.mrb[0].mxu0
      %v1203 = vadd.f32 0.0, %v1202
      %1204 = vdwg.mxu0
      %s1205 = scalar_lea.vmem %s326, 64
      %v1206 = vld [vmem:[%s1205] sm:$0xff]
      %v1207 = vld [vmem:[%s1205 + $0x8] sm:$0xff]
      %v1208 = vld [vmem:[%s1205 + $0x10] sm:$0xff]
      %v1209 = vld [vmem:[%s1205 + $0x18] sm:$0x11]
      %v1214 = vunpack.c.l.b16 %v1206
      %v1215 = vunpack.c.h.b16 %v1206
      %v1216 = vunpack.c.l.b16 %v1207
      %v1217 = vunpack.c.h.b16 %v1207
      %v1218 = vunpack.c.l.b16 %v1208
      %v1219 = vunpack.c.h.b16 %v1208
      %v1220 = vunpack.c.l.b16 %v1209
      %v1221 = vunpack.c.h.b16 %v1209
      %v1222 = vpack.c.b16 %v1216, %v1214
      %v1223 = vpack.c.b16 %v1217, %v1215
      %v1224 = vpack.c.b16 %v1220, %v1218
      %v1225 = vpack.c.b16 %v1221, %v1219
      %v1229 = vand.u32 %v1224, %v374
      %v1232 = vand.u32 %v1225, %v374
      %1234 = vmatprep.subr.bf16.mxu0 %v1223
      %1235 = vmatpush1.bf16.msra.mxu0 %v1222
      %1236 = vmatprep.subr.bf16.mxu0 %v1232
      %1237 = vmatpush1.bf16.msra.mxu0 %v1229
      %1238 = vmatprep.subr.bf16.mxu0 0
      %1239 = vmatpush1.bf16.msra.mxu0 0
      %1240 = vmatprep.subr.bf16.mxu0 0
      %1241 = vmatpush1.bf16.msra.mxu0 0
      %1242 = vmatprep.subr.bf16.mxu0 0
      %1243 = vmatpush1.bf16.msra.mxu0 0
      %1244 = vmatprep.subr.bf16.mxu0 0
      %1245 = vmatpush1.bf16.msra.mxu0 0
      %1246 = vmatprep.subr.bf16.mxu0 0
      %1247 = vmatpush1.bf16.msra.mxu0 0
      %1248 = vmatprep.subr.bf16.mxu0 0
      %1249 = vmatpush1.bf16.msra.mxu0 0
      %1250 = vmatprep.subr.bf16.mxu0 0
      %1251 = vmatpush1.bf16.msra.mxu0 0
      %1252 = vmatprep.subr.bf16.mxu0 0
      %1253 = vmatpush1.bf16.msra.mxu0 0
      %1254 = vmatprep.subr.bf16.mxu0 0
      %1255 = vmatpush1.bf16.msra.mxu0 0
      %1256 = vmatprep.subr.bf16.mxu0 0
      %1257 = vmatpush1.bf16.msra.mxu0 0
      %1258 = vmatprep.subr.bf16.mxu0 0
      %1259 = vmatpush1.bf16.msra.mxu0 0
      %1260 = vmatprep.subr.bf16.mxu0 0
      %1261 = vmatpush1.bf16.msra.mxu0 0
      %1262 = vmatprep.subr.bf16.mxu0 0
      %1263 = vmatpush1.bf16.msra.mxu0 0
      %1264 = vmatprep.subr.bf16.mxu0 0
      %1265 = vmatpush1.bf16.msra.mxu0 0
      %1266 = vmatprep.mubr.bf16.mxu0 0
      %1267 = vmatmul.mubr.bf16.gmra.mrb[0].mxu0 %v369
      %v1268 = vpop.f32.mrb[0].mxu0
      %v1269 = vadd.f32 0.0, %v1268
      %v1270 = vpop.f32.mrb[0].mxu0
      %v1271 = vadd.f32 0.0, %v1270
      %v1272 = vpop.f32.mrb[0].mxu0
      %v1273 = vadd.f32 0.0, %v1272
      %v1274 = vpop.f32.mrb[0].mxu0
      %v1275 = vadd.f32 0.0, %v1274
      %1276 = vdwg.mxu0
      %v1277 = vmax.f32 %v1197, %v1269
      %v1278 = vmax.f32 %v1199, %v1271
      %v1279 = vmax.f32 %v1201, %v1273
      %v1280 = vmax.f32 %v1203, %v1275
      %v1281 = vmax.f32 %v1129, %v1277
      %v1282 = vmax.f32 %v1130, %v1278
      %v1283 = vmax.f32 %v1131, %v1279
      %v1284 = vmax.f32 %v1132, %v1280
      %v1285 = vadd.f32 %v1281, %v652
      %v1286 = vadd.f32 %v1282, %v652
      %v1287 = vadd.f32 %v1283, %v657
      %v1288 = vadd.f32 %v1284, %v657
      %v1289 = vtanh.pop %v1285
      %v1290 = vtanh.pop %v1286
      %v1291 = vtanh.pop %v1287
      %v1292 = vtanh.pop %v1288
      %s1293 = scalar_lea.vmem %s333, 64
      %1294 = vst [vmem:[%s1293] sm:$0xff] %v1289
      %1295 = vst.msk [vmem:[%s1293 + $0x8] sm:$0xff] %vm668, %v1290
      %1296 = vst [vmem:[%s1293 + $0x10] sm:$0xff] %v1291
      %1297 = vst.msk [vmem:[%s1293 + $0x18] sm:$0xff] %vm668, %v1292
      %s1298 = scalar_lea.vmem %s305, 96
      %v1299 = vld [vmem:[%s1298] sm:$0xff]
      %v1300 = vld [vmem:[%s1298 + $0x8] sm:$0xff]
      %v1301 = vld [vmem:[%s1298 + $0x10] sm:$0xff]
      %v1302 = vld [vmem:[%s1298 + $0x18] sm:$0x11]
      %v1307 = vunpack.c.l.b16 %v1299
      %v1308 = vunpack.c.h.b16 %v1299
      %v1309 = vunpack.c.l.b16 %v1300
      %v1310 = vunpack.c.h.b16 %v1300
      %v1311 = vunpack.c.l.b16 %v1301
      %v1312 = vunpack.c.h.b16 %v1301
      %v1313 = vunpack.c.l.b16 %v1302
      %v1314 = vunpack.c.h.b16 %v1302
      %v1315 = vpack.c.b16 %v1309, %v1307
      %v1316 = vpack.c.b16 %v1310, %v1308
      %v1317 = vpack.c.b16 %v1313, %v1311
      %v1318 = vpack.c.b16 %v1314, %v1312
      %v1322 = vand.u32 %v1317, %v374
      %v1325 = vand.u32 %v1318, %v374
      %1327 = vmatprep.subr.bf16.mxu0 %v1316
      %1328 = vmatpush1.bf16.msra.mxu0 %v1315
      %1329 = vmatprep.subr.bf16.mxu0 %v1325
      %1330 = vmatpush1.bf16.msra.mxu0 %v1322
      %1331 = vmatprep.subr.bf16.mxu0 0
      %1332 = vmatpush1.bf16.msra.mxu0 0
      %1333 = vmatprep.subr.bf16.mxu0 0
      %1334 = vmatpush1.bf16.msra.mxu0 0
      %1335 = vmatprep.subr.bf16.mxu0 0
      %1336 = vmatpush1.bf16.msra.mxu0 0
      %1337 = vmatprep.subr.bf16.mxu0 0
      %1338 = vmatpush1.bf16.msra.mxu0 0
      %1339 = vmatprep.subr.bf16.mxu0 0
      %1340 = vmatpush1.bf16.msra.mxu0 0
      %1341 = vmatprep.subr.bf16.mxu0 0
      %1342 = vmatpush1.bf16.msra.mxu0 0
      %1343 = vmatprep.subr.bf16.mxu0 0
      %1344 = vmatpush1.bf16.msra.mxu0 0
      %1345 = vmatprep.subr.bf16.mxu0 0
      %1346 = vmatpush1.bf16.msra.mxu0 0
      %1347 = vmatprep.subr.bf16.mxu0 0
      %1348 = vmatpush1.bf16.msra.mxu0 0
      %1349 = vmatprep.subr.bf16.mxu0 0
      %1350 = vmatpush1.bf16.msra.mxu0 0
      %1351 = vmatprep.subr.bf16.mxu0 0
      %1352 = vmatpush1.bf16.msra.mxu0 0
      %1353 = vmatprep.subr.bf16.mxu0 0
      %1354 = vmatpush1.bf16.msra.mxu0 0
      %1355 = vmatprep.subr.bf16.mxu0 0
      %1356 = vmatpush1.bf16.msra.mxu0 0
      %1357 = vmatprep.subr.bf16.mxu0 0
      %1358 = vmatpush1.bf16.msra.mxu0 0
      %1359 = vmatprep.mubr.bf16.mxu0 0
      %1360 = vmatmul.mubr.bf16.gmra.mrb[0].mxu0 %v369
      %v1361 = vpop.f32.mrb[0].mxu0
      %v1362 = vadd.f32 0.0, %v1361
      %v1363 = vpop.f32.mrb[0].mxu0
      %v1364 = vadd.f32 0.0, %v1363
      %v1365 = vpop.f32.mrb[0].mxu0
      %v1366 = vadd.f32 0.0, %v1365
      %v1367 = vpop.f32.mrb[0].mxu0
      %v1368 = vadd.f32 0.0, %v1367
      %1369 = vdwg.mxu0
      %s1370 = scalar_lea.vmem %s312, 96
      %v1371 = vld [vmem:[%s1370] sm:$0xff]
      %v1372 = vld [vmem:[%s1370 + $0x8] sm:$0xff]
      %v1373 = vld [vmem:[%s1370 + $0x10] sm:$0xff]
      %v1374 = vld [vmem:[%s1370 + $0x18] sm:$0x11]
      %v1379 = vunpack.c.l.b16 %v1371
      %v1380 = vunpack.c.h.b16 %v1371
      %v1381 = vunpack.c.l.b16 %v1372
      %v1382 = vunpack.c.h.b16 %v1372
      %v1383 = vunpack.c.l.b16 %v1373
      %v1384 = vunpack.c.h.b16 %v1373
      %v1385 = vunpack.c.l.b16 %v1374
      %v1386 = vunpack.c.h.b16 %v1374
      %v1387 = vpack.c.b16 %v1381, %v1379
      %v1388 = vpack.c.b16 %v1382, %v1380
      %v1389 = vpack.c.b16 %v1385, %v1383
      %v1390 = vpack.c.b16 %v1386, %v1384
      %v1394 = vand.u32 %v1389, %v374
      %v1397 = vand.u32 %v1390, %v374
      %1399 = vmatprep.subr.bf16.mxu0 %v1388
      %1400 = vmatpush1.bf16.msra.mxu0 %v1387
      %1401 = vmatprep.subr.bf16.mxu0 %v1397
      %1402 = vmatpush1.bf16.msra.mxu0 %v1394
      %1403 = vmatprep.subr.bf16.mxu0 0
      %1404 = vmatpush1.bf16.msra.mxu0 0
      %1405 = vmatprep.subr.bf16.mxu0 0
      %1406 = vmatpush1.bf16.msra.mxu0 0
      %1407 = vmatprep.subr.bf16.mxu0 0
      %1408 = vmatpush1.bf16.msra.mxu0 0
      %1409 = vmatprep.subr.bf16.mxu0 0
      %1410 = vmatpush1.bf16.msra.mxu0 0
      %1411 = vmatprep.subr.bf16.mxu0 0
      %1412 = vmatpush1.bf16.msra.mxu0 0
      %1413 = vmatprep.subr.bf16.mxu0 0
      %1414 = vmatpush1.bf16.msra.mxu0 0
      %1415 = vmatprep.subr.bf16.mxu0 0
      %1416 = vmatpush1.bf16.msra.mxu0 0
      %1417 = vmatprep.subr.bf16.mxu0 0
      %1418 = vmatpush1.bf16.msra.mxu0 0
      %1419 = vmatprep.subr.bf16.mxu0 0
      %1420 = vmatpush1.bf16.msra.mxu0 0
      %1421 = vmatprep.subr.bf16.mxu0 0
      %1422 = vmatpush1.bf16.msra.mxu0 0
      %1423 = vmatprep.subr.bf16.mxu0 0
      %1424 = vmatpush1.bf16.msra.mxu0 0
      %1425 = vmatprep.subr.bf16.mxu0 0
      %1426 = vmatpush1.bf16.msra.mxu0 0
      %1427 = vmatprep.subr.bf16.mxu0 0
      %1428 = vmatpush1.bf16.msra.mxu0 0
      %1429 = vmatprep.subr.bf16.mxu0 0
      %1430 = vmatpush1.bf16.msra.mxu0 0
      %1431 = vmatprep.mubr.bf16.mxu0 0
      %1432 = vmatmul.mubr.bf16.gmra.mrb[0].mxu0 %v369
      %v1433 = vpop.f32.mrb[0].mxu0
      %v1434 = vadd.f32 0.0, %v1433
      %v1435 = vpop.f32.mrb[0].mxu0
      %v1436 = vadd.f32 0.0, %v1435
      %v1437 = vpop.f32.mrb[0].mxu0
      %v1438 = vadd.f32 0.0, %v1437
      %v1439 = vpop.f32.mrb[0].mxu0
      %v1440 = vadd.f32 0.0, %v1439
      %1441 = vdwg.mxu0
      %v1442 = vmax.f32 %v1362, %v1434
      %v1443 = vmax.f32 %v1364, %v1436
      %v1444 = vmax.f32 %v1366, %v1438
      %v1445 = vmax.f32 %v1368, %v1440
      %s1446 = scalar_lea.vmem %s319, 96
      %v1447 = vld [vmem:[%s1446] sm:$0xff]
      %v1448 = vld [vmem:[%s1446 + $0x8] sm:$0xff]
      %v1449 = vld [vmem:[%s1446 + $0x10] sm:$0xff]
      %v1450 = vld [vmem:[%s1446 + $0x18] sm:$0x11]
      %v1455 = vunpack.c.l.b16 %v1447
      %v1456 = vunpack.c.h.b16 %v1447
      %v1457 = vunpack.c.l.b16 %v1448
      %v1458 = vunpack.c.h.b16 %v1448
      %v1459 = vunpack.c.l.b16 %v1449
      %v1460 = vunpack.c.h.b16 %v1449
      %v1461 = vunpack.c.l.b16 %v1450
      %v1462 = vunpack.c.h.b16 %v1450
      %v1463 = vpack.c.b16 %v1457, %v1455
      %v1464 = vpack.c.b16 %v1458, %v1456
      %v1465 = vpack.c.b16 %v1461, %v1459
      %v1466 = vpack.c.b16 %v1462, %v1460
      %v1470 = vand.u32 %v1465, %v374
      %v1473 = vand.u32 %v1466, %v374
      %1475 = vmatprep.subr.bf16.mxu0 %v1464
      %1476 = vmatpush1.bf16.msra.mxu0 %v1463
      %1477 = vmatprep.subr.bf16.mxu0 %v1473
      %1478 = vmatpush1.bf16.msra.mxu0 %v1470
      %1479 = vmatprep.subr.bf16.mxu0 0
      %1480 = vmatpush1.bf16.msra.mxu0 0
      %1481 = vmatprep.subr.bf16.mxu0 0
      %1482 = vmatpush1.bf16.msra.mxu0 0
      %1483 = vmatprep.subr.bf16.mxu0 0
      %1484 = vmatpush1.bf16.msra.mxu0 0
      %1485 = vmatprep.subr.bf16.mxu0 0
      %1486 = vmatpush1.bf16.msra.mxu0 0
      %1487 = vmatprep.subr.bf16.mxu0 0
      %1488 = vmatpush1.bf16.msra.mxu0 0
      %1489 = vmatprep.subr.bf16.mxu0 0
      %1490 = vmatpush1.bf16.msra.mxu0 0
      %1491 = vmatprep.subr.bf16.mxu0 0
      %1492 = vmatpush1.bf16.msra.mxu0 0
      %1493 = vmatprep.subr.bf16.mxu0 0
      %1494 = vmatpush1.bf16.msra.mxu0 0
      %1495 = vmatprep.subr.bf16.mxu0 0
      %1496 = vmatpush1.bf16.msra.mxu0 0
      %1497 = vmatprep.subr.bf16.mxu0 0
      %1498 = vmatpush1.bf16.msra.mxu0 0
      %1499 = vmatprep.subr.bf16.mxu0 0
      %1500 = vmatpush1.bf16.msra.mxu0 0
      %1501 = vmatprep.subr.bf16.mxu0 0
      %1502 = vmatpush1.bf16.msra.mxu0 0
      %1503 = vmatprep.subr.bf16.mxu0 0
      %1504 = vmatpush1.bf16.msra.mxu0 0
      %1505 = vmatprep.subr.bf16.mxu0 0
      %1506 = vmatpush1.bf16.msra.mxu0 0
      %1507 = vmatprep.mubr.bf16.mxu0 0
      %1508 = vmatmul.mubr.bf16.gmra.mrb[0].mxu0 %v369
      %v1509 = vpop.f32.mrb[0].mxu0
      %v1510 = vadd.f32 0.0, %v1509
      %v1511 = vpop.f32.mrb[0].mxu0
      %v1512 = vadd.f32 0.0, %v1511
      %v1513 = vpop.f32.mrb[0].mxu0
      %v1514 = vadd.f32 0.0, %v1513
      %v1515 = vpop.f32.mrb[0].mxu0
      %v1516 = vadd.f32 0.0, %v1515
      %1517 = vdwg.mxu0
      %s1518 = scalar_lea.vmem %s326, 96
      %v1519 = vld [vmem:[%s1518] sm:$0xff]
      %v1520 = vld [vmem:[%s1518 + $0x8] sm:$0xff]
      %v1521 = vld [vmem:[%s1518 + $0x10] sm:$0xff]
      %v1522 = vld [vmem:[%s1518 + $0x18] sm:$0x11]
      %v1527 = vunpack.c.l.b16 %v1519
      %v1528 = vunpack.c.h.b16 %v1519
      %v1529 = vunpack.c.l.b16 %v1520
      %v1530 = vunpack.c.h.b16 %v1520
      %v1531 = vunpack.c.l.b16 %v1521
      %v1532 = vunpack.c.h.b16 %v1521
      %v1533 = vunpack.c.l.b16 %v1522
      %v1534 = vunpack.c.h.b16 %v1522
      %v1535 = vpack.c.b16 %v1529, %v1527
      %v1536 = vpack.c.b16 %v1530, %v1528
      %v1537 = vpack.c.b16 %v1533, %v1531
      %v1538 = vpack.c.b16 %v1534, %v1532
      %v1542 = vand.u32 %v1537, %v374
      %v1545 = vand.u32 %v1538, %v374
      %1547 = vmatprep.subr.bf16.mxu0 %v1536
      %1548 = vmatpush1.bf16.msra.mxu0 %v1535
      %1549 = vmatprep.subr.bf16.mxu0 %v1545
      %1550 = vmatpush1.bf16.msra.mxu0 %v1542
      %1551 = vmatprep.subr.bf16.mxu0 0
      %1552 = vmatpush1.bf16.msra.mxu0 0
      %1553 = vmatprep.subr.bf16.mxu0 0
      %1554 = vmatpush1.bf16.msra.mxu0 0
      %1555 = vmatprep.subr.bf16.mxu0 0
      %1556 = vmatpush1.bf16.msra.mxu0 0
      %1557 = vmatprep.subr.bf16.mxu0 0
      %1558 = vmatpush1.bf16.msra.mxu0 0
      %1559 = vmatprep.subr.bf16.mxu0 0
      %1560 = vmatpush1.bf16.msra.mxu0 0
      %1561 = vmatprep.subr.bf16.mxu0 0
      %1562 = vmatpush1.bf16.msra.mxu0 0
      %1563 = vmatprep.subr.bf16.mxu0 0
      %1564 = vmatpush1.bf16.msra.mxu0 0
      %1565 = vmatprep.subr.bf16.mxu0 0
      %1566 = vmatpush1.bf16.msra.mxu0 0
      %1567 = vmatprep.subr.bf16.mxu0 0
      %1568 = vmatpush1.bf16.msra.mxu0 0
      %1569 = vmatprep.subr.bf16.mxu0 0
      %1570 = vmatpush1.bf16.msra.mxu0 0
      %1571 = vmatprep.subr.bf16.mxu0 0
      %1572 = vmatpush1.bf16.msra.mxu0 0
      %1573 = vmatprep.subr.bf16.mxu0 0
      %1574 = vmatpush1.bf16.msra.mxu0 0
      %1575 = vmatprep.subr.bf16.mxu0 0
      %1576 = vmatpush1.bf16.msra.mxu0 0
      %1577 = vmatprep.subr.bf16.mxu0 0
      %1578 = vmatpush1.bf16.msra.mxu0 0
      %1579 = vmatprep.mubr.bf16.mxu0 0
      %1580 = vmatmul.mubr.bf16.gmra.mrb[0].mxu0 %v369
      %v1581 = vpop.f32.mrb[0].mxu0
      %v1582 = vadd.f32 0.0, %v1581
      %v1583 = vpop.f32.mrb[0].mxu0
      %v1584 = vadd.f32 0.0, %v1583
      %v1585 = vpop.f32.mrb[0].mxu0
      %v1586 = vadd.f32 0.0, %v1585
      %v1587 = vpop.f32.mrb[0].mxu0
      %v1588 = vadd.f32 0.0, %v1587
      %1589 = vdwg.mxu0
      %v1590 = vmax.f32 %v1510, %v1582
      %v1591 = vmax.f32 %v1512, %v1584
      %v1592 = vmax.f32 %v1514, %v1586
      %v1593 = vmax.f32 %v1516, %v1588
      %v1594 = vmax.f32 %v1442, %v1590
      %v1595 = vmax.f32 %v1443, %v1591
      %v1596 = vmax.f32 %v1444, %v1592
      %v1597 = vmax.f32 %v1445, %v1593
      %v1598 = vadd.f32 %v1594, %v652
      %v1599 = vadd.f32 %v1595, %v652
      %v1600 = vadd.f32 %v1596, %v657
      %v1601 = vadd.f32 %v1597, %v657
      %v1602 = vtanh.pop %v1598
      %v1603 = vtanh.pop %v1599
      %v1604 = vtanh.pop %v1600
      %v1605 = vtanh.pop %v1601
      %s1606 = scalar_lea.vmem %s333, 96
      %1607 = vst [vmem:[%s1606] sm:$0xff] %v1602
      %1608 = vst.msk [vmem:[%s1606 + $0x8] sm:$0xff] %vm668, %v1603
      %1609 = vst [vmem:[%s1606 + $0x10] sm:$0xff] %v1604
      %1610 = vst.msk [vmem:[%s1606 + $0x18] sm:$0xff] %vm668, %v1605
      %s1611 = smul.u32 4, %s17
      %p1612 = scmp.lt.s32.totalorder %s1611, 11
      %s1613 = scalar_select %p1612, %s1611, 11
      %s1614 = smul.addr %s1613, 4
      %s1615 = smul.addr %s1614, 8
      %s1616 = scalar_lea.vmem %s6, %s1615
      // Predicated region
      $region45: #{siamese_forward.3} parent=43 // pred_check
        %p1617 = pneg %p181
      $region46: #{siamese_forward.3} parent=43 // pred_check_branch
        %1619 = sbr.rel (%p1617) target = $region48
      $region47: #{siamese_forward.3} parent=43 // pred_region
        %s1620 = smul.u32 4, %s17
      $region48: #{siamese_forward.3} parent=43 // pred_fallthru
        _
    $region44: #{siamese_forward.3} parent=5 // pred_fallthru
      _
    %p1621 = scmp.le.s32.totalorder 2, %s12
    // Predicated region
    $region49: #{siamese_forward.3} parent=5 // pred_check
      %p1622 = pneg %p1621
    $region50: #{siamese_forward.3} parent=5 // pred_check_branch
      %1624 = sbr.rel (%p1622) target = $region52
    $region51: #{siamese_forward.3} parent=5 // pred_region
      %s1625 = ssub.s32 %s12, 2
      // Predicated region
      $region53: #{siamese_forward.3} parent=51 // pred_check
        %p1626 = pneg %p187
      $region54: #{siamese_forward.3} parent=51 // pred_check_branch
        %1628 = sbr.rel (%p1626) target = $region56
      $region55: #{siamese_forward.3} parent=51 // pred_region
        %s1629 = smul.u32 4, %s18
        %p1630 = scmp.lt.s32.totalorder %s1629, 11
        %s1631 = scalar_select %p1630, %s1629, 11
        %s1632 = smul.addr %s1631, 4
        %s1633 = smul.addr %s1632, 8
        %s1634 = scalar_lea.vmem %s6, %s1633
      $region56: #{siamese_forward.3} parent=51 // pred_fallthru
        _
    $region52: #{siamese_forward.3} parent=5 // pred_fallthru
      _
  $region6: #{siamese_forward.3} parent=0 // loop_footer
    %s16 = sadd.s32 1, %s12
  $region7: #{siamese_forward.3} parent=0 // loop_footer_branch
    %11 = sbr.rel target = $region3
  $region8: #{siamese_forward.3} parent=0 // loop_exit
    _

// kernel: siamese_forward.4
$region0: #{siamese_forward.4}
  #allocation0 [shape = 'u32[]', space=smem, size = 0x4, offset = 0x4, fixed_abs, tag = 'smem constant byte address 0x4 - core index']
  #allocation1 [shape = 'u32[144,128]{1,0:T(1,128)}', space=vmem, size = 0x12000, scoped, tag = 'internal scratch']
  %s0 = inlined_call_operand.vmem [shape: bf16[12,400,25], index: 0, kind: input, shape index: {}]
  %s1 = inlined_call_operand.vmem [shape: bf16[12,400,25], index: 1, kind: input, shape index: {}]
  %s2 = inlined_call_operand.vmem [shape: bf16[12,400,25], index: 2, kind: input, shape index: {}]
  %s3 = inlined_call_operand.vmem [shape: bf16[12,400,25], index: 3, kind: input, shape index: {}]
  %s4 = inlined_call_operand.vmem [shape: bf16[32,400], index: 4, kind: input, shape index: {}]
  %s5 = inlined_call_operand.vmem [shape: f32[32,1], index: 5, kind: input, shape index: {}]
  %s6 = inlined_call_operand.vmem [shape: f32[12,32,25], index: 6, kind: output, shape index: {}]
  %s7 = sld [smem:[#allocation0]]
  $region57: #{siamese_forward.4} parent=0
    _
  %s9 = ssub.s32 1, %s7
  %s10 = scalar_select 0, %s9, %s7
  loop: start=0, step=1, limit=5
  $region2: #{siamese_forward.4} parent=0 // loop_pre_header
    _
  $region3: #{siamese_forward.4} parent=0 // loop_header
    %s12 = sphi 0, %s16
    %p13 = scmp.ge.s32.totalorder %s12, 5
    %s22 = sphi 0, %s24
    %s25 = sphi 0, %s22
    %s26 = sphi 0, %s25
    %s42 = sphi 0, %s26
    %s48 = sphi 0, %s50
    %s51 = sphi 0, %s48
    %s52 = sphi 0, %s51
    %s68 = sphi 0, %s52
    %s74 = sphi 0, %s76
    %s77 = sphi 0, %s74
    %s78 = sphi 0, %s77
    %s94 = sphi 0, %s78
    %s100 = sphi 0, %s102
    %s103 = sphi 0, %s100
    %s104 = sphi 0, %s103
    %s120 = sphi 0, %s104
    %s124 = sphi 0, %s124
    %s126 = sphi 0, %s124
    %s127 = sphi 0, %s126
    %s141 = sphi 0, %s127
    %s145 = sphi 0, %s145
    %s147 = sphi 0, %s145
    %s148 = sphi 0, %s147
    %s162 = sphi 0, %s148
    %s168 = sphi 0, %s170
    %s171 = sphi 0, %s168
    %s172 = sphi 0, %s171
    %s188 = sphi 0, %s172
  $region4: #{siamese_forward.4} parent=0 // loop_header_branch
    %15 = sbr.rel (%p13) target = $region8
  $region5: #{siamese_forward.4} parent=0 // loop_body
    %s17 = ssub.s32 %s12, 1
    %s18 = ssub.s32 %s12, 2
    %s19 = sadd.s32 %s12, 1
    %s20 = ssub.s32 %s12, %s19
    %p21 = scmp.eq.s32.totalorder %s20, 0
    %s23 = sadd.s32 %s22, 1
    %s24 = scalar_select %p21, %s22, %s23
    %p27 = pneg %p21
    %p28 = scmp.eq.s32.totalorder %s12, 2
    %p29 = por %p27, %p28
    %p30 = scmp.ne.s32.totalorder %s22, %s25
    %p31 = scmp.eq.s32.totalorder %s12, 0
    %p32 = por %p30, %p31
    %p33 = scmp.ne.s32.totalorder %s22, %s25
    %p34 = scmp.eq.s32.totalorder %s17, 2
    %p35 = por %p33, %p34
    %p36 = scmp.ne.s32.totalorder %s25, %s26
    %p37 = scmp.eq.s32.totalorder %s17, 0
    %p38 = por %p36, %p37
    %p39 = scmp.ne.s32.totalorder %s25, %s26
    %p40 = scmp.eq.s32.totalorder %s18, 2
    %p41 = por %p39, %p40
    %p43 = scmp.ne.s32.totalorder %s26, %s42
    %p44 = scmp.eq.s32.totalorder %s18, 0
    %p45 = por %p43, %p44
    %s46 = ssub.s32 %s12, %s19
    %p47 = scmp.eq.s32.totalorder %s46, 0
    %s49 = sadd.s32 %s48, 1
    %s50 = scalar_select %p47, %s48, %s49
    %p53 = pneg %p47
    %p54 = scmp.eq.s32.totalorder %s12, 2
    %p55 = por %p53, %p54
    %p56 = scmp.ne.s32.totalorder %s48, %s51
    %p57 = scmp.eq.s32.totalorder %s12, 0
    %p58 = por %p56, %p57
    %p59 = scmp.ne.s32.totalorder %s48, %s51
    %p60 = scmp.eq.s32.totalorder %s17, 2
    %p61 = por %p59, %p60
    %p62 = scmp.ne.s32.totalorder %s51, %s52
    %p63 = scmp.eq.s32.totalorder %s17, 0
    %p64 = por %p62, %p63
    %p65 = scmp.ne.s32.totalorder %s51, %s52
    %p66 = scmp.eq.s32.totalorder %s18, 2
    %p67 = por %p65, %p66
    %p69 = scmp.ne.s32.totalorder %s52, %s68
    %p70 = scmp.eq.s32.totalorder %s18, 0
    %p71 = por %p69, %p70
    %s72 = ssub.s32 %s12, %s19
    %p73 = scmp.eq.s32.totalorder %s72, 0
    %s75 = sadd.s32 %s74, 1
    %s76 = scalar_select %p73, %s74, %s75
    %p79 = pneg %p73
    %p80 = scmp.eq.s32.totalorder %s12, 2
    %p81 = por %p79, %p80
    %p82 = scmp.ne.s32.totalorder %s74, %s77
    %p83 = scmp.eq.s32.totalorder %s12, 0
    %p84 = por %p82, %p83
    %p85 = scmp.ne.s32.totalorder %s74, %s77
    %p86 = scmp.eq.s32.totalorder %s17, 2
    %p87 = por %p85, %p86
    %p88 = scmp.ne.s32.totalorder %s77, %s78
    %p89 = scmp.eq.s32.totalorder %s17, 0
    %p90 = por %p88, %p89
    %p91 = scmp.ne.s32.totalorder %s77, %s78
    %p92 = scmp.eq.s32.totalorder %s18, 2
    %p93 = por %p91, %p92
    %p95 = scmp.ne.s32.totalorder %s78, %s94
    %p96 = scmp.eq.s32.totalorder %s18, 0
    %p97 = por %p95, %p96
    %s98 = ssub.s32 %s12, %s19
    %p99 = scmp.eq.s32.totalorder %s98, 0
    %s101 = sadd.s32 %s100, 1
    %s102 = scalar_select %p99, %s100, %s101
    %p105 = pneg %p99
    %p106 = scmp.eq.s32.totalorder %s12, 2
    %p107 = por %p105, %p106
    %p108 = scmp.ne.s32.totalorder %s100, %s103
    %p109 = scmp.eq.s32.totalorder %s12, 0
    %p110 = por %p108, %p109
    %p111 = scmp.ne.s32.totalorder %s100, %s103
    %p112 = scmp.eq.s32.totalorder %s17, 2
    %p113 = por %p111, %p112
    %p114 = scmp.ne.s32.totalorder %s103, %s104
    %p115 = scmp.eq.s32.totalorder %s17, 0
    %p116 = por %p114, %p115
    %p117 = scmp.ne.s32.totalorder %s103, %s104
    %p118 = scmp.eq.s32.totalorder %s18, 2
    %p119 = por %p117, %p118
    %p121 = scmp.ne.s32.totalorder %s104, %s120
    %p122 = scmp.eq.s32.totalorder %s18, 0
    %p123 = por %p121, %p122
    %s125 = sadd.s32 %s124, 1
    %p128 = scmp.eq.s32.totalorder %s12, 2
    %p129 = scmp.ne.s32.totalorder %s124, %s126
    %p130 = scmp.eq.s32.totalorder %s12, 0
    %p131 = por %p129, %p130
    %p132 = scmp.ne.s32.totalorder %s124, %s126
    %p133 = scmp.eq.s32.totalorder %s17, 2
    %p134 = por %p132, %p133
    %p135 = scmp.ne.s32.totalorder %s126, %s127
    %p136 = scmp.eq.s32.totalorder %s17, 0
    %p137 = por %p135, %p136
    %p138 = scmp.ne.s32.totalorder %s126, %s127
    %p139 = scmp.eq.s32.totalorder %s18, 2
    %p140 = por %p138, %p139
    %p142 = scmp.ne.s32.totalorder %s127, %s141
    %p143 = scmp.eq.s32.totalorder %s18, 0
    %p144 = por %p142, %p143
    %s146 = sadd.s32 %s145, 1
    %p149 = scmp.eq.s32.totalorder %s12, 2
    %p150 = scmp.ne.s32.totalorder %s145, %s147
    %p151 = scmp.eq.s32.totalorder %s12, 0
    %p152 = por %p150, %p151
    %p153 = scmp.ne.s32.totalorder %s145, %s147
    %p154 = scmp.eq.s32.totalorder %s17, 2
    %p155 = por %p153, %p154
    %p156 = scmp.ne.s32.totalorder %s147, %s148
    %p157 = scmp.eq.s32.totalorder %s17, 0
    %p158 = por %p156, %p157
    %p159 = scmp.ne.s32.totalorder %s147, %s148
    %p160 = scmp.eq.s32.totalorder %s18, 2
    %p161 = por %p159, %p160
    %p163 = scmp.ne.s32.totalorder %s148, %s162
    %p164 = scmp.eq.s32.totalorder %s18, 0
    %p165 = por %p163, %p164
    %s166 = ssub.s32 %s12, %s19
    %p167 = scmp.eq.s32.totalorder %s166, 0
    %s169 = sadd.s32 %s168, 1
    %s170 = scalar_select %p167, %s168, %s169
    %p173 = pneg %p167
    %p174 = scmp.eq.s32.totalorder %s12, 2
    %p175 = por %p173, %p174
    %p176 = scmp.ne.s32.totalorder %s168, %s171
    %p177 = scmp.eq.s32.totalorder %s12, 0
    %p178 = por %p176, %p177
    %p179 = scmp.ne.s32.totalorder %s168, %s171
    %p180 = scmp.eq.s32.totalorder %s17, 2
    %p181 = por %p179, %p180
    %p182 = scmp.ne.s32.totalorder %s171, %s172
    %p183 = scmp.eq.s32.totalorder %s17, 0
    %p184 = por %p182, %p183
    %p185 = scmp.ne.s32.totalorder %s171, %s172
    %p186 = scmp.eq.s32.totalorder %s18, 2
    %p187 = por %p185, %p186
    %p189 = scmp.ne.s32.totalorder %s172, %s188
    %p190 = scmp.eq.s32.totalorder %s18, 0
    %p191 = por %p189, %p190
    %p192 = scmp.le.s32.totalorder 1, %s12
    %p193 = scmp.lt.s32.totalorder %s12, 4
    %p194 = pnand %p192, %p193
    %p195 = pneg %p194
    // Predicated region
    $region9: #{siamese_forward.4} parent=5 // pred_check
      _
    $region10: #{siamese_forward.4} parent=5 // pred_check_branch
      %197 = sbr.rel (%p194) target = $region12
    $region11: #{siamese_forward.4} parent=5 // pred_region
      %s198 = ssub.s32 %s12, 1
      // Predicated region
      $region13: #{siamese_forward.4} parent=11 // pred_check
        %p199 = pneg %p137
      $region14: #{siamese_forward.4} parent=11 // pred_check_branch
        %201 = sbr.rel (%p199) target = $region16
      $region15: #{siamese_forward.4} parent=11 // pred_region
        _
      $region16: #{siamese_forward.4} parent=11 // pred_fallthru
        _
      // Predicated region
      $region17: #{siamese_forward.4} parent=11 // pred_check
        %p202 = pneg %p158
      $region18: #{siamese_forward.4} parent=11 // pred_check_branch
        %204 = sbr.rel (%p202) target = $region20
      $region19: #{siamese_forward.4} parent=11 // pred_region
        _
      $region20: #{siamese_forward.4} parent=11 // pred_fallthru
        _
    $region12: #{siamese_forward.4} parent=5 // pred_fallthru
      _
    %p205 = scmp.lt.s32.totalorder %s12, 3
    // Predicated region
    $region21: #{siamese_forward.4} parent=5 // pred_check
      %p206 = pneg %p205
    $region22: #{siamese_forward.4} parent=5 // pred_check_branch
      %208 = sbr.rel (%p206) target = $region24
    $region23: #{siamese_forward.4} parent=5 // pred_region
      // Predicated region
      $region25: #{siamese_forward.4} parent=23 // pred_check
        %p209 = pneg %p32
      $region26: #{siamese_forward.4} parent=23 // pred_check_branch
        %211 = sbr.rel (%p209) target = $region28
      $region27: #{siamese_forward.4} parent=23 // pred_region
        %s212 = smul.u32 4, %s12
        %p213 = scmp.lt.s32.totalorder %s212, 11
        %s214 = scalar_select %p213, %s212, 11
        %s215 = smul.addr %s214, 50
        %s216 = smul.addr %s215, 4
        %s217 = scalar_lea.vmem %s0, %s216
        %s218 = smul.u32 4, %s12
      $region28: #{siamese_forward.4} parent=23 // pred_fallthru
        _
      // Predicated region
      $region29: #{siamese_forward.4} parent=23 // pred_check
        %p219 = pneg %p58
      $region30: #{siamese_forward.4} parent=23 // pred_check_branch
        %221 = sbr.rel (%p219) target = $region32
      $region31: #{siamese_forward.4} parent=23 // pred_region
        %s222 = smul.u32 4, %s12
        %p223 = scmp.lt.s32.totalorder %s222, 11
        %s224 = scalar_select %p223, %s222, 11
        %s225 = smul.addr %s224, 50
        %s226 = smul.addr %s225, 4
        %s227 = scalar_lea.vmem %s1, %s226
        %s228 = smul.u32 4, %s12
      $region32: #{siamese_forward.4} parent=23 // pred_fallthru
        _
      // Predicated region
      $region33: #{siamese_forward.4} parent=23 // pred_check
        %p229 = pneg %p84
      $region34: #{siamese_forward.4} parent=23 // pred_check_branch
        %231 = sbr.rel (%p229) target = $region36
      $region35: #{siamese_forward.4} parent=23 // pred_region
        %s232 = smul.u32 4, %s12
        %p233 = scmp.lt.s32.totalorder %s232, 11
        %s234 = scalar_select %p233, %s232, 11
        %s235 = smul.addr %s234, 50
        %s236 = smul.addr %s235, 4
        %s237 = scalar_lea.vmem %s2, %s236
        %s238 = smul.u32 4, %s12
      $region36: #{siamese_forward.4} parent=23 // pred_fallthru
        _
      // Predicated region
      $region37: #{siamese_forward.4} parent=23 // pred_check
        %p239 = pneg %p110
      $region38: #{siamese_forward.4} parent=23 // pred_check_branch
        %241 = sbr.rel (%p239) target = $region40
      $region39: #{siamese_forward.4} parent=23 // pred_region
        %s242 = smul.u32 4, %s12
        %p243 = scmp.lt.s32.totalorder %s242, 11
        %s244 = scalar_select %p243, %s242, 11
        %s245 = smul.addr %s244, 50
        %s246 = smul.addr %s245, 4
        %s247 = scalar_lea.vmem %s3, %s246
        %s248 = smul.u32 4, %s12
      $region40: #{siamese_forward.4} parent=23 // pred_fallthru
        _
    $region24: #{siamese_forward.4} parent=5 // pred_fallthru
      _
    %p249 = scmp.le.s32.totalorder 1, %s12
    %p250 = scmp.lt.s32.totalorder %s12, 4
    %p251 = pnand %p249, %p250
    %p252 = pneg %p251
    // Predicated region
    $region41: #{siamese_forward.4} parent=5 // pred_check
      _
    $region42: #{siamese_forward.4} parent=5 // pred_check_branch
      %254 = sbr.rel (%p251) target = $region44
    $region43: #{siamese_forward.4} parent=5 // pred_region
      %s255 = ssub.s32 %s12, 1
      %s256 = smul.u32 4, %s17
      %p257 = scmp.lt.s32.totalorder %s256, 11
      %s258 = scalar_select %p257, %s256, 11
      %s259 = smul.addr %s258, 50
      %s260 = smul.addr %s259, 4
      %s261 = scalar_lea.vmem %s0, %s260
      %p262 = pneg %p38
      %p263 = pneg %p35
      %s264 = smul.u32 4, %s17
      %p265 = scmp.lt.s32.totalorder %s264, 11
      %s266 = scalar_select %p265, %s264, 11
      %s267 = smul.addr %s266, 50
      %s268 = smul.addr %s267, 4
      %s269 = scalar_lea.vmem %s1, %s268
      %p270 = pneg %p64
      %p271 = pneg %p61
      %s272 = smul.u32 4, %s17
      %p273 = scmp.lt.s32.totalorder %s272, 11
      %s274 = scalar_select %p273, %s272, 11
      %s275 = smul.addr %s274, 50
      %s276 = smul.addr %s275, 4
      %s277 = scalar_lea.vmem %s2, %s276
      %p278 = pneg %p90
      %p279 = pneg %p87
      %s280 = smul.u32 4, %s17
      %p281 = scmp.lt.s32.totalorder %s280, 11
      %s282 = scalar_select %p281, %s280, 11
      %s283 = smul.addr %s282, 50
      %s284 = smul.addr %s283, 4
      %s285 = scalar_lea.vmem %s3, %s284
      %p286 = pneg %p116
      %p287 = pneg %p113
      %p288 = pneg %p137
      %p289 = pneg %p134
      %p290 = pneg %p158
      %p291 = pneg %p155
      %p292 = pneg %p184
      %p293 = pneg %p181
      %s294 = smul.u32 4, %s17
      %p295 = scmp.lt.s32.totalorder %s294, 11
      %s296 = scalar_select %p295, %s294, 11
      %s297 = smul.addr %s296, 4
      %s298 = smul.addr %s297, 8
      %s299 = scalar_lea.vmem %s6, %s298
      %s300 = smul.u32 4, %s17
      %p301 = scmp.lt.s32.totalorder %s300, 11
      %s302 = scalar_select %p301, %s300, 11
      %s303 = smul.addr %s302, 50
      %s304 = smul.addr %s303, 4
      %s305 = scalar_lea.vmem %s0, %s304
      %s306 = smul.u32 4, %s17
      %s307 = smul.u32 4, %s17
      %p308 = scmp.lt.s32.totalorder %s307, 11
      %s309 = scalar_select %p308, %s307, 11
      %s310 = smul.addr %s309, 50
      %s311 = smul.addr %s310, 4
      %s312 = scalar_lea.vmem %s1, %s311
      %s313 = smul.u32 4, %s17
      %s314 = smul.u32 4, %s17
      %p315 = scmp.lt.s32.totalorder %s314, 11
      %s316 = scalar_select %p315, %s314, 11
      %s317 = smul.addr %s316, 50
      %s318 = smul.addr %s317, 4
      %s319 = scalar_lea.vmem %s2, %s318
      %s320 = smul.u32 4, %s17
      %s321 = smul.u32 4, %s17
      %p322 = scmp.lt.s32.totalorder %s321, 11
      %s323 = scalar_select %p322, %s321, 11
      %s324 = smul.addr %s323, 50
      %s325 = smul.addr %s324, 4
      %s326 = scalar_lea.vmem %s3, %s325
      %s327 = smul.u32 4, %s17
      %s328 = smul.u32 4, %s17
      %p329 = scmp.lt.s32.totalorder %s328, 11
      %s330 = scalar_select %p329, %s328, 11
      %s331 = smul.addr %s330, 4
      %s332 = smul.addr %s331, 8
      %s333 = scalar_lea.vmem %s6, %s332
      %s334 = smul.u32 4, %s17
      %v336 = vld [vmem:[%s4] sm:$0xff]
      %v337 = vld [vmem:[%s4 + $0x8] sm:$0xff]
      %v338 = vld [vmem:[%s4 + $0x10] sm:$0xff]
      %v339 = vld [vmem:[%s4 + $0x18] sm:$0xff]
      %v340 = vld [vmem:[%s4 + $0x20] sm:$0xff]
      %v341 = vld [vmem:[%s4 + $0x28] sm:$0xff]
      %v342 = vld [vmem:[%s4 + $0x30] sm:$0xff]
      %v343 = vld [vmem:[%s4 + $0x38] sm:$0xff]
      %v344 = vld [vmem:[%s5] sm:$0xff]
      %v345 = vld [vmem:[%s5 + $0x8] sm:$0xff]
      %v346 = vld [vmem:[%s5 + $0x10] sm:$0xff]
      %v347 = vld [vmem:[%s5 + $0x18] sm:$0xff]
      %v348 = vld [vmem:[%s305] sm:$0xf]
      %v349 = vld [vmem:[%s305 + $0x4] sm:$0xf]
      %v350 = vld [vmem:[%s305 + $0x8] sm:$0xf]
      %v351 = vld [vmem:[%s305 + $0xc] sm:$0xf]
      %v352 = vld [vmem:[%s305 + $0x10] sm:$0xf]
      %v353 = vld [vmem:[%s305 + $0x14] sm:$0xf]
      %v354 = vld [vmem:[%s305 + $0x18] sm:$0xf]
      %v355 = vld [vmem:[%s305 + $0x1c] sm:$0xf]
      %v356 = vld [vmem:[%s305 + $0x20] sm:$0xf]
      %v357 = vld [vmem:[%s305 + $0x24] sm:$0xf]
      %v358 = vld [vmem:[%s305 + $0x28] sm:$0xf]
      %v359 = vld [vmem:[%s305 + $0x2c] sm:$0xf]
      %v360 = vld [vmem:[%s305 + $0x30] sm:$0xf]
      %v361 = vld [vmem:[%s305 + $0x34] sm:$0xf]
      %v362 = vld [vmem:[%s305 + $0x38] sm:$0xf]
      %v363 = vld [vmem:[%s305 + $0x3c] sm:$0xf]
      %v364 = vld [vmem:[%s305 + $0x40] sm:$0xf]
      %v365 = vld [vmem:[%s305 + $0x44] sm:$0xf]
      %v366 = vld [vmem:[%s305 + $0x48] sm:$0xf]
      %v367 = vld [vmem:[%s305 + $0x4c] sm:$0xf]
      %v368 = vld [vmem:[%s305 + $0x50] sm:$0xf]
      %v369 = vld [vmem:[%s305 + $0x54] sm:$0xf]
      %v370 = vld [vmem:[%s305 + $0x58] sm:$0xf]
      %v371 = vld [vmem:[%s305 + $0x5c] sm:$0xf]
      %v372 = vld [vmem:[%s305 + $0x60] sm:$0xf]
      %v373 = vld [vmem:[%s305 + $0x64] sm:$0xf]
      %v374 = vld [vmem:[%s305 + $0x68] sm:$0xf]
      %v375 = vld [vmem:[%s305 + $0x6c] sm:$0xf]
      %v376 = vld [vmem:[%s305 + $0x70] sm:$0xf]
      %v377 = vld [vmem:[%s305 + $0x74] sm:$0xf]
      %v378 = vld [vmem:[%s305 + $0x78] sm:$0xf]
      %v379 = vld [vmem:[%s305 + $0x7c] sm:$0xf]
      %v380 = vld [vmem:[%s305 + $0x80] sm:$0xf]
      %v381 = vld [vmem:[%s305 + $0x84] sm:$0xf]
      %v382 = vld [vmem:[%s305 + $0x88] sm:$0xf]
      %v383 = vld [vmem:[%s305 + $0x8c] sm:$0xf]
      %v384 = vld [vmem:[%s305 + $0x90] sm:$0xf]
      %v385 = vld [vmem:[%s305 + $0x94] sm:$0xf]
      %v386 = vld [vmem:[%s305 + $0x98] sm:$0xf]
      %v387 = vld [vmem:[%s305 + $0x9c] sm:$0xf]
      %v388 = vld [vmem:[%s305 + $0xa0] sm:$0xf]
      %v389 = vld [vmem:[%s305 + $0xa4] sm:$0xf]
      %v390 = vld [vmem:[%s305 + $0xa8] sm:$0xf]
      %v391 = vld [vmem:[%s305 + $0xac] sm:$0xf]
      %v392 = vld [vmem:[%s305 + $0xb0] sm:$0xf]
      %v393 = vld [vmem:[%s305 + $0xb4] sm:$0xf]
      %v394 = vld [vmem:[%s305 + $0xb8] sm:$0xf]
      %v395 = vld [vmem:[%s305 + $0xbc] sm:$0xf]
      %v396 = vld [vmem:[%s305 + $0xc0] sm:$0xf]
      %v397 = vld [vmem:[%s305 + $0xc4] sm:$0xf]
      %v406 = vunpack.c.l.b16 %v336
      %v407 = vunpack.c.h.b16 %v336
      %v408 = vunpack.c.l.b16 %v337
      %v409 = vunpack.c.h.b16 %v337
      %v410 = vunpack.c.l.b16 %v338
      %v411 = vunpack.c.h.b16 %v338
      %v412 = vunpack.c.l.b16 %v339
      %v413 = vunpack.c.h.b16 %v339
      %v414 = vunpack.c.l.b16 %v340
      %v415 = vunpack.c.h.b16 %v340
      %v416 = vunpack.c.l.b16 %v341
      %v417 = vunpack.c.h.b16 %v341
      %v418 = vunpack.c.l.b16 %v342
      %v419 = vunpack.c.h.b16 %v342
      %v420 = vunpack.c.l.b16 %v343
      %v421 = vunpack.c.h.b16 %v343
      %v422 = vpack.c.b16 %v410, %v406
      %v423 = vpack.c.b16 %v411, %v407
      %v424 = vpack.c.b16 %v412, %v408
      %v425 = vpack.c.b16 %v413, %v409
      %v426 = vpack.c.b16 %v418, %v414
      %v427 = vpack.c.b16 %v419, %v415
      %v428 = vpack.c.b16 %v420, %v416
      %v429 = vpack.c.b16 %v421, %v417
      %v486 = vunpack.c.l.b16 %v348
      %v487 = vunpack.c.l.b16 %v349
      %v488 = vunpack.c.l.b16 %v350
      %v489 = vunpack.c.l.b16 %v351
      %v490 = vunpack.c.l.b16 %v352
      %v491 = vunpack.c.l.b16 %v353
      %v492 = vunpack.c.l.b16 %v354
      %v493 = vunpack.c.l.b16 %v355
      %v494 = vunpack.c.l.b16 %v356
      %v495 = vunpack.c.l.b16 %v357
      %v496 = vunpack.c.l.b16 %v358
      %v497 = vunpack.c.l.b16 %v359
      %v498 = vunpack.c.l.b16 %v360
      %v499 = vunpack.c.l.b16 %v361
      %v500 = vunpack.c.l.b16 %v362
      %v501 = vunpack.c.l.b16 %v363
      %v502 = vunpack.c.l.b16 %v364
      %v503 = vunpack.c.l.b16 %v365
      %v504 = vunpack.c.l.b16 %v366
      %v505 = vunpack.c.l.b16 %v367
      %v506 = vunpack.c.l.b16 %v368
      %v507 = vunpack.c.l.b16 %v369
      %v508 = vunpack.c.l.b16 %v370
      %v509 = vunpack.c.l.b16 %v371
      %v510 = vunpack.c.l.b16 %v372
      %v511 = vunpack.c.l.b16 %v373
      %v512 = vunpack.c.l.b16 %v374
      %v513 = vunpack.c.l.b16 %v375
      %v514 = vunpack.c.l.b16 %v376
      %v515 = vunpack.c.l.b16 %v377
      %v516 = vunpack.c.l.b16 %v378
      %v517 = vunpack.c.l.b16 %v379
      %v518 = vunpack.c.l.b16 %v380
      %v519 = vunpack.c.l.b16 %v381
      %v520 = vunpack.c.l.b16 %v382
      %v521 = vunpack.c.l.b16 %v383
      %v522 = vunpack.c.l.b16 %v384
      %v523 = vunpack.c.l.b16 %v385
      %v524 = vunpack.c.l.b16 %v386
      %v525 = vunpack.c.l.b16 %v387
      %v526 = vunpack.c.l.b16 %v388
      %v527 = vunpack.c.l.b16 %v389
      %v528 = vunpack.c.l.b16 %v390
      %v529 = vunpack.c.l.b16 %v391
      %v530 = vunpack.c.l.b16 %v392
      %v531 = vunpack.c.l.b16 %v393
      %v532 = vunpack.c.l.b16 %v394
      %v533 = vunpack.c.l.b16 %v395
      %v534 = vunpack.c.l.b16 %v396
      %v535 = vunpack.c.l.b16 %v397
      %v536 = vpack.c.b16 %v487, %v486
      %v537 = vpack.c.b16 %v489, %v488
      %v538 = vpack.c.b16 %v491, %v490
      %v539 = vpack.c.b16 %v493, %v492
      %v540 = vpack.c.b16 %v495, %v494
      %v541 = vpack.c.b16 %v497, %v496
      %v542 = vpack.c.b16 %v499, %v498
      %v543 = vpack.c.b16 %v501, %v500
      %v544 = vpack.c.b16 %v503, %v502
      %v545 = vpack.c.b16 %v505, %v504
      %v546 = vpack.c.b16 %v507, %v506
      %v547 = vpack.c.b16 %v509, %v508
      %v548 = vpack.c.b16 %v511, %v510
      %v549 = vpack.c.b16 %v513, %v512
      %v550 = vpack.c.b16 %v515, %v514
      %v551 = vpack.c.b16 %v517, %v516
      %v552 = vpack.c.b16 %v519, %v518
      %v553 = vpack.c.b16 %v521, %v520
      %v554 = vpack.c.b16 %v523, %v522
      %v555 = vpack.c.b16 %v525, %v524
      %v556 = vpack.c.b16 %v527, %v526
      %v557 = vpack.c.b16 %v529, %v528
      %v558 = vpack.c.b16 %v531, %v530
      %v559 = vpack.c.b16 %v533, %v532
      %v560 = vpack.c.b16 %v535, %v534
      %vm586 = vcmask 130048
      %v588 = vsel %vm586, %v425, 0
      %v591 = vsel %vm586, %v429, 0
      %593 = vmatprep.subr.bf16.mxu0 0
      %594 = vmatpush1.bf16.msra.mxu0 %v536
      %595 = vmatprep.subr.bf16.mxu0 0
      %596 = vmatpush1.bf16.msra.mxu0 %v537
      %597 = vmatprep.subr.bf16.mxu0 0
      %598 = vmatpush1.bf16.msra.mxu0 %v538
      %599 = vmatprep.subr.bf16.mxu0 0
      %600 = vmatpush1.bf16.msra.mxu0 %v539
      %601 = vmatprep.subr.bf16.mxu0 0
      %602 = vmatpush1.bf16.msra.mxu0 %v540
      %603 = vmatprep.subr.bf16.mxu0 0
      %604 = vmatpush1.bf16.msra.mxu0 %v541
      %605 = vmatprep.subr.bf16.mxu0 0
      %606 = vmatpush1.bf16.msra.mxu0 %v542
      %607 = vmatprep.subr.bf16.mxu0 0
      %608 = vmatpush1.bf16.msra.mxu0 %v543
      %609 = vmatprep.subr.bf16.mxu0 0
      %610 = vmatpush1.bf16.msra.mxu0 %v544
      %611 = vmatprep.subr.bf16.mxu0 0
      %612 = vmatpush1.bf16.msra.mxu0 %v545
      %613 = vmatprep.subr.bf16.mxu0 0
      %614 = vmatpush1.bf16.msra.mxu0 %v546
      %615 = vmatprep.subr.bf16.mxu0 0
      %616 = vmatpush1.bf16.msra.mxu0 %v547
      %617 = vmatprep.subr.bf16.mxu0 0
      %618 = vmatpush1.bf16.msra.mxu0 %v548
      %619 = vmatprep.subr.bf16.mxu0 0
      %620 = vmatpush1.bf16.msra.mxu0 %v549
      %621 = vmatprep.subr.bf16.mxu0 0
      %622 = vmatpush1.bf16.msra.mxu0 %v550
      %623 = vmatprep.subr.bf16.mxu0 0
      %624 = vmatpush1.bf16.msra.mxu0 %v551
      %625 = vmatprep.mubr.bf16.mxu0 %v423
      %626 = vmatmul.mubr.bf16.gmra.mrb[0].mxu0 %v422
      %v627 = vpop.f32.mrb[0].mxu0
      %v628 = vadd.f32 0.0, %v627
      %v629 = vpop.f32.mrb[0].mxu0
      %v630 = vpop.f32.mrb[0].mxu0
      %v631 = vadd.f32 0.0, %v630
      %v632 = vpop.f32.mrb[0].mxu0
      %633 = vmatprep.mubr.bf16.mxu0 %v427
      %634 = vmatmul.mubr.bf16.gmra.mrb[0].mxu0 %v426
      %v635 = vpop.f32.mrb[0].mxu0
      %v636 = vadd.f32 0.0, %v635
      %v637 = vpop.f32.mrb[0].mxu0
      %v638 = vpop.f32.mrb[0].mxu0
      %v639 = vadd.f32 0.0, %v638
      %v640 = vpop.f32.mrb[0].mxu0
      %641 = vdwg.mxu0
      %642 = vmatprep.subr.bf16.mxu0 0
      %643 = vmatpush1.bf16.msra.mxu0 %v552
      %644 = vmatprep.subr.bf16.mxu0 0
      %645 = vmatpush1.bf16.msra.mxu0 %v553
      %646 = vmatprep.subr.bf16.mxu0 0
      %647 = vmatpush1.bf16.msra.mxu0 %v554
      %648 = vmatprep.subr.bf16.mxu0 0
      %649 = vmatpush1.bf16.msra.mxu0 %v555
      %650 = vmatprep.subr.bf16.mxu0 0
      %651 = vmatpush1.bf16.msra.mxu0 %v556
      %652 = vmatprep.subr.bf16.mxu0 0
      %653 = vmatpush1.bf16.msra.mxu0 %v557
      %654 = vmatprep.subr.bf16.mxu0 0
      %655 = vmatpush1.bf16.msra.mxu0 %v558
      %656 = vmatprep.subr.bf16.mxu0 0
      %657 = vmatpush1.bf16.msra.mxu0 %v559
      %658 = vmatprep.subr.bf16.mxu0 0
      %659 = vmatpush1.bf16.msra.mxu0 %v560
      %660 = vmatprep.subr.bf16.mxu0 0
      %661 = vmatpush1.bf16.msra.mxu0 0
      %662 = vmatprep.subr.bf16.mxu0 0
      %663 = vmatpush1.bf16.msra.mxu0 0
      %664 = vmatprep.subr.bf16.mxu0 0
      %665 = vmatpush1.bf16.msra.mxu0 0
      %666 = vmatprep.subr.bf16.mxu0 0
      %667 = vmatpush1.bf16.msra.mxu0 0
      %668 = vmatprep.subr.bf16.mxu0 0
      %669 = vmatpush1.bf16.msra.mxu0 0
      %670 = vmatprep.subr.bf16.mxu0 0
      %671 = vmatpush1.bf16.msra.mxu0 0
      %672 = vmatprep.subr.bf16.mxu0 0
      %673 = vmatpush1.bf16.msra.mxu0 0
      %674 = vmatprep.mubr.bf16.mxu0 %v588
      %675 = vmatmul.mubr.bf16.gmra.mrb[0].mxu0 %v424
      %v676 = vpop.f32.mrb[0].mxu0
      %v677 = vadd.f32 %v628, %v676
      %v678 = vpop.f32.mrb[0].mxu0
      %v679 = vpop.f32.mrb[0].mxu0
      %v680 = vadd.f32 %v631, %v679
      %v681 = vpop.f32.mrb[0].mxu0
      %682 = vmatprep.mubr.bf16.mxu0 %v591
      %683 = vmatmul.mubr.bf16.gmra.mrb[0].mxu0 %v428
      %v684 = vpop.f32.mrb[0].mxu0
      %v685 = vadd.f32 %v636, %v684
      %v686 = vpop.f32.mrb[0].mxu0
      %v687 = vpop.f32.mrb[0].mxu0
      %v688 = vadd.f32 %v639, %v687
      %v689 = vpop.f32.mrb[0].mxu0
      %690 = vdwg.mxu0
      %v691 = vld [vmem:[%s312] sm:$0xf]
      %v692 = vld [vmem:[%s312 + $0x4] sm:$0xf]
      %v693 = vld [vmem:[%s312 + $0x8] sm:$0xf]
      %v694 = vld [vmem:[%s312 + $0xc] sm:$0xf]
      %v695 = vld [vmem:[%s312 + $0x10] sm:$0xf]
      %v696 = vld [vmem:[%s312 + $0x14] sm:$0xf]
      %v697 = vld [vmem:[%s312 + $0x18] sm:$0xf]
      %v698 = vld [vmem:[%s312 + $0x1c] sm:$0xf]
      %v699 = vld [vmem:[%s312 + $0x20] sm:$0xf]
      %v700 = vld [vmem:[%s312 + $0x24] sm:$0xf]
      %v701 = vld [vmem:[%s312 + $0x28] sm:$0xf]
      %v702 = vld [vmem:[%s312 + $0x2c] sm:$0xf]
      %v703 = vld [vmem:[%s312 + $0x30] sm:$0xf]
      %v704 = vld [vmem:[%s312 + $0x34] sm:$0xf]
      %v705 = vld [vmem:[%s312 + $0x38] sm:$0xf]
      %v706 = vld [vmem:[%s312 + $0x3c] sm:$0xf]
      %v707 = vld [vmem:[%s312 + $0x40] sm:$0xf]
      %v708 = vld [vmem:[%s312 + $0x44] sm:$0xf]
      %v709 = vld [vmem:[%s312 + $0x48] sm:$0xf]
      %v710 = vld [vmem:[%s312 + $0x4c] sm:$0xf]
      %v711 = vld [vmem:[%s312 + $0x50] sm:$0xf]
      %v712 = vld [vmem:[%s312 + $0x54] sm:$0xf]
      %v713 = vld [vmem:[%s312 + $0x58] sm:$0xf]
      %v714 = vld [vmem:[%s312 + $0x5c] sm:$0xf]
      %v715 = vld [vmem:[%s312 + $0x60] sm:$0xf]
      %v716 = vld [vmem:[%s312 + $0x64] sm:$0xf]
      %v717 = vld [vmem:[%s312 + $0x68] sm:$0xf]
      %v718 = vld [vmem:[%s312 + $0x6c] sm:$0xf]
      %v719 = vld [vmem:[%s312 + $0x70] sm:$0xf]
      %v720 = vld [vmem:[%s312 + $0x74] sm:$0xf]
      %v721 = vld [vmem:[%s312 + $0x78] sm:$0xf]
      %v722 = vld [vmem:[%s312 + $0x7c] sm:$0xf]
      %v723 = vld [vmem:[%s312 + $0x80] sm:$0xf]
      %v724 = vld [vmem:[%s312 + $0x84] sm:$0xf]
      %v725 = vld [vmem:[%s312 + $0x88] sm:$0xf]
      %v726 = vld [vmem:[%s312 + $0x8c] sm:$0xf]
      %v727 = vld [vmem:[%s312 + $0x90] sm:$0xf]
      %v728 = vld [vmem:[%s312 + $0x94] sm:$0xf]
      %v729 = vld [vmem:[%s312 + $0x98] sm:$0xf]
      %v730 = vld [vmem:[%s312 + $0x9c] sm:$0xf]
      %v731 = vld [vmem:[%s312 + $0xa0] sm:$0xf]
      %v732 = vld [vmem:[%s312 + $0xa4] sm:$0xf]
      %v733 = vld [vmem:[%s312 + $0xa8] sm:$0xf]
      %v734 = vld [vmem:[%s312 + $0xac] sm:$0xf]
      %v735 = vld [vmem:[%s312 + $0xb0] sm:$0xf]
      %v736 = vld [vmem:[%s312 + $0xb4] sm:$0xf]
      %v737 = vld [vmem:[%s312 + $0xb8] sm:$0xf]
      %v738 = vld [vmem:[%s312 + $0xbc] sm:$0xf]
      %v739 = vld [vmem:[%s312 + $0xc0] sm:$0xf]
      %v740 = vld [vmem:[%s312 + $0xc4] sm:$0xf]
      %v791 = vunpack.c.l.b16 %v691
      %v792 = vunpack.c.l.b16 %v692
      %v793 = vunpack.c.l.b16 %v693
      %v794 = vunpack.c.l.b16 %v694
      %v795 = vunpack.c.l.b16 %v695
      %v796 = vunpack.c.l.b16 %v696
      %v797 = vunpack.c.l.b16 %v697
      %v798 = vunpack.c.l.b16 %v698
      %v799 = vunpack.c.l.b16 %v699
      %v800 = vunpack.c.l.b16 %v700
      %v801 = vunpack.c.l.b16 %v701
      %v802 = vunpack.c.l.b16 %v702
      %v803 = vunpack.c.l.b16 %v703
      %v804 = vunpack.c.l.b16 %v704
      %v805 = vunpack.c.l.b16 %v705
      %v806 = vunpack.c.l.b16 %v706
      %v807 = vunpack.c.l.b16 %v707
      %v808 = vunpack.c.l.b16 %v708
      %v809 = vunpack.c.l.b16 %v709
      %v810 = vunpack.c.l.b16 %v710
      %v811 = vunpack.c.l.b16 %v711
      %v812 = vunpack.c.l.b16 %v712
      %v813 = vunpack.c.l.b16 %v713
      %v814 = vunpack.c.l.b16 %v714
      %v815 = vunpack.c.l.b16 %v715
      %v816 = vunpack.c.l.b16 %v716
      %v817 = vunpack.c.l.b16 %v717
      %v818 = vunpack.c.l.b16 %v718
      %v819 = vunpack.c.l.b16 %v719
      %v820 = vunpack.c.l.b16 %v720
      %v821 = vunpack.c.l.b16 %v721
      %v822 = vunpack.c.l.b16 %v722
      %v823 = vunpack.c.l.b16 %v723
      %v824 = vunpack.c.l.b16 %v724
      %v825 = vunpack.c.l.b16 %v725
      %v826 = vunpack.c.l.b16 %v726
      %v827 = vunpack.c.l.b16 %v727
      %v828 = vunpack.c.l.b16 %v728
      %v829 = vunpack.c.l.b16 %v729
      %v830 = vunpack.c.l.b16 %v730
      %v831 = vunpack.c.l.b16 %v731
      %v832 = vunpack.c.l.b16 %v732
      %v833 = vunpack.c.l.b16 %v733
      %v834 = vunpack.c.l.b16 %v734
      %v835 = vunpack.c.l.b16 %v735
      %v836 = vunpack.c.l.b16 %v736
      %v837 = vunpack.c.l.b16 %v737
      %v838 = vunpack.c.l.b16 %v738
      %v839 = vunpack.c.l.b16 %v739
      %v840 = vunpack.c.l.b16 %v740
      %v841 = vpack.c.b16 %v792, %v791
      %v842 = vpack.c.b16 %v794, %v793
      %v843 = vpack.c.b16 %v796, %v795
      %v844 = vpack.c.b16 %v798, %v797
      %v845 = vpack.c.b16 %v800, %v799
      %v846 = vpack.c.b16 %v802, %v801
      %v847 = vpack.c.b16 %v804, %v803
      %v848 = vpack.c.b16 %v806, %v805
      %v849 = vpack.c.b16 %v808, %v807
      %v850 = vpack.c.b16 %v810, %v809
      %v851 = vpack.c.b16 %v812, %v811
      %v852 = vpack.c.b16 %v814, %v813
      %v853 = vpack.c.b16 %v816, %v815
      %v854 = vpack.c.b16 %v818, %v817
      %v855 = vpack.c.b16 %v820, %v819
      %v856 = vpack.c.b16 %v822, %v821
      %v857 = vpack.c.b16 %v824, %v823
      %v858 = vpack.c.b16 %v826, %v825
      %v859 = vpack.c.b16 %v828, %v827
      %v860 = vpack.c.b16 %v830, %v829
      %v861 = vpack.c.b16 %v832, %v831
      %v862 = vpack.c.b16 %v834, %v833
      %v863 = vpack.c.b16 %v836, %v835
      %v864 = vpack.c.b16 %v838, %v837
      %v865 = vpack.c.b16 %v840, %v839
      %891 = vmatprep.subr.bf16.mxu0 0
      %892 = vmatpush1.bf16.msra.mxu0 %v841
      %893 = vmatprep.subr.bf16.mxu0 0
      %894 = vmatpush1.bf16.msra.mxu0 %v842
      %895 = vmatprep.subr.bf16.mxu0 0
      %896 = vmatpush1.bf16.msra.mxu0 %v843
      %897 = vmatprep.subr.bf16.mxu0 0
      %898 = vmatpush1.bf16.msra.mxu0 %v844
      %899 = vmatprep.subr.bf16.mxu0 0
      %900 = vmatpush1.bf16.msra.mxu0 %v845
      %901 = vmatprep.subr.bf16.mxu0 0
      %902 = vmatpush1.bf16.msra.mxu0 %v846
      %903 = vmatprep.subr.bf16.mxu0 0
      %904 = vmatpush1.bf16.msra.mxu0 %v847
      %905 = vmatprep.subr.bf16.mxu0 0
      %906 = vmatpush1.bf16.msra.mxu0 %v848
      %907 = vmatprep.subr.bf16.mxu0 0
      %908 = vmatpush1.bf16.msra.mxu0 %v849
      %909 = vmatprep.subr.bf16.mxu0 0
      %910 = vmatpush1.bf16.msra.mxu0 %v850
      %911 = vmatprep.subr.bf16.mxu0 0
      %912 = vmatpush1.bf16.msra.mxu0 %v851
      %913 = vmatprep.subr.bf16.mxu0 0
      %914 = vmatpush1.bf16.msra.mxu0 %v852
      %915 = vmatprep.subr.bf16.mxu0 0
      %916 = vmatpush1.bf16.msra.mxu0 %v853
      %917 = vmatprep.subr.bf16.mxu0 0
      %918 = vmatpush1.bf16.msra.mxu0 %v854
      %919 = vmatprep.subr.bf16.mxu0 0
      %920 = vmatpush1.bf16.msra.mxu0 %v855
      %921 = vmatprep.subr.bf16.mxu0 0
      %922 = vmatpush1.bf16.msra.mxu0 %v856
      %923 = vmatprep.mubr.bf16.mxu0 %v423
      %924 = vmatmul.mubr.bf16.gmra.mrb[0].mxu0 %v422
      %v925 = vpop.f32.mrb[0].mxu0
      %v926 = vadd.f32 0.0, %v925
      %v927 = vpop.f32.mrb[0].mxu0
      %v928 = vpop.f32.mrb[0].mxu0
      %v929 = vadd.f32 0.0, %v928
      %v930 = vpop.f32.mrb[0].mxu0
      %931 = vmatprep.mubr.bf16.mxu0 %v427
      %932 = vmatmul.mubr.bf16.gmra.mrb[0].mxu0 %v426
      %v933 = vpop.f32.mrb[0].mxu0
      %v934 = vadd.f32 0.0, %v933
      %v935 = vpop.f32.mrb[0].mxu0
      %v936 = vpop.f32.mrb[0].mxu0
      %v937 = vadd.f32 0.0, %v936
      %v938 = vpop.f32.mrb[0].mxu0
      %939 = vdwg.mxu0
      %940 = vmatprep.subr.bf16.mxu0 0
      %941 = vmatpush1.bf16.msra.mxu0 %v857
      %942 = vmatprep.subr.bf16.mxu0 0
      %943 = vmatpush1.bf16.msra.mxu0 %v858
      %944 = vmatprep.subr.bf16.mxu0 0
      %945 = vmatpush1.bf16.msra.mxu0 %v859
      %946 = vmatprep.subr.bf16.mxu0 0
      %947 = vmatpush1.bf16.msra.mxu0 %v860
      %948 = vmatprep.subr.bf16.mxu0 0
      %949 = vmatpush1.bf16.msra.mxu0 %v861
      %950 = vmatprep.subr.bf16.mxu0 0
      %951 = vmatpush1.bf16.msra.mxu0 %v862
      %952 = vmatprep.subr.bf16.mxu0 0
      %953 = vmatpush1.bf16.msra.mxu0 %v863
      %954 = vmatprep.subr.bf16.mxu0 0
      %955 = vmatpush1.bf16.msra.mxu0 %v864
      %956 = vmatprep.subr.bf16.mxu0 0
      %957 = vmatpush1.bf16.msra.mxu0 %v865
      %958 = vmatprep.subr.bf16.mxu0 0
      %959 = vmatpush1.bf16.msra.mxu0 0
      %960 = vmatprep.subr.bf16.mxu0 0
      %961 = vmatpush1.bf16.msra.mxu0 0
      %962 = vmatprep.subr.bf16.mxu0 0
      %963 = vmatpush1.bf16.msra.mxu0 0
      %964 = vmatprep.subr.bf16.mxu0 0
      %965 = vmatpush1.bf16.msra.mxu0 0
      %966 = vmatprep.subr.bf16.mxu0 0
      %967 = vmatpush1.bf16.msra.mxu0 0
      %968 = vmatprep.subr.bf16.mxu0 0
      %969 = vmatpush1.bf16.msra.mxu0 0
      %970 = vmatprep.subr.bf16.mxu0 0
      %971 = vmatpush1.bf16.msra.mxu0 0
      %972 = vmatprep.mubr.bf16.mxu0 %v588
      %973 = vmatmul.mubr.bf16.gmra.mrb[0].mxu0 %v424
      %v974 = vpop.f32.mrb[0].mxu0
      %v975 = vadd.f32 %v926, %v974
      %v976 = vpop.f32.mrb[0].mxu0
      %v977 = vpop.f32.mrb[0].mxu0
      %v978 = vadd.f32 %v929, %v977
      %v979 = vpop.f32.mrb[0].mxu0
      %980 = vmatprep.mubr.bf16.mxu0 %v591
      %981 = vmatmul.mubr.bf16.gmra.mrb[0].mxu0 %v428
      %v982 = vpop.f32.mrb[0].mxu0
      %v983 = vadd.f32 %v934, %v982
      %v984 = vpop.f32.mrb[0].mxu0
      %v985 = vpop.f32.mrb[0].mxu0
      %v986 = vadd.f32 %v937, %v985
      %v987 = vpop.f32.mrb[0].mxu0
      %988 = vdwg.mxu0
      %v989 = vmax.f32 %v677, %v975
      %v990 = vmax.f32 %v680, %v978
      %v991 = vmax.f32 %v685, %v983
      %v992 = vmax.f32 %v688, %v986
      %v993 = vld [vmem:[%s319] sm:$0xf]
      %v994 = vld [vmem:[%s319 + $0x4] sm:$0xf]
      %v995 = vld [vmem:[%s319 + $0x8] sm:$0xf]
      %v996 = vld [vmem:[%s319 + $0xc] sm:$0xf]
      %v997 = vld [vmem:[%s319 + $0x10] sm:$0xf]
      %v998 = vld [vmem:[%s319 + $0x14] sm:$0xf]
      %v999 = vld [vmem:[%s319 + $0x18] sm:$0xf]
      %v1000 = vld [vmem:[%s319 + $0x1c] sm:$0xf]
      %v1001 = vld [vmem:[%s319 + $0x20] sm:$0xf]
      %v1002 = vld [vmem:[%s319 + $0x24] sm:$0xf]
      %v1003 = vld [vmem:[%s319 + $0x28] sm:$0xf]
      %v1004 = vld [vmem:[%s319 + $0x2c] sm:$0xf]
      %v1005 = vld [vmem:[%s319 + $0x30] sm:$0xf]
      %v1006 = vld [vmem:[%s319 + $0x34] sm:$0xf]
      %v1007 = vld [vmem:[%s319 + $0x38] sm:$0xf]
      %v1008 = vld [vmem:[%s319 + $0x3c] sm:$0xf]
      %v1009 = vld [vmem:[%s319 + $0x40] sm:$0xf]
      %v1010 = vld [vmem:[%s319 + $0x44] sm:$0xf]
      %v1011 = vld [vmem:[%s319 + $0x48] sm:$0xf]
      %v1012 = vld [vmem:[%s319 + $0x4c] sm:$0xf]
      %v1013 = vld [vmem:[%s319 + $0x50] sm:$0xf]
      %v1014 = vld [vmem:[%s319 + $0x54] sm:$0xf]
      %v1015 = vld [vmem:[%s319 + $0x58] sm:$0xf]
      %v1016 = vld [vmem:[%s319 + $0x5c] sm:$0xf]
      %v1017 = vld [vmem:[%s319 + $0x60] sm:$0xf]
      %v1018 = vld [vmem:[%s319 + $0x64] sm:$0xf]
      %v1019 = vld [vmem:[%s319 + $0x68] sm:$0xf]
      %v1020 = vld [vmem:[%s319 + $0x6c] sm:$0xf]
      %v1021 = vld [vmem:[%s319 + $0x70] sm:$0xf]
      %v1022 = vld [vmem:[%s319 + $0x74] sm:$0xf]
      %v1023 = vld [vmem:[%s319 + $0x78] sm:$0xf]
      %v1024 = vld [vmem:[%s319 + $0x7c] sm:$0xf]
      %v1025 = vld [vmem:[%s319 + $0x80] sm:$0xf]
      %v1026 = vld [vmem:[%s319 + $0x84] sm:$0xf]
      %v1027 = vld [vmem:[%s319 + $0x88] sm:$0xf]
      %v1028 = vld [vmem:[%s319 + $0x8c] sm:$0xf]
      %v1029 = vld [vmem:[%s319 + $0x90] sm:$0xf]
      %v1030 = vld [vmem:[%s319 + $0x94] sm:$0xf]
      %v1031 = vld [vmem:[%s319 + $0x98] sm:$0xf]
      %v1032 = vld [vmem:[%s319 + $0x9c] sm:$0xf]
      %v1033 = vld [vmem:[%s319 + $0xa0] sm:$0xf]
      %v1034 = vld [vmem:[%s319 + $0xa4] sm:$0xf]
      %v1035 = vld [vmem:[%s319 + $0xa8] sm:$0xf]
      %v1036 = vld [vmem:[%s319 + $0xac] sm:$0xf]
      %v1037 = vld [vmem:[%s319 + $0xb0] sm:$0xf]
      %v1038 = vld [vmem:[%s319 + $0xb4] sm:$0xf]
      %v1039 = vld [vmem:[%s319 + $0xb8] sm:$0xf]
      %v1040 = vld [vmem:[%s319 + $0xbc] sm:$0xf]
      %v1041 = vld [vmem:[%s319 + $0xc0] sm:$0xf]
      %v1042 = vld [vmem:[%s319 + $0xc4] sm:$0xf]
      %v1093 = vunpack.c.l.b16 %v993
      %v1094 = vunpack.c.l.b16 %v994
      %v1095 = vunpack.c.l.b16 %v995
      %v1096 = vunpack.c.l.b16 %v996
      %v1097 = vunpack.c.l.b16 %v997
      %v1098 = vunpack.c.l.b16 %v998
      %v1099 = vunpack.c.l.b16 %v999
      %v1100 = vunpack.c.l.b16 %v1000
      %v1101 = vunpack.c.l.b16 %v1001
      %v1102 = vunpack.c.l.b16 %v1002
      %v1103 = vunpack.c.l.b16 %v1003
      %v1104 = vunpack.c.l.b16 %v1004
      %v1105 = vunpack.c.l.b16 %v1005
      %v1106 = vunpack.c.l.b16 %v1006
      %v1107 = vunpack.c.l.b16 %v1007
      %v1108 = vunpack.c.l.b16 %v1008
      %v1109 = vunpack.c.l.b16 %v1009
      %v1110 = vunpack.c.l.b16 %v1010
      %v1111 = vunpack.c.l.b16 %v1011
      %v1112 = vunpack.c.l.b16 %v1012
      %v1113 = vunpack.c.l.b16 %v1013
      %v1114 = vunpack.c.l.b16 %v1014
      %v1115 = vunpack.c.l.b16 %v1015
      %v1116 = vunpack.c.l.b16 %v1016
      %v1117 = vunpack.c.l.b16 %v1017
      %v1118 = vunpack.c.l.b16 %v1018
      %v1119 = vunpack.c.l.b16 %v1019
      %v1120 = vunpack.c.l.b16 %v1020
      %v1121 = vunpack.c.l.b16 %v1021
      %v1122 = vunpack.c.l.b16 %v1022
      %v1123 = vunpack.c.l.b16 %v1023
      %v1124 = vunpack.c.l.b16 %v1024
      %v1125 = vunpack.c.l.b16 %v1025
      %v1126 = vunpack.c.l.b16 %v1026
      %v1127 = vunpack.c.l.b16 %v1027
      %v1128 = vunpack.c.l.b16 %v1028
      %v1129 = vunpack.c.l.b16 %v1029
      %v1130 = vunpack.c.l.b16 %v1030
      %v1131 = vunpack.c.l.b16 %v1031
      %v1132 = vunpack.c.l.b16 %v1032
      %v1133 = vunpack.c.l.b16 %v1033
      %v1134 = vunpack.c.l.b16 %v1034
      %v1135 = vunpack.c.l.b16 %v1035
      %v1136 = vunpack.c.l.b16 %v1036
      %v1137 = vunpack.c.l.b16 %v1037
      %v1138 = vunpack.c.l.b16 %v1038
      %v1139 = vunpack.c.l.b16 %v1039
      %v1140 = vunpack.c.l.b16 %v1040
      %v1141 = vunpack.c.l.b16 %v1041
      %v1142 = vunpack.c.l.b16 %v1042
      %v1143 = vpack.c.b16 %v1094, %v1093
      %v1144 = vpack.c.b16 %v1096, %v1095
      %v1145 = vpack.c.b16 %v1098, %v1097
      %v1146 = vpack.c.b16 %v1100, %v1099
      %v1147 = vpack.c.b16 %v1102, %v1101
      %v1148 = vpack.c.b16 %v1104, %v1103
      %v1149 = vpack.c.b16 %v1106, %v1105
      %v1150 = vpack.c.b16 %v1108, %v1107
      %v1151 = vpack.c.b16 %v1110, %v1109
      %v1152 = vpack.c.b16 %v1112, %v1111
      %v1153 = vpack.c.b16 %v1114, %v1113
      %v1154 = vpack.c.b16 %v1116, %v1115
      %v1155 = vpack.c.b16 %v1118, %v1117
      %v1156 = vpack.c.b16 %v1120, %v1119
      %v1157 = vpack.c.b16 %v1122, %v1121
      %v1158 = vpack.c.b16 %v1124, %v1123
      %v1159 = vpack.c.b16 %v1126, %v1125
      %v1160 = vpack.c.b16 %v1128, %v1127
      %v1161 = vpack.c.b16 %v1130, %v1129
      %v1162 = vpack.c.b16 %v1132, %v1131
      %v1163 = vpack.c.b16 %v1134, %v1133
      %v1164 = vpack.c.b16 %v1136, %v1135
      %v1165 = vpack.c.b16 %v1138, %v1137
      %v1166 = vpack.c.b16 %v1140, %v1139
      %v1167 = vpack.c.b16 %v1142, %v1141
      %1193 = vmatprep.subr.bf16.mxu0 0
      %1194 = vmatpush1.bf16.msra.mxu0 %v1143
      %1195 = vmatprep.subr.bf16.mxu0 0
      %1196 = vmatpush1.bf16.msra.mxu0 %v1144
      %1197 = vmatprep.subr.bf16.mxu0 0
      %1198 = vmatpush1.bf16.msra.mxu0 %v1145
      %1199 = vmatprep.subr.bf16.mxu0 0
      %1200 = vmatpush1.bf16.msra.mxu0 %v1146
      %1201 = vmatprep.subr.bf16.mxu0 0
      %1202 = vmatpush1.bf16.msra.mxu0 %v1147
      %1203 = vmatprep.subr.bf16.mxu0 0
      %1204 = vmatpush1.bf16.msra.mxu0 %v1148
      %1205 = vmatprep.subr.bf16.mxu0 0
      %1206 = vmatpush1.bf16.msra.mxu0 %v1149
      %1207 = vmatprep.subr.bf16.mxu0 0
      %1208 = vmatpush1.bf16.msra.mxu0 %v1150
      %1209 = vmatprep.subr.bf16.mxu0 0
      %1210 = vmatpush1.bf16.msra.mxu0 %v1151
      %1211 = vmatprep.subr.bf16.mxu0 0
      %1212 = vmatpush1.bf16.msra.mxu0 %v1152
      %1213 = vmatprep.subr.bf16.mxu0 0
      %1214 = vmatpush1.bf16.msra.mxu0 %v1153
      %1215 = vmatprep.subr.bf16.mxu0 0
      %1216 = vmatpush1.bf16.msra.mxu0 %v1154
      %1217 = vmatprep.subr.bf16.mxu0 0
      %1218 = vmatpush1.bf16.msra.mxu0 %v1155
      %1219 = vmatprep.subr.bf16.mxu0 0
      %1220 = vmatpush1.bf16.msra.mxu0 %v1156
      %1221 = vmatprep.subr.bf16.mxu0 0
      %1222 = vmatpush1.bf16.msra.mxu0 %v1157
      %1223 = vmatprep.subr.bf16.mxu0 0
      %1224 = vmatpush1.bf16.msra.mxu0 %v1158
      %1225 = vmatprep.mubr.bf16.mxu0 %v423
      %1226 = vmatmul.mubr.bf16.gmra.mrb[0].mxu0 %v422
      %v1227 = vpop.f32.mrb[0].mxu0
      %v1228 = vadd.f32 0.0, %v1227
      %v1229 = vpop.f32.mrb[0].mxu0
      %v1230 = vpop.f32.mrb[0].mxu0
      %v1231 = vadd.f32 0.0, %v1230
      %v1232 = vpop.f32.mrb[0].mxu0
      %1233 = vmatprep.mubr.bf16.mxu0 %v427
      %1234 = vmatmul.mubr.bf16.gmra.mrb[0].mxu0 %v426
      %v1235 = vpop.f32.mrb[0].mxu0
      %v1236 = vadd.f32 0.0, %v1235
      %v1237 = vpop.f32.mrb[0].mxu0
      %v1238 = vpop.f32.mrb[0].mxu0
      %v1239 = vadd.f32 0.0, %v1238
      %v1240 = vpop.f32.mrb[0].mxu0
      %1241 = vdwg.mxu0
      %1242 = vmatprep.subr.bf16.mxu0 0
      %1243 = vmatpush1.bf16.msra.mxu0 %v1159
      %1244 = vmatprep.subr.bf16.mxu0 0
      %1245 = vmatpush1.bf16.msra.mxu0 %v1160
      %1246 = vmatprep.subr.bf16.mxu0 0
      %1247 = vmatpush1.bf16.msra.mxu0 %v1161
      %1248 = vmatprep.subr.bf16.mxu0 0
      %1249 = vmatpush1.bf16.msra.mxu0 %v1162
      %1250 = vmatprep.subr.bf16.mxu0 0
      %1251 = vmatpush1.bf16.msra.mxu0 %v1163
      %1252 = vmatprep.subr.bf16.mxu0 0
      %1253 = vmatpush1.bf16.msra.mxu0 %v1164
      %1254 = vmatprep.subr.bf16.mxu0 0
      %1255 = vmatpush1.bf16.msra.mxu0 %v1165
      %1256 = vmatprep.subr.bf16.mxu0 0
      %1257 = vmatpush1.bf16.msra.mxu0 %v1166
      %1258 = vmatprep.subr.bf16.mxu0 0
      %1259 = vmatpush1.bf16.msra.mxu0 %v1167
      %1260 = vmatprep.subr.bf16.mxu0 0
      %1261 = vmatpush1.bf16.msra.mxu0 0
      %1262 = vmatprep.subr.bf16.mxu0 0
      %1263 = vmatpush1.bf16.msra.mxu0 0
      %1264 = vmatprep.subr.bf16.mxu0 0
      %1265 = vmatpush1.bf16.msra.mxu0 0
      %1266 = vmatprep.subr.bf16.mxu0 0
      %1267 = vmatpush1.bf16.msra.mxu0 0
      %1268 = vmatprep.subr.bf16.mxu0 0
      %1269 = vmatpush1.bf16.msra.mxu0 0
      %1270 = vmatprep.subr.bf16.mxu0 0
      %1271 = vmatpush1.bf16.msra.mxu0 0
      %1272 = vmatprep.subr.bf16.mxu0 0
      %1273 = vmatpush1.bf16.msra.mxu0 0
      %1274 = vmatprep.mubr.bf16.mxu0 %v588
      %1275 = vmatmul.mubr.bf16.gmra.mrb[0].mxu0 %v424
      %v1276 = vpop.f32.mrb[0].mxu0
      %v1277 = vadd.f32 %v1228, %v1276
      %v1278 = vpop.f32.mrb[0].mxu0
      %v1279 = vpop.f32.mrb[0].mxu0
      %v1280 = vadd.f32 %v1231, %v1279
      %v1281 = vpop.f32.mrb[0].mxu0
      %1282 = vmatprep.mubr.bf16.mxu0 %v591
      %1283 = vmatmul.mubr.bf16.gmra.mrb[0].mxu0 %v428
      %v1284 = vpop.f32.mrb[0].mxu0
      %v1285 = vadd.f32 %v1236, %v1284
      %v1286 = vpop.f32.mrb[0].mxu0
      %v1287 = vpop.f32.mrb[0].mxu0
      %v1288 = vadd.f32 %v1239, %v1287
      %v1289 = vpop.f32.mrb[0].mxu0
      %1290 = vdwg.mxu0
      %v1291 = vld [vmem:[%s326] sm:$0xf]
      %v1292 = vld [vmem:[%s326 + $0x4] sm:$0xf]
      %v1293 = vld [vmem:[%s326 + $0x8] sm:$0xf]
      %v1294 = vld [vmem:[%s326 + $0xc] sm:$0xf]
      %v1295 = vld [vmem:[%s326 + $0x10] sm:$0xf]
      %v1296 = vld [vmem:[%s326 + $0x14] sm:$0xf]
      %v1297 = vld [vmem:[%s326 + $0x18] sm:$0xf]
      %v1298 = vld [vmem:[%s326 + $0x1c] sm:$0xf]
      %v1299 = vld [vmem:[%s326 + $0x20] sm:$0xf]
      %v1300 = vld [vmem:[%s326 + $0x24] sm:$0xf]
      %v1301 = vld [vmem:[%s326 + $0x28] sm:$0xf]
      %v1302 = vld [vmem:[%s326 + $0x2c] sm:$0xf]
      %v1303 = vld [vmem:[%s326 + $0x30] sm:$0xf]
      %v1304 = vld [vmem:[%s326 + $0x34] sm:$0xf]
      %v1305 = vld [vmem:[%s326 + $0x38] sm:$0xf]
      %v1306 = vld [vmem:[%s326 + $0x3c] sm:$0xf]
      %v1307 = vld [vmem:[%s326 + $0x40] sm:$0xf]
      %v1308 = vld [vmem:[%s326 + $0x44] sm:$0xf]
      %v1309 = vld [vmem:[%s326 + $0x48] sm:$0xf]
      %v1310 = vld [vmem:[%s326 + $0x4c] sm:$0xf]
      %v1311 = vld [vmem:[%s326 + $0x50] sm:$0xf]
      %v1312 = vld [vmem:[%s326 + $0x54] sm:$0xf]
      %v1313 = vld [vmem:[%s326 + $0x58] sm:$0xf]
      %v1314 = vld [vmem:[%s326 + $0x5c] sm:$0xf]
      %v1315 = vld [vmem:[%s326 + $0x60] sm:$0xf]
      %v1316 = vld [vmem:[%s326 + $0x64] sm:$0xf]
      %v1317 = vld [vmem:[%s326 + $0x68] sm:$0xf]
      %v1318 = vld [vmem:[%s326 + $0x6c] sm:$0xf]
      %v1319 = vld [vmem:[%s326 + $0x70] sm:$0xf]
      %v1320 = vld [vmem:[%s326 + $0x74] sm:$0xf]
      %v1321 = vld [vmem:[%s326 + $0x78] sm:$0xf]
      %v1322 = vld [vmem:[%s326 + $0x7c] sm:$0xf]
      %v1323 = vld [vmem:[%s326 + $0x80] sm:$0xf]
      %v1324 = vld [vmem:[%s326 + $0x84] sm:$0xf]
      %v1325 = vld [vmem:[%s326 + $0x88] sm:$0xf]
      %v1326 = vld [vmem:[%s326 + $0x8c] sm:$0xf]
      %v1327 = vld [vmem:[%s326 + $0x90] sm:$0xf]
      %v1328 = vld [vmem:[%s326 + $0x94] sm:$0xf]
      %v1329 = vld [vmem:[%s326 + $0x98] sm:$0xf]
      %v1330 = vld [vmem:[%s326 + $0x9c] sm:$0xf]
      %v1331 = vld [vmem:[%s326 + $0xa0] sm:$0xf]
      %v1332 = vld [vmem:[%s326 + $0xa4] sm:$0xf]
      %v1333 = vld [vmem:[%s326 + $0xa8] sm:$0xf]
      %v1334 = vld [vmem:[%s326 + $0xac] sm:$0xf]
      %v1335 = vld [vmem:[%s326 + $0xb0] sm:$0xf]
      %v1336 = vld [vmem:[%s326 + $0xb4] sm:$0xf]
      %v1337 = vld [vmem:[%s326 + $0xb8] sm:$0xf]
      %v1338 = vld [vmem:[%s326 + $0xbc] sm:$0xf]
      %v1339 = vld [vmem:[%s326 + $0xc0] sm:$0xf]
      %v1340 = vld [vmem:[%s326 + $0xc4] sm:$0xf]
      %v1391 = vunpack.c.l.b16 %v1291
      %v1392 = vunpack.c.l.b16 %v1292
      %v1393 = vunpack.c.l.b16 %v1293
      %v1394 = vunpack.c.l.b16 %v1294
      %v1395 = vunpack.c.l.b16 %v1295
      %v1396 = vunpack.c.l.b16 %v1296
      %v1397 = vunpack.c.l.b16 %v1297
      %v1398 = vunpack.c.l.b16 %v1298
      %v1399 = vunpack.c.l.b16 %v1299
      %v1400 = vunpack.c.l.b16 %v1300
      %v1401 = vunpack.c.l.b16 %v1301
      %v1402 = vunpack.c.l.b16 %v1302
      %v1403 = vunpack.c.l.b16 %v1303
      %v1404 = vunpack.c.l.b16 %v1304
      %v1405 = vunpack.c.l.b16 %v1305
      %v1406 = vunpack.c.l.b16 %v1306
      %v1407 = vunpack.c.l.b16 %v1307
      %v1408 = vunpack.c.l.b16 %v1308
      %v1409 = vunpack.c.l.b16 %v1309
      %v1410 = vunpack.c.l.b16 %v1310
      %v1411 = vunpack.c.l.b16 %v1311
      %v1412 = vunpack.c.l.b16 %v1312
      %v1413 = vunpack.c.l.b16 %v1313
      %v1414 = vunpack.c.l.b16 %v1314
      %v1415 = vunpack.c.l.b16 %v1315
      %v1416 = vunpack.c.l.b16 %v1316
      %v1417 = vunpack.c.l.b16 %v1317
      %v1418 = vunpack.c.l.b16 %v1318
      %v1419 = vunpack.c.l.b16 %v1319
      %v1420 = vunpack.c.l.b16 %v1320
      %v1421 = vunpack.c.l.b16 %v1321
      %v1422 = vunpack.c.l.b16 %v1322
      %v1423 = vunpack.c.l.b16 %v1323
      %v1424 = vunpack.c.l.b16 %v1324
      %v1425 = vunpack.c.l.b16 %v1325
      %v1426 = vunpack.c.l.b16 %v1326
      %v1427 = vunpack.c.l.b16 %v1327
      %v1428 = vunpack.c.l.b16 %v1328
      %v1429 = vunpack.c.l.b16 %v1329
      %v1430 = vunpack.c.l.b16 %v1330
      %v1431 = vunpack.c.l.b16 %v1331
      %v1432 = vunpack.c.l.b16 %v1332
      %v1433 = vunpack.c.l.b16 %v1333
      %v1434 = vunpack.c.l.b16 %v1334
      %v1435 = vunpack.c.l.b16 %v1335
      %v1436 = vunpack.c.l.b16 %v1336
      %v1437 = vunpack.c.l.b16 %v1337
      %v1438 = vunpack.c.l.b16 %v1338
      %v1439 = vunpack.c.l.b16 %v1339
      %v1440 = vunpack.c.l.b16 %v1340
      %v1441 = vpack.c.b16 %v1392, %v1391
      %v1442 = vpack.c.b16 %v1394, %v1393
      %v1443 = vpack.c.b16 %v1396, %v1395
      %v1444 = vpack.c.b16 %v1398, %v1397
      %v1445 = vpack.c.b16 %v1400, %v1399
      %v1446 = vpack.c.b16 %v1402, %v1401
      %v1447 = vpack.c.b16 %v1404, %v1403
      %v1448 = vpack.c.b16 %v1406, %v1405
      %v1449 = vpack.c.b16 %v1408, %v1407
      %v1450 = vpack.c.b16 %v1410, %v1409
      %v1451 = vpack.c.b16 %v1412, %v1411
      %v1452 = vpack.c.b16 %v1414, %v1413
      %v1453 = vpack.c.b16 %v1416, %v1415
      %v1454 = vpack.c.b16 %v1418, %v1417
      %v1455 = vpack.c.b16 %v1420, %v1419
      %v1456 = vpack.c.b16 %v1422, %v1421
      %v1457 = vpack.c.b16 %v1424, %v1423
      %v1458 = vpack.c.b16 %v1426, %v1425
      %v1459 = vpack.c.b16 %v1428, %v1427
      %v1460 = vpack.c.b16 %v1430, %v1429
      %v1461 = vpack.c.b16 %v1432, %v1431
      %v1462 = vpack.c.b16 %v1434, %v1433
      %v1463 = vpack.c.b16 %v1436, %v1435
      %v1464 = vpack.c.b16 %v1438, %v1437
      %v1465 = vpack.c.b16 %v1440, %v1439
      %1491 = vmatprep.subr.bf16.mxu0 0
      %1492 = vmatpush1.bf16.msra.mxu0 %v1441
      %1493 = vmatprep.subr.bf16.mxu0 0
      %1494 = vmatpush1.bf16.msra.mxu0 %v1442
      %1495 = vmatprep.subr.bf16.mxu0 0
      %1496 = vmatpush1.bf16.msra.mxu0 %v1443
      %1497 = vmatprep.subr.bf16.mxu0 0
      %1498 = vmatpush1.bf16.msra.mxu0 %v1444
      %1499 = vmatprep.subr.bf16.mxu0 0
      %1500 = vmatpush1.bf16.msra.mxu0 %v1445
      %1501 = vmatprep.subr.bf16.mxu0 0
      %1502 = vmatpush1.bf16.msra.mxu0 %v1446
      %1503 = vmatprep.subr.bf16.mxu0 0
      %1504 = vmatpush1.bf16.msra.mxu0 %v1447
      %1505 = vmatprep.subr.bf16.mxu0 0
      %1506 = vmatpush1.bf16.msra.mxu0 %v1448
      %1507 = vmatprep.subr.bf16.mxu0 0
      %1508 = vmatpush1.bf16.msra.mxu0 %v1449
      %1509 = vmatprep.subr.bf16.mxu0 0
      %1510 = vmatpush1.bf16.msra.mxu0 %v1450
      %1511 = vmatprep.subr.bf16.mxu0 0
      %1512 = vmatpush1.bf16.msra.mxu0 %v1451
      %1513 = vmatprep.subr.bf16.mxu0 0
      %1514 = vmatpush1.bf16.msra.mxu0 %v1452
      %1515 = vmatprep.subr.bf16.mxu0 0
      %1516 = vmatpush1.bf16.msra.mxu0 %v1453
      %1517 = vmatprep.subr.bf16.mxu0 0
      %1518 = vmatpush1.bf16.msra.mxu0 %v1454
      %1519 = vmatprep.subr.bf16.mxu0 0
      %1520 = vmatpush1.bf16.msra.mxu0 %v1455
      %1521 = vmatprep.subr.bf16.mxu0 0
      %1522 = vmatpush1.bf16.msra.mxu0 %v1456
      %1523 = vmatprep.mubr.bf16.mxu0 %v423
      %1524 = vmatmul.mubr.bf16.gmra.mrb[0].mxu0 %v422
      %v1525 = vpop.f32.mrb[0].mxu0
      %v1526 = vadd.f32 0.0, %v1525
      %v1527 = vpop.f32.mrb[0].mxu0
      %v1528 = vpop.f32.mrb[0].mxu0
      %v1529 = vadd.f32 0.0, %v1528
      %v1530 = vpop.f32.mrb[0].mxu0
      %1531 = vmatprep.mubr.bf16.mxu0 %v427
      %1532 = vmatmul.mubr.bf16.gmra.mrb[0].mxu0 %v426
      %v1533 = vpop.f32.mrb[0].mxu0
      %v1534 = vadd.f32 0.0, %v1533
      %v1535 = vpop.f32.mrb[0].mxu0
      %v1536 = vpop.f32.mrb[0].mxu0
      %v1537 = vadd.f32 0.0, %v1536
      %v1538 = vpop.f32.mrb[0].mxu0
      %1539 = vdwg.mxu0
      %1540 = vmatprep.subr.bf16.mxu0 0
      %1541 = vmatpush1.bf16.msra.mxu0 %v1457
      %1542 = vmatprep.subr.bf16.mxu0 0
      %1543 = vmatpush1.bf16.msra.mxu0 %v1458
      %1544 = vmatprep.subr.bf16.mxu0 0
      %1545 = vmatpush1.bf16.msra.mxu0 %v1459
      %1546 = vmatprep.subr.bf16.mxu0 0
      %1547 = vmatpush1.bf16.msra.mxu0 %v1460
      %1548 = vmatprep.subr.bf16.mxu0 0
      %1549 = vmatpush1.bf16.msra.mxu0 %v1461
      %1550 = vmatprep.subr.bf16.mxu0 0
      %1551 = vmatpush1.bf16.msra.mxu0 %v1462
      %1552 = vmatprep.subr.bf16.mxu0 0
      %1553 = vmatpush1.bf16.msra.mxu0 %v1463
      %1554 = vmatprep.subr.bf16.mxu0 0
      %1555 = vmatpush1.bf16.msra.mxu0 %v1464
      %1556 = vmatprep.subr.bf16.mxu0 0
      %1557 = vmatpush1.bf16.msra.mxu0 %v1465
      %1558 = vmatprep.subr.bf16.mxu0 0
      %1559 = vmatpush1.bf16.msra.mxu0 0
      %1560 = vmatprep.subr.bf16.mxu0 0
      %1561 = vmatpush1.bf16.msra.mxu0 0
      %1562 = vmatprep.subr.bf16.mxu0 0
      %1563 = vmatpush1.bf16.msra.mxu0 0
      %1564 = vmatprep.subr.bf16.mxu0 0
      %1565 = vmatpush1.bf16.msra.mxu0 0
      %1566 = vmatprep.subr.bf16.mxu0 0
      %1567 = vmatpush1.bf16.msra.mxu0 0
      %1568 = vmatprep.subr.bf16.mxu0 0
      %1569 = vmatpush1.bf16.msra.mxu0 0
      %1570 = vmatprep.subr.bf16.mxu0 0
      %1571 = vmatpush1.bf16.msra.mxu0 0
      %1572 = vmatprep.mubr.bf16.mxu0 %v588
      %1573 = vmatmul.mubr.bf16.gmra.mrb[0].mxu0 %v424
      %v1574 = vpop.f32.mrb[0].mxu0
      %v1575 = vadd.f32 %v1526, %v1574
      %v1576 = vpop.f32.mrb[0].mxu0
      %v1577 = vpop.f32.mrb[0].mxu0
      %v1578 = vadd.f32 %v1529, %v1577
      %v1579 = vpop.f32.mrb[0].mxu0
      %1580 = vmatprep.mubr.bf16.mxu0 %v591
      %1581 = vmatmul.mubr.bf16.gmra.mrb[0].mxu0 %v428
      %v1582 = vpop.f32.mrb[0].mxu0
      %v1583 = vadd.f32 %v1534, %v1582
      %v1584 = vpop.f32.mrb[0].mxu0
      %v1585 = vpop.f32.mrb[0].mxu0
      %v1586 = vadd.f32 %v1537, %v1585
      %v1587 = vpop.f32.mrb[0].mxu0
      %1588 = vdwg.mxu0
      %v1589 = vmax.f32 %v1277, %v1575
      %v1590 = vmax.f32 %v1280, %v1578
      %v1591 = vmax.f32 %v1285, %v1583
      %v1592 = vmax.f32 %v1288, %v1586
      %v1593 = vmax.f32 %v989, %v1589
      %v1594 = vmax.f32 %v990, %v1590
      %v1595 = vmax.f32 %v991, %v1591
      %v1596 = vmax.f32 %v992, %v1592
      %1598 = vset.pattern.permute.xlu0 0
      %1599 = vperm.xlu0 %1598, %v344
      %v1600 = vpop.permute.xlu0 %1599
      %1603 = vset.pattern.permute.xlu0 0
      %1604 = vperm.xlu0 %1603, %v345
      %v1605 = vpop.permute.xlu0 %1604
      %1608 = vset.pattern.permute.xlu0 0
      %1609 = vperm.xlu0 %1608, %v346
      %v1610 = vpop.permute.xlu0 %1609
      %1613 = vset.pattern.permute.xlu0 0
      %1614 = vperm.xlu0 %1613, %v347
      %v1615 = vpop.permute.xlu0 %1614
      %v1617 = vadd.f32 %v1593, %v1600
      %v1618 = vadd.f32 %v1594, %v1605
      %v1619 = vadd.f32 %v1595, %v1610
      %v1620 = vadd.f32 %v1596, %v1615
      %v1621 = vtanh.pop %v1617
      %v1622 = vtanh.pop %v1618
      %v1623 = vtanh.pop %v1619
      %v1624 = vtanh.pop %v1620
      %vm1625 = vcmask 203776
      %1626 = vst.msk [vmem:[%s333] sm:$0xff] %vm1625, %v1621
      %1627 = vst.msk [vmem:[%s333 + $0x8] sm:$0xff] %vm1625, %v1622
      %1628 = vst.msk [vmem:[%s333 + $0x10] sm:$0xff] %vm1625, %v1623
      %1629 = vst.msk [vmem:[%s333 + $0x18] sm:$0xff] %vm1625, %v1624
      %s1630 = scalar_lea.vmem %s305, 200
      %v1631 = vld [vmem:[%s1630] sm:$0xf]
      %v1632 = vld [vmem:[%s1630 + $0x4] sm:$0xf]
      %v1633 = vld [vmem:[%s1630 + $0x8] sm:$0xf]
      %v1634 = vld [vmem:[%s1630 + $0xc] sm:$0xf]
      %v1635 = vld [vmem:[%s1630 + $0x10] sm:$0xf]
      %v1636 = vld [vmem:[%s1630 + $0x14] sm:$0xf]
      %v1637 = vld [vmem:[%s1630 + $0x18] sm:$0xf]
      %v1638 = vld [vmem:[%s1630 + $0x1c] sm:$0xf]
      %v1639 = vld [vmem:[%s1630 + $0x20] sm:$0xf]
      %v1640 = vld [vmem:[%s1630 + $0x24] sm:$0xf]
      %v1641 = vld [vmem:[%s1630 + $0x28] sm:$0xf]
      %v1642 = vld [vmem:[%s1630 + $0x2c] sm:$0xf]
      %v1643 = vld [vmem:[%s1630 + $0x30] sm:$0xf]
      %v1644 = vld [vmem:[%s1630 + $0x34] sm:$0xf]
      %v1645 = vld [vmem:[%s1630 + $0x38] sm:$0xf]
      %v1646 = vld [vmem:[%s1630 + $0x3c] sm:$0xf]
      %v1647 = vld [vmem:[%s1630 + $0x40] sm:$0xf]
      %v1648 = vld [vmem:[%s1630 + $0x44] sm:$0xf]
      %v1649 = vld [vmem:[%s1630 + $0x48] sm:$0xf]
      %v1650 = vld [vmem:[%s1630 + $0x4c] sm:$0xf]
      %v1651 = vld [vmem:[%s1630 + $0x50] sm:$0xf]
      %v1652 = vld [vmem:[%s1630 + $0x54] sm:$0xf]
      %v1653 = vld [vmem:[%s1630 + $0x58] sm:$0xf]
      %v1654 = vld [vmem:[%s1630 + $0x5c] sm:$0xf]
      %v1655 = vld [vmem:[%s1630 + $0x60] sm:$0xf]
      %v1656 = vld [vmem:[%s1630 + $0x64] sm:$0xf]
      %v1657 = vld [vmem:[%s1630 + $0x68] sm:$0xf]
      %v1658 = vld [vmem:[%s1630 + $0x6c] sm:$0xf]
      %v1659 = vld [vmem:[%s1630 + $0x70] sm:$0xf]
      %v1660 = vld [vmem:[%s1630 + $0x74] sm:$0xf]
      %v1661 = vld [vmem:[%s1630 + $0x78] sm:$0xf]
      %v1662 = vld [vmem:[%s1630 + $0x7c] sm:$0xf]
      %v1663 = vld [vmem:[%s1630 + $0x80] sm:$0xf]
      %v1664 = vld [vmem:[%s1630 + $0x84] sm:$0xf]
      %v1665 = vld [vmem:[%s1630 + $0x88] sm:$0xf]
      %v1666 = vld [vmem:[%s1630 + $0x8c] sm:$0xf]
      %v1667 = vld [vmem:[%s1630 + $0x90] sm:$0xf]
      %v1668 = vld [vmem:[%s1630 + $0x94] sm:$0xf]
      %v1669 = vld [vmem:[%s1630 + $0x98] sm:$0xf]
      %v1670 = vld [vmem:[%s1630 + $0x9c] sm:$0xf]
      %v1671 = vld [vmem:[%s1630 + $0xa0] sm:$0xf]
      %v1672 = vld [vmem:[%s1630 + $0xa4] sm:$0xf]
      %v1673 = vld [vmem:[%s1630 + $0xa8] sm:$0xf]
      %v1674 = vld [vmem:[%s1630 + $0xac] sm:$0xf]
      %v1675 = vld [vmem:[%s1630 + $0xb0] sm:$0xf]
      %v1676 = vld [vmem:[%s1630 + $0xb4] sm:$0xf]
      %v1677 = vld [vmem:[%s1630 + $0xb8] sm:$0xf]
      %v1678 = vld [vmem:[%s1630 + $0xbc] sm:$0xf]
      %v1679 = vld [vmem:[%s1630 + $0xc0] sm:$0xf]
      %v1680 = vld [vmem:[%s1630 + $0xc4] sm:$0xf]
      %v1731 = vunpack.c.l.b16 %v1631
      %v1732 = vunpack.c.l.b16 %v1632
      %v1733 = vunpack.c.l.b16 %v1633
      %v1734 = vunpack.c.l.b16 %v1634
      %v1735 = vunpack.c.l.b16 %v1635
      %v1736 = vunpack.c.l.b16 %v1636
      %v1737 = vunpack.c.l.b16 %v1637
      %v1738 = vunpack.c.l.b16 %v1638
      %v1739 = vunpack.c.l.b16 %v1639
      %v1740 = vunpack.c.l.b16 %v1640
      %v1741 = vunpack.c.l.b16 %v1641
      %v1742 = vunpack.c.l.b16 %v1642
      %v1743 = vunpack.c.l.b16 %v1643
      %v1744 = vunpack.c.l.b16 %v1644
      %v1745 = vunpack.c.l.b16 %v1645
      %v1746 = vunpack.c.l.b16 %v1646
      %v1747 = vunpack.c.l.b16 %v1647
      %v1748 = vunpack.c.l.b16 %v1648
      %v1749 = vunpack.c.l.b16 %v1649
      %v1750 = vunpack.c.l.b16 %v1650
      %v1751 = vunpack.c.l.b16 %v1651
      %v1752 = vunpack.c.l.b16 %v1652
      %v1753 = vunpack.c.l.b16 %v1653
      %v1754 = vunpack.c.l.b16 %v1654
      %v1755 = vunpack.c.l.b16 %v1655
      %v1756 = vunpack.c.l.b16 %v1656
      %v1757 = vunpack.c.l.b16 %v1657
      %v1758 = vunpack.c.l.b16 %v1658
      %v1759 = vunpack.c.l.b16 %v1659
      %v1760 = vunpack.c.l.b16 %v1660
      %v1761 = vunpack.c.l.b16 %v1661
      %v1762 = vunpack.c.l.b16 %v1662
      %v1763 = vunpack.c.l.b16 %v1663
      %v1764 = vunpack.c.l.b16 %v1664
      %v1765 = vunpack.c.l.b16 %v1665
      %v1766 = vunpack.c.l.b16 %v1666
      %v1767 = vunpack.c.l.b16 %v1667
      %v1768 = vunpack.c.l.b16 %v1668
      %v1769 = vunpack.c.l.b16 %v1669
      %v1770 = vunpack.c.l.b16 %v1670
      %v1771 = vunpack.c.l.b16 %v1671
      %v1772 = vunpack.c.l.b16 %v1672
      %v1773 = vunpack.c.l.b16 %v1673
      %v1774 = vunpack.c.l.b16 %v1674
      %v1775 = vunpack.c.l.b16 %v1675
      %v1776 = vunpack.c.l.b16 %v1676
      %v1777 = vunpack.c.l.b16 %v1677
      %v1778 = vunpack.c.l.b16 %v1678
      %v1779 = vunpack.c.l.b16 %v1679
      %v1780 = vunpack.c.l.b16 %v1680
      %v1781 = vpack.c.b16 %v1732, %v1731
      %v1782 = vpack.c.b16 %v1734, %v1733
      %v1783 = vpack.c.b16 %v1736, %v1735
      %v1784 = vpack.c.b16 %v1738, %v1737
      %v1785 = vpack.c.b16 %v1740, %v1739
      %v1786 = vpack.c.b16 %v1742, %v1741
      %v1787 = vpack.c.b16 %v1744, %v1743
      %v1788 = vpack.c.b16 %v1746, %v1745
      %v1789 = vpack.c.b16 %v1748, %v1747
      %v1790 = vpack.c.b16 %v1750, %v1749
      %v1791 = vpack.c.b16 %v1752, %v1751
      %v1792 = vpack.c.b16 %v1754, %v1753
      %v1793 = vpack.c.b16 %v1756, %v1755
      %v1794 = vpack.c.b16 %v1758, %v1757
      %v1795 = vpack.c.b16 %v1760, %v1759
      %v1796 = vpack.c.b16 %v1762, %v1761
      %v1797 = vpack.c.b16 %v1764, %v1763
      %v1798 = vpack.c.b16 %v1766, %v1765
      %v1799 = vpack.c.b16 %v1768, %v1767
      %v1800 = vpack.c.b16 %v1770, %v1769
      %v1801 = vpack.c.b16 %v1772, %v1771
      %v1802 = vpack.c.b16 %v1774, %v1773
      %v1803 = vpack.c.b16 %v1776, %v1775
      %v1804 = vpack.c.b16 %v1778, %v1777
      %v1805 = vpack.c.b16 %v1780, %v1779
      %1831 = vmatprep.subr.bf16.mxu0 0
      %1832 = vmatpush1.bf16.msra.mxu0 %v1781
      %1833 = vmatprep.subr.bf16.mxu0 0
      %1834 = vmatpush1.bf16.msra.mxu0 %v1782
      %1835 = vmatprep.subr.bf16.mxu0 0
      %1836 = vmatpush1.bf16.msra.mxu0 %v1783
      %1837 = vmatprep.subr.bf16.mxu0 0
      %1838 = vmatpush1.bf16.msra.mxu0 %v1784
      %1839 = vmatprep.subr.bf16.mxu0 0
      %1840 = vmatpush1.bf16.msra.mxu0 %v1785
      %1841 = vmatprep.subr.bf16.mxu0 0
      %1842 = vmatpush1.bf16.msra.mxu0 %v1786
      %1843 = vmatprep.subr.bf16.mxu0 0
      %1844 = vmatpush1.bf16.msra.mxu0 %v1787
      %1845 = vmatprep.subr.bf16.mxu0 0
      %1846 = vmatpush1.bf16.msra.mxu0 %v1788
      %1847 = vmatprep.subr.bf16.mxu0 0
      %1848 = vmatpush1.bf16.msra.mxu0 %v1789
      %1849 = vmatprep.subr.bf16.mxu0 0
      %1850 = vmatpush1.bf16.msra.mxu0 %v1790
      %1851 = vmatprep.subr.bf16.mxu0 0
      %1852 = vmatpush1.bf16.msra.mxu0 %v1791
      %1853 = vmatprep.subr.bf16.mxu0 0
      %1854 = vmatpush1.bf16.msra.mxu0 %v1792
      %1855 = vmatprep.subr.bf16.mxu0 0
      %1856 = vmatpush1.bf16.msra.mxu0 %v1793
      %1857 = vmatprep.subr.bf16.mxu0 0
      %1858 = vmatpush1.bf16.msra.mxu0 %v1794
      %1859 = vmatprep.subr.bf16.mxu0 0
      %1860 = vmatpush1.bf16.msra.mxu0 %v1795
      %1861 = vmatprep.subr.bf16.mxu0 0
      %1862 = vmatpush1.bf16.msra.mxu0 %v1796
      %1863 = vmatprep.mubr.bf16.mxu0 %v423
      %1864 = vmatmul.mubr.bf16.gmra.mrb[0].mxu0 %v422
      %v1865 = vpop.f32.mrb[0].mxu0
      %v1866 = vadd.f32 0.0, %v1865
      %v1867 = vpop.f32.mrb[0].mxu0
      %v1868 = vpop.f32.mrb[0].mxu0
      %v1869 = vadd.f32 0.0, %v1868
      %v1870 = vpop.f32.mrb[0].mxu0
      %1871 = vmatprep.mubr.bf16.mxu0 %v427
      %1872 = vmatmul.mubr.bf16.gmra.mrb[0].mxu0 %v426
      %v1873 = vpop.f32.mrb[0].mxu0
      %v1874 = vadd.f32 0.0, %v1873
      %v1875 = vpop.f32.mrb[0].mxu0
      %v1876 = vpop.f32.mrb[0].mxu0
      %v1877 = vadd.f32 0.0, %v1876
      %v1878 = vpop.f32.mrb[0].mxu0
      %1879 = vdwg.mxu0
      %1880 = vmatprep.subr.bf16.mxu0 0
      %1881 = vmatpush1.bf16.msra.mxu0 %v1797
      %1882 = vmatprep.subr.bf16.mxu0 0
      %1883 = vmatpush1.bf16.msra.mxu0 %v1798
      %1884 = vmatprep.subr.bf16.mxu0 0
      %1885 = vmatpush1.bf16.msra.mxu0 %v1799
      %1886 = vmatprep.subr.bf16.mxu0 0
      %1887 = vmatpush1.bf16.msra.mxu0 %v1800
      %1888 = vmatprep.subr.bf16.mxu0 0
      %1889 = vmatpush1.bf16.msra.mxu0 %v1801
      %1890 = vmatprep.subr.bf16.mxu0 0
      %1891 = vmatpush1.bf16.msra.mxu0 %v1802
      %1892 = vmatprep.subr.bf16.mxu0 0
      %1893 = vmatpush1.bf16.msra.mxu0 %v1803
      %1894 = vmatprep.subr.bf16.mxu0 0
      %1895 = vmatpush1.bf16.msra.mxu0 %v1804
      %1896 = vmatprep.subr.bf16.mxu0 0
      %1897 = vmatpush1.bf16.msra.mxu0 %v1805
      %1898 = vmatprep.subr.bf16.mxu0 0
      %1899 = vmatpush1.bf16.msra.mxu0 0
      %1900 = vmatprep.subr.bf16.mxu0 0
      %1901 = vmatpush1.bf16.msra.mxu0 0
      %1902 = vmatprep.subr.bf16.mxu0 0
      %1903 = vmatpush1.bf16.msra.mxu0 0
      %1904 = vmatprep.subr.bf16.mxu0 0
      %1905 = vmatpush1.bf16.msra.mxu0 0
      %1906 = vmatprep.subr.bf16.mxu0 0
      %1907 = vmatpush1.bf16.msra.mxu0 0
      %1908 = vmatprep.subr.bf16.mxu0 0
      %1909 = vmatpush1.bf16.msra.mxu0 0
      %1910 = vmatprep.subr.bf16.mxu0 0
      %1911 = vmatpush1.bf16.msra.mxu0 0
      %1912 = vmatprep.mubr.bf16.mxu0 %v588
      %1913 = vmatmul.mubr.bf16.gmra.mrb[0].mxu0 %v424
      %v1914 = vpop.f32.mrb[0].mxu0
      %v1915 = vadd.f32 %v1866, %v1914
      %v1916 = vpop.f32.mrb[0].mxu0
      %v1917 = vpop.f32.mrb[0].mxu0
      %v1918 = vadd.f32 %v1869, %v1917
      %v1919 = vpop.f32.mrb[0].mxu0
      %1920 = vmatprep.mubr.bf16.mxu0 %v591
      %1921 = vmatmul.mubr.bf16.gmra.mrb[0].mxu0 %v428
      %v1922 = vpop.f32.mrb[0].mxu0
      %v1923 = vadd.f32 %v1874, %v1922
      %v1924 = vpop.f32.mrb[0].mxu0
      %v1925 = vpop.f32.mrb[0].mxu0
      %v1926 = vadd.f32 %v1877, %v1925
      %v1927 = vpop.f32.mrb[0].mxu0
      %1928 = vdwg.mxu0
      %s1929 = scalar_lea.vmem %s312, 200
      %v1930 = vld [vmem:[%s1929] sm:$0xf]
      %v1931 = vld [vmem:[%s1929 + $0x4] sm:$0xf]
      %v1932 = vld [vmem:[%s1929 + $0x8] sm:$0xf]
      %v1933 = vld [vmem:[%s1929 + $0xc] sm:$0xf]
      %v1934 = vld [vmem:[%s1929 + $0x10] sm:$0xf]
      %v1935 = vld [vmem:[%s1929 + $0x14] sm:$0xf]
      %v1936 = vld [vmem:[%s1929 + $0x18] sm:$0xf]
      %v1937 = vld [vmem:[%s1929 + $0x1c] sm:$0xf]
      %v1938 = vld [vmem:[%s1929 + $0x20] sm:$0xf]
      %v1939 = vld [vmem:[%s1929 + $0x24] sm:$0xf]
      %v1940 = vld [vmem:[%s1929 + $0x28] sm:$0xf]
      %v1941 = vld [vmem:[%s1929 + $0x2c] sm:$0xf]
      %v1942 = vld [vmem:[%s1929 + $0x30] sm:$0xf]
      %v1943 = vld [vmem:[%s1929 + $0x34] sm:$0xf]
      %v1944 = vld [vmem:[%s1929 + $0x38] sm:$0xf]
      %v1945 = vld [vmem:[%s1929 + $0x3c] sm:$0xf]
      %v1946 = vld [vmem:[%s1929 + $0x40] sm:$0xf]
      %v1947 = vld [vmem:[%s1929 + $0x44] sm:$0xf]
      %v1948 = vld [vmem:[%s1929 + $0x48] sm:$0xf]
      %v1949 = vld [vmem:[%s1929 + $0x4c] sm:$0xf]
      %v1950 = vld [vmem:[%s1929 + $0x50] sm:$0xf]
      %v1951 = vld [vmem:[%s1929 + $0x54] sm:$0xf]
      %v1952 = vld [vmem:[%s1929 + $0x58] sm:$0xf]
      %v1953 = vld [vmem:[%s1929 + $0x5c] sm:$0xf]
      %v1954 = vld [vmem:[%s1929 + $0x60] sm:$0xf]
      %v1955 = vld [vmem:[%s1929 + $0x64] sm:$0xf]
      %v1956 = vld [vmem:[%s1929 + $0x68] sm:$0xf]
      %v1957 = vld [vmem:[%s1929 + $0x6c] sm:$0xf]
      %v1958 = vld [vmem:[%s1929 + $0x70] sm:$0xf]
      %v1959 = vld [vmem:[%s1929 + $0x74] sm:$0xf]
      %v1960 = vld [vmem:[%s1929 + $0x78] sm:$0xf]
      %v1961 = vld [vmem:[%s1929 + $0x7c] sm:$0xf]
      %v1962 = vld [vmem:[%s1929 + $0x80] sm:$0xf]
      %v1963 = vld [vmem:[%s1929 + $0x84] sm:$0xf]
      %v1964 = vld [vmem:[%s1929 + $0x88] sm:$0xf]
      %v1965 = vld [vmem:[%s1929 + $0x8c] sm:$0xf]
      %v1966 = vld [vmem:[%s1929 + $0x90] sm:$0xf]
      %v1967 = vld [vmem:[%s1929 + $0x94] sm:$0xf]
      %v1968 = vld [vmem:[%s1929 + $0x98] sm:$0xf]
      %v1969 = vld [vmem:[%s1929 + $0x9c] sm:$0xf]
      %v1970 = vld [vmem:[%s1929 + $0xa0] sm:$0xf]
      %v1971 = vld [vmem:[%s1929 + $0xa4] sm:$0xf]
      %v1972 = vld [vmem:[%s1929 + $0xa8] sm:$0xf]
      %v1973 = vld [vmem:[%s1929 + $0xac] sm:$0xf]
      %v1974 = vld [vmem:[%s1929 + $0xb0] sm:$0xf]
      %v1975 = vld [vmem:[%s1929 + $0xb4] sm:$0xf]
      %v1976 = vld [vmem:[%s1929 + $0xb8] sm:$0xf]
      %v1977 = vld [vmem:[%s1929 + $0xbc] sm:$0xf]
      %v1978 = vld [vmem:[%s1929 + $0xc0] sm:$0xf]
      %v1979 = vld [vmem:[%s1929 + $0xc4] sm:$0xf]
      %v2030 = vunpack.c.l.b16 %v1930
      %v2031 = vunpack.c.l.b16 %v1931
      %v2032 = vunpack.c.l.b16 %v1932
      %v2033 = vunpack.c.l.b16 %v1933
      %v2034 = vunpack.c.l.b16 %v1934
      %v2035 = vunpack.c.l.b16 %v1935
      %v2036 = vunpack.c.l.b16 %v1936
      %v2037 = vunpack.c.l.b16 %v1937
      %v2038 = vunpack.c.l.b16 %v1938
      %v2039 = vunpack.c.l.b16 %v1939
      %v2040 = vunpack.c.l.b16 %v1940
      %v2041 = vunpack.c.l.b16 %v1941
      %v2042 = vunpack.c.l.b16 %v1942
      %v2043 = vunpack.c.l.b16 %v1943
      %v2044 = vunpack.c.l.b16 %v1944
      %v2045 = vunpack.c.l.b16 %v1945
      %v2046 = vunpack.c.l.b16 %v1946
      %v2047 = vunpack.c.l.b16 %v1947
      %v2048 = vunpack.c.l.b16 %v1948
      %v2049 = vunpack.c.l.b16 %v1949
      %v2050 = vunpack.c.l.b16 %v1950
      %v2051 = vunpack.c.l.b16 %v1951
      %v2052 = vunpack.c.l.b16 %v1952
      %v2053 = vunpack.c.l.b16 %v1953
      %v2054 = vunpack.c.l.b16 %v1954
      %v2055 = vunpack.c.l.b16 %v1955
      %v2056 = vunpack.c.l.b16 %v1956
      %v2057 = vunpack.c.l.b16 %v1957
      %v2058 = vunpack.c.l.b16 %v1958
      %v2059 = vunpack.c.l.b16 %v1959
      %v2060 = vunpack.c.l.b16 %v1960
      %v2061 = vunpack.c.l.b16 %v1961
      %v2062 = vunpack.c.l.b16 %v1962
      %v2063 = vunpack.c.l.b16 %v1963
      %v2064 = vunpack.c.l.b16 %v1964
      %v2065 = vunpack.c.l.b16 %v1965
      %v2066 = vunpack.c.l.b16 %v1966
      %v2067 = vunpack.c.l.b16 %v1967
      %v2068 = vunpack.c.l.b16 %v1968
      %v2069 = vunpack.c.l.b16 %v1969
      %v2070 = vunpack.c.l.b16 %v1970
      %v2071 = vunpack.c.l.b16 %v1971
      %v2072 = vunpack.c.l.b16 %v1972
      %v2073 = vunpack.c.l.b16 %v1973
      %v2074 = vunpack.c.l.b16 %v1974
      %v2075 = vunpack.c.l.b16 %v1975
      %v2076 = vunpack.c.l.b16 %v1976
      %v2077 = vunpack.c.l.b16 %v1977
      %v2078 = vunpack.c.l.b16 %v1978
      %v2079 = vunpack.c.l.b16 %v1979
      %v2080 = vpack.c.b16 %v2031, %v2030
      %v2081 = vpack.c.b16 %v2033, %v2032
      %v2082 = vpack.c.b16 %v2035, %v2034
      %v2083 = vpack.c.b16 %v2037, %v2036
      %v2084 = vpack.c.b16 %v2039, %v2038
      %v2085 = vpack.c.b16 %v2041, %v2040
      %v2086 = vpack.c.b16 %v2043, %v2042
      %v2087 = vpack.c.b16 %v2045, %v2044
      %v2088 = vpack.c.b16 %v2047, %v2046
      %v2089 = vpack.c.b16 %v2049, %v2048
      %v2090 = vpack.c.b16 %v2051, %v2050
      %v2091 = vpack.c.b16 %v2053, %v2052
      %v2092 = vpack.c.b16 %v2055, %v2054
      %v2093 = vpack.c.b16 %v2057, %v2056
      %v2094 = vpack.c.b16 %v2059, %v2058
      %v2095 = vpack.c.b16 %v2061, %v2060
      %v2096 = vpack.c.b16 %v2063, %v2062
      %v2097 = vpack.c.b16 %v2065, %v2064
      %v2098 = vpack.c.b16 %v2067, %v2066
      %v2099 = vpack.c.b16 %v2069, %v2068
      %v2100 = vpack.c.b16 %v2071, %v2070
      %v2101 = vpack.c.b16 %v2073, %v2072
      %v2102 = vpack.c.b16 %v2075, %v2074
      %v2103 = vpack.c.b16 %v2077, %v2076
      %v2104 = vpack.c.b16 %v2079, %v2078
      %2130 = vmatprep.subr.bf16.mxu0 0
      %2131 = vmatpush1.bf16.msra.mxu0 %v2080
      %2132 = vmatprep.subr.bf16.mxu0 0
      %2133 = vmatpush1.bf16.msra.mxu0 %v2081
      %2134 = vmatprep.subr.bf16.mxu0 0
      %2135 = vmatpush1.bf16.msra.mxu0 %v2082
      %2136 = vmatprep.subr.bf16.mxu0 0
      %2137 = vmatpush1.bf16.msra.mxu0 %v2083
      %2138 = vmatprep.subr.bf16.mxu0 0
      %2139 = vmatpush1.bf16.msra.mxu0 %v2084
      %2140 = vmatprep.subr.bf16.mxu0 0
      %2141 = vmatpush1.bf16.msra.mxu0 %v2085
      %2142 = vmatprep.subr.bf16.mxu0 0
      %2143 = vmatpush1.bf16.msra.mxu0 %v2086
      %2144 = vmatprep.subr.bf16.mxu0 0
      %2145 = vmatpush1.bf16.msra.mxu0 %v2087
      %2146 = vmatprep.subr.bf16.mxu0 0
      %2147 = vmatpush1.bf16.msra.mxu0 %v2088
      %2148 = vmatprep.subr.bf16.mxu0 0
      %2149 = vmatpush1.bf16.msra.mxu0 %v2089
      %2150 = vmatprep.subr.bf16.mxu0 0
      %2151 = vmatpush1.bf16.msra.mxu0 %v2090
      %2152 = vmatprep.subr.bf16.mxu0 0
      %2153 = vmatpush1.bf16.msra.mxu0 %v2091
      %2154 = vmatprep.subr.bf16.mxu0 0
      %2155 = vmatpush1.bf16.msra.mxu0 %v2092
      %2156 = vmatprep.subr.bf16.mxu0 0
      %2157 = vmatpush1.bf16.msra.mxu0 %v2093
      %2158 = vmatprep.subr.bf16.mxu0 0
      %2159 = vmatpush1.bf16.msra.mxu0 %v2094
      %2160 = vmatprep.subr.bf16.mxu0 0
      %2161 = vmatpush1.bf16.msra.mxu0 %v2095
      %2162 = vmatprep.mubr.bf16.mxu0 %v423
      %2163 = vmatmul.mubr.bf16.gmra.mrb[0].mxu0 %v422
      %v2164 = vpop.f32.mrb[0].mxu0
      %v2165 = vadd.f32 0.0, %v2164
      %v2166 = vpop.f32.mrb[0].mxu0
      %v2167 = vpop.f32.mrb[0].mxu0
      %v2168 = vadd.f32 0.0, %v2167
      %v2169 = vpop.f32.mrb[0].mxu0
      %2170 = vmatprep.mubr.bf16.mxu0 %v427
      %2171 = vmatmul.mubr.bf16.gmra.mrb[0].mxu0 %v426
      %v2172 = vpop.f32.mrb[0].mxu0
      %v2173 = vadd.f32 0.0, %v2172
      %v2174 = vpop.f32.mrb[0].mxu0
      %v2175 = vpop.f32.mrb[0].mxu0
      %v2176 = vadd.f32 0.0, %v2175
      %v2177 = vpop.f32.mrb[0].mxu0
      %2178 = vdwg.mxu0
      %2179 = vmatprep.subr.bf16.mxu0 0
      %2180 = vmatpush1.bf16.msra.mxu0 %v2096
      %2181 = vmatprep.subr.bf16.mxu0 0
      %2182 = vmatpush1.bf16.msra.mxu0 %v2097
      %2183 = vmatprep.subr.bf16.mxu0 0
      %2184 = vmatpush1.bf16.msra.mxu0 %v2098
      %2185 = vmatprep.subr.bf16.mxu0 0
      %2186 = vmatpush1.bf16.msra.mxu0 %v2099
      %2187 = vmatprep.subr.bf16.mxu0 0
      %2188 = vmatpush1.bf16.msra.mxu0 %v2100
      %2189 = vmatprep.subr.bf16.mxu0 0
      %2190 = vmatpush1.bf16.msra.mxu0 %v2101
      %2191 = vmatprep.subr.bf16.mxu0 0
      %2192 = vmatpush1.bf16.msra.mxu0 %v2102
      %2193 = vmatprep.subr.bf16.mxu0 0
      %2194 = vmatpush1.bf16.msra.mxu0 %v2103
      %2195 = vmatprep.subr.bf16.mxu0 0
      %2196 = vmatpush1.bf16.msra.mxu0 %v2104
      %2197 = vmatprep.subr.bf16.mxu0 0
      %2198 = vmatpush1.bf16.msra.mxu0 0
      %2199 = vmatprep.subr.bf16.mxu0 0
      %2200 = vmatpush1.bf16.msra.mxu0 0
      %2201 = vmatprep.subr.bf16.mxu0 0
      %2202 = vmatpush1.bf16.msra.mxu0 0
      %2203 = vmatprep.subr.bf16.mxu0 0
      %2204 = vmatpush1.bf16.msra.mxu0 0
      %2205 = vmatprep.subr.bf16.mxu0 0
      %2206 = vmatpush1.bf16.msra.mxu0 0
      %2207 = vmatprep.subr.bf16.mxu0 0
      %2208 = vmatpush1.bf16.msra.mxu0 0
      %2209 = vmatprep.subr.bf16.mxu0 0
      %2210 = vmatpush1.bf16.msra.mxu0 0
      %2211 = vmatprep.mubr.bf16.mxu0 %v588
      %2212 = vmatmul.mubr.bf16.gmra.mrb[0].mxu0 %v424
      %v2213 = vpop.f32.mrb[0].mxu0
      %v2214 = vadd.f32 %v2165, %v2213
      %v2215 = vpop.f32.mrb[0].mxu0
      %v2216 = vpop.f32.mrb[0].mxu0
      %v2217 = vadd.f32 %v2168, %v2216
      %v2218 = vpop.f32.mrb[0].mxu0
      %2219 = vmatprep.mubr.bf16.mxu0 %v591
      %2220 = vmatmul.mubr.bf16.gmra.mrb[0].mxu0 %v428
      %v2221 = vpop.f32.mrb[0].mxu0
      %v2222 = vadd.f32 %v2173, %v2221
      %v2223 = vpop.f32.mrb[0].mxu0
      %v2224 = vpop.f32.mrb[0].mxu0
      %v2225 = vadd.f32 %v2176, %v2224
      %v2226 = vpop.f32.mrb[0].mxu0
      %2227 = vdwg.mxu0
      %v2228 = vmax.f32 %v1915, %v2214
      %v2229 = vmax.f32 %v1918, %v2217
      %v2230 = vmax.f32 %v1923, %v2222
      %v2231 = vmax.f32 %v1926, %v2225
      %s2232 = scalar_lea.vmem %s319, 200
      %v2233 = vld [vmem:[%s2232] sm:$0xf]
      %v2234 = vld [vmem:[%s2232 + $0x4] sm:$0xf]
      %v2235 = vld [vmem:[%s2232 + $0x8] sm:$0xf]
      %v2236 = vld [vmem:[%s2232 + $0xc] sm:$0xf]
      %v2237 = vld [vmem:[%s2232 + $0x10] sm:$0xf]
      %v2238 = vld [vmem:[%s2232 + $0x14] sm:$0xf]
      %v2239 = vld [vmem:[%s2232 + $0x18] sm:$0xf]
      %v2240 = vld [vmem:[%s2232 + $0x1c] sm:$0xf]
      %v2241 = vld [vmem:[%s2232 + $0x20] sm:$0xf]
      %v2242 = vld [vmem:[%s2232 + $0x24] sm:$0xf]
      %v2243 = vld [vmem:[%s2232 + $0x28] sm:$0xf]
      %v2244 = vld [vmem:[%s2232 + $0x2c] sm:$0xf]
      %v2245 = vld [vmem:[%s2232 + $0x30] sm:$0xf]
      %v2246 = vld [vmem:[%s2232 + $0x34] sm:$0xf]
      %v2247 = vld [vmem:[%s2232 + $0x38] sm:$0xf]
      %v2248 = vld [vmem:[%s2232 + $0x3c] sm:$0xf]
      %v2249 = vld [vmem:[%s2232 + $0x40] sm:$0xf]
      %v2250 = vld [vmem:[%s2232 + $0x44] sm:$0xf]
      %v2251 = vld [vmem:[%s2232 + $0x48] sm:$0xf]
      %v2252 = vld [vmem:[%s2232 + $0x4c] sm:$0xf]
      %v2253 = vld [vmem:[%s2232 + $0x50] sm:$0xf]
      %v2254 = vld [vmem:[%s2232 + $0x54] sm:$0xf]
      %v2255 = vld [vmem:[%s2232 + $0x58] sm:$0xf]
      %v2256 = vld [vmem:[%s2232 + $0x5c] sm:$0xf]
      %v2257 = vld [vmem:[%s2232 + $0x60] sm:$0xf]
      %v2258 = vld [vmem:[%s2232 + $0x64] sm:$0xf]
      %v2259 = vld [vmem:[%s2232 + $0x68] sm:$0xf]
      %v2260 = vld [vmem:[%s2232 + $0x6c] sm:$0xf]
      %v2261 = vld [vmem:[%s2232 + $0x70] sm:$0xf]
      %v2262 = vld [vmem:[%s2232 + $0x74] sm:$0xf]
      %v2263 = vld [vmem:[%s2232 + $0x78] sm:$0xf]
      %v2264 = vld [vmem:[%s2232 + $0x7c] sm:$0xf]
      %v2265 = vld [vmem:[%s2232 + $0x80] sm:$0xf]
      %v2266 = vld [vmem:[%s2232 + $0x84] sm:$0xf]
      %v2267 = vld [vmem:[%s2232 + $0x88] sm:$0xf]
      %v2268 = vld [vmem:[%s2232 + $0x8c] sm:$0xf]
      %v2269 = vld [vmem:[%s2232 + $0x90] sm:$0xf]
      %v2270 = vld [vmem:[%s2232 + $0x94] sm:$0xf]
      %v2271 = vld [vmem:[%s2232 + $0x98] sm:$0xf]
      %v2272 = vld [vmem:[%s2232 + $0x9c] sm:$0xf]
      %v2273 = vld [vmem:[%s2232 + $0xa0] sm:$0xf]
      %v2274 = vld [vmem:[%s2232 + $0xa4] sm:$0xf]
      %v2275 = vld [vmem:[%s2232 + $0xa8] sm:$0xf]
      %v2276 = vld [vmem:[%s2232 + $0xac] sm:$0xf]
      %v2277 = vld [vmem:[%s2232 + $0xb0] sm:$0xf]
      %v2278 = vld [vmem:[%s2232 + $0xb4] sm:$0xf]
      %v2279 = vld [vmem:[%s2232 + $0xb8] sm:$0xf]
      %v2280 = vld [vmem:[%s2232 + $0xbc] sm:$0xf]
      %v2281 = vld [vmem:[%s2232 + $0xc0] sm:$0xf]
      %v2282 = vld [vmem:[%s2232 + $0xc4] sm:$0xf]
      %v2333 = vunpack.c.l.b16 %v2233
      %v2334 = vunpack.c.l.b16 %v2234
      %v2335 = vunpack.c.l.b16 %v2235
      %v2336 = vunpack.c.l.b16 %v2236
      %v2337 = vunpack.c.l.b16 %v2237
      %v2338 = vunpack.c.l.b16 %v2238
      %v2339 = vunpack.c.l.b16 %v2239
      %v2340 = vunpack.c.l.b16 %v2240
      %v2341 = vunpack.c.l.b16 %v2241
      %v2342 = vunpack.c.l.b16 %v2242
      %v2343 = vunpack.c.l.b16 %v2243
      %v2344 = vunpack.c.l.b16 %v2244
      %v2345 = vunpack.c.l.b16 %v2245
      %v2346 = vunpack.c.l.b16 %v2246
      %v2347 = vunpack.c.l.b16 %v2247
      %v2348 = vunpack.c.l.b16 %v2248
      %v2349 = vunpack.c.l.b16 %v2249
      %v2350 = vunpack.c.l.b16 %v2250
      %v2351 = vunpack.c.l.b16 %v2251
      %v2352 = vunpack.c.l.b16 %v2252
      %v2353 = vunpack.c.l.b16 %v2253
      %v2354 = vunpack.c.l.b16 %v2254
      %v2355 = vunpack.c.l.b16 %v2255
      %v2356 = vunpack.c.l.b16 %v2256
      %v2357 = vunpack.c.l.b16 %v2257
      %v2358 = vunpack.c.l.b16 %v2258
      %v2359 = vunpack.c.l.b16 %v2259
      %v2360 = vunpack.c.l.b16 %v2260
      %v2361 = vunpack.c.l.b16 %v2261
      %v2362 = vunpack.c.l.b16 %v2262
      %v2363 = vunpack.c.l.b16 %v2263
      %v2364 = vunpack.c.l.b16 %v2264
      %v2365 = vunpack.c.l.b16 %v2265
      %v2366 = vunpack.c.l.b16 %v2266
      %v2367 = vunpack.c.l.b16 %v2267
      %v2368 = vunpack.c.l.b16 %v2268
      %v2369 = vunpack.c.l.b16 %v2269
      %v2370 = vunpack.c.l.b16 %v2270
      %v2371 = vunpack.c.l.b16 %v2271
      %v2372 = vunpack.c.l.b16 %v2272
      %v2373 = vunpack.c.l.b16 %v2273
      %v2374 = vunpack.c.l.b16 %v2274
      %v2375 = vunpack.c.l.b16 %v2275
      %v2376 = vunpack.c.l.b16 %v2276
      %v2377 = vunpack.c.l.b16 %v2277
      %v2378 = vunpack.c.l.b16 %v2278
      %v2379 = vunpack.c.l.b16 %v2279
      %v2380 = vunpack.c.l.b16 %v2280
      %v2381 = vunpack.c.l.b16 %v2281
      %v2382 = vunpack.c.l.b16 %v2282
      %v2383 = vpack.c.b16 %v2334, %v2333
      %v2384 = vpack.c.b16 %v2336, %v2335
      %v2385 = vpack.c.b16 %v2338, %v2337
      %v2386 = vpack.c.b16 %v2340, %v2339
      %v2387 = vpack.c.b16 %v2342, %v2341
      %v2388 = vpack.c.b16 %v2344, %v2343
      %v2389 = vpack.c.b16 %v2346, %v2345
      %v2390 = vpack.c.b16 %v2348, %v2347
      %v2391 = vpack.c.b16 %v2350, %v2349
      %v2392 = vpack.c.b16 %v2352, %v2351
      %v2393 = vpack.c.b16 %v2354, %v2353
      %v2394 = vpack.c.b16 %v2356, %v2355
      %v2395 = vpack.c.b16 %v2358, %v2357
      %v2396 = vpack.c.b16 %v2360, %v2359
      %v2397 = vpack.c.b16 %v2362, %v2361
      %v2398 = vpack.c.b16 %v2364, %v2363
      %v2399 = vpack.c.b16 %v2366, %v2365
      %v2400 = vpack.c.b16 %v2368, %v2367
      %v2401 = vpack.c.b16 %v2370, %v2369
      %v2402 = vpack.c.b16 %v2372, %v2371
      %v2403 = vpack.c.b16 %v2374, %v2373
      %v2404 = vpack.c.b16 %v2376, %v2375
      %v2405 = vpack.c.b16 %v2378, %v2377
      %v2406 = vpack.c.b16 %v2380, %v2379
      %v2407 = vpack.c.b16 %v2382, %v2381
      %2433 = vmatprep.subr.bf16.mxu0 0
      %2434 = vmatpush1.bf16.msra.mxu0 %v2383
      %2435 = vmatprep.subr.bf16.mxu0 0
      %2436 = vmatpush1.bf16.msra.mxu0 %v2384
      %2437 = vmatprep.subr.bf16.mxu0 0
      %2438 = vmatpush1.bf16.msra.mxu0 %v2385
      %2439 = vmatprep.subr.bf16.mxu0 0
      %2440 = vmatpush1.bf16.msra.mxu0 %v2386
      %2441 = vmatprep.subr.bf16.mxu0 0
      %2442 = vmatpush1.bf16.msra.mxu0 %v2387
      %2443 = vmatprep.subr.bf16.mxu0 0
      %2444 = vmatpush1.bf16.msra.mxu0 %v2388
      %2445 = vmatprep.subr.bf16.mxu0 0
      %2446 = vmatpush1.bf16.msra.mxu0 %v2389
      %2447 = vmatprep.subr.bf16.mxu0 0
      %2448 = vmatpush1.bf16.msra.mxu0 %v2390
      %2449 = vmatprep.subr.bf16.mxu0 0
      %2450 = vmatpush1.bf16.msra.mxu0 %v2391
      %2451 = vmatprep.subr.bf16.mxu0 0
      %2452 = vmatpush1.bf16.msra.mxu0 %v2392
      %2453 = vmatprep.subr.bf16.mxu0 0
      %2454 = vmatpush1.bf16.msra.mxu0 %v2393
      %2455 = vmatprep.subr.bf16.mxu0 0
      %2456 = vmatpush1.bf16.msra.mxu0 %v2394
      %2457 = vmatprep.subr.bf16.mxu0 0
      %2458 = vmatpush1.bf16.msra.mxu0 %v2395
      %2459 = vmatprep.subr.bf16.mxu0 0
      %2460 = vmatpush1.bf16.msra.mxu0 %v2396
      %2461 = vmatprep.subr.bf16.mxu0 0
      %2462 = vmatpush1.bf16.msra.mxu0 %v2397
      %2463 = vmatprep.subr.bf16.mxu0 0
      %2464 = vmatpush1.bf16.msra.mxu0 %v2398
      %2465 = vmatprep.mubr.bf16.mxu0 %v423
      %2466 = vmatmul.mubr.bf16.gmra.mrb[0].mxu0 %v422
      %v2467 = vpop.f32.mrb[0].mxu0
      %v2468 = vadd.f32 0.0, %v2467
      %v2469 = vpop.f32.mrb[0].mxu0
      %v2470 = vpop.f32.mrb[0].mxu0
      %v2471 = vadd.f32 0.0, %v2470
      %v2472 = vpop.f32.mrb[0].mxu0
      %2473 = vmatprep.mubr.bf16.mxu0 %v427
      %2474 = vmatmul.mubr.bf16.gmra.mrb[0].mxu0 %v426
      %v2475 = vpop.f32.mrb[0].mxu0
      %v2476 = vadd.f32 0.0, %v2475
      %v2477 = vpop.f32.mrb[0].mxu0
      %v2478 = vpop.f32.mrb[0].mxu0
      %v2479 = vadd.f32 0.0, %v2478
      %v2480 = vpop.f32.mrb[0].mxu0
      %2481 = vdwg.mxu0
      %2482 = vmatprep.subr.bf16.mxu0 0
      %2483 = vmatpush1.bf16.msra.mxu0 %v2399
      %2484 = vmatprep.subr.bf16.mxu0 0
      %2485 = vmatpush1.bf16.msra.mxu0 %v2400
      %2486 = vmatprep.subr.bf16.mxu0 0
      %2487 = vmatpush1.bf16.msra.mxu0 %v2401
      %2488 = vmatprep.subr.bf16.mxu0 0
      %2489 = vmatpush1.bf16.msra.mxu0 %v2402
      %2490 = vmatprep.subr.bf16.mxu0 0
      %2491 = vmatpush1.bf16.msra.mxu0 %v2403
      %2492 = vmatprep.subr.bf16.mxu0 0
      %2493 = vmatpush1.bf16.msra.mxu0 %v2404
      %2494 = vmatprep.subr.bf16.mxu0 0
      %2495 = vmatpush1.bf16.msra.mxu0 %v2405
      %2496 = vmatprep.subr.bf16.mxu0 0
      %2497 = vmatpush1.bf16.msra.mxu0 %v2406
      %2498 = vmatprep.subr.bf16.mxu0 0
      %2499 = vmatpush1.bf16.msra.mxu0 %v2407
      %2500 = vmatprep.subr.bf16.mxu0 0
      %2501 = vmatpush1.bf16.msra.mxu0 0
      %2502 = vmatprep.subr.bf16.mxu0 0
      %2503 = vmatpush1.bf16.msra.mxu0 0
      %2504 = vmatprep.subr.bf16.mxu0 0
      %2505 = vmatpush1.bf16.msra.mxu0 0
      %2506 = vmatprep.subr.bf16.mxu0 0
      %2507 = vmatpush1.bf16.msra.mxu0 0
      %2508 = vmatprep.subr.bf16.mxu0 0
      %2509 = vmatpush1.bf16.msra.mxu0 0
      %2510 = vmatprep.subr.bf16.mxu0 0
      %2511 = vmatpush1.bf16.msra.mxu0 0
      %2512 = vmatprep.subr.bf16.mxu0 0
      %2513 = vmatpush1.bf16.msra.mxu0 0
      %2514 = vmatprep.mubr.bf16.mxu0 %v588
      %2515 = vmatmul.mubr.bf16.gmra.mrb[0].mxu0 %v424
      %v2516 = vpop.f32.mrb[0].mxu0
      %v2517 = vadd.f32 %v2468, %v2516
      %v2518 = vpop.f32.mrb[0].mxu0
      %v2519 = vpop.f32.mrb[0].mxu0
      %v2520 = vadd.f32 %v2471, %v2519
      %v2521 = vpop.f32.mrb[0].mxu0
      %2522 = vmatprep.mubr.bf16.mxu0 %v591
      %2523 = vmatmul.mubr.bf16.gmra.mrb[0].mxu0 %v428
      %v2524 = vpop.f32.mrb[0].mxu0
      %v2525 = vadd.f32 %v2476, %v2524
      %v2526 = vpop.f32.mrb[0].mxu0
      %v2527 = vpop.f32.mrb[0].mxu0
      %v2528 = vadd.f32 %v2479, %v2527
      %v2529 = vpop.f32.mrb[0].mxu0
      %2530 = vdwg.mxu0
      %s2531 = scalar_lea.vmem %s326, 200
      %v2532 = vld [vmem:[%s2531] sm:$0xf]
      %v2533 = vld [vmem:[%s2531 + $0x4] sm:$0xf]
      %v2534 = vld [vmem:[%s2531 + $0x8] sm:$0xf]
      %v2535 = vld [vmem:[%s2531 + $0xc] sm:$0xf]
      %v2536 = vld [vmem:[%s2531 + $0x10] sm:$0xf]
      %v2537 = vld [vmem:[%s2531 + $0x14] sm:$0xf]
      %v2538 = vld [vmem:[%s2531 + $0x18] sm:$0xf]
      %v2539 = vld [vmem:[%s2531 + $0x1c] sm:$0xf]
      %v2540 = vld [vmem:[%s2531 + $0x20] sm:$0xf]
      %v2541 = vld [vmem:[%s2531 + $0x24] sm:$0xf]
      %v2542 = vld [vmem:[%s2531 + $0x28] sm:$0xf]
      %v2543 = vld [vmem:[%s2531 + $0x2c] sm:$0xf]
      %v2544 = vld [vmem:[%s2531 + $0x30] sm:$0xf]
      %v2545 = vld [vmem:[%s2531 + $0x34] sm:$0xf]
      %v2546 = vld [vmem:[%s2531 + $0x38] sm:$0xf]
      %v2547 = vld [vmem:[%s2531 + $0x3c] sm:$0xf]
      %v2548 = vld [vmem:[%s2531 + $0x40] sm:$0xf]
      %v2549 = vld [vmem:[%s2531 + $0x44] sm:$0xf]
      %v2550 = vld [vmem:[%s2531 + $0x48] sm:$0xf]
      %v2551 = vld [vmem:[%s2531 + $0x4c] sm:$0xf]
      %v2552 = vld [vmem:[%s2531 + $0x50] sm:$0xf]
      %v2553 = vld [vmem:[%s2531 + $0x54] sm:$0xf]
      %v2554 = vld [vmem:[%s2531 + $0x58] sm:$0xf]
      %v2555 = vld [vmem:[%s2531 + $0x5c] sm:$0xf]
      %v2556 = vld [vmem:[%s2531 + $0x60] sm:$0xf]
      %v2557 = vld [vmem:[%s2531 + $0x64] sm:$0xf]
      %v2558 = vld [vmem:[%s2531 + $0x68] sm:$0xf]
      %v2559 = vld [vmem:[%s2531 + $0x6c] sm:$0xf]
      %v2560 = vld [vmem:[%s2531 + $0x70] sm:$0xf]
      %v2561 = vld [vmem:[%s2531 + $0x74] sm:$0xf]
      %v2562 = vld [vmem:[%s2531 + $0x78] sm:$0xf]
      %v2563 = vld [vmem:[%s2531 + $0x7c] sm:$0xf]
      %v2564 = vld [vmem:[%s2531 + $0x80] sm:$0xf]
      %v2565 = vld [vmem:[%s2531 + $0x84] sm:$0xf]
      %v2566 = vld [vmem:[%s2531 + $0x88] sm:$0xf]
      %v2567 = vld [vmem:[%s2531 + $0x8c] sm:$0xf]
      %v2568 = vld [vmem:[%s2531 + $0x90] sm:$0xf]
      %v2569 = vld [vmem:[%s2531 + $0x94] sm:$0xf]
      %v2570 = vld [vmem:[%s2531 + $0x98] sm:$0xf]
      %v2571 = vld [vmem:[%s2531 + $0x9c] sm:$0xf]
      %v2572 = vld [vmem:[%s2531 + $0xa0] sm:$0xf]
      %v2573 = vld [vmem:[%s2531 + $0xa4] sm:$0xf]
      %v2574 = vld [vmem:[%s2531 + $0xa8] sm:$0xf]
      %v2575 = vld [vmem:[%s2531 + $0xac] sm:$0xf]
      %v2576 = vld [vmem:[%s2531 + $0xb0] sm:$0xf]
      %v2577 = vld [vmem:[%s2531 + $0xb4] sm:$0xf]
      %v2578 = vld [vmem:[%s2531 + $0xb8] sm:$0xf]
      %v2579 = vld [vmem:[%s2531 + $0xbc] sm:$0xf]
      %v2580 = vld [vmem:[%s2531 + $0xc0] sm:$0xf]
      %v2581 = vld [vmem:[%s2531 + $0xc4] sm:$0xf]
      %v2632 = vunpack.c.l.b16 %v2532
      %v2633 = vunpack.c.l.b16 %v2533
      %v2634 = vunpack.c.l.b16 %v2534
      %v2635 = vunpack.c.l.b16 %v2535
      %v2636 = vunpack.c.l.b16 %v2536
      %v2637 = vunpack.c.l.b16 %v2537
      %v2638 = vunpack.c.l.b16 %v2538
      %v2639 = vunpack.c.l.b16 %v2539
      %v2640 = vunpack.c.l.b16 %v2540
      %v2641 = vunpack.c.l.b16 %v2541
      %v2642 = vunpack.c.l.b16 %v2542
      %v2643 = vunpack.c.l.b16 %v2543
      %v2644 = vunpack.c.l.b16 %v2544
      %v2645 = vunpack.c.l.b16 %v2545
      %v2646 = vunpack.c.l.b16 %v2546
      %v2647 = vunpack.c.l.b16 %v2547
      %v2648 = vunpack.c.l.b16 %v2548
      %v2649 = vunpack.c.l.b16 %v2549
      %v2650 = vunpack.c.l.b16 %v2550
      %v2651 = vunpack.c.l.b16 %v2551
      %v2652 = vunpack.c.l.b16 %v2552
      %v2653 = vunpack.c.l.b16 %v2553
      %v2654 = vunpack.c.l.b16 %v2554
      %v2655 = vunpack.c.l.b16 %v2555
      %v2656 = vunpack.c.l.b16 %v2556
      %v2657 = vunpack.c.l.b16 %v2557
      %v2658 = vunpack.c.l.b16 %v2558
      %v2659 = vunpack.c.l.b16 %v2559
      %v2660 = vunpack.c.l.b16 %v2560
      %v2661 = vunpack.c.l.b16 %v2561
      %v2662 = vunpack.c.l.b16 %v2562
      %v2663 = vunpack.c.l.b16 %v2563
      %v2664 = vunpack.c.l.b16 %v2564
      %v2665 = vunpack.c.l.b16 %v2565
      %v2666 = vunpack.c.l.b16 %v2566
      %v2667 = vunpack.c.l.b16 %v2567
      %v2668 = vunpack.c.l.b16 %v2568
      %v2669 = vunpack.c.l.b16 %v2569
      %v2670 = vunpack.c.l.b16 %v2570
      %v2671 = vunpack.c.l.b16 %v2571
      %v2672 = vunpack.c.l.b16 %v2572
      %v2673 = vunpack.c.l.b16 %v2573
      %v2674 = vunpack.c.l.b16 %v2574
      %v2675 = vunpack.c.l.b16 %v2575
      %v2676 = vunpack.c.l.b16 %v2576
      %v2677 = vunpack.c.l.b16 %v2577
      %v2678 = vunpack.c.l.b16 %v2578
      %v2679 = vunpack.c.l.b16 %v2579
      %v2680 = vunpack.c.l.b16 %v2580
      %v2681 = vunpack.c.l.b16 %v2581
      %v2682 = vpack.c.b16 %v2633, %v2632
      %v2683 = vpack.c.b16 %v2635, %v2634
      %v2684 = vpack.c.b16 %v2637, %v2636
      %v2685 = vpack.c.b16 %v2639, %v2638
      %v2686 = vpack.c.b16 %v2641, %v2640
      %v2687 = vpack.c.b16 %v2643, %v2642
      %v2688 = vpack.c.b16 %v2645, %v2644
      %v2689 = vpack.c.b16 %v2647, %v2646
      %v2690 = vpack.c.b16 %v2649, %v2648
      %v2691 = vpack.c.b16 %v2651, %v2650
      %v2692 = vpack.c.b16 %v2653, %v2652
      %v2693 = vpack.c.b16 %v2655, %v2654
      %v2694 = vpack.c.b16 %v2657, %v2656
      %v2695 = vpack.c.b16 %v2659, %v2658
      %v2696 = vpack.c.b16 %v2661, %v2660
      %v2697 = vpack.c.b16 %v2663, %v2662
      %v2698 = vpack.c.b16 %v2665, %v2664
      %v2699 = vpack.c.b16 %v2667, %v2666
      %v2700 = vpack.c.b16 %v2669, %v2668
      %v2701 = vpack.c.b16 %v2671, %v2670
      %v2702 = vpack.c.b16 %v2673, %v2672
      %v2703 = vpack.c.b16 %v2675, %v2674
      %v2704 = vpack.c.b16 %v2677, %v2676
      %v2705 = vpack.c.b16 %v2679, %v2678
      %v2706 = vpack.c.b16 %v2681, %v2680
      %2732 = vmatprep.subr.bf16.mxu0 0
      %2733 = vmatpush1.bf16.msra.mxu0 %v2682
      %2734 = vmatprep.subr.bf16.mxu0 0
      %2735 = vmatpush1.bf16.msra.mxu0 %v2683
      %2736 = vmatprep.subr.bf16.mxu0 0
      %2737 = vmatpush1.bf16.msra.mxu0 %v2684
      %2738 = vmatprep.subr.bf16.mxu0 0
      %2739 = vmatpush1.bf16.msra.mxu0 %v2685
      %2740 = vmatprep.subr.bf16.mxu0 0
      %2741 = vmatpush1.bf16.msra.mxu0 %v2686
      %2742 = vmatprep.subr.bf16.mxu0 0
      %2743 = vmatpush1.bf16.msra.mxu0 %v2687
      %2744 = vmatprep.subr.bf16.mxu0 0
      %2745 = vmatpush1.bf16.msra.mxu0 %v2688
      %2746 = vmatprep.subr.bf16.mxu0 0
      %2747 = vmatpush1.bf16.msra.mxu0 %v2689
      %2748 = vmatprep.subr.bf16.mxu0 0
      %2749 = vmatpush1.bf16.msra.mxu0 %v2690
      %2750 = vmatprep.subr.bf16.mxu0 0
      %2751 = vmatpush1.bf16.msra.mxu0 %v2691
      %2752 = vmatprep.subr.bf16.mxu0 0
      %2753 = vmatpush1.bf16.msra.mxu0 %v2692
      %2754 = vmatprep.subr.bf16.mxu0 0
      %2755 = vmatpush1.bf16.msra.mxu0 %v2693
      %2756 = vmatprep.subr.bf16.mxu0 0
      %2757 = vmatpush1.bf16.msra.mxu0 %v2694
      %2758 = vmatprep.subr.bf16.mxu0 0
      %2759 = vmatpush1.bf16.msra.mxu0 %v2695
      %2760 = vmatprep.subr.bf16.mxu0 0
      %2761 = vmatpush1.bf16.msra.mxu0 %v2696
      %2762 = vmatprep.subr.bf16.mxu0 0
      %2763 = vmatpush1.bf16.msra.mxu0 %v2697
      %2764 = vmatprep.mubr.bf16.mxu0 %v423
      %2765 = vmatmul.mubr.bf16.gmra.mrb[0].mxu0 %v422
      %v2766 = vpop.f32.mrb[0].mxu0
      %v2767 = vadd.f32 0.0, %v2766
      %v2768 = vpop.f32.mrb[0].mxu0
      %v2769 = vpop.f32.mrb[0].mxu0
      %v2770 = vadd.f32 0.0, %v2769
      %v2771 = vpop.f32.mrb[0].mxu0
      %2772 = vmatprep.mubr.bf16.mxu0 %v427
      %2773 = vmatmul.mubr.bf16.gmra.mrb[0].mxu0 %v426
      %v2774 = vpop.f32.mrb[0].mxu0
      %v2775 = vadd.f32 0.0, %v2774
      %v2776 = vpop.f32.mrb[0].mxu0
      %v2777 = vpop.f32.mrb[0].mxu0
      %v2778 = vadd.f32 0.0, %v2777
      %v2779 = vpop.f32.mrb[0].mxu0
      %2780 = vdwg.mxu0
      %2781 = vmatprep.subr.bf16.mxu0 0
      %2782 = vmatpush1.bf16.msra.mxu0 %v2698
      %2783 = vmatprep.subr.bf16.mxu0 0
      %2784 = vmatpush1.bf16.msra.mxu0 %v2699
      %2785 = vmatprep.subr.bf16.mxu0 0
      %2786 = vmatpush1.bf16.msra.mxu0 %v2700
      %2787 = vmatprep.subr.bf16.mxu0 0
      %2788 = vmatpush1.bf16.msra.mxu0 %v2701
      %2789 = vmatprep.subr.bf16.mxu0 0
      %2790 = vmatpush1.bf16.msra.mxu0 %v2702
      %2791 = vmatprep.subr.bf16.mxu0 0
      %2792 = vmatpush1.bf16.msra.mxu0 %v2703
      %2793 = vmatprep.subr.bf16.mxu0 0
      %2794 = vmatpush1.bf16.msra.mxu0 %v2704
      %2795 = vmatprep.subr.bf16.mxu0 0
      %2796 = vmatpush1.bf16.msra.mxu0 %v2705
      %2797 = vmatprep.subr.bf16.mxu0 0
      %2798 = vmatpush1.bf16.msra.mxu0 %v2706
      %2799 = vmatprep.subr.bf16.mxu0 0
      %2800 = vmatpush1.bf16.msra.mxu0 0
      %2801 = vmatprep.subr.bf16.mxu0 0
      %2802 = vmatpush1.bf16.msra.mxu0 0
      %2803 = vmatprep.subr.bf16.mxu0 0
      %2804 = vmatpush1.bf16.msra.mxu0 0
      %2805 = vmatprep.subr.bf16.mxu0 0
      %2806 = vmatpush1.bf16.msra.mxu0 0
      %2807 = vmatprep.subr.bf16.mxu0 0
      %2808 = vmatpush1.bf16.msra.mxu0 0
      %2809 = vmatprep.subr.bf16.mxu0 0
      %2810 = vmatpush1.bf16.msra.mxu0 0
      %2811 = vmatprep.subr.bf16.mxu0 0
      %2812 = vmatpush1.bf16.msra.mxu0 0
      %2813 = vmatprep.mubr.bf16.mxu0 %v588
      %2814 = vmatmul.mubr.bf16.gmra.mrb[0].mxu0 %v424
      %v2815 = vpop.f32.mrb[0].mxu0
      %v2816 = vadd.f32 %v2767, %v2815
      %v2817 = vpop.f32.mrb[0].mxu0
      %v2818 = vpop.f32.mrb[0].mxu0
      %v2819 = vadd.f32 %v2770, %v2818
      %v2820 = vpop.f32.mrb[0].mxu0
      %2821 = vmatprep.mubr.bf16.mxu0 %v591
      %2822 = vmatmul.mubr.bf16.gmra.mrb[0].mxu0 %v428
      %v2823 = vpop.f32.mrb[0].mxu0
      %v2824 = vadd.f32 %v2775, %v2823
      %v2825 = vpop.f32.mrb[0].mxu0
      %v2826 = vpop.f32.mrb[0].mxu0
      %v2827 = vadd.f32 %v2778, %v2826
      %v2828 = vpop.f32.mrb[0].mxu0
      %2829 = vdwg.mxu0
      %v2830 = vmax.f32 %v2517, %v2816
      %v2831 = vmax.f32 %v2520, %v2819
      %v2832 = vmax.f32 %v2525, %v2824
      %v2833 = vmax.f32 %v2528, %v2827
      %v2834 = vmax.f32 %v2228, %v2830
      %v2835 = vmax.f32 %v2229, %v2831
      %v2836 = vmax.f32 %v2230, %v2832
      %v2837 = vmax.f32 %v2231, %v2833
      %v2838 = vadd.f32 %v2834, %v1600
      %v2839 = vadd.f32 %v2835, %v1605
      %v2840 = vadd.f32 %v2836, %v1610
      %v2841 = vadd.f32 %v2837, %v1615
      %v2842 = vtanh.pop %v2838
      %v2843 = vtanh.pop %v2839
      %v2844 = vtanh.pop %v2840
      %v2845 = vtanh.pop %v2841
      %s2846 = scalar_lea.vmem %s333, 32
      %2847 = vst.msk [vmem:[%s2846] sm:$0xff] %vm1625, %v2842
      %2848 = vst.msk [vmem:[%s2846 + $0x8] sm:$0xff] %vm1625, %v2843
      %2849 = vst.msk [vmem:[%s2846 + $0x10] sm:$0xff] %vm1625, %v2844
      %2850 = vst.msk [vmem:[%s2846 + $0x18] sm:$0xff] %vm1625, %v2845
      %s2851 = scalar_lea.vmem %s305, 400
      %v2852 = vld [vmem:[%s2851] sm:$0xf]
      %v2853 = vld [vmem:[%s2851 + $0x4] sm:$0xf]
      %v2854 = vld [vmem:[%s2851 + $0x8] sm:$0xf]
      %v2855 = vld [vmem:[%s2851 + $0xc] sm:$0xf]
      %v2856 = vld [vmem:[%s2851 + $0x10] sm:$0xf]
      %v2857 = vld [vmem:[%s2851 + $0x14] sm:$0xf]
      %v2858 = vld [vmem:[%s2851 + $0x18] sm:$0xf]
      %v2859 = vld [vmem:[%s2851 + $0x1c] sm:$0xf]
      %v2860 = vld [vmem:[%s2851 + $0x20] sm:$0xf]
      %v2861 = vld [vmem:[%s2851 + $0x24] sm:$0xf]
      %v2862 = vld [vmem:[%s2851 + $0x28] sm:$0xf]
      %v2863 = vld [vmem:[%s2851 + $0x2c] sm:$0xf]
      %v2864 = vld [vmem:[%s2851 + $0x30] sm:$0xf]
      %v2865 = vld [vmem:[%s2851 + $0x34] sm:$0xf]
      %v2866 = vld [vmem:[%s2851 + $0x38] sm:$0xf]
      %v2867 = vld [vmem:[%s2851 + $0x3c] sm:$0xf]
      %v2868 = vld [vmem:[%s2851 + $0x40] sm:$0xf]
      %v2869 = vld [vmem:[%s2851 + $0x44] sm:$0xf]
      %v2870 = vld [vmem:[%s2851 + $0x48] sm:$0xf]
      %v2871 = vld [vmem:[%s2851 + $0x4c] sm:$0xf]
      %v2872 = vld [vmem:[%s2851 + $0x50] sm:$0xf]
      %v2873 = vld [vmem:[%s2851 + $0x54] sm:$0xf]
      %v2874 = vld [vmem:[%s2851 + $0x58] sm:$0xf]
      %v2875 = vld [vmem:[%s2851 + $0x5c] sm:$0xf]
      %v2876 = vld [vmem:[%s2851 + $0x60] sm:$0xf]
      %v2877 = vld [vmem:[%s2851 + $0x64] sm:$0xf]
      %v2878 = vld [vmem:[%s2851 + $0x68] sm:$0xf]
      %v2879 = vld [vmem:[%s2851 + $0x6c] sm:$0xf]
      %v2880 = vld [vmem:[%s2851 + $0x70] sm:$0xf]
      %v2881 = vld [vmem:[%s2851 + $0x74] sm:$0xf]
      %v2882 = vld [vmem:[%s2851 + $0x78] sm:$0xf]
      %v2883 = vld [vmem:[%s2851 + $0x7c] sm:$0xf]
      %v2884 = vld [vmem:[%s2851 + $0x80] sm:$0xf]
      %v2885 = vld [vmem:[%s2851 + $0x84] sm:$0xf]
      %v2886 = vld [vmem:[%s2851 + $0x88] sm:$0xf]
      %v2887 = vld [vmem:[%s2851 + $0x8c] sm:$0xf]
      %v2888 = vld [vmem:[%s2851 + $0x90] sm:$0xf]
      %v2889 = vld [vmem:[%s2851 + $0x94] sm:$0xf]
      %v2890 = vld [vmem:[%s2851 + $0x98] sm:$0xf]
      %v2891 = vld [vmem:[%s2851 + $0x9c] sm:$0xf]
      %v2892 = vld [vmem:[%s2851 + $0xa0] sm:$0xf]
      %v2893 = vld [vmem:[%s2851 + $0xa4] sm:$0xf]
      %v2894 = vld [vmem:[%s2851 + $0xa8] sm:$0xf]
      %v2895 = vld [vmem:[%s2851 + $0xac] sm:$0xf]
      %v2896 = vld [vmem:[%s2851 + $0xb0] sm:$0xf]
      %v2897 = vld [vmem:[%s2851 + $0xb4] sm:$0xf]
      %v2898 = vld [vmem:[%s2851 + $0xb8] sm:$0xf]
      %v2899 = vld [vmem:[%s2851 + $0xbc] sm:$0xf]
      %v2900 = vld [vmem:[%s2851 + $0xc0] sm:$0xf]
      %v2901 = vld [vmem:[%s2851 + $0xc4] sm:$0xf]
      %v2952 = vunpack.c.l.b16 %v2852
      %v2953 = vunpack.c.l.b16 %v2853
      %v2954 = vunpack.c.l.b16 %v2854
      %v2955 = vunpack.c.l.b16 %v2855
      %v2956 = vunpack.c.l.b16 %v2856
      %v2957 = vunpack.c.l.b16 %v2857
      %v2958 = vunpack.c.l.b16 %v2858
      %v2959 = vunpack.c.l.b16 %v2859
      %v2960 = vunpack.c.l.b16 %v2860
      %v2961 = vunpack.c.l.b16 %v2861
      %v2962 = vunpack.c.l.b16 %v2862
      %v2963 = vunpack.c.l.b16 %v2863
      %v2964 = vunpack.c.l.b16 %v2864
      %v2965 = vunpack.c.l.b16 %v2865
      %v2966 = vunpack.c.l.b16 %v2866
      %v2967 = vunpack.c.l.b16 %v2867
      %v2968 = vunpack.c.l.b16 %v2868
      %v2969 = vunpack.c.l.b16 %v2869
      %v2970 = vunpack.c.l.b16 %v2870
      %v2971 = vunpack.c.l.b16 %v2871
      %v2972 = vunpack.c.l.b16 %v2872
      %v2973 = vunpack.c.l.b16 %v2873
      %v2974 = vunpack.c.l.b16 %v2874
      %v2975 = vunpack.c.l.b16 %v2875
      %v2976 = vunpack.c.l.b16 %v2876
      %v2977 = vunpack.c.l.b16 %v2877
      %v2978 = vunpack.c.l.b16 %v2878
      %v2979 = vunpack.c.l.b16 %v2879
      %v2980 = vunpack.c.l.b16 %v2880
      %v2981 = vunpack.c.l.b16 %v2881
      %v2982 = vunpack.c.l.b16 %v2882
      %v2983 = vunpack.c.l.b16 %v2883
      %v2984 = vunpack.c.l.b16 %v2884
      %v2985 = vunpack.c.l.b16 %v2885
      %v2986 = vunpack.c.l.b16 %v2886
      %v2987 = vunpack.c.l.b16 %v2887
      %v2988 = vunpack.c.l.b16 %v2888
      %v2989 = vunpack.c.l.b16 %v2889
      %v2990 = vunpack.c.l.b16 %v2890
      %v2991 = vunpack.c.l.b16 %v2891
      %v2992 = vunpack.c.l.b16 %v2892
      %v2993 = vunpack.c.l.b16 %v2893
      %v2994 = vunpack.c.l.b16 %v2894
      %v2995 = vunpack.c.l.b16 %v2895
      %v2996 = vunpack.c.l.b16 %v2896
      %v2997 = vunpack.c.l.b16 %v2897
      %v2998 = vunpack.c.l.b16 %v2898
      %v2999 = vunpack.c.l.b16 %v2899
      %v3000 = vunpack.c.l.b16 %v2900
      %v3001 = vunpack.c.l.b16 %v2901
      %v3002 = vpack.c.b16 %v2953, %v2952
      %v3003 = vpack.c.b16 %v2955, %v2954
      %v3004 = vpack.c.b16 %v2957, %v2956
      %v3005 = vpack.c.b16 %v2959, %v2958
      %v3006 = vpack.c.b16 %v2961, %v2960
      %v3007 = vpack.c.b16 %v2963, %v2962
      %v3008 = vpack.c.b16 %v2965, %v2964
      %v3009 = vpack.c.b16 %v2967, %v2966
      %v3010 = vpack.c.b16 %v2969, %v2968
      %v3011 = vpack.c.b16 %v2971, %v2970
      %v3012 = vpack.c.b16 %v2973, %v2972
      %v3013 = vpack.c.b16 %v2975, %v2974
      %v3014 = vpack.c.b16 %v2977, %v2976
      %v3015 = vpack.c.b16 %v2979, %v2978
      %v3016 = vpack.c.b16 %v2981, %v2980
      %v3017 = vpack.c.b16 %v2983, %v2982
      %v3018 = vpack.c.b16 %v2985, %v2984
      %v3019 = vpack.c.b16 %v2987, %v2986
      %v3020 = vpack.c.b16 %v2989, %v2988
      %v3021 = vpack.c.b16 %v2991, %v2990
      %v3022 = vpack.c.b16 %v2993, %v2992
      %v3023 = vpack.c.b16 %v2995, %v2994
      %v3024 = vpack.c.b16 %v2997, %v2996
      %v3025 = vpack.c.b16 %v2999, %v2998
      %v3026 = vpack.c.b16 %v3001, %v3000
      %3052 = vmatprep.subr.bf16.mxu0 0
      %3053 = vmatpush1.bf16.msra.mxu0 %v3002
      %3054 = vmatprep.subr.bf16.mxu0 0
      %3055 = vmatpush1.bf16.msra.mxu0 %v3003
      %3056 = vmatprep.subr.bf16.mxu0 0
      %3057 = vmatpush1.bf16.msra.mxu0 %v3004
      %3058 = vmatprep.subr.bf16.mxu0 0
      %3059 = vmatpush1.bf16.msra.mxu0 %v3005
      %3060 = vmatprep.subr.bf16.mxu0 0
      %3061 = vmatpush1.bf16.msra.mxu0 %v3006
      %3062 = vmatprep.subr.bf16.mxu0 0
      %3063 = vmatpush1.bf16.msra.mxu0 %v3007
      %3064 = vmatprep.subr.bf16.mxu0 0
      %3065 = vmatpush1.bf16.msra.mxu0 %v3008
      %3066 = vmatprep.subr.bf16.mxu0 0
      %3067 = vmatpush1.bf16.msra.mxu0 %v3009
      %3068 = vmatprep.subr.bf16.mxu0 0
      %3069 = vmatpush1.bf16.msra.mxu0 %v3010
      %3070 = vmatprep.subr.bf16.mxu0 0
      %3071 = vmatpush1.bf16.msra.mxu0 %v3011
      %3072 = vmatprep.subr.bf16.mxu0 0
      %3073 = vmatpush1.bf16.msra.mxu0 %v3012
      %3074 = vmatprep.subr.bf16.mxu0 0
      %3075 = vmatpush1.bf16.msra.mxu0 %v3013
      %3076 = vmatprep.subr.bf16.mxu0 0
      %3077 = vmatpush1.bf16.msra.mxu0 %v3014
      %3078 = vmatprep.subr.bf16.mxu0 0
      %3079 = vmatpush1.bf16.msra.mxu0 %v3015
      %3080 = vmatprep.subr.bf16.mxu0 0
      %3081 = vmatpush1.bf16.msra.mxu0 %v3016
      %3082 = vmatprep.subr.bf16.mxu0 0
      %3083 = vmatpush1.bf16.msra.mxu0 %v3017
      %3084 = vmatprep.mubr.bf16.mxu0 %v423
      %3085 = vmatmul.mubr.bf16.gmra.mrb[0].mxu0 %v422
      %v3086 = vpop.f32.mrb[0].mxu0
      %v3087 = vadd.f32 0.0, %v3086
      %v3088 = vpop.f32.mrb[0].mxu0
      %v3089 = vpop.f32.mrb[0].mxu0
      %v3090 = vadd.f32 0.0, %v3089
      %v3091 = vpop.f32.mrb[0].mxu0
      %3092 = vmatprep.mubr.bf16.mxu0 %v427
      %3093 = vmatmul.mubr.bf16.gmra.mrb[0].mxu0 %v426
      %v3094 = vpop.f32.mrb[0].mxu0
      %v3095 = vadd.f32 0.0, %v3094
      %v3096 = vpop.f32.mrb[0].mxu0
      %v3097 = vpop.f32.mrb[0].mxu0
      %v3098 = vadd.f32 0.0, %v3097
      %v3099 = vpop.f32.mrb[0].mxu0
      %3100 = vdwg.mxu0
      %3101 = vmatprep.subr.bf16.mxu0 0
      %3102 = vmatpush1.bf16.msra.mxu0 %v3018
      %3103 = vmatprep.subr.bf16.mxu0 0
      %3104 = vmatpush1.bf16.msra.mxu0 %v3019
      %3105 = vmatprep.subr.bf16.mxu0 0
      %3106 = vmatpush1.bf16.msra.mxu0 %v3020
      %3107 = vmatprep.subr.bf16.mxu0 0
      %3108 = vmatpush1.bf16.msra.mxu0 %v3021
      %3109 = vmatprep.subr.bf16.mxu0 0
      %3110 = vmatpush1.bf16.msra.mxu0 %v3022
      %3111 = vmatprep.subr.bf16.mxu0 0
      %3112 = vmatpush1.bf16.msra.mxu0 %v3023
      %3113 = vmatprep.subr.bf16.mxu0 0
      %3114 = vmatpush1.bf16.msra.mxu0 %v3024
      %3115 = vmatprep.subr.bf16.mxu0 0
      %3116 = vmatpush1.bf16.msra.mxu0 %v3025
      %3117 = vmatprep.subr.bf16.mxu0 0
      %3118 = vmatpush1.bf16.msra.mxu0 %v3026
      %3119 = vmatprep.subr.bf16.mxu0 0
      %3120 = vmatpush1.bf16.msra.mxu0 0
      %3121 = vmatprep.subr.bf16.mxu0 0
      %3122 = vmatpush1.bf16.msra.mxu0 0
      %3123 = vmatprep.subr.bf16.mxu0 0
      %3124 = vmatpush1.bf16.msra.mxu0 0
      %3125 = vmatprep.subr.bf16.mxu0 0
      %3126 = vmatpush1.bf16.msra.mxu0 0
      %3127 = vmatprep.subr.bf16.mxu0 0
      %3128 = vmatpush1.bf16.msra.mxu0 0
      %3129 = vmatprep.subr.bf16.mxu0 0
      %3130 = vmatpush1.bf16.msra.mxu0 0
      %3131 = vmatprep.subr.bf16.mxu0 0
      %3132 = vmatpush1.bf16.msra.mxu0 0
      %3133 = vmatprep.mubr.bf16.mxu0 %v588
      %3134 = vmatmul.mubr.bf16.gmra.mrb[0].mxu0 %v424
      %v3135 = vpop.f32.mrb[0].mxu0
      %v3136 = vadd.f32 %v3087, %v3135
      %v3137 = vpop.f32.mrb[0].mxu0
      %v3138 = vpop.f32.mrb[0].mxu0
      %v3139 = vadd.f32 %v3090, %v3138
      %v3140 = vpop.f32.mrb[0].mxu0
      %3141 = vmatprep.mubr.bf16.mxu0 %v591
      %3142 = vmatmul.mubr.bf16.gmra.mrb[0].mxu0 %v428
      %v3143 = vpop.f32.mrb[0].mxu0
      %v3144 = vadd.f32 %v3095, %v3143
      %v3145 = vpop.f32.mrb[0].mxu0
      %v3146 = vpop.f32.mrb[0].mxu0
      %v3147 = vadd.f32 %v3098, %v3146
      %v3148 = vpop.f32.mrb[0].mxu0
      %3149 = vdwg.mxu0
      %s3150 = scalar_lea.vmem %s312, 400
      %v3151 = vld [vmem:[%s3150] sm:$0xf]
      %v3152 = vld [vmem:[%s3150 + $0x4] sm:$0xf]
      %v3153 = vld [vmem:[%s3150 + $0x8] sm:$0xf]
      %v3154 = vld [vmem:[%s3150 + $0xc] sm:$0xf]
      %v3155 = vld [vmem:[%s3150 + $0x10] sm:$0xf]
      %v3156 = vld [vmem:[%s3150 + $0x14] sm:$0xf]
      %v3157 = vld [vmem:[%s3150 + $0x18] sm:$0xf]
      %v3158 = vld [vmem:[%s3150 + $0x1c] sm:$0xf]
      %v3159 = vld [vmem:[%s3150 + $0x20] sm:$0xf]
      %v3160 = vld [vmem:[%s3150 + $0x24] sm:$0xf]
      %v3161 = vld [vmem:[%s3150 + $0x28] sm:$0xf]
      %v3162 = vld [vmem:[%s3150 + $0x2c] sm:$0xf]
      %v3163 = vld [vmem:[%s3150 + $0x30] sm:$0xf]
      %v3164 = vld [vmem:[%s3150 + $0x34] sm:$0xf]
      %v3165 = vld [vmem:[%s3150 + $0x38] sm:$0xf]
      %v3166 = vld [vmem:[%s3150 + $0x3c] sm:$0xf]
      %v3167 = vld [vmem:[%s3150 + $0x40] sm:$0xf]
      %v3168 = vld [vmem:[%s3150 + $0x44] sm:$0xf]
      %v3169 = vld [vmem:[%s3150 + $0x48] sm:$0xf]
      %v3170 = vld [vmem:[%s3150 + $0x4c] sm:$0xf]
      %v3171 = vld [vmem:[%s3150 + $0x50] sm:$0xf]
      %v3172 = vld [vmem:[%s3150 + $0x54] sm:$0xf]
      %v3173 = vld [vmem:[%s3150 + $0x58] sm:$0xf]
      %v3174 = vld [vmem:[%s3150 + $0x5c] sm:$0xf]
      %v3175 = vld [vmem:[%s3150 + $0x60] sm:$0xf]
      %v3176 = vld [vmem:[%s3150 + $0x64] sm:$0xf]
      %v3177 = vld [vmem:[%s3150 + $0x68] sm:$0xf]
      %v3178 = vld [vmem:[%s3150 + $0x6c] sm:$0xf]
      %v3179 = vld [vmem:[%s3150 + $0x70] sm:$0xf]
      %v3180 = vld [vmem:[%s3150 + $0x74] sm:$0xf]
      %v3181 = vld [vmem:[%s3150 + $0x78] sm:$0xf]
      %v3182 = vld [vmem:[%s3150 + $0x7c] sm:$0xf]
      %v3183 = vld [vmem:[%s3150 + $0x80] sm:$0xf]
      %v3184 = vld [vmem:[%s3150 + $0x84] sm:$0xf]
      %v3185 = vld [vmem:[%s3150 + $0x88] sm:$0xf]
      %v3186 = vld [vmem:[%s3150 + $0x8c] sm:$0xf]
      %v3187 = vld [vmem:[%s3150 + $0x90] sm:$0xf]
      %v3188 = vld [vmem:[%s3150 + $0x94] sm:$0xf]
      %v3189 = vld [vmem:[%s3150 + $0x98] sm:$0xf]
      %v3190 = vld [vmem:[%s3150 + $0x9c] sm:$0xf]
      %v3191 = vld [vmem:[%s3150 + $0xa0] sm:$0xf]
      %v3192 = vld [vmem:[%s3150 + $0xa4] sm:$0xf]
      %v3193 = vld [vmem:[%s3150 + $0xa8] sm:$0xf]
      %v3194 = vld [vmem:[%s3150 + $0xac] sm:$0xf]
      %v3195 = vld [vmem:[%s3150 + $0xb0] sm:$0xf]
      %v3196 = vld [vmem:[%s3150 + $0xb4] sm:$0xf]
      %v3197 = vld [vmem:[%s3150 + $0xb8] sm:$0xf]
      %v3198 = vld [vmem:[%s3150 + $0xbc] sm:$0xf]
      %v3199 = vld [vmem:[%s3150 + $0xc0] sm:$0xf]
      %v3200 = vld [vmem:[%s3150 + $0xc4] sm:$0xf]
      %v3251 = vunpack.c.l.b16 %v3151
      %v3252 = vunpack.c.l.b16 %v3152
      %v3253 = vunpack.c.l.b16 %v3153
      %v3254 = vunpack.c.l.b16 %v3154
      %v3255 = vunpack.c.l.b16 %v3155
      %v3256 = vunpack.c.l.b16 %v3156
      %v3257 = vunpack.c.l.b16 %v3157
      %v3258 = vunpack.c.l.b16 %v3158
      %v3259 = vunpack.c.l.b16 %v3159
      %v3260 = vunpack.c.l.b16 %v3160
      %v3261 = vunpack.c.l.b16 %v3161
      %v3262 = vunpack.c.l.b16 %v3162
      %v3263 = vunpack.c.l.b16 %v3163
      %v3264 = vunpack.c.l.b16 %v3164
      %v3265 = vunpack.c.l.b16 %v3165
      %v3266 = vunpack.c.l.b16 %v3166
      %v3267 = vunpack.c.l.b16 %v3167
      %v3268 = vunpack.c.l.b16 %v3168
      %v3269 = vunpack.c.l.b16 %v3169
      %v3270 = vunpack.c.l.b16 %v3170
      %v3271 = vunpack.c.l.b16 %v3171
      %v3272 = vunpack.c.l.b16 %v3172
      %v3273 = vunpack.c.l.b16 %v3173
      %v3274 = vunpack.c.l.b16 %v3174
      %v3275 = vunpack.c.l.b16 %v3175
      %v3276 = vunpack.c.l.b16 %v3176
      %v3277 = vunpack.c.l.b16 %v3177
      %v3278 = vunpack.c.l.b16 %v3178
      %v3279 = vunpack.c.l.b16 %v3179
      %v3280 = vunpack.c.l.b16 %v3180
      %v3281 = vunpack.c.l.b16 %v3181
      %v3282 = vunpack.c.l.b16 %v3182
      %v3283 = vunpack.c.l.b16 %v3183
      %v3284 = vunpack.c.l.b16 %v3184
      %v3285 = vunpack.c.l.b16 %v3185
      %v3286 = vunpack.c.l.b16 %v3186
      %v3287 = vunpack.c.l.b16 %v3187
      %v3288 = vunpack.c.l.b16 %v3188
      %v3289 = vunpack.c.l.b16 %v3189
      %v3290 = vunpack.c.l.b16 %v3190
      %v3291 = vunpack.c.l.b16 %v3191
      %v3292 = vunpack.c.l.b16 %v3192
      %v3293 = vunpack.c.l.b16 %v3193
      %v3294 = vunpack.c.l.b16 %v3194
      %v3295 = vunpack.c.l.b16 %v3195
      %v3296 = vunpack.c.l.b16 %v3196
      %v3297 = vunpack.c.l.b16 %v3197
      %v3298 = vunpack.c.l.b16 %v3198
      %v3299 = vunpack.c.l.b16 %v3199
      %v3300 = vunpack.c.l.b16 %v3200
      %v3301 = vpack.c.b16 %v3252, %v3251
      %v3302 = vpack.c.b16 %v3254, %v3253
      %v3303 = vpack.c.b16 %v3256, %v3255
      %v3304 = vpack.c.b16 %v3258, %v3257
      %v3305 = vpack.c.b16 %v3260, %v3259
      %v3306 = vpack.c.b16 %v3262, %v3261
      %v3307 = vpack.c.b16 %v3264, %v3263
      %v3308 = vpack.c.b16 %v3266, %v3265
      %v3309 = vpack.c.b16 %v3268, %v3267
      %v3310 = vpack.c.b16 %v3270, %v3269
      %v3311 = vpack.c.b16 %v3272, %v3271
      %v3312 = vpack.c.b16 %v3274, %v3273
      %v3313 = vpack.c.b16 %v3276, %v3275
      %v3314 = vpack.c.b16 %v3278, %v3277
      %v3315 = vpack.c.b16 %v3280, %v3279
      %v3316 = vpack.c.b16 %v3282, %v3281
      %v3317 = vpack.c.b16 %v3284, %v3283
      %v3318 = vpack.c.b16 %v3286, %v3285
      %v3319 = vpack.c.b16 %v3288, %v3287
      %v3320 = vpack.c.b16 %v3290, %v3289
      %v3321 = vpack.c.b16 %v3292, %v3291
      %v3322 = vpack.c.b16 %v3294, %v3293
      %v3323 = vpack.c.b16 %v3296, %v3295
      %v3324 = vpack.c.b16 %v3298, %v3297
      %v3325 = vpack.c.b16 %v3300, %v3299
      %3351 = vmatprep.subr.bf16.mxu0 0
      %3352 = vmatpush1.bf16.msra.mxu0 %v3301
      %3353 = vmatprep.subr.bf16.mxu0 0
      %3354 = vmatpush1.bf16.msra.mxu0 %v3302
      %3355 = vmatprep.subr.bf16.mxu0 0
      %3356 = vmatpush1.bf16.msra.mxu0 %v3303
      %3357 = vmatprep.subr.bf16.mxu0 0
      %3358 = vmatpush1.bf16.msra.mxu0 %v3304
      %3359 = vmatprep.subr.bf16.mxu0 0
      %3360 = vmatpush1.bf16.msra.mxu0 %v3305
      %3361 = vmatprep.subr.bf16.mxu0 0
      %3362 = vmatpush1.bf16.msra.mxu0 %v3306
      %3363 = vmatprep.subr.bf16.mxu0 0
      %3364 = vmatpush1.bf16.msra.mxu0 %v3307
      %3365 = vmatprep.subr.bf16.mxu0 0
      %3366 = vmatpush1.bf16.msra.mxu0 %v3308
      %3367 = vmatprep.subr.bf16.mxu0 0
      %3368 = vmatpush1.bf16.msra.mxu0 %v3309
      %3369 = vmatprep.subr.bf16.mxu0 0
      %3370 = vmatpush1.bf16.msra.mxu0 %v3310
      %3371 = vmatprep.subr.bf16.mxu0 0
      %3372 = vmatpush1.bf16.msra.mxu0 %v3311
      %3373 = vmatprep.subr.bf16.mxu0 0
      %3374 = vmatpush1.bf16.msra.mxu0 %v3312
      %3375 = vmatprep.subr.bf16.mxu0 0
      %3376 = vmatpush1.bf16.msra.mxu0 %v3313
      %3377 = vmatprep.subr.bf16.mxu0 0
      %3378 = vmatpush1.bf16.msra.mxu0 %v3314
      %3379 = vmatprep.subr.bf16.mxu0 0
      %3380 = vmatpush1.bf16.msra.mxu0 %v3315
      %3381 = vmatprep.subr.bf16.mxu0 0
      %3382 = vmatpush1.bf16.msra.mxu0 %v3316
      %3383 = vmatprep.mubr.bf16.mxu0 %v423
      %3384 = vmatmul.mubr.bf16.gmra.mrb[0].mxu0 %v422
      %v3385 = vpop.f32.mrb[0].mxu0
      %v3386 = vadd.f32 0.0, %v3385
      %v3387 = vpop.f32.mrb[0].mxu0
      %v3388 = vpop.f32.mrb[0].mxu0
      %v3389 = vadd.f32 0.0, %v3388
      %v3390 = vpop.f32.mrb[0].mxu0
      %3391 = vmatprep.mubr.bf16.mxu0 %v427
      %3392 = vmatmul.mubr.bf16.gmra.mrb[0].mxu0 %v426
      %v3393 = vpop.f32.mrb[0].mxu0
      %v3394 = vadd.f32 0.0, %v3393
      %v3395 = vpop.f32.mrb[0].mxu0
      %v3396 = vpop.f32.mrb[0].mxu0
      %v3397 = vadd.f32 0.0, %v3396
      %v3398 = vpop.f32.mrb[0].mxu0
      %3399 = vdwg.mxu0
      %3400 = vmatprep.subr.bf16.mxu0 0
      %3401 = vmatpush1.bf16.msra.mxu0 %v3317
      %3402 = vmatprep.subr.bf16.mxu0 0
      %3403 = vmatpush1.bf16.msra.mxu0 %v3318
      %3404 = vmatprep.subr.bf16.mxu0 0
      %3405 = vmatpush1.bf16.msra.mxu0 %v3319
      %3406 = vmatprep.subr.bf16.mxu0 0
      %3407 = vmatpush1.bf16.msra.mxu0 %v3320
      %3408 = vmatprep.subr.bf16.mxu0 0
      %3409 = vmatpush1.bf16.msra.mxu0 %v3321
      %3410 = vmatprep.subr.bf16.mxu0 0
      %3411 = vmatpush1.bf16.msra.mxu0 %v3322
      %3412 = vmatprep.subr.bf16.mxu0 0
      %3413 = vmatpush1.bf16.msra.mxu0 %v3323
      %3414 = vmatprep.subr.bf16.mxu0 0
      %3415 = vmatpush1.bf16.msra.mxu0 %v3324
      %3416 = vmatprep.subr.bf16.mxu0 0
      %3417 = vmatpush1.bf16.msra.mxu0 %v3325
      %3418 = vmatprep.subr.bf16.mxu0 0
      %3419 = vmatpush1.bf16.msra.mxu0 0
      %3420 = vmatprep.subr.bf16.mxu0 0
      %3421 = vmatpush1.bf16.msra.mxu0 0
      %3422 = vmatprep.subr.bf16.mxu0 0
      %3423 = vmatpush1.bf16.msra.mxu0 0
      %3424 = vmatprep.subr.bf16.mxu0 0
      %3425 = vmatpush1.bf16.msra.mxu0 0
      %3426 = vmatprep.subr.bf16.mxu0 0
      %3427 = vmatpush1.bf16.msra.mxu0 0
      %3428 = vmatprep.subr.bf16.mxu0 0
      %3429 = vmatpush1.bf16.msra.mxu0 0
      %3430 = vmatprep.subr.bf16.mxu0 0
      %3431 = vmatpush1.bf16.msra.mxu0 0
      %3432 = vmatprep.mubr.bf16.mxu0 %v588
      %3433 = vmatmul.mubr.bf16.gmra.mrb[0].mxu0 %v424
      %v3434 = vpop.f32.mrb[0].mxu0
      %v3435 = vadd.f32 %v3386, %v3434
      %v3436 = vpop.f32.mrb[0].mxu0
      %v3437 = vpop.f32.mrb[0].mxu0
      %v3438 = vadd.f32 %v3389, %v3437
      %v3439 = vpop.f32.mrb[0].mxu0
      %3440 = vmatprep.mubr.bf16.mxu0 %v591
      %3441 = vmatmul.mubr.bf16.gmra.mrb[0].mxu0 %v428
      %v3442 = vpop.f32.mrb[0].mxu0
      %v3443 = vadd.f32 %v3394, %v3442
      %v3444 = vpop.f32.mrb[0].mxu0
      %v3445 = vpop.f32.mrb[0].mxu0
      %v3446 = vadd.f32 %v3397, %v3445
      %v3447 = vpop.f32.mrb[0].mxu0
      %3448 = vdwg.mxu0
      %v3449 = vmax.f32 %v3136, %v3435
      %v3450 = vmax.f32 %v3139, %v3438
      %v3451 = vmax.f32 %v3144, %v3443
      %v3452 = vmax.f32 %v3147, %v3446
      %s3453 = scalar_lea.vmem %s319, 400
      %v3454 = vld [vmem:[%s3453] sm:$0xf]
      %v3455 = vld [vmem:[%s3453 + $0x4] sm:$0xf]
      %v3456 = vld [vmem:[%s3453 + $0x8] sm:$0xf]
      %v3457 = vld [vmem:[%s3453 + $0xc] sm:$0xf]
      %v3458 = vld [vmem:[%s3453 + $0x10] sm:$0xf]
      %v3459 = vld [vmem:[%s3453 + $0x14] sm:$0xf]
      %v3460 = vld [vmem:[%s3453 + $0x18] sm:$0xf]
      %v3461 = vld [vmem:[%s3453 + $0x1c] sm:$0xf]
      %v3462 = vld [vmem:[%s3453 + $0x20] sm:$0xf]
      %v3463 = vld [vmem:[%s3453 + $0x24] sm:$0xf]
      %v3464 = vld [vmem:[%s3453 + $0x28] sm:$0xf]
      %v3465 = vld [vmem:[%s3453 + $0x2c] sm:$0xf]
      %v3466 = vld [vmem:[%s3453 + $0x30] sm:$0xf]
      %v3467 = vld [vmem:[%s3453 + $0x34] sm:$0xf]
      %v3468 = vld [vmem:[%s3453 + $0x38] sm:$0xf]
      %v3469 = vld [vmem:[%s3453 + $0x3c] sm:$0xf]
      %v3470 = vld [vmem:[%s3453 + $0x40] sm:$0xf]
      %v3471 = vld [vmem:[%s3453 + $0x44] sm:$0xf]
      %v3472 = vld [vmem:[%s3453 + $0x48] sm:$0xf]
      %v3473 = vld [vmem:[%s3453 + $0x4c] sm:$0xf]
      %v3474 = vld [vmem:[%s3453 + $0x50] sm:$0xf]
      %v3475 = vld [vmem:[%s3453 + $0x54] sm:$0xf]
      %v3476 = vld [vmem:[%s3453 + $0x58] sm:$0xf]
      %v3477 = vld [vmem:[%s3453 + $0x5c] sm:$0xf]
      %v3478 = vld [vmem:[%s3453 + $0x60] sm:$0xf]
      %v3479 = vld [vmem:[%s3453 + $0x64] sm:$0xf]
      %v3480 = vld [vmem:[%s3453 + $0x68] sm:$0xf]
      %v3481 = vld [vmem:[%s3453 + $0x6c] sm:$0xf]
      %v3482 = vld [vmem:[%s3453 + $0x70] sm:$0xf]
      %v3483 = vld [vmem:[%s3453 + $0x74] sm:$0xf]
      %v3484 = vld [vmem:[%s3453 + $0x78] sm:$0xf]
      %v3485 = vld [vmem:[%s3453 + $0x7c] sm:$0xf]
      %v3486 = vld [vmem:[%s3453 + $0x80] sm:$0xf]
      %v3487 = vld [vmem:[%s3453 + $0x84] sm:$0xf]
      %v3488 = vld [vmem:[%s3453 + $0x88] sm:$0xf]
      %v3489 = vld [vmem:[%s3453 + $0x8c] sm:$0xf]
      %v3490 = vld [vmem:[%s3453 + $0x90] sm:$0xf]
      %v3491 = vld [vmem:[%s3453 + $0x94] sm:$0xf]
      %v3492 = vld [vmem:[%s3453 + $0x98] sm:$0xf]
      %v3493 = vld [vmem:[%s3453 + $0x9c] sm:$0xf]
      %v3494 = vld [vmem:[%s3453 + $0xa0] sm:$0xf]
      %v3495 = vld [vmem:[%s3453 + $0xa4] sm:$0xf]
      %v3496 = vld [vmem:[%s3453 + $0xa8] sm:$0xf]
      %v3497 = vld [vmem:[%s3453 + $0xac] sm:$0xf]
      %v3498 = vld [vmem:[%s3453 + $0xb0] sm:$0xf]
      %v3499 = vld [vmem:[%s3453 + $0xb4] sm:$0xf]
      %v3500 = vld [vmem:[%s3453 + $0xb8] sm:$0xf]
      %v3501 = vld [vmem:[%s3453 + $0xbc] sm:$0xf]
      %v3502 = vld [vmem:[%s3453 + $0xc0] sm:$0xf]
      %v3503 = vld [vmem:[%s3453 + $0xc4] sm:$0xf]
      %v3554 = vunpack.c.l.b16 %v3454
      %v3555 = vunpack.c.l.b16 %v3455
      %v3556 = vunpack.c.l.b16 %v3456
      %v3557 = vunpack.c.l.b16 %v3457
      %v3558 = vunpack.c.l.b16 %v3458
      %v3559 = vunpack.c.l.b16 %v3459
      %v3560 = vunpack.c.l.b16 %v3460
      %v3561 = vunpack.c.l.b16 %v3461
      %v3562 = vunpack.c.l.b16 %v3462
      %v3563 = vunpack.c.l.b16 %v3463
      %v3564 = vunpack.c.l.b16 %v3464
      %v3565 = vunpack.c.l.b16 %v3465
      %v3566 = vunpack.c.l.b16 %v3466
      %v3567 = vunpack.c.l.b16 %v3467
      %v3568 = vunpack.c.l.b16 %v3468
      %v3569 = vunpack.c.l.b16 %v3469
      %v3570 = vunpack.c.l.b16 %v3470
      %v3571 = vunpack.c.l.b16 %v3471
      %v3572 = vunpack.c.l.b16 %v3472
      %v3573 = vunpack.c.l.b16 %v3473
      %v3574 = vunpack.c.l.b16 %v3474
      %v3575 = vunpack.c.l.b16 %v3475
      %v3576 = vunpack.c.l.b16 %v3476
      %v3577 = vunpack.c.l.b16 %v3477
      %v3578 = vunpack.c.l.b16 %v3478
      %v3579 = vunpack.c.l.b16 %v3479
      %v3580 = vunpack.c.l.b16 %v3480
      %v3581 = vunpack.c.l.b16 %v3481
      %v3582 = vunpack.c.l.b16 %v3482
      %v3583 = vunpack.c.l.b16 %v3483
      %v3584 = vunpack.c.l.b16 %v3484
      %v3585 = vunpack.c.l.b16 %v3485
      %v3586 = vunpack.c.l.b16 %v3486
      %v3587 = vunpack.c.l.b16 %v3487
      %v3588 = vunpack.c.l.b16 %v3488
      %v3589 = vunpack.c.l.b16 %v3489
      %v3590 = vunpack.c.l.b16 %v3490
      %v3591 = vunpack.c.l.b16 %v3491
      %v3592 = vunpack.c.l.b16 %v3492
      %v3593 = vunpack.c.l.b16 %v3493
      %v3594 = vunpack.c.l.b16 %v3494
      %v3595 = vunpack.c.l.b16 %v3495
      %v3596 = vunpack.c.l.b16 %v3496
      %v3597 = vunpack.c.l.b16 %v3497
      %v3598 = vunpack.c.l.b16 %v3498
      %v3599 = vunpack.c.l.b16 %v3499
      %v3600 = vunpack.c.l.b16 %v3500
      %v3601 = vunpack.c.l.b16 %v3501
      %v3602 = vunpack.c.l.b16 %v3502
      %v3603 = vunpack.c.l.b16 %v3503
      %v3604 = vpack.c.b16 %v3555, %v3554
      %v3605 = vpack.c.b16 %v3557, %v3556
      %v3606 = vpack.c.b16 %v3559, %v3558
      %v3607 = vpack.c.b16 %v3561, %v3560
      %v3608 = vpack.c.b16 %v3563, %v3562
      %v3609 = vpack.c.b16 %v3565, %v3564
      %v3610 = vpack.c.b16 %v3567, %v3566
      %v3611 = vpack.c.b16 %v3569, %v3568
      %v3612 = vpack.c.b16 %v3571, %v3570
      %v3613 = vpack.c.b16 %v3573, %v3572
      %v3614 = vpack.c.b16 %v3575, %v3574
      %v3615 = vpack.c.b16 %v3577, %v3576
      %v3616 = vpack.c.b16 %v3579, %v3578
      %v3617 = vpack.c.b16 %v3581, %v3580
      %v3618 = vpack.c.b16 %v3583, %v3582
      %v3619 = vpack.c.b16 %v3585, %v3584
      %v3620 = vpack.c.b16 %v3587, %v3586
      %v3621 = vpack.c.b16 %v3589, %v3588
      %v3622 = vpack.c.b16 %v3591, %v3590
      %v3623 = vpack.c.b16 %v3593, %v3592
      %v3624 = vpack.c.b16 %v3595, %v3594
      %v3625 = vpack.c.b16 %v3597, %v3596
      %v3626 = vpack.c.b16 %v3599, %v3598
      %v3627 = vpack.c.b16 %v3601, %v3600
      %v3628 = vpack.c.b16 %v3603, %v3602
      %3654 = vmatprep.subr.bf16.mxu0 0
      %3655 = vmatpush1.bf16.msra.mxu0 %v3604
      %3656 = vmatprep.subr.bf16.mxu0 0
      %3657 = vmatpush1.bf16.msra.mxu0 %v3605
      %3658 = vmatprep.subr.bf16.mxu0 0
      %3659 = vmatpush1.bf16.msra.mxu0 %v3606
      %3660 = vmatprep.subr.bf16.mxu0 0
      %3661 = vmatpush1.bf16.msra.mxu0 %v3607
      %3662 = vmatprep.subr.bf16.mxu0 0
      %3663 = vmatpush1.bf16.msra.mxu0 %v3608
      %3664 = vmatprep.subr.bf16.mxu0 0
      %3665 = vmatpush1.bf16.msra.mxu0 %v3609
      %3666 = vmatprep.subr.bf16.mxu0 0
      %3667 = vmatpush1.bf16.msra.mxu0 %v3610
      %3668 = vmatprep.subr.bf16.mxu0 0
      %3669 = vmatpush1.bf16.msra.mxu0 %v3611
      %3670 = vmatprep.subr.bf16.mxu0 0
      %3671 = vmatpush1.bf16.msra.mxu0 %v3612
      %3672 = vmatprep.subr.bf16.mxu0 0
      %3673 = vmatpush1.bf16.msra.mxu0 %v3613
      %3674 = vmatprep.subr.bf16.mxu0 0
      %3675 = vmatpush1.bf16.msra.mxu0 %v3614
      %3676 = vmatprep.subr.bf16.mxu0 0
      %3677 = vmatpush1.bf16.msra.mxu0 %v3615
      %3678 = vmatprep.subr.bf16.mxu0 0
      %3679 = vmatpush1.bf16.msra.mxu0 %v3616
      %3680 = vmatprep.subr.bf16.mxu0 0
      %3681 = vmatpush1.bf16.msra.mxu0 %v3617
      %3682 = vmatprep.subr.bf16.mxu0 0
      %3683 = vmatpush1.bf16.msra.mxu0 %v3618
      %3684 = vmatprep.subr.bf16.mxu0 0
      %3685 = vmatpush1.bf16.msra.mxu0 %v3619
      %3686 = vmatprep.mubr.bf16.mxu0 %v423
      %3687 = vmatmul.mubr.bf16.gmra.mrb[0].mxu0 %v422
      %v3688 = vpop.f32.mrb[0].mxu0
      %v3689 = vadd.f32 0.0, %v3688
      %v3690 = vpop.f32.mrb[0].mxu0
      %v3691 = vpop.f32.mrb[0].mxu0
      %v3692 = vadd.f32 0.0, %v3691
      %v3693 = vpop.f32.mrb[0].mxu0
      %3694 = vmatprep.mubr.bf16.mxu0 %v427
      %3695 = vmatmul.mubr.bf16.gmra.mrb[0].mxu0 %v426
      %v3696 = vpop.f32.mrb[0].mxu0
      %v3697 = vadd.f32 0.0, %v3696
      %v3698 = vpop.f32.mrb[0].mxu0
      %v3699 = vpop.f32.mrb[0].mxu0
      %v3700 = vadd.f32 0.0, %v3699
      %v3701 = vpop.f32.mrb[0].mxu0
      %3702 = vdwg.mxu0
      %3703 = vmatprep.subr.bf16.mxu0 0
      %3704 = vmatpush1.bf16.msra.mxu0 %v3620
      %3705 = vmatprep.subr.bf16.mxu0 0
      %3706 = vmatpush1.bf16.msra.mxu0 %v3621
      %3707 = vmatprep.subr.bf16.mxu0 0
      %3708 = vmatpush1.bf16.msra.mxu0 %v3622
      %3709 = vmatprep.subr.bf16.mxu0 0
      %3710 = vmatpush1.bf16.msra.mxu0 %v3623
      %3711 = vmatprep.subr.bf16.mxu0 0
      %3712 = vmatpush1.bf16.msra.mxu0 %v3624
      %3713 = vmatprep.subr.bf16.mxu0 0
      %3714 = vmatpush1.bf16.msra.mxu0 %v3625
      %3715 = vmatprep.subr.bf16.mxu0 0
      %3716 = vmatpush1.bf16.msra.mxu0 %v3626
      %3717 = vmatprep.subr.bf16.mxu0 0
      %3718 = vmatpush1.bf16.msra.mxu0 %v3627
      %3719 = vmatprep.subr.bf16.mxu0 0
      %3720 = vmatpush1.bf16.msra.mxu0 %v3628
      %3721 = vmatprep.subr.bf16.mxu0 0
      %3722 = vmatpush1.bf16.msra.mxu0 0
      %3723 = vmatprep.subr.bf16.mxu0 0
      %3724 = vmatpush1.bf16.msra.mxu0 0
      %3725 = vmatprep.subr.bf16.mxu0 0
      %3726 = vmatpush1.bf16.msra.mxu0 0
      %3727 = vmatprep.subr.bf16.mxu0 0
      %3728 = vmatpush1.bf16.msra.mxu0 0
      %3729 = vmatprep.subr.bf16.mxu0 0
      %3730 = vmatpush1.bf16.msra.mxu0 0
      %3731 = vmatprep.subr.bf16.mxu0 0
      %3732 = vmatpush1.bf16.msra.mxu0 0
      %3733 = vmatprep.subr.bf16.mxu0 0
      %3734 = vmatpush1.bf16.msra.mxu0 0
      %3735 = vmatprep.mubr.bf16.mxu0 %v588
      %3736 = vmatmul.mubr.bf16.gmra.mrb[0].mxu0 %v424
      %v3737 = vpop.f32.mrb[0].mxu0
      %v3738 = vadd.f32 %v3689, %v3737
      %v3739 = vpop.f32.mrb[0].mxu0
      %v3740 = vpop.f32.mrb[0].mxu0
      %v3741 = vadd.f32 %v3692, %v3740
      %v3742 = vpop.f32.mrb[0].mxu0
      %3743 = vmatprep.mubr.bf16.mxu0 %v591
      %3744 = vmatmul.mubr.bf16.gmra.mrb[0].mxu0 %v428
      %v3745 = vpop.f32.mrb[0].mxu0
      %v3746 = vadd.f32 %v3697, %v3745
      %v3747 = vpop.f32.mrb[0].mxu0
      %v3748 = vpop.f32.mrb[0].mxu0
      %v3749 = vadd.f32 %v3700, %v3748
      %v3750 = vpop.f32.mrb[0].mxu0
      %3751 = vdwg.mxu0
      %s3752 = scalar_lea.vmem %s326, 400
      %v3753 = vld [vmem:[%s3752] sm:$0xf]
      %v3754 = vld [vmem:[%s3752 + $0x4] sm:$0xf]
      %v3755 = vld [vmem:[%s3752 + $0x8] sm:$0xf]
      %v3756 = vld [vmem:[%s3752 + $0xc] sm:$0xf]
      %v3757 = vld [vmem:[%s3752 + $0x10] sm:$0xf]
      %v3758 = vld [vmem:[%s3752 + $0x14] sm:$0xf]
      %v3759 = vld [vmem:[%s3752 + $0x18] sm:$0xf]
      %v3760 = vld [vmem:[%s3752 + $0x1c] sm:$0xf]
      %v3761 = vld [vmem:[%s3752 + $0x20] sm:$0xf]
      %v3762 = vld [vmem:[%s3752 + $0x24] sm:$0xf]
      %v3763 = vld [vmem:[%s3752 + $0x28] sm:$0xf]
      %v3764 = vld [vmem:[%s3752 + $0x2c] sm:$0xf]
      %v3765 = vld [vmem:[%s3752 + $0x30] sm:$0xf]
      %v3766 = vld [vmem:[%s3752 + $0x34] sm:$0xf]
      %v3767 = vld [vmem:[%s3752 + $0x38] sm:$0xf]
      %v3768 = vld [vmem:[%s3752 + $0x3c] sm:$0xf]
      %v3769 = vld [vmem:[%s3752 + $0x40] sm:$0xf]
      %v3770 = vld [vmem:[%s3752 + $0x44] sm:$0xf]
      %v3771 = vld [vmem:[%s3752 + $0x48] sm:$0xf]
      %v3772 = vld [vmem:[%s3752 + $0x4c] sm:$0xf]
      %v3773 = vld [vmem:[%s3752 + $0x50] sm:$0xf]
      %v3774 = vld [vmem:[%s3752 + $0x54] sm:$0xf]
      %v3775 = vld [vmem:[%s3752 + $0x58] sm:$0xf]
      %v3776 = vld [vmem:[%s3752 + $0x5c] sm:$0xf]
      %v3777 = vld [vmem:[%s3752 + $0x60] sm:$0xf]
      %v3778 = vld [vmem:[%s3752 + $0x64] sm:$0xf]
      %v3779 = vld [vmem:[%s3752 + $0x68] sm:$0xf]
      %v3780 = vld [vmem:[%s3752 + $0x6c] sm:$0xf]
      %v3781 = vld [vmem:[%s3752 + $0x70] sm:$0xf]
      %v3782 = vld [vmem:[%s3752 + $0x74] sm:$0xf]
      %v3783 = vld [vmem:[%s3752 + $0x78] sm:$0xf]
      %v3784 = vld [vmem:[%s3752 + $0x7c] sm:$0xf]
      %v3785 = vld [vmem:[%s3752 + $0x80] sm:$0xf]
      %v3786 = vld [vmem:[%s3752 + $0x84] sm:$0xf]
      %v3787 = vld [vmem:[%s3752 + $0x88] sm:$0xf]
      %v3788 = vld [vmem:[%s3752 + $0x8c] sm:$0xf]
      %v3789 = vld [vmem:[%s3752 + $0x90] sm:$0xf]
      %v3790 = vld [vmem:[%s3752 + $0x94] sm:$0xf]
      %v3791 = vld [vmem:[%s3752 + $0x98] sm:$0xf]
      %v3792 = vld [vmem:[%s3752 + $0x9c] sm:$0xf]
      %v3793 = vld [vmem:[%s3752 + $0xa0] sm:$0xf]
      %v3794 = vld [vmem:[%s3752 + $0xa4] sm:$0xf]
      %v3795 = vld [vmem:[%s3752 + $0xa8] sm:$0xf]
      %v3796 = vld [vmem:[%s3752 + $0xac] sm:$0xf]
      %v3797 = vld [vmem:[%s3752 + $0xb0] sm:$0xf]
      %v3798 = vld [vmem:[%s3752 + $0xb4] sm:$0xf]
      %v3799 = vld [vmem:[%s3752 + $0xb8] sm:$0xf]
      %v3800 = vld [vmem:[%s3752 + $0xbc] sm:$0xf]
      %v3801 = vld [vmem:[%s3752 + $0xc0] sm:$0xf]
      %v3802 = vld [vmem:[%s3752 + $0xc4] sm:$0xf]
      %v3853 = vunpack.c.l.b16 %v3753
      %v3854 = vunpack.c.l.b16 %v3754
      %v3855 = vunpack.c.l.b16 %v3755
      %v3856 = vunpack.c.l.b16 %v3756
      %v3857 = vunpack.c.l.b16 %v3757
      %v3858 = vunpack.c.l.b16 %v3758
      %v3859 = vunpack.c.l.b16 %v3759
      %v3860 = vunpack.c.l.b16 %v3760
      %v3861 = vunpack.c.l.b16 %v3761
      %v3862 = vunpack.c.l.b16 %v3762
      %v3863 = vunpack.c.l.b16 %v3763
      %v3864 = vunpack.c.l.b16 %v3764
      %v3865 = vunpack.c.l.b16 %v3765
      %v3866 = vunpack.c.l.b16 %v3766
      %v3867 = vunpack.c.l.b16 %v3767
      %v3868 = vunpack.c.l.b16 %v3768
      %v3869 = vunpack.c.l.b16 %v3769
      %v3870 = vunpack.c.l.b16 %v3770
      %v3871 = vunpack.c.l.b16 %v3771
      %v3872 = vunpack.c.l.b16 %v3772
      %v3873 = vunpack.c.l.b16 %v3773
      %v3874 = vunpack.c.l.b16 %v3774
      %v3875 = vunpack.c.l.b16 %v3775
      %v3876 = vunpack.c.l.b16 %v3776
      %v3877 = vunpack.c.l.b16 %v3777
      %v3878 = vunpack.c.l.b16 %v3778
      %v3879 = vunpack.c.l.b16 %v3779
      %v3880 = vunpack.c.l.b16 %v3780
      %v3881 = vunpack.c.l.b16 %v3781
      %v3882 = vunpack.c.l.b16 %v3782
      %v3883 = vunpack.c.l.b16 %v3783
      %v3884 = vunpack.c.l.b16 %v3784
      %v3885 = vunpack.c.l.b16 %v3785
      %v3886 = vunpack.c.l.b16 %v3786
      %v3887 = vunpack.c.l.b16 %v3787
      %v3888 = vunpack.c.l.b16 %v3788
      %v3889 = vunpack.c.l.b16 %v3789
      %v3890 = vunpack.c.l.b16 %v3790
      %v3891 = vunpack.c.l.b16 %v3791
      %v3892 = vunpack.c.l.b16 %v3792
      %v3893 = vunpack.c.l.b16 %v3793
      %v3894 = vunpack.c.l.b16 %v3794
      %v3895 = vunpack.c.l.b16 %v3795
      %v3896 = vunpack.c.l.b16 %v3796
      %v3897 = vunpack.c.l.b16 %v3797
      %v3898 = vunpack.c.l.b16 %v3798
      %v3899 = vunpack.c.l.b16 %v3799
      %v3900 = vunpack.c.l.b16 %v3800
      %v3901 = vunpack.c.l.b16 %v3801
      %v3902 = vunpack.c.l.b16 %v3802
      %v3903 = vpack.c.b16 %v3854, %v3853
      %v3904 = vpack.c.b16 %v3856, %v3855
      %v3905 = vpack.c.b16 %v3858, %v3857
      %v3906 = vpack.c.b16 %v3860, %v3859
      %v3907 = vpack.c.b16 %v3862, %v3861
      %v3908 = vpack.c.b16 %v3864, %v3863
      %v3909 = vpack.c.b16 %v3866, %v3865
      %v3910 = vpack.c.b16 %v3868, %v3867
      %v3911 = vpack.c.b16 %v3870, %v3869
      %v3912 = vpack.c.b16 %v3872, %v3871
      %v3913 = vpack.c.b16 %v3874, %v3873
      %v3914 = vpack.c.b16 %v3876, %v3875
      %v3915 = vpack.c.b16 %v3878, %v3877
      %v3916 = vpack.c.b16 %v3880, %v3879
      %v3917 = vpack.c.b16 %v3882, %v3881
      %v3918 = vpack.c.b16 %v3884, %v3883
      %v3919 = vpack.c.b16 %v3886, %v3885
      %v3920 = vpack.c.b16 %v3888, %v3887
      %v3921 = vpack.c.b16 %v3890, %v3889
      %v3922 = vpack.c.b16 %v3892, %v3891
      %v3923 = vpack.c.b16 %v3894, %v3893
      %v3924 = vpack.c.b16 %v3896, %v3895
      %v3925 = vpack.c.b16 %v3898, %v3897
      %v3926 = vpack.c.b16 %v3900, %v3899
      %v3927 = vpack.c.b16 %v3902, %v3901
      %3953 = vmatprep.subr.bf16.mxu0 0
      %3954 = vmatpush1.bf16.msra.mxu0 %v3903
      %3955 = vmatprep.subr.bf16.mxu0 0
      %3956 = vmatpush1.bf16.msra.mxu0 %v3904
      %3957 = vmatprep.subr.bf16.mxu0 0
      %3958 = vmatpush1.bf16.msra.mxu0 %v3905
      %3959 = vmatprep.subr.bf16.mxu0 0
      %3960 = vmatpush1.bf16.msra.mxu0 %v3906
      %3961 = vmatprep.subr.bf16.mxu0 0
      %3962 = vmatpush1.bf16.msra.mxu0 %v3907
      %3963 = vmatprep.subr.bf16.mxu0 0
      %3964 = vmatpush1.bf16.msra.mxu0 %v3908
      %3965 = vmatprep.subr.bf16.mxu0 0
      %3966 = vmatpush1.bf16.msra.mxu0 %v3909
      %3967 = vmatprep.subr.bf16.mxu0 0
      %3968 = vmatpush1.bf16.msra.mxu0 %v3910
      %3969 = vmatprep.subr.bf16.mxu0 0
      %3970 = vmatpush1.bf16.msra.mxu0 %v3911
      %3971 = vmatprep.subr.bf16.mxu0 0
      %3972 = vmatpush1.bf16.msra.mxu0 %v3912
      %3973 = vmatprep.subr.bf16.mxu0 0
      %3974 = vmatpush1.bf16.msra.mxu0 %v3913
      %3975 = vmatprep.subr.bf16.mxu0 0
      %3976 = vmatpush1.bf16.msra.mxu0 %v3914
      %3977 = vmatprep.subr.bf16.mxu0 0
      %3978 = vmatpush1.bf16.msra.mxu0 %v3915
      %3979 = vmatprep.subr.bf16.mxu0 0
      %3980 = vmatpush1.bf16.msra.mxu0 %v3916
      %3981 = vmatprep.subr.bf16.mxu0 0
      %3982 = vmatpush1.bf16.msra.mxu0 %v3917
      %3983 = vmatprep.subr.bf16.mxu0 0
      %3984 = vmatpush1.bf16.msra.mxu0 %v3918
      %3985 = vmatprep.mubr.bf16.mxu0 %v423
      %3986 = vmatmul.mubr.bf16.gmra.mrb[0].mxu0 %v422
      %v3987 = vpop.f32.mrb[0].mxu0
      %v3988 = vadd.f32 0.0, %v3987
      %v3989 = vpop.f32.mrb[0].mxu0
      %v3990 = vpop.f32.mrb[0].mxu0
      %v3991 = vadd.f32 0.0, %v3990
      %v3992 = vpop.f32.mrb[0].mxu0
      %3993 = vmatprep.mubr.bf16.mxu0 %v427
      %3994 = vmatmul.mubr.bf16.gmra.mrb[0].mxu0 %v426
      %v3995 = vpop.f32.mrb[0].mxu0
      %v3996 = vadd.f32 0.0, %v3995
      %v3997 = vpop.f32.mrb[0].mxu0
      %v3998 = vpop.f32.mrb[0].mxu0
      %v3999 = vadd.f32 0.0, %v3998
      %v4000 = vpop.f32.mrb[0].mxu0
      %4001 = vdwg.mxu0
      %4002 = vmatprep.subr.bf16.mxu0 0
      %4003 = vmatpush1.bf16.msra.mxu0 %v3919
      %4004 = vmatprep.subr.bf16.mxu0 0
      %4005 = vmatpush1.bf16.msra.mxu0 %v3920
      %4006 = vmatprep.subr.bf16.mxu0 0
      %4007 = vmatpush1.bf16.msra.mxu0 %v3921
      %4008 = vmatprep.subr.bf16.mxu0 0
      %4009 = vmatpush1.bf16.msra.mxu0 %v3922
      %4010 = vmatprep.subr.bf16.mxu0 0
      %4011 = vmatpush1.bf16.msra.mxu0 %v3923
      %4012 = vmatprep.subr.bf16.mxu0 0
      %4013 = vmatpush1.bf16.msra.mxu0 %v3924
      %4014 = vmatprep.subr.bf16.mxu0 0
      %4015 = vmatpush1.bf16.msra.mxu0 %v3925
      %4016 = vmatprep.subr.bf16.mxu0 0
      %4017 = vmatpush1.bf16.msra.mxu0 %v3926
      %4018 = vmatprep.subr.bf16.mxu0 0
      %4019 = vmatpush1.bf16.msra.mxu0 %v3927
      %4020 = vmatprep.subr.bf16.mxu0 0
      %4021 = vmatpush1.bf16.msra.mxu0 0
      %4022 = vmatprep.subr.bf16.mxu0 0
      %4023 = vmatpush1.bf16.msra.mxu0 0
      %4024 = vmatprep.subr.bf16.mxu0 0
      %4025 = vmatpush1.bf16.msra.mxu0 0
      %4026 = vmatprep.subr.bf16.mxu0 0
      %4027 = vmatpush1.bf16.msra.mxu0 0
      %4028 = vmatprep.subr.bf16.mxu0 0
      %4029 = vmatpush1.bf16.msra.mxu0 0
      %4030 = vmatprep.subr.bf16.mxu0 0
      %4031 = vmatpush1.bf16.msra.mxu0 0
      %4032 = vmatprep.subr.bf16.mxu0 0
      %4033 = vmatpush1.bf16.msra.mxu0 0
      %4034 = vmatprep.mubr.bf16.mxu0 %v588
      %4035 = vmatmul.mubr.bf16.gmra.mrb[0].mxu0 %v424
      %v4036 = vpop.f32.mrb[0].mxu0
      %v4037 = vadd.f32 %v3988, %v4036
      %v4038 = vpop.f32.mrb[0].mxu0
      %v4039 = vpop.f32.mrb[0].mxu0
      %v4040 = vadd.f32 %v3991, %v4039
      %v4041 = vpop.f32.mrb[0].mxu0
      %4042 = vmatprep.mubr.bf16.mxu0 %v591
      %4043 = vmatmul.mubr.bf16.gmra.mrb[0].mxu0 %v428
      %v4044 = vpop.f32.mrb[0].mxu0
      %v4045 = vadd.f32 %v3996, %v4044
      %v4046 = vpop.f32.mrb[0].mxu0
      %v4047 = vpop.f32.mrb[0].mxu0
      %v4048 = vadd.f32 %v3999, %v4047
      %v4049 = vpop.f32.mrb[0].mxu0
      %4050 = vdwg.mxu0
      %v4051 = vmax.f32 %v3738, %v4037
      %v4052 = vmax.f32 %v3741, %v4040
      %v4053 = vmax.f32 %v3746, %v4045
      %v4054 = vmax.f32 %v3749, %v4048
      %v4055 = vmax.f32 %v3449, %v4051
      %v4056 = vmax.f32 %v3450, %v4052
      %v4057 = vmax.f32 %v3451, %v4053
      %v4058 = vmax.f32 %v3452, %v4054
      %v4059 = vadd.f32 %v4055, %v1600
      %v4060 = vadd.f32 %v4056, %v1605
      %v4061 = vadd.f32 %v4057, %v1610
      %v4062 = vadd.f32 %v4058, %v1615
      %v4063 = vtanh.pop %v4059
      %v4064 = vtanh.pop %v4060
      %v4065 = vtanh.pop %v4061
      %v4066 = vtanh.pop %v4062
      %s4067 = scalar_lea.vmem %s333, 64
      %4068 = vst.msk [vmem:[%s4067] sm:$0xff] %vm1625, %v4063
      %4069 = vst.msk [vmem:[%s4067 + $0x8] sm:$0xff] %vm1625, %v4064
      %4070 = vst.msk [vmem:[%s4067 + $0x10] sm:$0xff] %vm1625, %v4065
      %4071 = vst.msk [vmem:[%s4067 + $0x18] sm:$0xff] %vm1625, %v4066
      %s4072 = scalar_lea.vmem %s305, 600
      %v4073 = vld [vmem:[%s4072] sm:$0xf]
      %v4074 = vld [vmem:[%s4072 + $0x4] sm:$0xf]
      %v4075 = vld [vmem:[%s4072 + $0x8] sm:$0xf]
      %v4076 = vld [vmem:[%s4072 + $0xc] sm:$0xf]
      %v4077 = vld [vmem:[%s4072 + $0x10] sm:$0xf]
      %v4078 = vld [vmem:[%s4072 + $0x14] sm:$0xf]
      %v4079 = vld [vmem:[%s4072 + $0x18] sm:$0xf]
      %v4080 = vld [vmem:[%s4072 + $0x1c] sm:$0xf]
      %v4081 = vld [vmem:[%s4072 + $0x20] sm:$0xf]
      %v4082 = vld [vmem:[%s4072 + $0x24] sm:$0xf]
      %v4083 = vld [vmem:[%s4072 + $0x28] sm:$0xf]
      %v4084 = vld [vmem:[%s4072 + $0x2c] sm:$0xf]
      %v4085 = vld [vmem:[%s4072 + $0x30] sm:$0xf]
      %v4086 = vld [vmem:[%s4072 + $0x34] sm:$0xf]
      %v4087 = vld [vmem:[%s4072 + $0x38] sm:$0xf]
      %v4088 = vld [vmem:[%s4072 + $0x3c] sm:$0xf]
      %v4089 = vld [vmem:[%s4072 + $0x40] sm:$0xf]
      %v4090 = vld [vmem:[%s4072 + $0x44] sm:$0xf]
      %v4091 = vld [vmem:[%s4072 + $0x48] sm:$0xf]
      %v4092 = vld [vmem:[%s4072 + $0x4c] sm:$0xf]
      %v4093 = vld [vmem:[%s4072 + $0x50] sm:$0xf]
      %v4094 = vld [vmem:[%s4072 + $0x54] sm:$0xf]
      %v4095 = vld [vmem:[%s4072 + $0x58] sm:$0xf]
      %v4096 = vld [vmem:[%s4072 + $0x5c] sm:$0xf]
      %v4097 = vld [vmem:[%s4072 + $0x60] sm:$0xf]
      %v4098 = vld [vmem:[%s4072 + $0x64] sm:$0xf]
      %v4099 = vld [vmem:[%s4072 + $0x68] sm:$0xf]
      %v4100 = vld [vmem:[%s4072 + $0x6c] sm:$0xf]
      %v4101 = vld [vmem:[%s4072 + $0x70] sm:$0xf]
      %v4102 = vld [vmem:[%s4072 + $0x74] sm:$0xf]
      %v4103 = vld [vmem:[%s4072 + $0x78] sm:$0xf]
      %v4104 = vld [vmem:[%s4072 + $0x7c] sm:$0xf]
      %v4105 = vld [vmem:[%s4072 + $0x80] sm:$0xf]
      %v4106 = vld [vmem:[%s4072 + $0x84] sm:$0xf]
      %v4107 = vld [vmem:[%s4072 + $0x88] sm:$0xf]
      %v4108 = vld [vmem:[%s4072 + $0x8c] sm:$0xf]
      %v4109 = vld [vmem:[%s4072 + $0x90] sm:$0xf]
      %v4110 = vld [vmem:[%s4072 + $0x94] sm:$0xf]
      %v4111 = vld [vmem:[%s4072 + $0x98] sm:$0xf]
      %v4112 = vld [vmem:[%s4072 + $0x9c] sm:$0xf]
      %v4113 = vld [vmem:[%s4072 + $0xa0] sm:$0xf]
      %v4114 = vld [vmem:[%s4072 + $0xa4] sm:$0xf]
      %v4115 = vld [vmem:[%s4072 + $0xa8] sm:$0xf]
      %v4116 = vld [vmem:[%s4072 + $0xac] sm:$0xf]
      %v4117 = vld [vmem:[%s4072 + $0xb0] sm:$0xf]
      %v4118 = vld [vmem:[%s4072 + $0xb4] sm:$0xf]
      %v4119 = vld [vmem:[%s4072 + $0xb8] sm:$0xf]
      %v4120 = vld [vmem:[%s4072 + $0xbc] sm:$0xf]
      %v4121 = vld [vmem:[%s4072 + $0xc0] sm:$0xf]
      %v4122 = vld [vmem:[%s4072 + $0xc4] sm:$0xf]
      %v4173 = vunpack.c.l.b16 %v4073
      %v4174 = vunpack.c.l.b16 %v4074
      %v4175 = vunpack.c.l.b16 %v4075
      %v4176 = vunpack.c.l.b16 %v4076
      %v4177 = vunpack.c.l.b16 %v4077
      %v4178 = vunpack.c.l.b16 %v4078
      %v4179 = vunpack.c.l.b16 %v4079
      %v4180 = vunpack.c.l.b16 %v4080
      %v4181 = vunpack.c.l.b16 %v4081
      %v4182 = vunpack.c.l.b16 %v4082
      %v4183 = vunpack.c.l.b16 %v4083
      %v4184 = vunpack.c.l.b16 %v4084
      %v4185 = vunpack.c.l.b16 %v4085
      %v4186 = vunpack.c.l.b16 %v4086
      %v4187 = vunpack.c.l.b16 %v4087
      %v4188 = vunpack.c.l.b16 %v4088
      %v4189 = vunpack.c.l.b16 %v4089
      %v4190 = vunpack.c.l.b16 %v4090
      %v4191 = vunpack.c.l.b16 %v4091
      %v4192 = vunpack.c.l.b16 %v4092
      %v4193 = vunpack.c.l.b16 %v4093
      %v4194 = vunpack.c.l.b16 %v4094
      %v4195 = vunpack.c.l.b16 %v4095
      %v4196 = vunpack.c.l.b16 %v4096
      %v4197 = vunpack.c.l.b16 %v4097
      %v4198 = vunpack.c.l.b16 %v4098
      %v4199 = vunpack.c.l.b16 %v4099
      %v4200 = vunpack.c.l.b16 %v4100
      %v4201 = vunpack.c.l.b16 %v4101
      %v4202 = vunpack.c.l.b16 %v4102
      %v4203 = vunpack.c.l.b16 %v4103
      %v4204 = vunpack.c.l.b16 %v4104
      %v4205 = vunpack.c.l.b16 %v4105
      %v4206 = vunpack.c.l.b16 %v4106
      %v4207 = vunpack.c.l.b16 %v4107
      %v4208 = vunpack.c.l.b16 %v4108
      %v4209 = vunpack.c.l.b16 %v4109
      %v4210 = vunpack.c.l.b16 %v4110
      %v4211 = vunpack.c.l.b16 %v4111
      %v4212 = vunpack.c.l.b16 %v4112
      %v4213 = vunpack.c.l.b16 %v4113
      %v4214 = vunpack.c.l.b16 %v4114
      %v4215 = vunpack.c.l.b16 %v4115
      %v4216 = vunpack.c.l.b16 %v4116
      %v4217 = vunpack.c.l.b16 %v4117
      %v4218 = vunpack.c.l.b16 %v4118
      %v4219 = vunpack.c.l.b16 %v4119
      %v4220 = vunpack.c.l.b16 %v4120
      %v4221 = vunpack.c.l.b16 %v4121
      %v4222 = vunpack.c.l.b16 %v4122
      %v4223 = vpack.c.b16 %v4174, %v4173
      %v4224 = vpack.c.b16 %v4176, %v4175
      %v4225 = vpack.c.b16 %v4178, %v4177
      %v4226 = vpack.c.b16 %v4180, %v4179
      %v4227 = vpack.c.b16 %v4182, %v4181
      %v4228 = vpack.c.b16 %v4184, %v4183
      %v4229 = vpack.c.b16 %v4186, %v4185
      %v4230 = vpack.c.b16 %v4188, %v4187
      %v4231 = vpack.c.b16 %v4190, %v4189
      %v4232 = vpack.c.b16 %v4192, %v4191
      %v4233 = vpack.c.b16 %v4194, %v4193
      %v4234 = vpack.c.b16 %v4196, %v4195
      %v4235 = vpack.c.b16 %v4198, %v4197
      %v4236 = vpack.c.b16 %v4200, %v4199
      %v4237 = vpack.c.b16 %v4202, %v4201
      %v4238 = vpack.c.b16 %v4204, %v4203
      %v4239 = vpack.c.b16 %v4206, %v4205
      %v4240 = vpack.c.b16 %v4208, %v4207
      %v4241 = vpack.c.b16 %v4210, %v4209
      %v4242 = vpack.c.b16 %v4212, %v4211
      %v4243 = vpack.c.b16 %v4214, %v4213
      %v4244 = vpack.c.b16 %v4216, %v4215
      %v4245 = vpack.c.b16 %v4218, %v4217
      %v4246 = vpack.c.b16 %v4220, %v4219
      %v4247 = vpack.c.b16 %v4222, %v4221
      %4273 = vmatprep.subr.bf16.mxu0 0
      %4274 = vmatpush1.bf16.msra.mxu0 %v4223
      %4275 = vmatprep.subr.bf16.mxu0 0
      %4276 = vmatpush1.bf16.msra.mxu0 %v4224
      %4277 = vmatprep.subr.bf16.mxu0 0
      %4278 = vmatpush1.bf16.msra.mxu0 %v4225
      %4279 = vmatprep.subr.bf16.mxu0 0
      %4280 = vmatpush1.bf16.msra.mxu0 %v4226
      %4281 = vmatprep.subr.bf16.mxu0 0
      %4282 = vmatpush1.bf16.msra.mxu0 %v4227
      %4283 = vmatprep.subr.bf16.mxu0 0
      %4284 = vmatpush1.bf16.msra.mxu0 %v4228
      %4285 = vmatprep.subr.bf16.mxu0 0
      %4286 = vmatpush1.bf16.msra.mxu0 %v4229
      %4287 = vmatprep.subr.bf16.mxu0 0
      %4288 = vmatpush1.bf16.msra.mxu0 %v4230
      %4289 = vmatprep.subr.bf16.mxu0 0
      %4290 = vmatpush1.bf16.msra.mxu0 %v4231
      %4291 = vmatprep.subr.bf16.mxu0 0
      %4292 = vmatpush1.bf16.msra.mxu0 %v4232
      %4293 = vmatprep.subr.bf16.mxu0 0
      %4294 = vmatpush1.bf16.msra.mxu0 %v4233
      %4295 = vmatprep.subr.bf16.mxu0 0
      %4296 = vmatpush1.bf16.msra.mxu0 %v4234
      %4297 = vmatprep.subr.bf16.mxu0 0
      %4298 = vmatpush1.bf16.msra.mxu0 %v4235
      %4299 = vmatprep.subr.bf16.mxu0 0
      %4300 = vmatpush1.bf16.msra.mxu0 %v4236
      %4301 = vmatprep.subr.bf16.mxu0 0
      %4302 = vmatpush1.bf16.msra.mxu0 %v4237
      %4303 = vmatprep.subr.bf16.mxu0 0
      %4304 = vmatpush1.bf16.msra.mxu0 %v4238
      %4305 = vmatprep.mubr.bf16.mxu0 %v423
      %4306 = vmatmul.mubr.bf16.gmra.mrb[0].mxu0 %v422
      %v4307 = vpop.f32.mrb[0].mxu0
      %v4308 = vadd.f32 0.0, %v4307
      %v4309 = vpop.f32.mrb[0].mxu0
      %v4310 = vpop.f32.mrb[0].mxu0
      %v4311 = vadd.f32 0.0, %v4310
      %v4312 = vpop.f32.mrb[0].mxu0
      %4313 = vmatprep.mubr.bf16.mxu0 %v427
      %4314 = vmatmul.mubr.bf16.gmra.mrb[0].mxu0 %v426
      %v4315 = vpop.f32.mrb[0].mxu0
      %v4316 = vadd.f32 0.0, %v4315
      %v4317 = vpop.f32.mrb[0].mxu0
      %v4318 = vpop.f32.mrb[0].mxu0
      %v4319 = vadd.f32 0.0, %v4318
      %v4320 = vpop.f32.mrb[0].mxu0
      %4321 = vdwg.mxu0
      %4322 = vmatprep.subr.bf16.mxu0 0
      %4323 = vmatpush1.bf16.msra.mxu0 %v4239
      %4324 = vmatprep.subr.bf16.mxu0 0
      %4325 = vmatpush1.bf16.msra.mxu0 %v4240
      %4326 = vmatprep.subr.bf16.mxu0 0
      %4327 = vmatpush1.bf16.msra.mxu0 %v4241
      %4328 = vmatprep.subr.bf16.mxu0 0
      %4329 = vmatpush1.bf16.msra.mxu0 %v4242
      %4330 = vmatprep.subr.bf16.mxu0 0
      %4331 = vmatpush1.bf16.msra.mxu0 %v4243
      %4332 = vmatprep.subr.bf16.mxu0 0
      %4333 = vmatpush1.bf16.msra.mxu0 %v4244
      %4334 = vmatprep.subr.bf16.mxu0 0
      %4335 = vmatpush1.bf16.msra.mxu0 %v4245
      %4336 = vmatprep.subr.bf16.mxu0 0
      %4337 = vmatpush1.bf16.msra.mxu0 %v4246
      %4338 = vmatprep.subr.bf16.mxu0 0
      %4339 = vmatpush1.bf16.msra.mxu0 %v4247
      %4340 = vmatprep.subr.bf16.mxu0 0
      %4341 = vmatpush1.bf16.msra.mxu0 0
      %4342 = vmatprep.subr.bf16.mxu0 0
      %4343 = vmatpush1.bf16.msra.mxu0 0
      %4344 = vmatprep.subr.bf16.mxu0 0
      %4345 = vmatpush1.bf16.msra.mxu0 0
      %4346 = vmatprep.subr.bf16.mxu0 0
      %4347 = vmatpush1.bf16.msra.mxu0 0
      %4348 = vmatprep.subr.bf16.mxu0 0
      %4349 = vmatpush1.bf16.msra.mxu0 0
      %4350 = vmatprep.subr.bf16.mxu0 0
      %4351 = vmatpush1.bf16.msra.mxu0 0
      %4352 = vmatprep.subr.bf16.mxu0 0
      %4353 = vmatpush1.bf16.msra.mxu0 0
      %4354 = vmatprep.mubr.bf16.mxu0 %v588
      %4355 = vmatmul.mubr.bf16.gmra.mrb[0].mxu0 %v424
      %v4356 = vpop.f32.mrb[0].mxu0
      %v4357 = vadd.f32 %v4308, %v4356
      %v4358 = vpop.f32.mrb[0].mxu0
      %v4359 = vpop.f32.mrb[0].mxu0
      %v4360 = vadd.f32 %v4311, %v4359
      %v4361 = vpop.f32.mrb[0].mxu0
      %4362 = vmatprep.mubr.bf16.mxu0 %v591
      %4363 = vmatmul.mubr.bf16.gmra.mrb[0].mxu0 %v428
      %v4364 = vpop.f32.mrb[0].mxu0
      %v4365 = vadd.f32 %v4316, %v4364
      %v4366 = vpop.f32.mrb[0].mxu0
      %v4367 = vpop.f32.mrb[0].mxu0
      %v4368 = vadd.f32 %v4319, %v4367
      %v4369 = vpop.f32.mrb[0].mxu0
      %4370 = vdwg.mxu0
      %s4371 = scalar_lea.vmem %s312, 600
      %v4372 = vld [vmem:[%s4371] sm:$0xf]
      %v4373 = vld [vmem:[%s4371 + $0x4] sm:$0xf]
      %v4374 = vld [vmem:[%s4371 + $0x8] sm:$0xf]
      %v4375 = vld [vmem:[%s4371 + $0xc] sm:$0xf]
      %v4376 = vld [vmem:[%s4371 + $0x10] sm:$0xf]
      %v4377 = vld [vmem:[%s4371 + $0x14] sm:$0xf]
      %v4378 = vld [vmem:[%s4371 + $0x18] sm:$0xf]
      %v4379 = vld [vmem:[%s4371 + $0x1c] sm:$0xf]
      %v4380 = vld [vmem:[%s4371 + $0x20] sm:$0xf]
      %v4381 = vld [vmem:[%s4371 + $0x24] sm:$0xf]
      %v4382 = vld [vmem:[%s4371 + $0x28] sm:$0xf]
      %v4383 = vld [vmem:[%s4371 + $0x2c] sm:$0xf]
      %v4384 = vld [vmem:[%s4371 + $0x30] sm:$0xf]
      %v4385 = vld [vmem:[%s4371 + $0x34] sm:$0xf]
      %v4386 = vld [vmem:[%s4371 + $0x38] sm:$0xf]
      %v4387 = vld [vmem:[%s4371 + $0x3c] sm:$0xf]
      %v4388 = vld [vmem:[%s4371 + $0x40] sm:$0xf]
      %v4389 = vld [vmem:[%s4371 + $0x44] sm:$0xf]
      %v4390 = vld [vmem:[%s4371 + $0x48] sm:$0xf]
      %v4391 = vld [vmem:[%s4371 + $0x4c] sm:$0xf]
      %v4392 = vld [vmem:[%s4371 + $0x50] sm:$0xf]
      %v4393 = vld [vmem:[%s4371 + $0x54] sm:$0xf]
      %v4394 = vld [vmem:[%s4371 + $0x58] sm:$0xf]
      %v4395 = vld [vmem:[%s4371 + $0x5c] sm:$0xf]
      %v4396 = vld [vmem:[%s4371 + $0x60] sm:$0xf]
      %v4397 = vld [vmem:[%s4371 + $0x64] sm:$0xf]
      %v4398 = vld [vmem:[%s4371 + $0x68] sm:$0xf]
      %v4399 = vld [vmem:[%s4371 + $0x6c] sm:$0xf]
      %v4400 = vld [vmem:[%s4371 + $0x70] sm:$0xf]
      %v4401 = vld [vmem:[%s4371 + $0x74] sm:$0xf]
      %v4402 = vld [vmem:[%s4371 + $0x78] sm:$0xf]
      %v4403 = vld [vmem:[%s4371 + $0x7c] sm:$0xf]
      %v4404 = vld [vmem:[%s4371 + $0x80] sm:$0xf]
      %v4405 = vld [vmem:[%s4371 + $0x84] sm:$0xf]
      %v4406 = vld [vmem:[%s4371 + $0x88] sm:$0xf]
      %v4407 = vld [vmem:[%s4371 + $0x8c] sm:$0xf]
      %v4408 = vld [vmem:[%s4371 + $0x90] sm:$0xf]
      %v4409 = vld [vmem:[%s4371 + $0x94] sm:$0xf]
      %v4410 = vld [vmem:[%s4371 + $0x98] sm:$0xf]
      %v4411 = vld [vmem:[%s4371 + $0x9c] sm:$0xf]
      %v4412 = vld [vmem:[%s4371 + $0xa0] sm:$0xf]
      %v4413 = vld [vmem:[%s4371 + $0xa4] sm:$0xf]
      %v4414 = vld [vmem:[%s4371 + $0xa8] sm:$0xf]
      %v4415 = vld [vmem:[%s4371 + $0xac] sm:$0xf]
      %v4416 = vld [vmem:[%s4371 + $0xb0] sm:$0xf]
      %v4417 = vld [vmem:[%s4371 + $0xb4] sm:$0xf]
      %v4418 = vld [vmem:[%s4371 + $0xb8] sm:$0xf]
      %v4419 = vld [vmem:[%s4371 + $0xbc] sm:$0xf]
      %v4420 = vld [vmem:[%s4371 + $0xc0] sm:$0xf]
      %v4421 = vld [vmem:[%s4371 + $0xc4] sm:$0xf]
      %v4472 = vunpack.c.l.b16 %v4372
      %v4473 = vunpack.c.l.b16 %v4373
      %v4474 = vunpack.c.l.b16 %v4374
      %v4475 = vunpack.c.l.b16 %v4375
      %v4476 = vunpack.c.l.b16 %v4376
      %v4477 = vunpack.c.l.b16 %v4377
      %v4478 = vunpack.c.l.b16 %v4378
      %v4479 = vunpack.c.l.b16 %v4379
      %v4480 = vunpack.c.l.b16 %v4380
      %v4481 = vunpack.c.l.b16 %v4381
      %v4482 = vunpack.c.l.b16 %v4382
      %v4483 = vunpack.c.l.b16 %v4383
      %v4484 = vunpack.c.l.b16 %v4384
      %v4485 = vunpack.c.l.b16 %v4385
      %v4486 = vunpack.c.l.b16 %v4386
      %v4487 = vunpack.c.l.b16 %v4387
      %v4488 = vunpack.c.l.b16 %v4388
      %v4489 = vunpack.c.l.b16 %v4389
      %v4490 = vunpack.c.l.b16 %v4390
      %v4491 = vunpack.c.l.b16 %v4391
      %v4492 = vunpack.c.l.b16 %v4392
      %v4493 = vunpack.c.l.b16 %v4393
      %v4494 = vunpack.c.l.b16 %v4394
      %v4495 = vunpack.c.l.b16 %v4395
      %v4496 = vunpack.c.l.b16 %v4396
      %v4497 = vunpack.c.l.b16 %v4397
      %v4498 = vunpack.c.l.b16 %v4398
      %v4499 = vunpack.c.l.b16 %v4399
      %v4500 = vunpack.c.l.b16 %v4400
      %v4501 = vunpack.c.l.b16 %v4401
      %v4502 = vunpack.c.l.b16 %v4402
      %v4503 = vunpack.c.l.b16 %v4403
      %v4504 = vunpack.c.l.b16 %v4404
      %v4505 = vunpack.c.l.b16 %v4405
      %v4506 = vunpack.c.l.b16 %v4406
      %v4507 = vunpack.c.l.b16 %v4407
      %v4508 = vunpack.c.l.b16 %v4408
      %v4509 = vunpack.c.l.b16 %v4409
      %v4510 = vunpack.c.l.b16 %v4410
      %v4511 = vunpack.c.l.b16 %v4411
      %v4512 = vunpack.c.l.b16 %v4412
      %v4513 = vunpack.c.l.b16 %v4413
      %v4514 = vunpack.c.l.b16 %v4414
      %v4515 = vunpack.c.l.b16 %v4415
      %v4516 = vunpack.c.l.b16 %v4416
      %v4517 = vunpack.c.l.b16 %v4417
      %v4518 = vunpack.c.l.b16 %v4418
      %v4519 = vunpack.c.l.b16 %v4419
      %v4520 = vunpack.c.l.b16 %v4420
      %v4521 = vunpack.c.l.b16 %v4421
      %v4522 = vpack.c.b16 %v4473, %v4472
      %v4523 = vpack.c.b16 %v4475, %v4474
      %v4524 = vpack.c.b16 %v4477, %v4476
      %v4525 = vpack.c.b16 %v4479, %v4478
      %v4526 = vpack.c.b16 %v4481, %v4480
      %v4527 = vpack.c.b16 %v4483, %v4482
      %v4528 = vpack.c.b16 %v4485, %v4484
      %v4529 = vpack.c.b16 %v4487, %v4486
      %v4530 = vpack.c.b16 %v4489, %v4488
      %v4531 = vpack.c.b16 %v4491, %v4490
      %v4532 = vpack.c.b16 %v4493, %v4492
      %v4533 = vpack.c.b16 %v4495, %v4494
      %v4534 = vpack.c.b16 %v4497, %v4496
      %v4535 = vpack.c.b16 %v4499, %v4498
      %v4536 = vpack.c.b16 %v4501, %v4500
      %v4537 = vpack.c.b16 %v4503, %v4502
      %v4538 = vpack.c.b16 %v4505, %v4504
      %v4539 = vpack.c.b16 %v4507, %v4506
      %v4540 = vpack.c.b16 %v4509, %v4508
      %v4541 = vpack.c.b16 %v4511, %v4510
      %v4542 = vpack.c.b16 %v4513, %v4512
      %v4543 = vpack.c.b16 %v4515, %v4514
      %v4544 = vpack.c.b16 %v4517, %v4516
      %v4545 = vpack.c.b16 %v4519, %v4518
      %v4546 = vpack.c.b16 %v4521, %v4520
      %4572 = vmatprep.subr.bf16.mxu0 0
      %4573 = vmatpush1.bf16.msra.mxu0 %v4522
      %4574 = vmatprep.subr.bf16.mxu0 0
      %4575 = vmatpush1.bf16.msra.mxu0 %v4523
      %4576 = vmatprep.subr.bf16.mxu0 0
      %4577 = vmatpush1.bf16.msra.mxu0 %v4524
      %4578 = vmatprep.subr.bf16.mxu0 0
      %4579 = vmatpush1.bf16.msra.mxu0 %v4525
      %4580 = vmatprep.subr.bf16.mxu0 0
      %4581 = vmatpush1.bf16.msra.mxu0 %v4526
      %4582 = vmatprep.subr.bf16.mxu0 0
      %4583 = vmatpush1.bf16.msra.mxu0 %v4527
      %4584 = vmatprep.subr.bf16.mxu0 0
      %4585 = vmatpush1.bf16.msra.mxu0 %v4528
      %4586 = vmatprep.subr.bf16.mxu0 0
      %4587 = vmatpush1.bf16.msra.mxu0 %v4529
      %4588 = vmatprep.subr.bf16.mxu0 0
      %4589 = vmatpush1.bf16.msra.mxu0 %v4530
      %4590 = vmatprep.subr.bf16.mxu0 0
      %4591 = vmatpush1.bf16.msra.mxu0 %v4531
      %4592 = vmatprep.subr.bf16.mxu0 0
      %4593 = vmatpush1.bf16.msra.mxu0 %v4532
      %4594 = vmatprep.subr.bf16.mxu0 0
      %4595 = vmatpush1.bf16.msra.mxu0 %v4533
      %4596 = vmatprep.subr.bf16.mxu0 0
      %4597 = vmatpush1.bf16.msra.mxu0 %v4534
      %4598 = vmatprep.subr.bf16.mxu0 0
      %4599 = vmatpush1.bf16.msra.mxu0 %v4535
      %4600 = vmatprep.subr.bf16.mxu0 0
      %4601 = vmatpush1.bf16.msra.mxu0 %v4536
      %4602 = vmatprep.subr.bf16.mxu0 0
      %4603 = vmatpush1.bf16.msra.mxu0 %v4537
      %4604 = vmatprep.mubr.bf16.mxu0 %v423
      %4605 = vmatmul.mubr.bf16.gmra.mrb[0].mxu0 %v422
      %v4606 = vpop.f32.mrb[0].mxu0
      %v4607 = vadd.f32 0.0, %v4606
      %v4608 = vpop.f32.mrb[0].mxu0
      %v4609 = vpop.f32.mrb[0].mxu0
      %v4610 = vadd.f32 0.0, %v4609
      %v4611 = vpop.f32.mrb[0].mxu0
      %4612 = vmatprep.mubr.bf16.mxu0 %v427
      %4613 = vmatmul.mubr.bf16.gmra.mrb[0].mxu0 %v426
      %v4614 = vpop.f32.mrb[0].mxu0
      %v4615 = vadd.f32 0.0, %v4614
      %v4616 = vpop.f32.mrb[0].mxu0
      %v4617 = vpop.f32.mrb[0].mxu0
      %v4618 = vadd.f32 0.0, %v4617
      %v4619 = vpop.f32.mrb[0].mxu0
      %4620 = vdwg.mxu0
      %4621 = vmatprep.subr.bf16.mxu0 0
      %4622 = vmatpush1.bf16.msra.mxu0 %v4538
      %4623 = vmatprep.subr.bf16.mxu0 0
      %4624 = vmatpush1.bf16.msra.mxu0 %v4539
      %4625 = vmatprep.subr.bf16.mxu0 0
      %4626 = vmatpush1.bf16.msra.mxu0 %v4540
      %4627 = vmatprep.subr.bf16.mxu0 0
      %4628 = vmatpush1.bf16.msra.mxu0 %v4541
      %4629 = vmatprep.subr.bf16.mxu0 0
      %4630 = vmatpush1.bf16.msra.mxu0 %v4542
      %4631 = vmatprep.subr.bf16.mxu0 0
      %4632 = vmatpush1.bf16.msra.mxu0 %v4543
      %4633 = vmatprep.subr.bf16.mxu0 0
      %4634 = vmatpush1.bf16.msra.mxu0 %v4544
      %4635 = vmatprep.subr.bf16.mxu0 0
      %4636 = vmatpush1.bf16.msra.mxu0 %v4545
      %4637 = vmatprep.subr.bf16.mxu0 0
      %4638 = vmatpush1.bf16.msra.mxu0 %v4546
      %4639 = vmatprep.subr.bf16.mxu0 0
      %4640 = vmatpush1.bf16.msra.mxu0 0
      %4641 = vmatprep.subr.bf16.mxu0 0
      %4642 = vmatpush1.bf16.msra.mxu0 0
      %4643 = vmatprep.subr.bf16.mxu0 0
      %4644 = vmatpush1.bf16.msra.mxu0 0
      %4645 = vmatprep.subr.bf16.mxu0 0
      %4646 = vmatpush1.bf16.msra.mxu0 0
      %4647 = vmatprep.subr.bf16.mxu0 0
      %4648 = vmatpush1.bf16.msra.mxu0 0
      %4649 = vmatprep.subr.bf16.mxu0 0
      %4650 = vmatpush1.bf16.msra.mxu0 0
      %4651 = vmatprep.subr.bf16.mxu0 0
      %4652 = vmatpush1.bf16.msra.mxu0 0
      %4653 = vmatprep.mubr.bf16.mxu0 %v588
      %4654 = vmatmul.mubr.bf16.gmra.mrb[0].mxu0 %v424
      %v4655 = vpop.f32.mrb[0].mxu0
      %v4656 = vadd.f32 %v4607, %v4655
      %v4657 = vpop.f32.mrb[0].mxu0
      %v4658 = vpop.f32.mrb[0].mxu0
      %v4659 = vadd.f32 %v4610, %v4658
      %v4660 = vpop.f32.mrb[0].mxu0
      %4661 = vmatprep.mubr.bf16.mxu0 %v591
      %4662 = vmatmul.mubr.bf16.gmra.mrb[0].mxu0 %v428
      %v4663 = vpop.f32.mrb[0].mxu0
      %v4664 = vadd.f32 %v4615, %v4663
      %v4665 = vpop.f32.mrb[0].mxu0
      %v4666 = vpop.f32.mrb[0].mxu0
      %v4667 = vadd.f32 %v4618, %v4666
      %v4668 = vpop.f32.mrb[0].mxu0
      %4669 = vdwg.mxu0
      %v4670 = vmax.f32 %v4357, %v4656
      %v4671 = vmax.f32 %v4360, %v4659
      %v4672 = vmax.f32 %v4365, %v4664
      %v4673 = vmax.f32 %v4368, %v4667
      %s4674 = scalar_lea.vmem %s319, 600
      %v4675 = vld [vmem:[%s4674] sm:$0xf]
      %v4676 = vld [vmem:[%s4674 + $0x4] sm:$0xf]
      %v4677 = vld [vmem:[%s4674 + $0x8] sm:$0xf]
      %v4678 = vld [vmem:[%s4674 + $0xc] sm:$0xf]
      %v4679 = vld [vmem:[%s4674 + $0x10] sm:$0xf]
      %v4680 = vld [vmem:[%s4674 + $0x14] sm:$0xf]
      %v4681 = vld [vmem:[%s4674 + $0x18] sm:$0xf]
      %v4682 = vld [vmem:[%s4674 + $0x1c] sm:$0xf]
      %v4683 = vld [vmem:[%s4674 + $0x20] sm:$0xf]
      %v4684 = vld [vmem:[%s4674 + $0x24] sm:$0xf]
      %v4685 = vld [vmem:[%s4674 + $0x28] sm:$0xf]
      %v4686 = vld [vmem:[%s4674 + $0x2c] sm:$0xf]
      %v4687 = vld [vmem:[%s4674 + $0x30] sm:$0xf]
      %v4688 = vld [vmem:[%s4674 + $0x34] sm:$0xf]
      %v4689 = vld [vmem:[%s4674 + $0x38] sm:$0xf]
      %v4690 = vld [vmem:[%s4674 + $0x3c] sm:$0xf]
      %v4691 = vld [vmem:[%s4674 + $0x40] sm:$0xf]
      %v4692 = vld [vmem:[%s4674 + $0x44] sm:$0xf]
      %v4693 = vld [vmem:[%s4674 + $0x48] sm:$0xf]
      %v4694 = vld [vmem:[%s4674 + $0x4c] sm:$0xf]
      %v4695 = vld [vmem:[%s4674 + $0x50] sm:$0xf]
      %v4696 = vld [vmem:[%s4674 + $0x54] sm:$0xf]
      %v4697 = vld [vmem:[%s4674 + $0x58] sm:$0xf]
      %v4698 = vld [vmem:[%s4674 + $0x5c] sm:$0xf]
      %v4699 = vld [vmem:[%s4674 + $0x60] sm:$0xf]
      %v4700 = vld [vmem:[%s4674 + $0x64] sm:$0xf]
      %v4701 = vld [vmem:[%s4674 + $0x68] sm:$0xf]
      %v4702 = vld [vmem:[%s4674 + $0x6c] sm:$0xf]
      %v4703 = vld [vmem:[%s4674 + $0x70] sm:$0xf]
      %v4704 = vld [vmem:[%s4674 + $0x74] sm:$0xf]
      %v4705 = vld [vmem:[%s4674 + $0x78] sm:$0xf]
      %v4706 = vld [vmem:[%s4674 + $0x7c] sm:$0xf]
      %v4707 = vld [vmem:[%s4674 + $0x80] sm:$0xf]
      %v4708 = vld [vmem:[%s4674 + $0x84] sm:$0xf]
      %v4709 = vld [vmem:[%s4674 + $0x88] sm:$0xf]
      %v4710 = vld [vmem:[%s4674 + $0x8c] sm:$0xf]
      %v4711 = vld [vmem:[%s4674 + $0x90] sm:$0xf]
      %v4712 = vld [vmem:[%s4674 + $0x94] sm:$0xf]
      %v4713 = vld [vmem:[%s4674 + $0x98] sm:$0xf]
      %v4714 = vld [vmem:[%s4674 + $0x9c] sm:$0xf]
      %v4715 = vld [vmem:[%s4674 + $0xa0] sm:$0xf]
      %v4716 = vld [vmem:[%s4674 + $0xa4] sm:$0xf]
      %v4717 = vld [vmem:[%s4674 + $0xa8] sm:$0xf]
      %v4718 = vld [vmem:[%s4674 + $0xac] sm:$0xf]
      %v4719 = vld [vmem:[%s4674 + $0xb0] sm:$0xf]
      %v4720 = vld [vmem:[%s4674 + $0xb4] sm:$0xf]
      %v4721 = vld [vmem:[%s4674 + $0xb8] sm:$0xf]
      %v4722 = vld [vmem:[%s4674 + $0xbc] sm:$0xf]
      %v4723 = vld [vmem:[%s4674 + $0xc0] sm:$0xf]
      %v4724 = vld [vmem:[%s4674 + $0xc4] sm:$0xf]
      %v4775 = vunpack.c.l.b16 %v4675
      %v4776 = vunpack.c.l.b16 %v4676
      %v4777 = vunpack.c.l.b16 %v4677
      %v4778 = vunpack.c.l.b16 %v4678
      %v4779 = vunpack.c.l.b16 %v4679
      %v4780 = vunpack.c.l.b16 %v4680
      %v4781 = vunpack.c.l.b16 %v4681
      %v4782 = vunpack.c.l.b16 %v4682
      %v4783 = vunpack.c.l.b16 %v4683
      %v4784 = vunpack.c.l.b16 %v4684
      %v4785 = vunpack.c.l.b16 %v4685
      %v4786 = vunpack.c.l.b16 %v4686
      %v4787 = vunpack.c.l.b16 %v4687
      %v4788 = vunpack.c.l.b16 %v4688
      %v4789 = vunpack.c.l.b16 %v4689
      %v4790 = vunpack.c.l.b16 %v4690
      %v4791 = vunpack.c.l.b16 %v4691
      %v4792 = vunpack.c.l.b16 %v4692
      %v4793 = vunpack.c.l.b16 %v4693
      %v4794 = vunpack.c.l.b16 %v4694
      %v4795 = vunpack.c.l.b16 %v4695
      %v4796 = vunpack.c.l.b16 %v4696
      %v4797 = vunpack.c.l.b16 %v4697
      %v4798 = vunpack.c.l.b16 %v4698
      %v4799 = vunpack.c.l.b16 %v4699
      %v4800 = vunpack.c.l.b16 %v4700
      %v4801 = vunpack.c.l.b16 %v4701
      %v4802 = vunpack.c.l.b16 %v4702
      %v4803 = vunpack.c.l.b16 %v4703
      %v4804 = vunpack.c.l.b16 %v4704
      %v4805 = vunpack.c.l.b16 %v4705
      %v4806 = vunpack.c.l.b16 %v4706
      %v4807 = vunpack.c.l.b16 %v4707
      %v4808 = vunpack.c.l.b16 %v4708
      %v4809 = vunpack.c.l.b16 %v4709
      %v4810 = vunpack.c.l.b16 %v4710
      %v4811 = vunpack.c.l.b16 %v4711
      %v4812 = vunpack.c.l.b16 %v4712
      %v4813 = vunpack.c.l.b16 %v4713
      %v4814 = vunpack.c.l.b16 %v4714
      %v4815 = vunpack.c.l.b16 %v4715
      %v4816 = vunpack.c.l.b16 %v4716
      %v4817 = vunpack.c.l.b16 %v4717
      %v4818 = vunpack.c.l.b16 %v4718
      %v4819 = vunpack.c.l.b16 %v4719
      %v4820 = vunpack.c.l.b16 %v4720
      %v4821 = vunpack.c.l.b16 %v4721
      %v4822 = vunpack.c.l.b16 %v4722
      %v4823 = vunpack.c.l.b16 %v4723
      %v4824 = vunpack.c.l.b16 %v4724
      %v4825 = vpack.c.b16 %v4776, %v4775
      %v4826 = vpack.c.b16 %v4778, %v4777
      %v4827 = vpack.c.b16 %v4780, %v4779
      %v4828 = vpack.c.b16 %v4782, %v4781
      %v4829 = vpack.c.b16 %v4784, %v4783
      %v4830 = vpack.c.b16 %v4786, %v4785
      %v4831 = vpack.c.b16 %v4788, %v4787
      %v4832 = vpack.c.b16 %v4790, %v4789
      %v4833 = vpack.c.b16 %v4792, %v4791
      %v4834 = vpack.c.b16 %v4794, %v4793
      %v4835 = vpack.c.b16 %v4796, %v4795
      %v4836 = vpack.c.b16 %v4798, %v4797
      %v4837 = vpack.c.b16 %v4800, %v4799
      %v4838 = vpack.c.b16 %v4802, %v4801
      %v4839 = vpack.c.b16 %v4804, %v4803
      %v4840 = vpack.c.b16 %v4806, %v4805
      %v4841 = vpack.c.b16 %v4808, %v4807
      %v4842 = vpack.c.b16 %v4810, %v4809
      %v4843 = vpack.c.b16 %v4812, %v4811
      %v4844 = vpack.c.b16 %v4814, %v4813
      %v4845 = vpack.c.b16 %v4816, %v4815
      %v4846 = vpack.c.b16 %v4818, %v4817
      %v4847 = vpack.c.b16 %v4820, %v4819
      %v4848 = vpack.c.b16 %v4822, %v4821
      %v4849 = vpack.c.b16 %v4824, %v4823
      %4875 = vmatprep.subr.bf16.mxu0 0
      %4876 = vmatpush1.bf16.msra.mxu0 %v4825
      %4877 = vmatprep.subr.bf16.mxu0 0
      %4878 = vmatpush1.bf16.msra.mxu0 %v4826
      %4879 = vmatprep.subr.bf16.mxu0 0
      %4880 = vmatpush1.bf16.msra.mxu0 %v4827
      %4881 = vmatprep.subr.bf16.mxu0 0
      %4882 = vmatpush1.bf16.msra.mxu0 %v4828
      %4883 = vmatprep.subr.bf16.mxu0 0
      %4884 = vmatpush1.bf16.msra.mxu0 %v4829
      %4885 = vmatprep.subr.bf16.mxu0 0
      %4886 = vmatpush1.bf16.msra.mxu0 %v4830
      %4887 = vmatprep.subr.bf16.mxu0 0
      %4888 = vmatpush1.bf16.msra.mxu0 %v4831
      %4889 = vmatprep.subr.bf16.mxu0 0
      %4890 = vmatpush1.bf16.msra.mxu0 %v4832
      %4891 = vmatprep.subr.bf16.mxu0 0
      %4892 = vmatpush1.bf16.msra.mxu0 %v4833
      %4893 = vmatprep.subr.bf16.mxu0 0
      %4894 = vmatpush1.bf16.msra.mxu0 %v4834
      %4895 = vmatprep.subr.bf16.mxu0 0
      %4896 = vmatpush1.bf16.msra.mxu0 %v4835
      %4897 = vmatprep.subr.bf16.mxu0 0
      %4898 = vmatpush1.bf16.msra.mxu0 %v4836
      %4899 = vmatprep.subr.bf16.mxu0 0
      %4900 = vmatpush1.bf16.msra.mxu0 %v4837
      %4901 = vmatprep.subr.bf16.mxu0 0
      %4902 = vmatpush1.bf16.msra.mxu0 %v4838
      %4903 = vmatprep.subr.bf16.mxu0 0
      %4904 = vmatpush1.bf16.msra.mxu0 %v4839
      %4905 = vmatprep.subr.bf16.mxu0 0
      %4906 = vmatpush1.bf16.msra.mxu0 %v4840
      %4907 = vmatprep.mubr.bf16.mxu0 %v423
      %4908 = vmatmul.mubr.bf16.gmra.mrb[0].mxu0 %v422
      %v4909 = vpop.f32.mrb[0].mxu0
      %v4910 = vadd.f32 0.0, %v4909
      %v4911 = vpop.f32.mrb[0].mxu0
      %v4912 = vpop.f32.mrb[0].mxu0
      %v4913 = vadd.f32 0.0, %v4912
      %v4914 = vpop.f32.mrb[0].mxu0
      %4915 = vmatprep.mubr.bf16.mxu0 %v427
      %4916 = vmatmul.mubr.bf16.gmra.mrb[0].mxu0 %v426
      %v4917 = vpop.f32.mrb[0].mxu0
      %v4918 = vadd.f32 0.0, %v4917
      %v4919 = vpop.f32.mrb[0].mxu0
      %v4920 = vpop.f32.mrb[0].mxu0
      %v4921 = vadd.f32 0.0, %v4920
      %v4922 = vpop.f32.mrb[0].mxu0
      %4923 = vdwg.mxu0
      %4924 = vmatprep.subr.bf16.mxu0 0
      %4925 = vmatpush1.bf16.msra.mxu0 %v4841
      %4926 = vmatprep.subr.bf16.mxu0 0
      %4927 = vmatpush1.bf16.msra.mxu0 %v4842
      %4928 = vmatprep.subr.bf16.mxu0 0
      %4929 = vmatpush1.bf16.msra.mxu0 %v4843
      %4930 = vmatprep.subr.bf16.mxu0 0
      %4931 = vmatpush1.bf16.msra.mxu0 %v4844
      %4932 = vmatprep.subr.bf16.mxu0 0
      %4933 = vmatpush1.bf16.msra.mxu0 %v4845
      %4934 = vmatprep.subr.bf16.mxu0 0
      %4935 = vmatpush1.bf16.msra.mxu0 %v4846
      %4936 = vmatprep.subr.bf16.mxu0 0
      %4937 = vmatpush1.bf16.msra.mxu0 %v4847
      %4938 = vmatprep.subr.bf16.mxu0 0
      %4939 = vmatpush1.bf16.msra.mxu0 %v4848
      %4940 = vmatprep.subr.bf16.mxu0 0
      %4941 = vmatpush1.bf16.msra.mxu0 %v4849
      %4942 = vmatprep.subr.bf16.mxu0 0
      %4943 = vmatpush1.bf16.msra.mxu0 0
      %4944 = vmatprep.subr.bf16.mxu0 0
      %4945 = vmatpush1.bf16.msra.mxu0 0
      %4946 = vmatprep.subr.bf16.mxu0 0
      %4947 = vmatpush1.bf16.msra.mxu0 0
      %4948 = vmatprep.subr.bf16.mxu0 0
      %4949 = vmatpush1.bf16.msra.mxu0 0
      %4950 = vmatprep.subr.bf16.mxu0 0
      %4951 = vmatpush1.bf16.msra.mxu0 0
      %4952 = vmatprep.subr.bf16.mxu0 0
      %4953 = vmatpush1.bf16.msra.mxu0 0
      %4954 = vmatprep.subr.bf16.mxu0 0
      %4955 = vmatpush1.bf16.msra.mxu0 0
      %4956 = vmatprep.mubr.bf16.mxu0 %v588
      %4957 = vmatmul.mubr.bf16.gmra.mrb[0].mxu0 %v424
      %v4958 = vpop.f32.mrb[0].mxu0
      %v4959 = vadd.f32 %v4910, %v4958
      %v4960 = vpop.f32.mrb[0].mxu0
      %v4961 = vpop.f32.mrb[0].mxu0
      %v4962 = vadd.f32 %v4913, %v4961
      %v4963 = vpop.f32.mrb[0].mxu0
      %4964 = vmatprep.mubr.bf16.mxu0 %v591
      %4965 = vmatmul.mubr.bf16.gmra.mrb[0].mxu0 %v428
      %v4966 = vpop.f32.mrb[0].mxu0
      %v4967 = vadd.f32 %v4918, %v4966
      %v4968 = vpop.f32.mrb[0].mxu0
      %v4969 = vpop.f32.mrb[0].mxu0
      %v4970 = vadd.f32 %v4921, %v4969
      %v4971 = vpop.f32.mrb[0].mxu0
      %4972 = vdwg.mxu0
      %s4973 = scalar_lea.vmem %s326, 600
      %v4974 = vld [vmem:[%s4973] sm:$0xf]
      %v4975 = vld [vmem:[%s4973 + $0x4] sm:$0xf]
      %v4976 = vld [vmem:[%s4973 + $0x8] sm:$0xf]
      %v4977 = vld [vmem:[%s4973 + $0xc] sm:$0xf]
      %v4978 = vld [vmem:[%s4973 + $0x10] sm:$0xf]
      %v4979 = vld [vmem:[%s4973 + $0x14] sm:$0xf]
      %v4980 = vld [vmem:[%s4973 + $0x18] sm:$0xf]
      %v4981 = vld [vmem:[%s4973 + $0x1c] sm:$0xf]
      %v4982 = vld [vmem:[%s4973 + $0x20] sm:$0xf]
      %v4983 = vld [vmem:[%s4973 + $0x24] sm:$0xf]
      %v4984 = vld [vmem:[%s4973 + $0x28] sm:$0xf]
      %v4985 = vld [vmem:[%s4973 + $0x2c] sm:$0xf]
      %v4986 = vld [vmem:[%s4973 + $0x30] sm:$0xf]
      %v4987 = vld [vmem:[%s4973 + $0x34] sm:$0xf]
      %v4988 = vld [vmem:[%s4973 + $0x38] sm:$0xf]
      %v4989 = vld [vmem:[%s4973 + $0x3c] sm:$0xf]
      %v4990 = vld [vmem:[%s4973 + $0x40] sm:$0xf]
      %v4991 = vld [vmem:[%s4973 + $0x44] sm:$0xf]
      %v4992 = vld [vmem:[%s4973 + $0x48] sm:$0xf]
      %v4993 = vld [vmem:[%s4973 + $0x4c] sm:$0xf]
      %v4994 = vld [vmem:[%s4973 + $0x50] sm:$0xf]
      %v4995 = vld [vmem:[%s4973 + $0x54] sm:$0xf]
      %v4996 = vld [vmem:[%s4973 + $0x58] sm:$0xf]
      %v4997 = vld [vmem:[%s4973 + $0x5c] sm:$0xf]
      %v4998 = vld [vmem:[%s4973 + $0x60] sm:$0xf]
      %v4999 = vld [vmem:[%s4973 + $0x64] sm:$0xf]
      %v5000 = vld [vmem:[%s4973 + $0x68] sm:$0xf]
      %v5001 = vld [vmem:[%s4973 + $0x6c] sm:$0xf]
      %v5002 = vld [vmem:[%s4973 + $0x70] sm:$0xf]
      %v5003 = vld [vmem:[%s4973 + $0x74] sm:$0xf]
      %v5004 = vld [vmem:[%s4973 + $0x78] sm:$0xf]
      %v5005 = vld [vmem:[%s4973 + $0x7c] sm:$0xf]
      %v5006 = vld [vmem:[%s4973 + $0x80] sm:$0xf]
      %v5007 = vld [vmem:[%s4973 + $0x84] sm:$0xf]
      %v5008 = vld [vmem:[%s4973 + $0x88] sm:$0xf]
      %v5009 = vld [vmem:[%s4973 + $0x8c] sm:$0xf]
      %v5010 = vld [vmem:[%s4973 + $0x90] sm:$0xf]
      %v5011 = vld [vmem:[%s4973 + $0x94] sm:$0xf]
      %v5012 = vld [vmem:[%s4973 + $0x98] sm:$0xf]
      %v5013 = vld [vmem:[%s4973 + $0x9c] sm:$0xf]
      %v5014 = vld [vmem:[%s4973 + $0xa0] sm:$0xf]
      %v5015 = vld [vmem:[%s4973 + $0xa4] sm:$0xf]
      %v5016 = vld [vmem:[%s4973 + $0xa8] sm:$0xf]
      %v5017 = vld [vmem:[%s4973 + $0xac] sm:$0xf]
      %v5018 = vld [vmem:[%s4973 + $0xb0] sm:$0xf]
      %v5019 = vld [vmem:[%s4973 + $0xb4] sm:$0xf]
      %v5020 = vld [vmem:[%s4973 + $0xb8] sm:$0xf]
      %v5021 = vld [vmem:[%s4973 + $0xbc] sm:$0xf]
      %v5022 = vld [vmem:[%s4973 + $0xc0] sm:$0xf]
      %v5023 = vld [vmem:[%s4973 + $0xc4] sm:$0xf]
      %v5074 = vunpack.c.l.b16 %v4974
      %v5075 = vunpack.c.l.b16 %v4975
      %v5076 = vunpack.c.l.b16 %v4976
      %v5077 = vunpack.c.l.b16 %v4977
      %v5078 = vunpack.c.l.b16 %v4978
      %v5079 = vunpack.c.l.b16 %v4979
      %v5080 = vunpack.c.l.b16 %v4980
      %v5081 = vunpack.c.l.b16 %v4981
      %v5082 = vunpack.c.l.b16 %v4982
      %v5083 = vunpack.c.l.b16 %v4983
      %v5084 = vunpack.c.l.b16 %v4984
      %v5085 = vunpack.c.l.b16 %v4985
      %v5086 = vunpack.c.l.b16 %v4986
      %v5087 = vunpack.c.l.b16 %v4987
      %v5088 = vunpack.c.l.b16 %v4988
      %v5089 = vunpack.c.l.b16 %v4989
      %v5090 = vunpack.c.l.b16 %v4990
      %v5091 = vunpack.c.l.b16 %v4991
      %v5092 = vunpack.c.l.b16 %v4992
      %v5093 = vunpack.c.l.b16 %v4993
      %v5094 = vunpack.c.l.b16 %v4994
      %v5095 = vunpack.c.l.b16 %v4995
      %v5096 = vunpack.c.l.b16 %v4996
      %v5097 = vunpack.c.l.b16 %v4997
      %v5098 = vunpack.c.l.b16 %v4998
      %v5099 = vunpack.c.l.b16 %v4999
      %v5100 = vunpack.c.l.b16 %v5000
      %v5101 = vunpack.c.l.b16 %v5001
      %v5102 = vunpack.c.l.b16 %v5002
      %v5103 = vunpack.c.l.b16 %v5003
      %v5104 = vunpack.c.l.b16 %v5004
      %v5105 = vunpack.c.l.b16 %v5005
      %v5106 = vunpack.c.l.b16 %v5006
      %v5107 = vunpack.c.l.b16 %v5007
      %v5108 = vunpack.c.l.b16 %v5008
      %v5109 = vunpack.c.l.b16 %v5009
      %v5110 = vunpack.c.l.b16 %v5010
      %v5111 = vunpack.c.l.b16 %v5011
      %v5112 = vunpack.c.l.b16 %v5012
      %v5113 = vunpack.c.l.b16 %v5013
      %v5114 = vunpack.c.l.b16 %v5014
      %v5115 = vunpack.c.l.b16 %v5015
      %v5116 = vunpack.c.l.b16 %v5016
      %v5117 = vunpack.c.l.b16 %v5017
      %v5118 = vunpack.c.l.b16 %v5018
      %v5119 = vunpack.c.l.b16 %v5019
      %v5120 = vunpack.c.l.b16 %v5020
      %v5121 = vunpack.c.l.b16 %v5021
      %v5122 = vunpack.c.l.b16 %v5022
      %v5123 = vunpack.c.l.b16 %v5023
      %v5124 = vpack.c.b16 %v5075, %v5074
      %v5125 = vpack.c.b16 %v5077, %v5076
      %v5126 = vpack.c.b16 %v5079, %v5078
      %v5127 = vpack.c.b16 %v5081, %v5080
      %v5128 = vpack.c.b16 %v5083, %v5082
      %v5129 = vpack.c.b16 %v5085, %v5084
      %v5130 = vpack.c.b16 %v5087, %v5086
      %v5131 = vpack.c.b16 %v5089, %v5088
      %v5132 = vpack.c.b16 %v5091, %v5090
      %v5133 = vpack.c.b16 %v5093, %v5092
      %v5134 = vpack.c.b16 %v5095, %v5094
      %v5135 = vpack.c.b16 %v5097, %v5096
      %v5136 = vpack.c.b16 %v5099, %v5098
      %v5137 = vpack.c.b16 %v5101, %v5100
      %v5138 = vpack.c.b16 %v5103, %v5102
      %v5139 = vpack.c.b16 %v5105, %v5104
      %v5140 = vpack.c.b16 %v5107, %v5106
      %v5141 = vpack.c.b16 %v5109, %v5108
      %v5142 = vpack.c.b16 %v5111, %v5110
      %v5143 = vpack.c.b16 %v5113, %v5112
      %v5144 = vpack.c.b16 %v5115, %v5114
      %v5145 = vpack.c.b16 %v5117, %v5116
      %v5146 = vpack.c.b16 %v5119, %v5118
      %v5147 = vpack.c.b16 %v5121, %v5120
      %v5148 = vpack.c.b16 %v5123, %v5122
      %5174 = vmatprep.subr.bf16.mxu0 0
      %5175 = vmatpush1.bf16.msra.mxu0 %v5124
      %5176 = vmatprep.subr.bf16.mxu0 0
      %5177 = vmatpush1.bf16.msra.mxu0 %v5125
      %5178 = vmatprep.subr.bf16.mxu0 0
      %5179 = vmatpush1.bf16.msra.mxu0 %v5126
      %5180 = vmatprep.subr.bf16.mxu0 0
      %5181 = vmatpush1.bf16.msra.mxu0 %v5127
      %5182 = vmatprep.subr.bf16.mxu0 0
      %5183 = vmatpush1.bf16.msra.mxu0 %v5128
      %5184 = vmatprep.subr.bf16.mxu0 0
      %5185 = vmatpush1.bf16.msra.mxu0 %v5129
      %5186 = vmatprep.subr.bf16.mxu0 0
      %5187 = vmatpush1.bf16.msra.mxu0 %v5130
      %5188 = vmatprep.subr.bf16.mxu0 0
      %5189 = vmatpush1.bf16.msra.mxu0 %v5131
      %5190 = vmatprep.subr.bf16.mxu0 0
      %5191 = vmatpush1.bf16.msra.mxu0 %v5132
      %5192 = vmatprep.subr.bf16.mxu0 0
      %5193 = vmatpush1.bf16.msra.mxu0 %v5133
      %5194 = vmatprep.subr.bf16.mxu0 0
      %5195 = vmatpush1.bf16.msra.mxu0 %v5134
      %5196 = vmatprep.subr.bf16.mxu0 0
      %5197 = vmatpush1.bf16.msra.mxu0 %v5135
      %5198 = vmatprep.subr.bf16.mxu0 0
      %5199 = vmatpush1.bf16.msra.mxu0 %v5136
      %5200 = vmatprep.subr.bf16.mxu0 0
      %5201 = vmatpush1.bf16.msra.mxu0 %v5137
      %5202 = vmatprep.subr.bf16.mxu0 0
      %5203 = vmatpush1.bf16.msra.mxu0 %v5138
      %5204 = vmatprep.subr.bf16.mxu0 0
      %5205 = vmatpush1.bf16.msra.mxu0 %v5139
      %5206 = vmatprep.mubr.bf16.mxu0 %v423
      %5207 = vmatmul.mubr.bf16.gmra.mrb[0].mxu0 %v422
      %v5208 = vpop.f32.mrb[0].mxu0
      %v5209 = vadd.f32 0.0, %v5208
      %v5210 = vpop.f32.mrb[0].mxu0
      %v5211 = vpop.f32.mrb[0].mxu0
      %v5212 = vadd.f32 0.0, %v5211
      %v5213 = vpop.f32.mrb[0].mxu0
      %5214 = vmatprep.mubr.bf16.mxu0 %v427
      %5215 = vmatmul.mubr.bf16.gmra.mrb[0].mxu0 %v426
      %v5216 = vpop.f32.mrb[0].mxu0
      %v5217 = vadd.f32 0.0, %v5216
      %v5218 = vpop.f32.mrb[0].mxu0
      %v5219 = vpop.f32.mrb[0].mxu0
      %v5220 = vadd.f32 0.0, %v5219
      %v5221 = vpop.f32.mrb[0].mxu0
      %5222 = vdwg.mxu0
      %5223 = vmatprep.subr.bf16.mxu0 0
      %5224 = vmatpush1.bf16.msra.mxu0 %v5140
      %5225 = vmatprep.subr.bf16.mxu0 0
      %5226 = vmatpush1.bf16.msra.mxu0 %v5141
      %5227 = vmatprep.subr.bf16.mxu0 0
      %5228 = vmatpush1.bf16.msra.mxu0 %v5142
      %5229 = vmatprep.subr.bf16.mxu0 0
      %5230 = vmatpush1.bf16.msra.mxu0 %v5143
      %5231 = vmatprep.subr.bf16.mxu0 0
      %5232 = vmatpush1.bf16.msra.mxu0 %v5144
      %5233 = vmatprep.subr.bf16.mxu0 0
      %5234 = vmatpush1.bf16.msra.mxu0 %v5145
      %5235 = vmatprep.subr.bf16.mxu0 0
      %5236 = vmatpush1.bf16.msra.mxu0 %v5146
      %5237 = vmatprep.subr.bf16.mxu0 0
      %5238 = vmatpush1.bf16.msra.mxu0 %v5147
      %5239 = vmatprep.subr.bf16.mxu0 0
      %5240 = vmatpush1.bf16.msra.mxu0 %v5148
      %5241 = vmatprep.subr.bf16.mxu0 0
      %5242 = vmatpush1.bf16.msra.mxu0 0
      %5243 = vmatprep.subr.bf16.mxu0 0
      %5244 = vmatpush1.bf16.msra.mxu0 0
      %5245 = vmatprep.subr.bf16.mxu0 0
      %5246 = vmatpush1.bf16.msra.mxu0 0
      %5247 = vmatprep.subr.bf16.mxu0 0
      %5248 = vmatpush1.bf16.msra.mxu0 0
      %5249 = vmatprep.subr.bf16.mxu0 0
      %5250 = vmatpush1.bf16.msra.mxu0 0
      %5251 = vmatprep.subr.bf16.mxu0 0
      %5252 = vmatpush1.bf16.msra.mxu0 0
      %5253 = vmatprep.subr.bf16.mxu0 0
      %5254 = vmatpush1.bf16.msra.mxu0 0
      %5255 = vmatprep.mubr.bf16.mxu0 %v588
      %5256 = vmatmul.mubr.bf16.gmra.mrb[0].mxu0 %v424
      %v5257 = vpop.f32.mrb[0].mxu0
      %v5258 = vadd.f32 %v5209, %v5257
      %v5259 = vpop.f32.mrb[0].mxu0
      %v5260 = vpop.f32.mrb[0].mxu0
      %v5261 = vadd.f32 %v5212, %v5260
      %v5262 = vpop.f32.mrb[0].mxu0
      %5263 = vmatprep.mubr.bf16.mxu0 %v591
      %5264 = vmatmul.mubr.bf16.gmra.mrb[0].mxu0 %v428
      %v5265 = vpop.f32.mrb[0].mxu0
      %v5266 = vadd.f32 %v5217, %v5265
      %v5267 = vpop.f32.mrb[0].mxu0
      %v5268 = vpop.f32.mrb[0].mxu0
      %v5269 = vadd.f32 %v5220, %v5268
      %v5270 = vpop.f32.mrb[0].mxu0
      %5271 = vdwg.mxu0
      %v5272 = vmax.f32 %v4959, %v5258
      %v5273 = vmax.f32 %v4962, %v5261
      %v5274 = vmax.f32 %v4967, %v5266
      %v5275 = vmax.f32 %v4970, %v5269
      %v5276 = vmax.f32 %v4670, %v5272
      %v5277 = vmax.f32 %v4671, %v5273
      %v5278 = vmax.f32 %v4672, %v5274
      %v5279 = vmax.f32 %v4673, %v5275
      %v5280 = vadd.f32 %v5276, %v1600
      %v5281 = vadd.f32 %v5277, %v1605
      %v5282 = vadd.f32 %v5278, %v1610
      %v5283 = vadd.f32 %v5279, %v1615
      %v5284 = vtanh.pop %v5280
      %v5285 = vtanh.pop %v5281
      %v5286 = vtanh.pop %v5282
      %v5287 = vtanh.pop %v5283
      %s5288 = scalar_lea.vmem %s333, 96
      %5289 = vst.msk [vmem:[%s5288] sm:$0xff] %vm1625, %v5284
      %5290 = vst.msk [vmem:[%s5288 + $0x8] sm:$0xff] %vm1625, %v5285
      %5291 = vst.msk [vmem:[%s5288 + $0x10] sm:$0xff] %vm1625, %v5286
      %5292 = vst.msk [vmem:[%s5288 + $0x18] sm:$0xff] %vm1625, %v5287
      %s5293 = smul.u32 4, %s17
      %p5294 = scmp.lt.s32.totalorder %s5293, 11
      %s5295 = scalar_select %p5294, %s5293, 11
      %s5296 = smul.addr %s5295, 4
      %s5297 = smul.addr %s5296, 8
      %s5298 = scalar_lea.vmem %s6, %s5297
      // Predicated region
      $region45: #{siamese_forward.4} parent=43 // pred_check
        %p5299 = pneg %p181
      $region46: #{siamese_forward.4} parent=43 // pred_check_branch
        %5301 = sbr.rel (%p5299) target = $region48
      $region47: #{siamese_forward.4} parent=43 // pred_region
        %s5302 = smul.u32 4, %s17
      $region48: #{siamese_forward.4} parent=43 // pred_fallthru
        _
    $region44: #{siamese_forward.4} parent=5 // pred_fallthru
      _
    %p5303 = scmp.le.s32.totalorder 2, %s12
    // Predicated region
    $region49: #{siamese_forward.4} parent=5 // pred_check
      %p5304 = pneg %p5303
    $region50: #{siamese_forward.4} parent=5 // pred_check_branch
      %5306 = sbr.rel (%p5304) target = $region52
    $region51: #{siamese_forward.4} parent=5 // pred_region
      %s5307 = ssub.s32 %s12, 2
      // Predicated region
      $region53: #{siamese_forward.4} parent=51 // pred_check
        %p5308 = pneg %p187
      $region54: #{siamese_forward.4} parent=51 // pred_check_branch
        %5310 = sbr.rel (%p5308) target = $region56
      $region55: #{siamese_forward.4} parent=51 // pred_region
        %s5311 = smul.u32 4, %s18
        %p5312 = scmp.lt.s32.totalorder %s5311, 11
        %s5313 = scalar_select %p5312, %s5311, 11
        %s5314 = smul.addr %s5313, 4
        %s5315 = smul.addr %s5314, 8
        %s5316 = scalar_lea.vmem %s6, %s5315
      $region56: #{siamese_forward.4} parent=51 // pred_fallthru
        _
    $region52: #{siamese_forward.4} parent=5 // pred_fallthru
      _
  $region6: #{siamese_forward.4} parent=0 // loop_footer
    %s16 = sadd.s32 1, %s12
  $region7: #{siamese_forward.4} parent=0 // loop_footer_branch
    %11 = sbr.rel target = $region3
  $region8: #{siamese_forward.4} parent=0 // loop_exit
    _

// kernel: siamese_forward.5
$region0: #{siamese_forward.5}
  #allocation0 [shape = 'u32[]', space=smem, size = 0x4, offset = 0x4, fixed_abs, tag = 'smem constant byte address 0x4 - core index']
  #allocation1 [shape = 'u32[144,128]{1,0:T(1,128)}', space=vmem, size = 0x12000, scoped, tag = 'internal scratch']
  #allocation2 [shape = 'f32[4,512]{1,0:T(4,128)}', space=vmem, size = 0x2000, scoped, tag = 'scratch operand']
  #allocation3 [shape = 'f32[4,512]{1,0:T(4,128)}', space=vmem, size = 0x2000, scoped, tag = 'scratch operand']
  #allocation4 [shape = 'f32[1,1]{1,0:T(1,128)S(1)}', space=vmem, size = 0x200, scoped, tag = 'scoped memory for siamese_forward.5']
  %s0 = inlined_call_operand.vmem [shape: f32[3,4,800], index: 0, kind: input, shape index: {}]
  %s1 = inlined_call_operand.vmem [shape: f32[800,32], index: 1, kind: input, shape index: {}]
  %s2 = inlined_call_operand.vmem [shape: f32[1,32], index: 2, kind: input, shape index: {}]
  %s3 = inlined_call_operand.vmem [shape: f32[32,512], index: 3, kind: input, shape index: {}]
  %s4 = inlined_call_operand.vmem [shape: f32[512,512], index: 4, kind: input, shape index: {}]
  %s5 = inlined_call_operand.vmem [shape: f32[1,512], index: 5, kind: input, shape index: {}]
  %s6 = inlined_call_operand.vmem [shape: f32[4,6], index: 6, kind: input, shape index: {}]
  %s7 = inlined_call_operand.vmem [shape: f32[512,128], index: 7, kind: input, shape index: {}]
  %s8 = inlined_call_operand.vmem [shape: f32[6,128], index: 8, kind: input, shape index: {}]
  %s9 = inlined_call_operand.vmem [shape: f32[1,128], index: 9, kind: input, shape index: {}]
  %s10 = inlined_call_operand.vmem [shape: f32[128,16], index: 10, kind: input, shape index: {}]
  %s11 = inlined_call_operand.vmem [shape: f32[1,16], index: 11, kind: input, shape index: {}]
  %s12 = inlined_call_operand.vmem [shape: f32[2,1], index: 12, kind: input, shape index: {}]
  %s13 = inlined_call_operand.vmem [shape: f32[2,1], index: 13, kind: input, shape index: {}]
  %s14 = inlined_call_operand.vmem [shape: f32[16,64], index: 14, kind: input, shape index: {}]
  %s15 = inlined_call_operand.vmem [shape: f32[1,64], index: 15, kind: input, shape index: {}]
  %s16 = inlined_call_operand.vmem [shape: f32[16,64], index: 16, kind: input, shape index: {}]
  %s17 = inlined_call_operand.vmem [shape: f32[1,64], index: 17, kind: input, shape index: {}]
  %s18 = inlined_call_operand.vmem [shape: f32[64,1], index: 18, kind: input, shape index: {}]
  %s19 = inlined_call_operand.<no memory space> [shape: f32[1,1], index: 19, kind: input, shape index: {}]
  %s20 = inlined_call_operand.vmem [shape: f32[4,16], index: 20, kind: output, shape index: {0}]
  %s21 = inlined_call_operand.vmem [shape: f32[2,1], index: 21, kind: output, shape index: {1}]
  %22 = xla_tuple %s20, %s21
  %s23 = sld [smem:[#allocation0]]
  $region129: #{siamese_forward.5} parent=0
    _
  %s25 = ssub.s32 1, %s23
  %s26 = scalar_select 0, %s25, %s23
  %v27 = vstv %s19
  %28 = vst [vmem:[#allocation4] sm:$0x1] %v27
  loop: start=0, step=1, limit=5
  $region2: #{siamese_forward.5} parent=0 // loop_pre_header
    _
  $region3: #{siamese_forward.5} parent=0 // loop_header
    %s30 = sphi 0, %s34
    %p31 = scmp.ge.s32.totalorder %s30, 5
    %s40 = sphi 0, %s42
    %s43 = sphi 0, %s40
    %s44 = sphi 0, %s43
    %s60 = sphi 0, %s44
    %s64 = sphi 0, %s64
    %s66 = sphi 0, %s64
    %s67 = sphi 0, %s66
    %s81 = sphi 0, %s67
    %s85 = sphi 0, %s85
    %s87 = sphi 0, %s85
    %s88 = sphi 0, %s87
    %s102 = sphi 0, %s88
    %s106 = sphi 0, %s106
    %s108 = sphi 0, %s106
    %s109 = sphi 0, %s108
    %s123 = sphi 0, %s109
    %s127 = sphi 0, %s127
    %s129 = sphi 0, %s127
    %s130 = sphi 0, %s129
    %s144 = sphi 0, %s130
    %s148 = sphi 0, %s148
    %s150 = sphi 0, %s148
    %s151 = sphi 0, %s150
    %s165 = sphi 0, %s151
    %s169 = sphi 0, %s169
    %s171 = sphi 0, %s169
    %s172 = sphi 0, %s171
    %s186 = sphi 0, %s172
    %s190 = sphi 0, %s190
    %s192 = sphi 0, %s190
    %s193 = sphi 0, %s192
    %s207 = sphi 0, %s193
    %s211 = sphi 0, %s211
    %s213 = sphi 0, %s211
    %s214 = sphi 0, %s213
    %s228 = sphi 0, %s214
    %s232 = sphi 0, %s232
    %s234 = sphi 0, %s232
    %s235 = sphi 0, %s234
    %s249 = sphi 0, %s235
    %s253 = sphi 0, %s253
    %s255 = sphi 0, %s253
    %s256 = sphi 0, %s255
    %s270 = sphi 0, %s256
    %s274 = sphi 0, %s274
    %s276 = sphi 0, %s274
    %s277 = sphi 0, %s276
    %s291 = sphi 0, %s277
    %s295 = sphi 0, %s295
    %s297 = sphi 0, %s295
    %s298 = sphi 0, %s297
    %s312 = sphi 0, %s298
    %s316 = sphi 0, %s316
    %s318 = sphi 0, %s316
    %s319 = sphi 0, %s318
    %s333 = sphi 0, %s319
    %s337 = sphi 0, %s337
    %s339 = sphi 0, %s337
    %s340 = sphi 0, %s339
    %s354 = sphi 0, %s340
    %s358 = sphi 0, %s358
    %s360 = sphi 0, %s358
    %s361 = sphi 0, %s360
    %s375 = sphi 0, %s361
    %s379 = sphi 0, %s379
    %s381 = sphi 0, %s379
    %s382 = sphi 0, %s381
    %s396 = sphi 0, %s382
    %s400 = sphi 0, %s400
    %s402 = sphi 0, %s400
    %s403 = sphi 0, %s402
    %s417 = sphi 0, %s403
    %s421 = sphi 0, %s421
    %s423 = sphi 0, %s421
    %s424 = sphi 0, %s423
    %s438 = sphi 0, %s424
    %s442 = sphi 0, %s442
    %s444 = sphi 0, %s442
    %s445 = sphi 0, %s444
    %s459 = sphi 0, %s445
    %s463 = sphi 0, %s463
    %s465 = sphi 0, %s463
    %s466 = sphi 0, %s465
    %s480 = sphi 0, %s466
    %s484 = sphi 0, %s484
    %s486 = sphi 0, %s484
    %s487 = sphi 0, %s486
    %s501 = sphi 0, %s487
  $region4: #{siamese_forward.5} parent=0 // loop_header_branch
    %33 = sbr.rel (%p31) target = $region8
  $region5: #{siamese_forward.5} parent=0 // loop_body
    %s35 = ssub.s32 %s30, 1
    %s36 = ssub.s32 %s30, 2
    %s37 = sadd.s32 %s30, 1
    %s38 = ssub.s32 %s30, %s37
    %p39 = scmp.eq.s32.totalorder %s38, 0
    %s41 = sadd.s32 %s40, 1
    %s42 = scalar_select %p39, %s40, %s41
    %p45 = pneg %p39
    %p46 = scmp.eq.s32.totalorder %s30, 2
    %p47 = por %p45, %p46
    %p48 = scmp.ne.s32.totalorder %s40, %s43
    %p49 = scmp.eq.s32.totalorder %s30, 0
    %p50 = por %p48, %p49
    %p51 = scmp.ne.s32.totalorder %s40, %s43
    %p52 = scmp.eq.s32.totalorder %s35, 2
    %p53 = por %p51, %p52
    %p54 = scmp.ne.s32.totalorder %s43, %s44
    %p55 = scmp.eq.s32.totalorder %s35, 0
    %p56 = por %p54, %p55
    %p57 = scmp.ne.s32.totalorder %s43, %s44
    %p58 = scmp.eq.s32.totalorder %s36, 2
    %p59 = por %p57, %p58
    %p61 = scmp.ne.s32.totalorder %s44, %s60
    %p62 = scmp.eq.s32.totalorder %s36, 0
    %p63 = por %p61, %p62
    %s65 = sadd.s32 %s64, 1
    %p68 = scmp.eq.s32.totalorder %s30, 2
    %p69 = scmp.ne.s32.totalorder %s64, %s66
    %p70 = scmp.eq.s32.totalorder %s30, 0
    %p71 = por %p69, %p70
    %p72 = scmp.ne.s32.totalorder %s64, %s66
    %p73 = scmp.eq.s32.totalorder %s35, 2
    %p74 = por %p72, %p73
    %p75 = scmp.ne.s32.totalorder %s66, %s67
    %p76 = scmp.eq.s32.totalorder %s35, 0
    %p77 = por %p75, %p76
    %p78 = scmp.ne.s32.totalorder %s66, %s67
    %p79 = scmp.eq.s32.totalorder %s36, 2
    %p80 = por %p78, %p79
    %p82 = scmp.ne.s32.totalorder %s67, %s81
    %p83 = scmp.eq.s32.totalorder %s36, 0
    %p84 = por %p82, %p83
    %s86 = sadd.s32 %s85, 1
    %p89 = scmp.eq.s32.totalorder %s30, 2
    %p90 = scmp.ne.s32.totalorder %s85, %s87
    %p91 = scmp.eq.s32.totalorder %s30, 0
    %p92 = por %p90, %p91
    %p93 = scmp.ne.s32.totalorder %s85, %s87
    %p94 = scmp.eq.s32.totalorder %s35, 2
    %p95 = por %p93, %p94
    %p96 = scmp.ne.s32.totalorder %s87, %s88
    %p97 = scmp.eq.s32.totalorder %s35, 0
    %p98 = por %p96, %p97
    %p99 = scmp.ne.s32.totalorder %s87, %s88
    %p100 = scmp.eq.s32.totalorder %s36, 2
    %p101 = por %p99, %p100
    %p103 = scmp.ne.s32.totalorder %s88, %s102
    %p104 = scmp.eq.s32.totalorder %s36, 0
    %p105 = por %p103, %p104
    %s107 = sadd.s32 %s106, 1
    %p110 = scmp.eq.s32.totalorder %s30, 2
    %p111 = scmp.ne.s32.totalorder %s106, %s108
    %p112 = scmp.eq.s32.totalorder %s30, 0
    %p113 = por %p111, %p112
    %p114 = scmp.ne.s32.totalorder %s106, %s108
    %p115 = scmp.eq.s32.totalorder %s35, 2
    %p116 = por %p114, %p115
    %p117 = scmp.ne.s32.totalorder %s108, %s109
    %p118 = scmp.eq.s32.totalorder %s35, 0
    %p119 = por %p117, %p118
    %p120 = scmp.ne.s32.totalorder %s108, %s109
    %p121 = scmp.eq.s32.totalorder %s36, 2
    %p122 = por %p120, %p121
    %p124 = scmp.ne.s32.totalorder %s109, %s123
    %p125 = scmp.eq.s32.totalorder %s36, 0
    %p126 = por %p124, %p125
    %s128 = sadd.s32 %s127, 1
    %p131 = scmp.eq.s32.totalorder %s30, 2
    %p132 = scmp.ne.s32.totalorder %s127, %s129
    %p133 = scmp.eq.s32.totalorder %s30, 0
    %p134 = por %p132, %p133
    %p135 = scmp.ne.s32.totalorder %s127, %s129
    %p136 = scmp.eq.s32.totalorder %s35, 2
    %p137 = por %p135, %p136
    %p138 = scmp.ne.s32.totalorder %s129, %s130
    %p139 = scmp.eq.s32.totalorder %s35, 0
    %p140 = por %p138, %p139
    %p141 = scmp.ne.s32.totalorder %s129, %s130
    %p142 = scmp.eq.s32.totalorder %s36, 2
    %p143 = por %p141, %p142
    %p145 = scmp.ne.s32.totalorder %s130, %s144
    %p146 = scmp.eq.s32.totalorder %s36, 0
    %p147 = por %p145, %p146
    %s149 = sadd.s32 %s148, 1
    %p152 = scmp.eq.s32.totalorder %s30, 2
    %p153 = scmp.ne.s32.totalorder %s148, %s150
    %p154 = scmp.eq.s32.totalorder %s30, 0
    %p155 = por %p153, %p154
    %p156 = scmp.ne.s32.totalorder %s148, %s150
    %p157 = scmp.eq.s32.totalorder %s35, 2
    %p158 = por %p156, %p157
    %p159 = scmp.ne.s32.totalorder %s150, %s151
    %p160 = scmp.eq.s32.totalorder %s35, 0
    %p161 = por %p159, %p160
    %p162 = scmp.ne.s32.totalorder %s150, %s151
    %p163 = scmp.eq.s32.totalorder %s36, 2
    %p164 = por %p162, %p163
    %p166 = scmp.ne.s32.totalorder %s151, %s165
    %p167 = scmp.eq.s32.totalorder %s36, 0
    %p168 = por %p166, %p167
    %s170 = sadd.s32 %s169, 1
    %p173 = scmp.eq.s32.totalorder %s30, 2
    %p174 = scmp.ne.s32.totalorder %s169, %s171
    %p175 = scmp.eq.s32.totalorder %s30, 0
    %p176 = por %p174, %p175
    %p177 = scmp.ne.s32.totalorder %s169, %s171
    %p178 = scmp.eq.s32.totalorder %s35, 2
    %p179 = por %p177, %p178
    %p180 = scmp.ne.s32.totalorder %s171, %s172
    %p181 = scmp.eq.s32.totalorder %s35, 0
    %p182 = por %p180, %p181
    %p183 = scmp.ne.s32.totalorder %s171, %s172
    %p184 = scmp.eq.s32.totalorder %s36, 2
    %p185 = por %p183, %p184
    %p187 = scmp.ne.s32.totalorder %s172, %s186
    %p188 = scmp.eq.s32.totalorder %s36, 0
    %p189 = por %p187, %p188
    %s191 = sadd.s32 %s190, 1
    %p194 = scmp.eq.s32.totalorder %s30, 2
    %p195 = scmp.ne.s32.totalorder %s190, %s192
    %p196 = scmp.eq.s32.totalorder %s30, 0
    %p197 = por %p195, %p196
    %p198 = scmp.ne.s32.totalorder %s190, %s192
    %p199 = scmp.eq.s32.totalorder %s35, 2
    %p200 = por %p198, %p199
    %p201 = scmp.ne.s32.totalorder %s192, %s193
    %p202 = scmp.eq.s32.totalorder %s35, 0
    %p203 = por %p201, %p202
    %p204 = scmp.ne.s32.totalorder %s192, %s193
    %p205 = scmp.eq.s32.totalorder %s36, 2
    %p206 = por %p204, %p205
    %p208 = scmp.ne.s32.totalorder %s193, %s207
    %p209 = scmp.eq.s32.totalorder %s36, 0
    %p210 = por %p208, %p209
    %s212 = sadd.s32 %s211, 1
    %p215 = scmp.eq.s32.totalorder %s30, 2
    %p216 = scmp.ne.s32.totalorder %s211, %s213
    %p217 = scmp.eq.s32.totalorder %s30, 0
    %p218 = por %p216, %p217
    %p219 = scmp.ne.s32.totalorder %s211, %s213
    %p220 = scmp.eq.s32.totalorder %s35, 2
    %p221 = por %p219, %p220
    %p222 = scmp.ne.s32.totalorder %s213, %s214
    %p223 = scmp.eq.s32.totalorder %s35, 0
    %p224 = por %p222, %p223
    %p225 = scmp.ne.s32.totalorder %s213, %s214
    %p226 = scmp.eq.s32.totalorder %s36, 2
    %p227 = por %p225, %p226
    %p229 = scmp.ne.s32.totalorder %s214, %s228
    %p230 = scmp.eq.s32.totalorder %s36, 0
    %p231 = por %p229, %p230
    %s233 = sadd.s32 %s232, 1
    %p236 = scmp.eq.s32.totalorder %s30, 2
    %p237 = scmp.ne.s32.totalorder %s232, %s234
    %p238 = scmp.eq.s32.totalorder %s30, 0
    %p239 = por %p237, %p238
    %p240 = scmp.ne.s32.totalorder %s232, %s234
    %p241 = scmp.eq.s32.totalorder %s35, 2
    %p242 = por %p240, %p241
    %p243 = scmp.ne.s32.totalorder %s234, %s235
    %p244 = scmp.eq.s32.totalorder %s35, 0
    %p245 = por %p243, %p244
    %p246 = scmp.ne.s32.totalorder %s234, %s235
    %p247 = scmp.eq.s32.totalorder %s36, 2
    %p248 = por %p246, %p247
    %p250 = scmp.ne.s32.totalorder %s235, %s249
    %p251 = scmp.eq.s32.totalorder %s36, 0
    %p252 = por %p250, %p251
    %s254 = sadd.s32 %s253, 1
    %p257 = scmp.eq.s32.totalorder %s30, 2
    %p258 = scmp.ne.s32.totalorder %s253, %s255
    %p259 = scmp.eq.s32.totalorder %s30, 0
    %p260 = por %p258, %p259
    %p261 = scmp.ne.s32.totalorder %s253, %s255
    %p262 = scmp.eq.s32.totalorder %s35, 2
    %p263 = por %p261, %p262
    %p264 = scmp.ne.s32.totalorder %s255, %s256
    %p265 = scmp.eq.s32.totalorder %s35, 0
    %p266 = por %p264, %p265
    %p267 = scmp.ne.s32.totalorder %s255, %s256
    %p268 = scmp.eq.s32.totalorder %s36, 2
    %p269 = por %p267, %p268
    %p271 = scmp.ne.s32.totalorder %s256, %s270
    %p272 = scmp.eq.s32.totalorder %s36, 0
    %p273 = por %p271, %p272
    %s275 = sadd.s32 %s274, 1
    %p278 = scmp.eq.s32.totalorder %s30, 2
    %p279 = scmp.ne.s32.totalorder %s274, %s276
    %p280 = scmp.eq.s32.totalorder %s30, 0
    %p281 = por %p279, %p280
    %p282 = scmp.ne.s32.totalorder %s274, %s276
    %p283 = scmp.eq.s32.totalorder %s35, 2
    %p284 = por %p282, %p283
    %p285 = scmp.ne.s32.totalorder %s276, %s277
    %p286 = scmp.eq.s32.totalorder %s35, 0
    %p287 = por %p285, %p286
    %p288 = scmp.ne.s32.totalorder %s276, %s277
    %p289 = scmp.eq.s32.totalorder %s36, 2
    %p290 = por %p288, %p289
    %p292 = scmp.ne.s32.totalorder %s277, %s291
    %p293 = scmp.eq.s32.totalorder %s36, 0
    %p294 = por %p292, %p293
    %s296 = sadd.s32 %s295, 1
    %p299 = scmp.eq.s32.totalorder %s30, 2
    %p300 = scmp.ne.s32.totalorder %s295, %s297
    %p301 = scmp.eq.s32.totalorder %s30, 0
    %p302 = por %p300, %p301
    %p303 = scmp.ne.s32.totalorder %s295, %s297
    %p304 = scmp.eq.s32.totalorder %s35, 2
    %p305 = por %p303, %p304
    %p306 = scmp.ne.s32.totalorder %s297, %s298
    %p307 = scmp.eq.s32.totalorder %s35, 0
    %p308 = por %p306, %p307
    %p309 = scmp.ne.s32.totalorder %s297, %s298
    %p310 = scmp.eq.s32.totalorder %s36, 2
    %p311 = por %p309, %p310
    %p313 = scmp.ne.s32.totalorder %s298, %s312
    %p314 = scmp.eq.s32.totalorder %s36, 0
    %p315 = por %p313, %p314
    %s317 = sadd.s32 %s316, 1
    %p320 = scmp.eq.s32.totalorder %s30, 2
    %p321 = scmp.ne.s32.totalorder %s316, %s318
    %p322 = scmp.eq.s32.totalorder %s30, 0
    %p323 = por %p321, %p322
    %p324 = scmp.ne.s32.totalorder %s316, %s318
    %p325 = scmp.eq.s32.totalorder %s35, 2
    %p326 = por %p324, %p325
    %p327 = scmp.ne.s32.totalorder %s318, %s319
    %p328 = scmp.eq.s32.totalorder %s35, 0
    %p329 = por %p327, %p328
    %p330 = scmp.ne.s32.totalorder %s318, %s319
    %p331 = scmp.eq.s32.totalorder %s36, 2
    %p332 = por %p330, %p331
    %p334 = scmp.ne.s32.totalorder %s319, %s333
    %p335 = scmp.eq.s32.totalorder %s36, 0
    %p336 = por %p334, %p335
    %s338 = sadd.s32 %s337, 1
    %p341 = scmp.eq.s32.totalorder %s30, 2
    %p342 = scmp.ne.s32.totalorder %s337, %s339
    %p343 = scmp.eq.s32.totalorder %s30, 0
    %p344 = por %p342, %p343
    %p345 = scmp.ne.s32.totalorder %s337, %s339
    %p346 = scmp.eq.s32.totalorder %s35, 2
    %p347 = por %p345, %p346
    %p348 = scmp.ne.s32.totalorder %s339, %s340
    %p349 = scmp.eq.s32.totalorder %s35, 0
    %p350 = por %p348, %p349
    %p351 = scmp.ne.s32.totalorder %s339, %s340
    %p352 = scmp.eq.s32.totalorder %s36, 2
    %p353 = por %p351, %p352
    %p355 = scmp.ne.s32.totalorder %s340, %s354
    %p356 = scmp.eq.s32.totalorder %s36, 0
    %p357 = por %p355, %p356
    %s359 = sadd.s32 %s358, 1
    %p362 = scmp.eq.s32.totalorder %s30, 2
    %p363 = scmp.ne.s32.totalorder %s358, %s360
    %p364 = scmp.eq.s32.totalorder %s30, 0
    %p365 = por %p363, %p364
    %p366 = scmp.ne.s32.totalorder %s358, %s360
    %p367 = scmp.eq.s32.totalorder %s35, 2
    %p368 = por %p366, %p367
    %p369 = scmp.ne.s32.totalorder %s360, %s361
    %p370 = scmp.eq.s32.totalorder %s35, 0
    %p371 = por %p369, %p370
    %p372 = scmp.ne.s32.totalorder %s360, %s361
    %p373 = scmp.eq.s32.totalorder %s36, 2
    %p374 = por %p372, %p373
    %p376 = scmp.ne.s32.totalorder %s361, %s375
    %p377 = scmp.eq.s32.totalorder %s36, 0
    %p378 = por %p376, %p377
    %s380 = sadd.s32 %s379, 1
    %p383 = scmp.eq.s32.totalorder %s30, 2
    %p384 = scmp.ne.s32.totalorder %s379, %s381
    %p385 = scmp.eq.s32.totalorder %s30, 0
    %p386 = por %p384, %p385
    %p387 = scmp.ne.s32.totalorder %s379, %s381
    %p388 = scmp.eq.s32.totalorder %s35, 2
    %p389 = por %p387, %p388
    %p390 = scmp.ne.s32.totalorder %s381, %s382
    %p391 = scmp.eq.s32.totalorder %s35, 0
    %p392 = por %p390, %p391
    %p393 = scmp.ne.s32.totalorder %s381, %s382
    %p394 = scmp.eq.s32.totalorder %s36, 2
    %p395 = por %p393, %p394
    %p397 = scmp.ne.s32.totalorder %s382, %s396
    %p398 = scmp.eq.s32.totalorder %s36, 0
    %p399 = por %p397, %p398
    %s401 = sadd.s32 %s400, 1
    %p404 = scmp.eq.s32.totalorder %s30, 2
    %p405 = scmp.ne.s32.totalorder %s400, %s402
    %p406 = scmp.eq.s32.totalorder %s30, 0
    %p407 = por %p405, %p406
    %p408 = scmp.ne.s32.totalorder %s400, %s402
    %p409 = scmp.eq.s32.totalorder %s35, 2
    %p410 = por %p408, %p409
    %p411 = scmp.ne.s32.totalorder %s402, %s403
    %p412 = scmp.eq.s32.totalorder %s35, 0
    %p413 = por %p411, %p412
    %p414 = scmp.ne.s32.totalorder %s402, %s403
    %p415 = scmp.eq.s32.totalorder %s36, 2
    %p416 = por %p414, %p415
    %p418 = scmp.ne.s32.totalorder %s403, %s417
    %p419 = scmp.eq.s32.totalorder %s36, 0
    %p420 = por %p418, %p419
    %s422 = sadd.s32 %s421, 1
    %p425 = scmp.eq.s32.totalorder %s30, 2
    %p426 = scmp.ne.s32.totalorder %s421, %s423
    %p427 = scmp.eq.s32.totalorder %s30, 0
    %p428 = por %p426, %p427
    %p429 = scmp.ne.s32.totalorder %s421, %s423
    %p430 = scmp.eq.s32.totalorder %s35, 2
    %p431 = por %p429, %p430
    %p432 = scmp.ne.s32.totalorder %s423, %s424
    %p433 = scmp.eq.s32.totalorder %s35, 0
    %p434 = por %p432, %p433
    %p435 = scmp.ne.s32.totalorder %s423, %s424
    %p436 = scmp.eq.s32.totalorder %s36, 2
    %p437 = por %p435, %p436
    %p439 = scmp.ne.s32.totalorder %s424, %s438
    %p440 = scmp.eq.s32.totalorder %s36, 0
    %p441 = por %p439, %p440
    %s443 = sadd.s32 %s442, 1
    %p446 = scmp.eq.s32.totalorder %s30, 2
    %p447 = scmp.ne.s32.totalorder %s442, %s444
    %p448 = scmp.eq.s32.totalorder %s30, 0
    %p449 = por %p447, %p448
    %p450 = scmp.ne.s32.totalorder %s442, %s444
    %p451 = scmp.eq.s32.totalorder %s35, 2
    %p452 = por %p450, %p451
    %p453 = scmp.ne.s32.totalorder %s444, %s445
    %p454 = scmp.eq.s32.totalorder %s35, 0
    %p455 = por %p453, %p454
    %p456 = scmp.ne.s32.totalorder %s444, %s445
    %p457 = scmp.eq.s32.totalorder %s36, 2
    %p458 = por %p456, %p457
    %p460 = scmp.ne.s32.totalorder %s445, %s459
    %p461 = scmp.eq.s32.totalorder %s36, 0
    %p462 = por %p460, %p461
    %s464 = sadd.s32 %s463, 1
    %p467 = scmp.eq.s32.totalorder %s30, 2
    %p468 = scmp.ne.s32.totalorder %s463, %s465
    %p469 = scmp.eq.s32.totalorder %s30, 0
    %p470 = por %p468, %p469
    %p471 = scmp.ne.s32.totalorder %s463, %s465
    %p472 = scmp.eq.s32.totalorder %s35, 2
    %p473 = por %p471, %p472
    %p474 = scmp.ne.s32.totalorder %s465, %s466
    %p475 = scmp.eq.s32.totalorder %s35, 0
    %p476 = por %p474, %p475
    %p477 = scmp.ne.s32.totalorder %s465, %s466
    %p478 = scmp.eq.s32.totalorder %s36, 2
    %p479 = por %p477, %p478
    %p481 = scmp.ne.s32.totalorder %s466, %s480
    %p482 = scmp.eq.s32.totalorder %s36, 0
    %p483 = por %p481, %p482
    %s485 = sadd.s32 %s484, 1
    %p488 = scmp.eq.s32.totalorder %s30, 2
    %p489 = scmp.ne.s32.totalorder %s484, %s486
    %p490 = scmp.eq.s32.totalorder %s30, 0
    %p491 = por %p489, %p490
    %p492 = scmp.ne.s32.totalorder %s484, %s486
    %p493 = scmp.eq.s32.totalorder %s35, 2
    %p494 = por %p492, %p493
    %p495 = scmp.ne.s32.totalorder %s486, %s487
    %p496 = scmp.eq.s32.totalorder %s35, 0
    %p497 = por %p495, %p496
    %p498 = scmp.ne.s32.totalorder %s486, %s487
    %p499 = scmp.eq.s32.totalorder %s36, 2
    %p500 = por %p498, %p499
    %p502 = scmp.ne.s32.totalorder %s487, %s501
    %p503 = scmp.eq.s32.totalorder %s36, 0
    %p504 = por %p502, %p503
    %p505 = scmp.le.s32.totalorder 1, %s30
    %p506 = scmp.lt.s32.totalorder %s30, 4
    %p507 = pnand %p505, %p506
    %p508 = pneg %p507
    // Predicated region
    $region9: #{siamese_forward.5} parent=5 // pred_check
      _
    $region10: #{siamese_forward.5} parent=5 // pred_check_branch
      %510 = sbr.rel (%p507) target = $region12
    $region11: #{siamese_forward.5} parent=5 // pred_region
      %s511 = ssub.s32 %s30, 1
      // Predicated region
      $region13: #{siamese_forward.5} parent=11 // pred_check
        %p512 = pneg %p77
      $region14: #{siamese_forward.5} parent=11 // pred_check_branch
        %514 = sbr.rel (%p512) target = $region16
      $region15: #{siamese_forward.5} parent=11 // pred_region
        _
      $region16: #{siamese_forward.5} parent=11 // pred_fallthru
        _
      // Predicated region
      $region17: #{siamese_forward.5} parent=11 // pred_check
        %p515 = pneg %p98
      $region18: #{siamese_forward.5} parent=11 // pred_check_branch
        %517 = sbr.rel (%p515) target = $region20
      $region19: #{siamese_forward.5} parent=11 // pred_region
        _
      $region20: #{siamese_forward.5} parent=11 // pred_fallthru
        _
      // Predicated region
      $region21: #{siamese_forward.5} parent=11 // pred_check
        %p518 = pneg %p119
      $region22: #{siamese_forward.5} parent=11 // pred_check_branch
        %520 = sbr.rel (%p518) target = $region24
      $region23: #{siamese_forward.5} parent=11 // pred_region
        _
      $region24: #{siamese_forward.5} parent=11 // pred_fallthru
        _
      // Predicated region
      $region25: #{siamese_forward.5} parent=11 // pred_check
        %p521 = pneg %p140
      $region26: #{siamese_forward.5} parent=11 // pred_check_branch
        %523 = sbr.rel (%p521) target = $region28
      $region27: #{siamese_forward.5} parent=11 // pred_region
        _
      $region28: #{siamese_forward.5} parent=11 // pred_fallthru
        _
      // Predicated region
      $region29: #{siamese_forward.5} parent=11 // pred_check
        %p524 = pneg %p161
      $region30: #{siamese_forward.5} parent=11 // pred_check_branch
        %526 = sbr.rel (%p524) target = $region32
      $region31: #{siamese_forward.5} parent=11 // pred_region
        _
      $region32: #{siamese_forward.5} parent=11 // pred_fallthru
        _
      // Predicated region
      $region33: #{siamese_forward.5} parent=11 // pred_check
        %p527 = pneg %p182
      $region34: #{siamese_forward.5} parent=11 // pred_check_branch
        %529 = sbr.rel (%p527) target = $region36
      $region35: #{siamese_forward.5} parent=11 // pred_region
        _
      $region36: #{siamese_forward.5} parent=11 // pred_fallthru
        _
      // Predicated region
      $region37: #{siamese_forward.5} parent=11 // pred_check
        %p530 = pneg %p203
      $region38: #{siamese_forward.5} parent=11 // pred_check_branch
        %532 = sbr.rel (%p530) target = $region40
      $region39: #{siamese_forward.5} parent=11 // pred_region
        _
      $region40: #{siamese_forward.5} parent=11 // pred_fallthru
        _
      // Predicated region
      $region41: #{siamese_forward.5} parent=11 // pred_check
        %p533 = pneg %p224
      $region42: #{siamese_forward.5} parent=11 // pred_check_branch
        %535 = sbr.rel (%p533) target = $region44
      $region43: #{siamese_forward.5} parent=11 // pred_region
        _
      $region44: #{siamese_forward.5} parent=11 // pred_fallthru
        _
      // Predicated region
      $region45: #{siamese_forward.5} parent=11 // pred_check
        %p536 = pneg %p245
      $region46: #{siamese_forward.5} parent=11 // pred_check_branch
        %538 = sbr.rel (%p536) target = $region48
      $region47: #{siamese_forward.5} parent=11 // pred_region
        _
      $region48: #{siamese_forward.5} parent=11 // pred_fallthru
        _
      // Predicated region
      $region49: #{siamese_forward.5} parent=11 // pred_check
        %p539 = pneg %p266
      $region50: #{siamese_forward.5} parent=11 // pred_check_branch
        %541 = sbr.rel (%p539) target = $region52
      $region51: #{siamese_forward.5} parent=11 // pred_region
        _
      $region52: #{siamese_forward.5} parent=11 // pred_fallthru
        _
      // Predicated region
      $region53: #{siamese_forward.5} parent=11 // pred_check
        %p542 = pneg %p287
      $region54: #{siamese_forward.5} parent=11 // pred_check_branch
        %544 = sbr.rel (%p542) target = $region56
      $region55: #{siamese_forward.5} parent=11 // pred_region
        _
      $region56: #{siamese_forward.5} parent=11 // pred_fallthru
        _
      // Predicated region
      $region57: #{siamese_forward.5} parent=11 // pred_check
        %p545 = pneg %p308
      $region58: #{siamese_forward.5} parent=11 // pred_check_branch
        %547 = sbr.rel (%p545) target = $region60
      $region59: #{siamese_forward.5} parent=11 // pred_region
        _
      $region60: #{siamese_forward.5} parent=11 // pred_fallthru
        _
      // Predicated region
      $region61: #{siamese_forward.5} parent=11 // pred_check
        %p548 = pneg %p329
      $region62: #{siamese_forward.5} parent=11 // pred_check_branch
        %550 = sbr.rel (%p548) target = $region64
      $region63: #{siamese_forward.5} parent=11 // pred_region
        _
      $region64: #{siamese_forward.5} parent=11 // pred_fallthru
        _
      // Predicated region
      $region65: #{siamese_forward.5} parent=11 // pred_check
        %p551 = pneg %p350
      $region66: #{siamese_forward.5} parent=11 // pred_check_branch
        %553 = sbr.rel (%p551) target = $region68
      $region67: #{siamese_forward.5} parent=11 // pred_region
        _
      $region68: #{siamese_forward.5} parent=11 // pred_fallthru
        _
      // Predicated region
      $region69: #{siamese_forward.5} parent=11 // pred_check
        %p554 = pneg %p371
      $region70: #{siamese_forward.5} parent=11 // pred_check_branch
        %556 = sbr.rel (%p554) target = $region72
      $region71: #{siamese_forward.5} parent=11 // pred_region
        _
      $region72: #{siamese_forward.5} parent=11 // pred_fallthru
        _
      // Predicated region
      $region73: #{siamese_forward.5} parent=11 // pred_check
        %p557 = pneg %p392
      $region74: #{siamese_forward.5} parent=11 // pred_check_branch
        %559 = sbr.rel (%p557) target = $region76
      $region75: #{siamese_forward.5} parent=11 // pred_region
        _
      $region76: #{siamese_forward.5} parent=11 // pred_fallthru
        _
      // Predicated region
      $region77: #{siamese_forward.5} parent=11 // pred_check
        %p560 = pneg %p413
      $region78: #{siamese_forward.5} parent=11 // pred_check_branch
        %562 = sbr.rel (%p560) target = $region80
      $region79: #{siamese_forward.5} parent=11 // pred_region
        _
      $region80: #{siamese_forward.5} parent=11 // pred_fallthru
        _
      // Predicated region
      $region81: #{siamese_forward.5} parent=11 // pred_check
        %p563 = pneg %p434
      $region82: #{siamese_forward.5} parent=11 // pred_check_branch
        %565 = sbr.rel (%p563) target = $region84
      $region83: #{siamese_forward.5} parent=11 // pred_region
        _
      $region84: #{siamese_forward.5} parent=11 // pred_fallthru
        _
      // Predicated region
      $region85: #{siamese_forward.5} parent=11 // pred_check
        %p566 = pneg %p455
      $region86: #{siamese_forward.5} parent=11 // pred_check_branch
        %568 = sbr.rel (%p566) target = $region88
      $region87: #{siamese_forward.5} parent=11 // pred_region
        _
      $region88: #{siamese_forward.5} parent=11 // pred_fallthru
        _
    $region12: #{siamese_forward.5} parent=5 // pred_fallthru
      _
    %p569 = scmp.lt.s32.totalorder %s30, 3
    // Predicated region
    $region89: #{siamese_forward.5} parent=5 // pred_check
      %p570 = pneg %p569
    $region90: #{siamese_forward.5} parent=5 // pred_check_branch
      %572 = sbr.rel (%p570) target = $region92
    $region91: #{siamese_forward.5} parent=5 // pred_region
      // Predicated region
      $region93: #{siamese_forward.5} parent=91 // pred_check
        %p573 = pneg %p50
      $region94: #{siamese_forward.5} parent=91 // pred_check_branch
        %575 = sbr.rel (%p573) target = $region96
      $region95: #{siamese_forward.5} parent=91 // pred_region
        %p576 = scmp.lt.s32.totalorder %s30, 2
        %s577 = scalar_select %p576, %s30, 2
        %s578 = smul.addr %s577, 7
        %s579 = smul.addr %s578, 4
        %s580 = scalar_lea.vmem %s0, %s579
      $region96: #{siamese_forward.5} parent=91 // pred_fallthru
        _
    $region92: #{siamese_forward.5} parent=5 // pred_fallthru
      _
    %p581 = scmp.le.s32.totalorder 1, %s30
    %p582 = scmp.lt.s32.totalorder %s30, 4
    %p583 = pnand %p581, %p582
    %p584 = pneg %p583
    // Predicated region
    $region97: #{siamese_forward.5} parent=5 // pred_check
      _
    $region98: #{siamese_forward.5} parent=5 // pred_check_branch
      %586 = sbr.rel (%p583) target = $region100
    $region99: #{siamese_forward.5} parent=5 // pred_region
      %s587 = ssub.s32 %s30, 1
      %p588 = scmp.lt.s32.totalorder %s35, 2
      %s589 = scalar_select %p588, %s35, 2
      %s590 = smul.addr %s589, 7
      %s591 = smul.addr %s590, 4
      %s592 = scalar_lea.vmem %s0, %s591
      %p593 = pneg %p56
      %p594 = pneg %p53
      %p595 = pneg %p77
      %p596 = pneg %p74
      %p597 = pneg %p98
      %p598 = pneg %p95
      %p599 = pneg %p119
      %p600 = pneg %p116
      %p601 = pneg %p140
      %p602 = pneg %p137
      %p603 = pneg %p161
      %p604 = pneg %p158
      %p605 = pneg %p182
      %p606 = pneg %p179
      %p607 = pneg %p203
      %p608 = pneg %p200
      %p609 = pneg %p224
      %p610 = pneg %p221
      %p611 = pneg %p245
      %p612 = pneg %p242
      %p613 = pneg %p266
      %p614 = pneg %p263
      %p615 = pneg %p287
      %p616 = pneg %p284
      %p617 = pneg %p308
      %p618 = pneg %p305
      %p619 = pneg %p329
      %p620 = pneg %p326
      %p621 = pneg %p350
      %p622 = pneg %p347
      %p623 = pneg %p371
      %p624 = pneg %p368
      %p625 = pneg %p392
      %p626 = pneg %p389
      %p627 = pneg %p413
      %p628 = pneg %p410
      %p629 = pneg %p434
      %p630 = pneg %p431
      %p631 = pneg %p455
      %p632 = pneg %p452
      %p633 = pneg %p476
      %p634 = pneg %p473
      %p635 = pneg %p497
      %p636 = pneg %p494
      %p637 = scmp.lt.s32.totalorder %s35, 2
      %s638 = scalar_select %p637, %s35, 2
      %s639 = smul.addr %s638, 7
      %s640 = smul.addr %s639, 4
      %s641 = scalar_lea.vmem %s0, %s640
      %p642 = scmp.eq.s32.totalorder %s35, 0
      // Predicated region
      $region101: #{siamese_forward.5} parent=99 // pred_check
        %p643 = pneg %p642
      $region102: #{siamese_forward.5} parent=99 // pred_check_branch
        %645 = sbr.rel (%p643) target = $region104
      $region103: #{siamese_forward.5} parent=99 // pred_region
        %646 = vst [vmem:[#allocation2] sm:$0xff] 0.0
        %647 = vst [vmem:[#allocation2 + $0x8] sm:$0xff] 0.0
        %648 = vst [vmem:[#allocation3] sm:$0xff] 0.0
        %649 = vst [vmem:[#allocation3 + $0x8] sm:$0xff] 0.0
      $region104: #{siamese_forward.5} parent=99 // pred_fallthru
        _
      %v650 = vld [vmem:[%s641] sm:$0xff]
      %v651 = vld [vmem:[%s641 + $0x8] sm:$0xff]
      %v652 = vld [vmem:[%s641 + $0x10] sm:$0xff]
      %v653 = vld [vmem:[%s641 + $0x18] sm:$0xf]
      %v654 = vld [vmem:[%s1] sm:$0xff]
      %v655 = vld [vmem:[%s1 + $0x8] sm:$0xff]
      %v656 = vld [vmem:[%s1 + $0x10] sm:$0xff]
      %v657 = vld [vmem:[%s1 + $0x18] sm:$0xff]
      %v658 = vld [vmem:[%s1 + $0x20] sm:$0xff]
      %v659 = vld [vmem:[%s1 + $0x28] sm:$0xff]
      %v660 = vld [vmem:[%s1 + $0x30] sm:$0xff]
      %v661 = vld [vmem:[%s1 + $0x38] sm:$0xff]
      %v662 = vld [vmem:[%s1 + $0x40] sm:$0xff]
      %v663 = vld [vmem:[%s1 + $0x48] sm:$0xff]
      %v664 = vld [vmem:[%s1 + $0x50] sm:$0xff]
      %v665 = vld [vmem:[%s1 + $0x58] sm:$0xff]
      %v666 = vld [vmem:[%s1 + $0x60] sm:$0xff]
      %v667 = vld [vmem:[%s1 + $0x68] sm:$0xff]
      %v668 = vld [vmem:[%s1 + $0x70] sm:$0xff]
      %v669 = vld [vmem:[%s1 + $0x78] sm:$0xff]
      %v670 = vld [vmem:[%s1 + $0x80] sm:$0xff]
      %v671 = vld [vmem:[%s1 + $0x88] sm:$0xff]
      %v672 = vld [vmem:[%s1 + $0x90] sm:$0xff]
      %v673 = vld [vmem:[%s1 + $0x98] sm:$0xff]
      %v674 = vld [vmem:[%s1 + $0xa0] sm:$0xff]
      %v675 = vld [vmem:[%s1 + $0xa8] sm:$0xff]
      %v676 = vld [vmem:[%s1 + $0xb0] sm:$0xff]
      %v677 = vld [vmem:[%s1 + $0xb8] sm:$0xff]
      %v678 = vld [vmem:[%s1 + $0xc0] sm:$0xff]
      %v679 = vld [vmem:[%s1 + $0xc8] sm:$0xff]
      %v680 = vld [vmem:[%s1 + $0xd0] sm:$0xff]
      %v681 = vld [vmem:[%s1 + $0xd8] sm:$0xff]
      %v682 = vld [vmem:[%s1 + $0xe0] sm:$0xff]
      %v683 = vld [vmem:[%s1 + $0xe8] sm:$0xff]
      %v684 = vld [vmem:[%s1 + $0xf0] sm:$0xff]
      %v685 = vld [vmem:[%s1 + $0xf8] sm:$0xff]
      %v686 = vld [vmem:[%s1 + $0x100] sm:$0xff]
      %v687 = vld [vmem:[%s1 + $0x108] sm:$0xff]
      %v688 = vld [vmem:[%s1 + $0x110] sm:$0xff]
      %v689 = vld [vmem:[%s1 + $0x118] sm:$0xff]
      %v690 = vld [vmem:[%s1 + $0x120] sm:$0xff]
      %v691 = vld [vmem:[%s1 + $0x128] sm:$0xff]
      %v692 = vld [vmem:[%s1 + $0x130] sm:$0xff]
      %v693 = vld [vmem:[%s1 + $0x138] sm:$0xff]
      %v694 = vld [vmem:[%s1 + $0x140] sm:$0xff]
      %v695 = vld [vmem:[%s1 + $0x148] sm:$0xff]
      %v696 = vld [vmem:[%s1 + $0x150] sm:$0xff]
      %v697 = vld [vmem:[%s1 + $0x158] sm:$0xff]
      %v698 = vld [vmem:[%s1 + $0x160] sm:$0xff]
      %v699 = vld [vmem:[%s1 + $0x168] sm:$0xff]
      %v700 = vld [vmem:[%s1 + $0x170] sm:$0xff]
      %v701 = vld [vmem:[%s1 + $0x178] sm:$0xff]
      %v702 = vld [vmem:[%s1 + $0x180] sm:$0xff]
      %v703 = vld [vmem:[%s1 + $0x188] sm:$0xff]
      %v704 = vld [vmem:[%s1 + $0x190] sm:$0xff]
      %v705 = vld [vmem:[%s1 + $0x198] sm:$0xff]
      %v706 = vld [vmem:[%s1 + $0x1a0] sm:$0xff]
      %v707 = vld [vmem:[%s1 + $0x1a8] sm:$0xff]
      %v708 = vld [vmem:[%s1 + $0x1b0] sm:$0xff]
      %v709 = vld [vmem:[%s1 + $0x1b8] sm:$0xff]
      %v710 = vld [vmem:[%s1 + $0x1c0] sm:$0xff]
      %v711 = vld [vmem:[%s1 + $0x1c8] sm:$0xff]
      %v712 = vld [vmem:[%s1 + $0x1d0] sm:$0xff]
      %v713 = vld [vmem:[%s1 + $0x1d8] sm:$0xff]
      %v714 = vld [vmem:[%s1 + $0x1e0] sm:$0xff]
      %v715 = vld [vmem:[%s1 + $0x1e8] sm:$0xff]
      %v716 = vld [vmem:[%s1 + $0x1f0] sm:$0xff]
      %v717 = vld [vmem:[%s1 + $0x1f8] sm:$0xff]
      %v718 = vld [vmem:[%s1 + $0x200] sm:$0xff]
      %v719 = vld [vmem:[%s1 + $0x208] sm:$0xff]
      %v720 = vld [vmem:[%s1 + $0x210] sm:$0xff]
      %v721 = vld [vmem:[%s1 + $0x218] sm:$0xff]
      %v722 = vld [vmem:[%s1 + $0x220] sm:$0xff]
      %v723 = vld [vmem:[%s1 + $0x228] sm:$0xff]
      %v724 = vld [vmem:[%s1 + $0x230] sm:$0xff]
      %v725 = vld [vmem:[%s1 + $0x238] sm:$0xff]
      %v726 = vld [vmem:[%s1 + $0x240] sm:$0xff]
      %v727 = vld [vmem:[%s1 + $0x248] sm:$0xff]
      %v728 = vld [vmem:[%s1 + $0x250] sm:$0xff]
      %v729 = vld [vmem:[%s1 + $0x258] sm:$0xff]
      %v730 = vld [vmem:[%s1 + $0x260] sm:$0xff]
      %v731 = vld [vmem:[%s1 + $0x268] sm:$0xff]
      %v732 = vld [vmem:[%s1 + $0x270] sm:$0xff]
      %v733 = vld [vmem:[%s1 + $0x278] sm:$0xff]
      %v734 = vld [vmem:[%s1 + $0x280] sm:$0xff]
      %v735 = vld [vmem:[%s1 + $0x288] sm:$0xff]
      %v736 = vld [vmem:[%s1 + $0x290] sm:$0xff]
      %v737 = vld [vmem:[%s1 + $0x298] sm:$0xff]
      %v738 = vld [vmem:[%s1 + $0x2a0] sm:$0xff]
      %v739 = vld [vmem:[%s1 + $0x2a8] sm:$0xff]
      %v740 = vld [vmem:[%s1 + $0x2b0] sm:$0xff]
      %v741 = vld [vmem:[%s1 + $0x2b8] sm:$0xff]
      %v742 = vld [vmem:[%s1 + $0x2c0] sm:$0xff]
      %v743 = vld [vmem:[%s1 + $0x2c8] sm:$0xff]
      %v744 = vld [vmem:[%s1 + $0x2d0] sm:$0xff]
      %v745 = vld [vmem:[%s1 + $0x2d8] sm:$0xff]
      %v746 = vld [vmem:[%s1 + $0x2e0] sm:$0xff]
      %v747 = vld [vmem:[%s1 + $0x2e8] sm:$0xff]
      %v748 = vld [vmem:[%s1 + $0x2f0] sm:$0xff]
      %v749 = vld [vmem:[%s1 + $0x2f8] sm:$0xff]
      %v750 = vld [vmem:[%s1 + $0x300] sm:$0xff]
      %v751 = vld [vmem:[%s1 + $0x308] sm:$0xff]
      %v752 = vld [vmem:[%s1 + $0x310] sm:$0xff]
      %v753 = vld [vmem:[%s1 + $0x318] sm:$0xff]
      %v754 = vld [vmem:[%s2] sm:$0x1]
      %v756 = vlaneseq
      %v757 = vshrl.u32 %v756, 7
      %v758 = vsub.s32 0, %v757
      %v759 = vrot.slane %v754, %v758
      %v765 = vcombine.high %v650, %v650
      %v766 = vcombine.high %v651, %v651
      %v767 = vcombine.high %v652, %v652
      %vm771 = vcmask 261120
      %v772 = vsel %vm771, %v653, 0
      %774 = vmatprep.subr.mxu0 0.0
      %775 = vmatpush1.msra.mxu0 %v654
      %776 = vmatprep.subr.mxu0 0.0
      %777 = vmatpush1.msra.mxu0 %v655
      %778 = vmatprep.subr.mxu0 0.0
      %779 = vmatpush1.msra.mxu0 %v656
      %780 = vmatprep.subr.mxu0 0.0
      %781 = vmatpush1.msra.mxu0 %v657
      %782 = vmatprep.subr.mxu0 0.0
      %783 = vmatpush1.msra.mxu0 %v658
      %784 = vmatprep.subr.mxu0 0.0
      %785 = vmatpush1.msra.mxu0 %v659
      %786 = vmatprep.subr.mxu0 0.0
      %787 = vmatpush1.msra.mxu0 %v660
      %788 = vmatprep.subr.mxu0 0.0
      %789 = vmatpush1.msra.mxu0 %v661
      %790 = vmatprep.subr.mxu0 0.0
      %791 = vmatpush1.msra.mxu0 %v662
      %792 = vmatprep.subr.mxu0 0.0
      %793 = vmatpush1.msra.mxu0 %v663
      %794 = vmatprep.subr.mxu0 0.0
      %795 = vmatpush1.msra.mxu0 %v664
      %796 = vmatprep.subr.mxu0 0.0
      %797 = vmatpush1.msra.mxu0 %v665
      %798 = vmatprep.subr.mxu0 0.0
      %799 = vmatpush1.msra.mxu0 %v666
      %800 = vmatprep.subr.mxu0 0.0
      %801 = vmatpush1.msra.mxu0 %v667
      %802 = vmatprep.subr.mxu0 0.0
      %803 = vmatpush1.msra.mxu0 %v668
      %804 = vmatprep.subr.mxu0 0.0
      %805 = vmatpush1.msra.mxu0 %v669
      %806 = vmatprep.subr.mxu0 0.0
      %807 = vmatpush1.msra.mxu0 %v670
      %808 = vmatprep.subr.mxu0 0.0
      %809 = vmatpush1.msra.mxu0 %v671
      %810 = vmatprep.subr.mxu0 0.0
      %811 = vmatpush1.msra.mxu0 %v672
      %812 = vmatprep.subr.mxu0 0.0
      %813 = vmatpush1.msra.mxu0 %v673
      %814 = vmatprep.subr.mxu0 0.0
      %815 = vmatpush1.msra.mxu0 %v674
      %816 = vmatprep.subr.mxu0 0.0
      %817 = vmatpush1.msra.mxu0 %v675
      %818 = vmatprep.subr.mxu0 0.0
      %819 = vmatpush1.msra.mxu0 %v676
      %820 = vmatprep.subr.mxu0 0.0
      %821 = vmatpush1.msra.mxu0 %v677
      %822 = vmatprep.subr.mxu0 0.0
      %823 = vmatpush1.msra.mxu0 %v678
      %824 = vmatprep.subr.mxu0 0.0
      %825 = vmatpush1.msra.mxu0 %v679
      %826 = vmatprep.subr.mxu0 0.0
      %827 = vmatpush1.msra.mxu0 %v680
      %828 = vmatprep.subr.mxu0 0.0
      %829 = vmatpush1.msra.mxu0 %v681
      %830 = vmatprep.subr.mxu0 0.0
      %831 = vmatpush1.msra.mxu0 %v682
      %832 = vmatprep.subr.mxu0 0.0
      %833 = vmatpush1.msra.mxu0 %v683
      %834 = vmatprep.subr.mxu0 0.0
      %835 = vmatpush1.msra.mxu0 %v684
      %836 = vmatprep.subr.mxu0 0.0
      %837 = vmatpush1.msra.mxu0 %v685
      %838 = vmatprep.mubr.f32.mxu0 %v765
      %839 = vmatmul.mubr.f32.gmra.mrb[0].mxu0 %v650
      %v840 = vpop.f32.mrb[0].mxu0
      %v841 = vadd.f32 %v759, %v840
      %v842 = vpop.f32.mrb[0].mxu0
      %843 = vdwg.mxu0
      %844 = vmatprep.subr.mxu0 0.0
      %845 = vmatpush1.msra.mxu0 %v686
      %846 = vmatprep.subr.mxu0 0.0
      %847 = vmatpush1.msra.mxu0 %v687
      %848 = vmatprep.subr.mxu0 0.0
      %849 = vmatpush1.msra.mxu0 %v688
      %850 = vmatprep.subr.mxu0 0.0
      %851 = vmatpush1.msra.mxu0 %v689
      %852 = vmatprep.subr.mxu0 0.0
      %853 = vmatpush1.msra.mxu0 %v690
      %854 = vmatprep.subr.mxu0 0.0
      %855 = vmatpush1.msra.mxu0 %v691
      %856 = vmatprep.subr.mxu0 0.0
      %857 = vmatpush1.msra.mxu0 %v692
      %858 = vmatprep.subr.mxu0 0.0
      %859 = vmatpush1.msra.mxu0 %v693
      %860 = vmatprep.subr.mxu0 0.0
      %861 = vmatpush1.msra.mxu0 %v694
      %862 = vmatprep.subr.mxu0 0.0
      %863 = vmatpush1.msra.mxu0 %v695
      %864 = vmatprep.subr.mxu0 0.0
      %865 = vmatpush1.msra.mxu0 %v696
      %866 = vmatprep.subr.mxu0 0.0
      %867 = vmatpush1.msra.mxu0 %v697
      %868 = vmatprep.subr.mxu0 0.0
      %869 = vmatpush1.msra.mxu0 %v698
      %870 = vmatprep.subr.mxu0 0.0
      %871 = vmatpush1.msra.mxu0 %v699
      %872 = vmatprep.subr.mxu0 0.0
      %873 = vmatpush1.msra.mxu0 %v700
      %874 = vmatprep.subr.mxu0 0.0
      %875 = vmatpush1.msra.mxu0 %v701
      %876 = vmatprep.subr.mxu0 0.0
      %877 = vmatpush1.msra.mxu0 %v702
      %878 = vmatprep.subr.mxu0 0.0
      %879 = vmatpush1.msra.mxu0 %v703
      %880 = vmatprep.subr.mxu0 0.0
      %881 = vmatpush1.msra.mxu0 %v704
      %882 = vmatprep.subr.mxu0 0.0
      %883 = vmatpush1.msra.mxu0 %v705
      %884 = vmatprep.subr.mxu0 0.0
      %885 = vmatpush1.msra.mxu0 %v706
      %886 = vmatprep.subr.mxu0 0.0
      %887 = vmatpush1.msra.mxu0 %v707
      %888 = vmatprep.subr.mxu0 0.0
      %889 = vmatpush1.msra.mxu0 %v708
      %890 = vmatprep.subr.mxu0 0.0
      %891 = vmatpush1.msra.mxu0 %v709
      %892 = vmatprep.subr.mxu0 0.0
      %893 = vmatpush1.msra.mxu0 %v710
      %894 = vmatprep.subr.mxu0 0.0
      %895 = vmatpush1.msra.mxu0 %v711
      %896 = vmatprep.subr.mxu0 0.0
      %897 = vmatpush1.msra.mxu0 %v712
      %898 = vmatprep.subr.mxu0 0.0
      %899 = vmatpush1.msra.mxu0 %v713
      %900 = vmatprep.subr.mxu0 0.0
      %901 = vmatpush1.msra.mxu0 %v714
      %902 = vmatprep.subr.mxu0 0.0
      %903 = vmatpush1.msra.mxu0 %v715
      %904 = vmatprep.subr.mxu0 0.0
      %905 = vmatpush1.msra.mxu0 %v716
      %906 = vmatprep.subr.mxu0 0.0
      %907 = vmatpush1.msra.mxu0 %v717
      %908 = vmatprep.mubr.f32.mxu0 %v766
      %909 = vmatmul.mubr.f32.gmra.mrb[0].mxu0 %v651
      %v910 = vpop.f32.mrb[0].mxu0
      %v911 = vadd.f32 %v841, %v910
      %v912 = vpop.f32.mrb[0].mxu0
      %913 = vdwg.mxu0
      %914 = vmatprep.subr.mxu0 0.0
      %915 = vmatpush1.msra.mxu0 %v718
      %916 = vmatprep.subr.mxu0 0.0
      %917 = vmatpush1.msra.mxu0 %v719
      %918 = vmatprep.subr.mxu0 0.0
      %919 = vmatpush1.msra.mxu0 %v720
      %920 = vmatprep.subr.mxu0 0.0
      %921 = vmatpush1.msra.mxu0 %v721
      %922 = vmatprep.subr.mxu0 0.0
      %923 = vmatpush1.msra.mxu0 %v722
      %924 = vmatprep.subr.mxu0 0.0
      %925 = vmatpush1.msra.mxu0 %v723
      %926 = vmatprep.subr.mxu0 0.0
      %927 = vmatpush1.msra.mxu0 %v724
      %928 = vmatprep.subr.mxu0 0.0
      %929 = vmatpush1.msra.mxu0 %v725
      %930 = vmatprep.subr.mxu0 0.0
      %931 = vmatpush1.msra.mxu0 %v726
      %932 = vmatprep.subr.mxu0 0.0
      %933 = vmatpush1.msra.mxu0 %v727
      %934 = vmatprep.subr.mxu0 0.0
      %935 = vmatpush1.msra.mxu0 %v728
      %936 = vmatprep.subr.mxu0 0.0
      %937 = vmatpush1.msra.mxu0 %v729
      %938 = vmatprep.subr.mxu0 0.0
      %939 = vmatpush1.msra.mxu0 %v730
      %940 = vmatprep.subr.mxu0 0.0
      %941 = vmatpush1.msra.mxu0 %v731
      %942 = vmatprep.subr.mxu0 0.0
      %943 = vmatpush1.msra.mxu0 %v732
      %944 = vmatprep.subr.mxu0 0.0
      %945 = vmatpush1.msra.mxu0 %v733
      %946 = vmatprep.subr.mxu0 0.0
      %947 = vmatpush1.msra.mxu0 %v734
      %948 = vmatprep.subr.mxu0 0.0
      %949 = vmatpush1.msra.mxu0 %v735
      %950 = vmatprep.subr.mxu0 0.0
      %951 = vmatpush1.msra.mxu0 %v736
      %952 = vmatprep.subr.mxu0 0.0
      %953 = vmatpush1.msra.mxu0 %v737
      %954 = vmatprep.subr.mxu0 0.0
      %955 = vmatpush1.msra.mxu0 %v738
      %956 = vmatprep.subr.mxu0 0.0
      %957 = vmatpush1.msra.mxu0 %v739
      %958 = vmatprep.subr.mxu0 0.0
      %959 = vmatpush1.msra.mxu0 %v740
      %960 = vmatprep.subr.mxu0 0.0
      %961 = vmatpush1.msra.mxu0 %v741
      %962 = vmatprep.subr.mxu0 0.0
      %963 = vmatpush1.msra.mxu0 %v742
      %964 = vmatprep.subr.mxu0 0.0
      %965 = vmatpush1.msra.mxu0 %v743
      %966 = vmatprep.subr.mxu0 0.0
      %967 = vmatpush1.msra.mxu0 %v744
      %968 = vmatprep.subr.mxu0 0.0
      %969 = vmatpush1.msra.mxu0 %v745
      %970 = vmatprep.subr.mxu0 0.0
      %971 = vmatpush1.msra.mxu0 %v746
      %972 = vmatprep.subr.mxu0 0.0
      %973 = vmatpush1.msra.mxu0 %v747
      %974 = vmatprep.subr.mxu0 0.0
      %975 = vmatpush1.msra.mxu0 %v748
      %976 = vmatprep.subr.mxu0 0.0
      %977 = vmatpush1.msra.mxu0 %v749
      %978 = vmatprep.mubr.f32.mxu0 %v767
      %979 = vmatmul.mubr.f32.gmra.mrb[0].mxu0 %v652
      %v980 = vpop.f32.mrb[0].mxu0
      %v981 = vadd.f32 %v911, %v980
      %v982 = vpop.f32.mrb[0].mxu0
      %983 = vdwg.mxu0
      %984 = vmatprep.subr.mxu0 0.0
      %985 = vmatpush1.msra.mxu0 %v750
      %986 = vmatprep.subr.mxu0 0.0
      %987 = vmatpush1.msra.mxu0 %v751
      %988 = vmatprep.subr.mxu0 0.0
      %989 = vmatpush1.msra.mxu0 %v752
      %990 = vmatprep.subr.mxu0 0.0
      %991 = vmatpush1.msra.mxu0 %v753
      %992 = vmatprep.subr.mxu0 0.0
      %993 = vmatpush1.msra.mxu0 0.0
      %994 = vmatprep.subr.mxu0 0.0
      %995 = vmatpush1.msra.mxu0 0.0
      %996 = vmatprep.subr.mxu0 0.0
      %997 = vmatpush1.msra.mxu0 0.0
      %998 = vmatprep.subr.mxu0 0.0
      %999 = vmatpush1.msra.mxu0 0.0
      %1000 = vmatprep.subr.mxu0 0.0
      %1001 = vmatpush1.msra.mxu0 0.0
      %1002 = vmatprep.subr.mxu0 0.0
      %1003 = vmatpush1.msra.mxu0 0.0
      %1004 = vmatprep.subr.mxu0 0.0
      %1005 = vmatpush1.msra.mxu0 0.0
      %1006 = vmatprep.subr.mxu0 0.0
      %1007 = vmatpush1.msra.mxu0 0.0
      %1008 = vmatprep.subr.mxu0 0.0
      %1009 = vmatpush1.msra.mxu0 0.0
      %1010 = vmatprep.subr.mxu0 0.0
      %1011 = vmatpush1.msra.mxu0 0.0
      %1012 = vmatprep.subr.mxu0 0.0
      %1013 = vmatpush1.msra.mxu0 0.0
      %1014 = vmatprep.subr.mxu0 0.0
      %1015 = vmatpush1.msra.mxu0 0.0
      %1016 = vmatprep.subr.mxu0 0.0
      %1017 = vmatpush1.msra.mxu0 0.0
      %1018 = vmatprep.subr.mxu0 0.0
      %1019 = vmatpush1.msra.mxu0 0.0
      %1020 = vmatprep.subr.mxu0 0.0
      %1021 = vmatpush1.msra.mxu0 0.0
      %1022 = vmatprep.subr.mxu0 0.0
      %1023 = vmatpush1.msra.mxu0 0.0
      %1024 = vmatprep.subr.mxu0 0.0
      %1025 = vmatpush1.msra.mxu0 0.0
      %1026 = vmatprep.subr.mxu0 0.0
      %1027 = vmatpush1.msra.mxu0 0.0
      %1028 = vmatprep.subr.mxu0 0.0
      %1029 = vmatpush1.msra.mxu0 0.0
      %1030 = vmatprep.subr.mxu0 0.0
      %1031 = vmatpush1.msra.mxu0 0.0
      %1032 = vmatprep.subr.mxu0 0.0
      %1033 = vmatpush1.msra.mxu0 0.0
      %1034 = vmatprep.subr.mxu0 0.0
      %1035 = vmatpush1.msra.mxu0 0.0
      %1036 = vmatprep.subr.mxu0 0.0
      %1037 = vmatpush1.msra.mxu0 0.0
      %1038 = vmatprep.subr.mxu0 0.0
      %1039 = vmatpush1.msra.mxu0 0.0
      %1040 = vmatprep.subr.mxu0 0.0
      %1041 = vmatpush1.msra.mxu0 0.0
      %1042 = vmatprep.subr.mxu0 0.0
      %1043 = vmatpush1.msra.mxu0 0.0
      %1044 = vmatprep.subr.mxu0 0.0
      %1045 = vmatpush1.msra.mxu0 0.0
      %1046 = vmatprep.subr.mxu0 0.0
      %1047 = vmatpush1.msra.mxu0 0.0
      %1048 = vmatprep.mubr.f32.mxu0 0.0
      %1049 = vmatmul.mubr.f32.gmra.mrb[0].mxu0 %v772
      %v1050 = vpop.f32.mrb[0].mxu0
      %v1051 = vadd.f32 %v981, %v1050
      %v1052 = vpop.f32.mrb[0].mxu0
      %1053 = vdwg.mxu0
      %v1054 = vld [vmem:[%s3] sm:$0xff]
      %v1055 = vld [vmem:[%s3 + $0x8] sm:$0xff]
      %v1056 = vld [vmem:[%s3 + $0x10] sm:$0xff]
      %v1057 = vld [vmem:[%s3 + $0x18] sm:$0xff]
      %v1058 = vld [vmem:[%s3 + $0x20] sm:$0xff]
      %v1059 = vld [vmem:[%s3 + $0x28] sm:$0xff]
      %v1060 = vld [vmem:[%s3 + $0x30] sm:$0xff]
      %v1061 = vld [vmem:[%s3 + $0x38] sm:$0xff]
      %v1062 = vld [vmem:[%s3 + $0x40] sm:$0xff]
      %v1063 = vld [vmem:[%s3 + $0x48] sm:$0xff]
      %v1064 = vld [vmem:[%s3 + $0x50] sm:$0xff]
      %v1065 = vld [vmem:[%s3 + $0x58] sm:$0xff]
      %v1066 = vld [vmem:[%s3 + $0x60] sm:$0xff]
      %v1067 = vld [vmem:[%s3 + $0x68] sm:$0xff]
      %v1068 = vld [vmem:[%s3 + $0x70] sm:$0xff]
      %v1069 = vld [vmem:[%s3 + $0x78] sm:$0xff]
      %v1070 = vld [vmem:[%s5] sm:$0xf]
      %v1072 = vlaneseq
      %v1073 = vshrl.u32 %v1072, 7
      %v1074 = vsub.s32 0, %v1073
      %v1075 = vrot.slane %v1070, %v1074
      %v1076 = vlaneseq
      %v1077 = vshrl.u32 %v1076, 7
      %v1078 = vsub.s32 1, %v1077
      %v1079 = vrot.slane %v1070, %v1078
      %v1080 = vlaneseq
      %v1081 = vshrl.u32 %v1080, 7
      %v1082 = vsub.s32 2, %v1081
      %v1083 = vrot.slane %v1070, %v1082
      %v1084 = vlaneseq
      %v1085 = vshrl.u32 %v1084, 7
      %v1086 = vsub.s32 3, %v1085
      %v1087 = vrot.slane %v1070, %v1086
      %v1093 = vsel %vm771, %v1051, 0
      %1095 = vmatprep.subr.mxu0 %v1055
      %1096 = vmatpush1.msra.mxu0 %v1054
      %1097 = vmatprep.subr.mxu0 %v1059
      %1098 = vmatpush1.msra.mxu0 %v1058
      %1099 = vmatprep.subr.mxu0 %v1063
      %1100 = vmatpush1.msra.mxu0 %v1062
      %1101 = vmatprep.subr.mxu0 %v1067
      %1102 = vmatpush1.msra.mxu0 %v1066
      %1103 = vmatprep.subr.mxu0 0.0
      %1104 = vmatpush1.msra.mxu0 0.0
      %1105 = vmatprep.subr.mxu0 0.0
      %1106 = vmatpush1.msra.mxu0 0.0
      %1107 = vmatprep.subr.mxu0 0.0
      %1108 = vmatpush1.msra.mxu0 0.0
      %1109 = vmatprep.subr.mxu0 0.0
      %1110 = vmatpush1.msra.mxu0 0.0
      %1111 = vmatprep.subr.mxu0 0.0
      %1112 = vmatpush1.msra.mxu0 0.0
      %1113 = vmatprep.subr.mxu0 0.0
      %1114 = vmatpush1.msra.mxu0 0.0
      %1115 = vmatprep.subr.mxu0 0.0
      %1116 = vmatpush1.msra.mxu0 0.0
      %1117 = vmatprep.subr.mxu0 0.0
      %1118 = vmatpush1.msra.mxu0 0.0
      %1119 = vmatprep.subr.mxu0 0.0
      %1120 = vmatpush1.msra.mxu0 0.0
      %1121 = vmatprep.subr.mxu0 0.0
      %1122 = vmatpush1.msra.mxu0 0.0
      %1123 = vmatprep.subr.mxu0 0.0
      %1124 = vmatpush1.msra.mxu0 0.0
      %1125 = vmatprep.subr.mxu0 0.0
      %1126 = vmatpush1.msra.mxu0 0.0
      %1127 = vmatprep.subr.mxu0 0.0
      %1128 = vmatpush1.msra.mxu0 0.0
      %1129 = vmatprep.subr.mxu0 0.0
      %1130 = vmatpush1.msra.mxu0 0.0
      %1131 = vmatprep.subr.mxu0 0.0
      %1132 = vmatpush1.msra.mxu0 0.0
      %1133 = vmatprep.subr.mxu0 0.0
      %1134 = vmatpush1.msra.mxu0 0.0
      %1135 = vmatprep.subr.mxu0 0.0
      %1136 = vmatpush1.msra.mxu0 0.0
      %1137 = vmatprep.subr.mxu0 0.0
      %1138 = vmatpush1.msra.mxu0 0.0
      %1139 = vmatprep.subr.mxu0 0.0
      %1140 = vmatpush1.msra.mxu0 0.0
      %1141 = vmatprep.subr.mxu0 0.0
      %1142 = vmatpush1.msra.mxu0 0.0
      %1143 = vmatprep.subr.mxu0 0.0
      %1144 = vmatpush1.msra.mxu0 0.0
      %1145 = vmatprep.subr.mxu0 0.0
      %1146 = vmatpush1.msra.mxu0 0.0
      %1147 = vmatprep.subr.mxu0 0.0
      %1148 = vmatpush1.msra.mxu0 0.0
      %1149 = vmatprep.subr.mxu0 0.0
      %1150 = vmatpush1.msra.mxu0 0.0
      %1151 = vmatprep.subr.mxu0 0.0
      %1152 = vmatpush1.msra.mxu0 0.0
      %1153 = vmatprep.subr.mxu0 0.0
      %1154 = vmatpush1.msra.mxu0 0.0
      %1155 = vmatprep.subr.mxu0 0.0
      %1156 = vmatpush1.msra.mxu0 0.0
      %1157 = vmatprep.subr.mxu0 0.0
      %1158 = vmatpush1.msra.mxu0 0.0
      %1159 = vmatprep.mubr.f32.mxu0 0.0
      %1160 = vmatmul.mubr.f32.gmra.mrb[0].mxu0 %v1093
      %v1161 = vpop.f32.mrb[0].mxu0
      %v1162 = vadd.f32 %v1075, %v1161
      %v1163 = vpop.f32.mrb[0].mxu0
      %v1164 = vadd.f32 %v1079, %v1163
      %1165 = vdwg.mxu0
      %1166 = vmatprep.subr.mxu0 %v1057
      %1167 = vmatpush1.msra.mxu0 %v1056
      %1168 = vmatprep.subr.mxu0 %v1061
      %1169 = vmatpush1.msra.mxu0 %v1060
      %1170 = vmatprep.subr.mxu0 %v1065
      %1171 = vmatpush1.msra.mxu0 %v1064
      %1172 = vmatprep.subr.mxu0 %v1069
      %1173 = vmatpush1.msra.mxu0 %v1068
      %1174 = vmatprep.subr.mxu0 0.0
      %1175 = vmatpush1.msra.mxu0 0.0
      %1176 = vmatprep.subr.mxu0 0.0
      %1177 = vmatpush1.msra.mxu0 0.0
      %1178 = vmatprep.subr.mxu0 0.0
      %1179 = vmatpush1.msra.mxu0 0.0
      %1180 = vmatprep.subr.mxu0 0.0
      %1181 = vmatpush1.msra.mxu0 0.0
      %1182 = vmatprep.subr.mxu0 0.0
      %1183 = vmatpush1.msra.mxu0 0.0
      %1184 = vmatprep.subr.mxu0 0.0
      %1185 = vmatpush1.msra.mxu0 0.0
      %1186 = vmatprep.subr.mxu0 0.0
      %1187 = vmatpush1.msra.mxu0 0.0
      %1188 = vmatprep.subr.mxu0 0.0
      %1189 = vmatpush1.msra.mxu0 0.0
      %1190 = vmatprep.subr.mxu0 0.0
      %1191 = vmatpush1.msra.mxu0 0.0
      %1192 = vmatprep.subr.mxu0 0.0
      %1193 = vmatpush1.msra.mxu0 0.0
      %1194 = vmatprep.subr.mxu0 0.0
      %1195 = vmatpush1.msra.mxu0 0.0
      %1196 = vmatprep.subr.mxu0 0.0
      %1197 = vmatpush1.msra.mxu0 0.0
      %1198 = vmatprep.subr.mxu0 0.0
      %1199 = vmatpush1.msra.mxu0 0.0
      %1200 = vmatprep.subr.mxu0 0.0
      %1201 = vmatpush1.msra.mxu0 0.0
      %1202 = vmatprep.subr.mxu0 0.0
      %1203 = vmatpush1.msra.mxu0 0.0
      %1204 = vmatprep.subr.mxu0 0.0
      %1205 = vmatpush1.msra.mxu0 0.0
      %1206 = vmatprep.subr.mxu0 0.0
      %1207 = vmatpush1.msra.mxu0 0.0
      %1208 = vmatprep.subr.mxu0 0.0
      %1209 = vmatpush1.msra.mxu0 0.0
      %1210 = vmatprep.subr.mxu0 0.0
      %1211 = vmatpush1.msra.mxu0 0.0
      %1212 = vmatprep.subr.mxu0 0.0
      %1213 = vmatpush1.msra.mxu0 0.0
      %1214 = vmatprep.subr.mxu0 0.0
      %1215 = vmatpush1.msra.mxu0 0.0
      %1216 = vmatprep.subr.mxu0 0.0
      %1217 = vmatpush1.msra.mxu0 0.0
      %1218 = vmatprep.subr.mxu0 0.0
      %1219 = vmatpush1.msra.mxu0 0.0
      %1220 = vmatprep.subr.mxu0 0.0
      %1221 = vmatpush1.msra.mxu0 0.0
      %1222 = vmatprep.subr.mxu0 0.0
      %1223 = vmatpush1.msra.mxu0 0.0
      %1224 = vmatprep.subr.mxu0 0.0
      %1225 = vmatpush1.msra.mxu0 0.0
      %1226 = vmatprep.subr.mxu0 0.0
      %1227 = vmatpush1.msra.mxu0 0.0
      %1228 = vmatprep.subr.mxu0 0.0
      %1229 = vmatpush1.msra.mxu0 0.0
      %1230 = vmatprep.mubr.f32.mxu0 0.0
      %1231 = vmatmul.mubr.f32.gmra.mrb[0].mxu0 %v1093
      %v1232 = vpop.f32.mrb[0].mxu0
      %v1233 = vadd.f32 %v1083, %v1232
      %v1234 = vpop.f32.mrb[0].mxu0
      %v1235 = vadd.f32 %v1087, %v1234
      %1236 = vdwg.mxu0
      %v1237 = vld [vmem:[#allocation2] sm:$0xff]
      %v1238 = vld [vmem:[#allocation2 + $0x8] sm:$0xff]
      %v1239 = vld [vmem:[%s4] sm:$0xff]
      %v1240 = vld [vmem:[%s4 + $0x8] sm:$0xff]
      %v1241 = vld [vmem:[%s4 + $0x10] sm:$0xff]
      %v1242 = vld [vmem:[%s4 + $0x18] sm:$0xff]
      %v1243 = vld [vmem:[%s4 + $0x20] sm:$0xff]
      %v1244 = vld [vmem:[%s4 + $0x28] sm:$0xff]
      %v1245 = vld [vmem:[%s4 + $0x30] sm:$0xff]
      %v1246 = vld [vmem:[%s4 + $0x38] sm:$0xff]
      %v1247 = vld [vmem:[%s4 + $0x40] sm:$0xff]
      %v1248 = vld [vmem:[%s4 + $0x48] sm:$0xff]
      %v1249 = vld [vmem:[%s4 + $0x50] sm:$0xff]
      %v1250 = vld [vmem:[%s4 + $0x58] sm:$0xff]
      %v1251 = vld [vmem:[%s4 + $0x60] sm:$0xff]
      %v1252 = vld [vmem:[%s4 + $0x68] sm:$0xff]
      %v1253 = vld [vmem:[%s4 + $0x70] sm:$0xff]
      %v1254 = vld [vmem:[%s4 + $0x78] sm:$0xff]
      %v1255 = vld [vmem:[%s4 + $0x80] sm:$0xff]
      %v1256 = vld [vmem:[%s4 + $0x88] sm:$0xff]
      %v1257 = vld [vmem:[%s4 + $0x90] sm:$0xff]
      %v1258 = vld [vmem:[%s4 + $0x98] sm:$0xff]
      %v1259 = vld [vmem:[%s4 + $0xa0] sm:$0xff]
      %v1260 = vld [vmem:[%s4 + $0xa8] sm:$0xff]
      %v1261 = vld [vmem:[%s4 + $0xb0] sm:$0xff]
      %v1262 = vld [vmem:[%s4 + $0xb8] sm:$0xff]
      %v1263 = vld [vmem:[%s4 + $0xc0] sm:$0xff]
      %v1264 = vld [vmem:[%s4 + $0xc8] sm:$0xff]
      %v1265 = vld [vmem:[%s4 + $0xd0] sm:$0xff]
      %v1266 = vld [vmem:[%s4 + $0xd8] sm:$0xff]
      %v1267 = vld [vmem:[%s4 + $0xe0] sm:$0xff]
      %v1268 = vld [vmem:[%s4 + $0xe8] sm:$0xff]
      %v1269 = vld [vmem:[%s4 + $0xf0] sm:$0xff]
      %v1270 = vld [vmem:[%s4 + $0xf8] sm:$0xff]
      %v1271 = vld [vmem:[%s4 + $0x100] sm:$0xff]
      %v1272 = vld [vmem:[%s4 + $0x108] sm:$0xff]
      %v1273 = vld [vmem:[%s4 + $0x110] sm:$0xff]
      %v1274 = vld [vmem:[%s4 + $0x118] sm:$0xff]
      %v1275 = vld [vmem:[%s4 + $0x120] sm:$0xff]
      %v1276 = vld [vmem:[%s4 + $0x128] sm:$0xff]
      %v1277 = vld [vmem:[%s4 + $0x130] sm:$0xff]
      %v1278 = vld [vmem:[%s4 + $0x138] sm:$0xff]
      %v1279 = vld [vmem:[%s4 + $0x140] sm:$0xff]
      %v1280 = vld [vmem:[%s4 + $0x148] sm:$0xff]
      %v1281 = vld [vmem:[%s4 + $0x150] sm:$0xff]
      %v1282 = vld [vmem:[%s4 + $0x158] sm:$0xff]
      %v1283 = vld [vmem:[%s4 + $0x160] sm:$0xff]
      %v1284 = vld [vmem:[%s4 + $0x168] sm:$0xff]
      %v1285 = vld [vmem:[%s4 + $0x170] sm:$0xff]
      %v1286 = vld [vmem:[%s4 + $0x178] sm:$0xff]
      %v1287 = vld [vmem:[%s4 + $0x180] sm:$0xff]
      %v1288 = vld [vmem:[%s4 + $0x188] sm:$0xff]
      %v1289 = vld [vmem:[%s4 + $0x190] sm:$0xff]
      %v1290 = vld [vmem:[%s4 + $0x198] sm:$0xff]
      %v1291 = vld [vmem:[%s4 + $0x1a0] sm:$0xff]
      %v1292 = vld [vmem:[%s4 + $0x1a8] sm:$0xff]
      %v1293 = vld [vmem:[%s4 + $0x1b0] sm:$0xff]
      %v1294 = vld [vmem:[%s4 + $0x1b8] sm:$0xff]
      %v1295 = vld [vmem:[%s4 + $0x1c0] sm:$0xff]
      %v1296 = vld [vmem:[%s4 + $0x1c8] sm:$0xff]
      %v1297 = vld [vmem:[%s4 + $0x1d0] sm:$0xff]
      %v1298 = vld [vmem:[%s4 + $0x1d8] sm:$0xff]
      %v1299 = vld [vmem:[%s4 + $0x1e0] sm:$0xff]
      %v1300 = vld [vmem:[%s4 + $0x1e8] sm:$0xff]
      %v1301 = vld [vmem:[%s4 + $0x1f0] sm:$0xff]
      %v1302 = vld [vmem:[%s4 + $0x1f8] sm:$0xff]
      %v1303 = vld [vmem:[%s4 + $0x200] sm:$0xff]
      %v1304 = vld [vmem:[%s4 + $0x208] sm:$0xff]
      %v1305 = vld [vmem:[%s4 + $0x210] sm:$0xff]
      %v1306 = vld [vmem:[%s4 + $0x218] sm:$0xff]
      %v1307 = vld [vmem:[%s4 + $0x220] sm:$0xff]
      %v1308 = vld [vmem:[%s4 + $0x228] sm:$0xff]
      %v1309 = vld [vmem:[%s4 + $0x230] sm:$0xff]
      %v1310 = vld [vmem:[%s4 + $0x238] sm:$0xff]
      %v1311 = vld [vmem:[%s4 + $0x240] sm:$0xff]
      %v1312 = vld [vmem:[%s4 + $0x248] sm:$0xff]
      %v1313 = vld [vmem:[%s4 + $0x250] sm:$0xff]
      %v1314 = vld [vmem:[%s4 + $0x258] sm:$0xff]
      %v1315 = vld [vmem:[%s4 + $0x260] sm:$0xff]
      %v1316 = vld [vmem:[%s4 + $0x268] sm:$0xff]
      %v1317 = vld [vmem:[%s4 + $0x270] sm:$0xff]
      %v1318 = vld [vmem:[%s4 + $0x278] sm:$0xff]
      %v1319 = vld [vmem:[%s4 + $0x280] sm:$0xff]
      %v1320 = vld [vmem:[%s4 + $0x288] sm:$0xff]
      %v1321 = vld [vmem:[%s4 + $0x290] sm:$0xff]
      %v1322 = vld [vmem:[%s4 + $0x298] sm:$0xff]
      %v1323 = vld [vmem:[%s4 + $0x2a0] sm:$0xff]
      %v1324 = vld [vmem:[%s4 + $0x2a8] sm:$0xff]
      %v1325 = vld [vmem:[%s4 + $0x2b0] sm:$0xff]
      %v1326 = vld [vmem:[%s4 + $0x2b8] sm:$0xff]
      %v1327 = vld [vmem:[%s4 + $0x2c0] sm:$0xff]
      %v1328 = vld [vmem:[%s4 + $0x2c8] sm:$0xff]
      %v1329 = vld [vmem:[%s4 + $0x2d0] sm:$0xff]
      %v1330 = vld [vmem:[%s4 + $0x2d8] sm:$0xff]
      %v1331 = vld [vmem:[%s4 + $0x2e0] sm:$0xff]
      %v1332 = vld [vmem:[%s4 + $0x2e8] sm:$0xff]
      %v1333 = vld [vmem:[%s4 + $0x2f0] sm:$0xff]
      %v1334 = vld [vmem:[%s4 + $0x2f8] sm:$0xff]
      %v1335 = vld [vmem:[%s4 + $0x300] sm:$0xff]
      %v1336 = vld [vmem:[%s4 + $0x308] sm:$0xff]
      %v1337 = vld [vmem:[%s4 + $0x310] sm:$0xff]
      %v1338 = vld [vmem:[%s4 + $0x318] sm:$0xff]
      %v1339 = vld [vmem:[%s4 + $0x320] sm:$0xff]
      %v1340 = vld [vmem:[%s4 + $0x328] sm:$0xff]
      %v1341 = vld [vmem:[%s4 + $0x330] sm:$0xff]
      %v1342 = vld [vmem:[%s4 + $0x338] sm:$0xff]
      %v1343 = vld [vmem:[%s4 + $0x340] sm:$0xff]
      %v1344 = vld [vmem:[%s4 + $0x348] sm:$0xff]
      %v1345 = vld [vmem:[%s4 + $0x350] sm:$0xff]
      %v1346 = vld [vmem:[%s4 + $0x358] sm:$0xff]
      %v1347 = vld [vmem:[%s4 + $0x360] sm:$0xff]
      %v1348 = vld [vmem:[%s4 + $0x368] sm:$0xff]
      %v1349 = vld [vmem:[%s4 + $0x370] sm:$0xff]
      %v1350 = vld [vmem:[%s4 + $0x378] sm:$0xff]
      %v1351 = vld [vmem:[%s4 + $0x380] sm:$0xff]
      %v1352 = vld [vmem:[%s4 + $0x388] sm:$0xff]
      %v1353 = vld [vmem:[%s4 + $0x390] sm:$0xff]
      %v1354 = vld [vmem:[%s4 + $0x398] sm:$0xff]
      %v1355 = vld [vmem:[%s4 + $0x3a0] sm:$0xff]
      %v1356 = vld [vmem:[%s4 + $0x3a8] sm:$0xff]
      %v1357 = vld [vmem:[%s4 + $0x3b0] sm:$0xff]
      %v1358 = vld [vmem:[%s4 + $0x3b8] sm:$0xff]
      %v1359 = vld [vmem:[%s4 + $0x3c0] sm:$0xff]
      %v1360 = vld [vmem:[%s4 + $0x3c8] sm:$0xff]
      %v1361 = vld [vmem:[%s4 + $0x3d0] sm:$0xff]
      %v1362 = vld [vmem:[%s4 + $0x3d8] sm:$0xff]
      %v1363 = vld [vmem:[%s4 + $0x3e0] sm:$0xff]
      %v1364 = vld [vmem:[%s4 + $0x3e8] sm:$0xff]
      %v1365 = vld [vmem:[%s4 + $0x3f0] sm:$0xff]
      %v1366 = vld [vmem:[%s4 + $0x3f8] sm:$0xff]
      %v1367 = vld [vmem:[%s4 + $0x400] sm:$0xff]
      %v1368 = vld [vmem:[%s4 + $0x408] sm:$0xff]
      %v1369 = vld [vmem:[%s4 + $0x410] sm:$0xff]
      %v1370 = vld [vmem:[%s4 + $0x418] sm:$0xff]
      %v1371 = vld [vmem:[%s4 + $0x420] sm:$0xff]
      %v1372 = vld [vmem:[%s4 + $0x428] sm:$0xff]
      %v1373 = vld [vmem:[%s4 + $0x430] sm:$0xff]
      %v1374 = vld [vmem:[%s4 + $0x438] sm:$0xff]
      %v1375 = vld [vmem:[%s4 + $0x440] sm:$0xff]
      %v1376 = vld [vmem:[%s4 + $0x448] sm:$0xff]
      %v1377 = vld [vmem:[%s4 + $0x450] sm:$0xff]
      %v1378 = vld [vmem:[%s4 + $0x458] sm:$0xff]
      %v1379 = vld [vmem:[%s4 + $0x460] sm:$0xff]
      %v1380 = vld [vmem:[%s4 + $0x468] sm:$0xff]
      %v1381 = vld [vmem:[%s4 + $0x470] sm:$0xff]
      %v1382 = vld [vmem:[%s4 + $0x478] sm:$0xff]
      %v1383 = vld [vmem:[%s4 + $0x480] sm:$0xff]
      %v1384 = vld [vmem:[%s4 + $0x488] sm:$0xff]
      %v1385 = vld [vmem:[%s4 + $0x490] sm:$0xff]
      %v1386 = vld [vmem:[%s4 + $0x498] sm:$0xff]
      %v1387 = vld [vmem:[%s4 + $0x4a0] sm:$0xff]
      %v1388 = vld [vmem:[%s4 + $0x4a8] sm:$0xff]
      %v1389 = vld [vmem:[%s4 + $0x4b0] sm:$0xff]
      %v1390 = vld [vmem:[%s4 + $0x4b8] sm:$0xff]
      %v1391 = vld [vmem:[%s4 + $0x4c0] sm:$0xff]
      %v1392 = vld [vmem:[%s4 + $0x4c8] sm:$0xff]
      %v1393 = vld [vmem:[%s4 + $0x4d0] sm:$0xff]
      %v1394 = vld [vmem:[%s4 + $0x4d8] sm:$0xff]
      %v1395 = vld [vmem:[%s4 + $0x4e0] sm:$0xff]
      %v1396 = vld [vmem:[%s4 + $0x4e8] sm:$0xff]
      %v1397 = vld [vmem:[%s4 + $0x4f0] sm:$0xff]
      %v1398 = vld [vmem:[%s4 + $0x4f8] sm:$0xff]
      %v1399 = vld [vmem:[%s4 + $0x500] sm:$0xff]
      %v1400 = vld [vmem:[%s4 + $0x508] sm:$0xff]
      %v1401 = vld [vmem:[%s4 + $0x510] sm:$0xff]
      %v1402 = vld [vmem:[%s4 + $0x518] sm:$0xff]
      %v1403 = vld [vmem:[%s4 + $0x520] sm:$0xff]
      %v1404 = vld [vmem:[%s4 + $0x528] sm:$0xff]
      %v1405 = vld [vmem:[%s4 + $0x530] sm:$0xff]
      %v1406 = vld [vmem:[%s4 + $0x538] sm:$0xff]
      %v1407 = vld [vmem:[%s4 + $0x540] sm:$0xff]
      %v1408 = vld [vmem:[%s4 + $0x548] sm:$0xff]
      %v1409 = vld [vmem:[%s4 + $0x550] sm:$0xff]
      %v1410 = vld [vmem:[%s4 + $0x558] sm:$0xff]
      %v1411 = vld [vmem:[%s4 + $0x560] sm:$0xff]
      %v1412 = vld [vmem:[%s4 + $0x568] sm:$0xff]
      %v1413 = vld [vmem:[%s4 + $0x570] sm:$0xff]
      %v1414 = vld [vmem:[%s4 + $0x578] sm:$0xff]
      %v1415 = vld [vmem:[%s4 + $0x580] sm:$0xff]
      %v1416 = vld [vmem:[%s4 + $0x588] sm:$0xff]
      %v1417 = vld [vmem:[%s4 + $0x590] sm:$0xff]
      %v1418 = vld [vmem:[%s4 + $0x598] sm:$0xff]
      %v1419 = vld [vmem:[%s4 + $0x5a0] sm:$0xff]
      %v1420 = vld [vmem:[%s4 + $0x5a8] sm:$0xff]
      %v1421 = vld [vmem:[%s4 + $0x5b0] sm:$0xff]
      %v1422 = vld [vmem:[%s4 + $0x5b8] sm:$0xff]
      %v1423 = vld [vmem:[%s4 + $0x5c0] sm:$0xff]
      %v1424 = vld [vmem:[%s4 + $0x5c8] sm:$0xff]
      %v1425 = vld [vmem:[%s4 + $0x5d0] sm:$0xff]
      %v1426 = vld [vmem:[%s4 + $0x5d8] sm:$0xff]
      %v1427 = vld [vmem:[%s4 + $0x5e0] sm:$0xff]
      %v1428 = vld [vmem:[%s4 + $0x5e8] sm:$0xff]
      %v1429 = vld [vmem:[%s4 + $0x5f0] sm:$0xff]
      %v1430 = vld [vmem:[%s4 + $0x5f8] sm:$0xff]
      %v1431 = vld [vmem:[%s4 + $0x600] sm:$0xff]
      %v1432 = vld [vmem:[%s4 + $0x608] sm:$0xff]
      %v1433 = vld [vmem:[%s4 + $0x610] sm:$0xff]
      %v1434 = vld [vmem:[%s4 + $0x618] sm:$0xff]
      %v1435 = vld [vmem:[%s4 + $0x620] sm:$0xff]
      %v1436 = vld [vmem:[%s4 + $0x628] sm:$0xff]
      %v1437 = vld [vmem:[%s4 + $0x630] sm:$0xff]
      %v1438 = vld [vmem:[%s4 + $0x638] sm:$0xff]
      %v1439 = vld [vmem:[%s4 + $0x640] sm:$0xff]
      %v1440 = vld [vmem:[%s4 + $0x648] sm:$0xff]
      %v1441 = vld [vmem:[%s4 + $0x650] sm:$0xff]
      %v1442 = vld [vmem:[%s4 + $0x658] sm:$0xff]
      %v1443 = vld [vmem:[%s4 + $0x660] sm:$0xff]
      %v1444 = vld [vmem:[%s4 + $0x668] sm:$0xff]
      %v1445 = vld [vmem:[%s4 + $0x670] sm:$0xff]
      %v1446 = vld [vmem:[%s4 + $0x678] sm:$0xff]
      %v1447 = vld [vmem:[%s4 + $0x680] sm:$0xff]
      %v1448 = vld [vmem:[%s4 + $0x688] sm:$0xff]
      %v1449 = vld [vmem:[%s4 + $0x690] sm:$0xff]
      %v1450 = vld [vmem:[%s4 + $0x698] sm:$0xff]
      %v1451 = vld [vmem:[%s4 + $0x6a0] sm:$0xff]
      %v1452 = vld [vmem:[%s4 + $0x6a8] sm:$0xff]
      %v1453 = vld [vmem:[%s4 + $0x6b0] sm:$0xff]
      %v1454 = vld [vmem:[%s4 + $0x6b8] sm:$0xff]
      %v1455 = vld [vmem:[%s4 + $0x6c0] sm:$0xff]
      %v1456 = vld [vmem:[%s4 + $0x6c8] sm:$0xff]
      %v1457 = vld [vmem:[%s4 + $0x6d0] sm:$0xff]
      %v1458 = vld [vmem:[%s4 + $0x6d8] sm:$0xff]
      %v1459 = vld [vmem:[%s4 + $0x6e0] sm:$0xff]
      %v1460 = vld [vmem:[%s4 + $0x6e8] sm:$0xff]
      %v1461 = vld [vmem:[%s4 + $0x6f0] sm:$0xff]
      %v1462 = vld [vmem:[%s4 + $0x6f8] sm:$0xff]
      %v1463 = vld [vmem:[%s4 + $0x700] sm:$0xff]
      %v1464 = vld [vmem:[%s4 + $0x708] sm:$0xff]
      %v1465 = vld [vmem:[%s4 + $0x710] sm:$0xff]
      %v1466 = vld [vmem:[%s4 + $0x718] sm:$0xff]
      %v1467 = vld [vmem:[%s4 + $0x720] sm:$0xff]
      %v1468 = vld [vmem:[%s4 + $0x728] sm:$0xff]
      %v1469 = vld [vmem:[%s4 + $0x730] sm:$0xff]
      %v1470 = vld [vmem:[%s4 + $0x738] sm:$0xff]
      %v1471 = vld [vmem:[%s4 + $0x740] sm:$0xff]
      %v1472 = vld [vmem:[%s4 + $0x748] sm:$0xff]
      %v1473 = vld [vmem:[%s4 + $0x750] sm:$0xff]
      %v1474 = vld [vmem:[%s4 + $0x758] sm:$0xff]
      %v1475 = vld [vmem:[%s4 + $0x760] sm:$0xff]
      %v1476 = vld [vmem:[%s4 + $0x768] sm:$0xff]
      %v1477 = vld [vmem:[%s4 + $0x770] sm:$0xff]
      %v1478 = vld [vmem:[%s4 + $0x778] sm:$0xff]
      %v1479 = vld [vmem:[%s4 + $0x780] sm:$0xff]
      %v1480 = vld [vmem:[%s4 + $0x788] sm:$0xff]
      %v1481 = vld [vmem:[%s4 + $0x790] sm:$0xff]
      %v1482 = vld [vmem:[%s4 + $0x798] sm:$0xff]
      %v1483 = vld [vmem:[%s4 + $0x7a0] sm:$0xff]
      %v1484 = vld [vmem:[%s4 + $0x7a8] sm:$0xff]
      %v1485 = vld [vmem:[%s4 + $0x7b0] sm:$0xff]
      %v1486 = vld [vmem:[%s4 + $0x7b8] sm:$0xff]
      %v1487 = vld [vmem:[%s4 + $0x7c0] sm:$0xff]
      %v1488 = vld [vmem:[%s4 + $0x7c8] sm:$0xff]
      %v1489 = vld [vmem:[%s4 + $0x7d0] sm:$0xff]
      %v1490 = vld [vmem:[%s4 + $0x7d8] sm:$0xff]
      %v1491 = vld [vmem:[%s4 + $0x7e0] sm:$0xff]
      %v1492 = vld [vmem:[%s4 + $0x7e8] sm:$0xff]
      %v1493 = vld [vmem:[%s4 + $0x7f0] sm:$0xff]
      %v1494 = vld [vmem:[%s4 + $0x7f8] sm:$0xff]
      %v1497 = vcombine.high %v1237, %v1237
      %v1498 = vcombine.high %v1238, %v1238
      %1501 = vmatprep.subr.mxu0 %v1240
      %1502 = vmatpush1.msra.mxu0 %v1239
      %1503 = vmatprep.subr.mxu0 %v1244
      %1504 = vmatpush1.msra.mxu0 %v1243
      %1505 = vmatprep.subr.mxu0 %v1248
      %1506 = vmatpush1.msra.mxu0 %v1247
      %1507 = vmatprep.subr.mxu0 %v1252
      %1508 = vmatpush1.msra.mxu0 %v1251
      %1509 = vmatprep.subr.mxu0 %v1256
      %1510 = vmatpush1.msra.mxu0 %v1255
      %1511 = vmatprep.subr.mxu0 %v1260
      %1512 = vmatpush1.msra.mxu0 %v1259
      %1513 = vmatprep.subr.mxu0 %v1264
      %1514 = vmatpush1.msra.mxu0 %v1263
      %1515 = vmatprep.subr.mxu0 %v1268
      %1516 = vmatpush1.msra.mxu0 %v1267
      %1517 = vmatprep.subr.mxu0 %v1272
      %1518 = vmatpush1.msra.mxu0 %v1271
      %1519 = vmatprep.subr.mxu0 %v1276
      %1520 = vmatpush1.msra.mxu0 %v1275
      %1521 = vmatprep.subr.mxu0 %v1280
      %1522 = vmatpush1.msra.mxu0 %v1279
      %1523 = vmatprep.subr.mxu0 %v1284
      %1524 = vmatpush1.msra.mxu0 %v1283
      %1525 = vmatprep.subr.mxu0 %v1288
      %1526 = vmatpush1.msra.mxu0 %v1287
      %1527 = vmatprep.subr.mxu0 %v1292
      %1528 = vmatpush1.msra.mxu0 %v1291
      %1529 = vmatprep.subr.mxu0 %v1296
      %1530 = vmatpush1.msra.mxu0 %v1295
      %1531 = vmatprep.subr.mxu0 %v1300
      %1532 = vmatpush1.msra.mxu0 %v1299
      %1533 = vmatprep.subr.mxu0 %v1304
      %1534 = vmatpush1.msra.mxu0 %v1303
      %1535 = vmatprep.subr.mxu0 %v1308
      %1536 = vmatpush1.msra.mxu0 %v1307
      %1537 = vmatprep.subr.mxu0 %v1312
      %1538 = vmatpush1.msra.mxu0 %v1311
      %1539 = vmatprep.subr.mxu0 %v1316
      %1540 = vmatpush1.msra.mxu0 %v1315
      %1541 = vmatprep.subr.mxu0 %v1320
      %1542 = vmatpush1.msra.mxu0 %v1319
      %1543 = vmatprep.subr.mxu0 %v1324
      %1544 = vmatpush1.msra.mxu0 %v1323
      %1545 = vmatprep.subr.mxu0 %v1328
      %1546 = vmatpush1.msra.mxu0 %v1327
      %1547 = vmatprep.subr.mxu0 %v1332
      %1548 = vmatpush1.msra.mxu0 %v1331
      %1549 = vmatprep.subr.mxu0 %v1336
      %1550 = vmatpush1.msra.mxu0 %v1335
      %1551 = vmatprep.subr.mxu0 %v1340
      %1552 = vmatpush1.msra.mxu0 %v1339
      %1553 = vmatprep.subr.mxu0 %v1344
      %1554 = vmatpush1.msra.mxu0 %v1343
      %1555 = vmatprep.subr.mxu0 %v1348
      %1556 = vmatpush1.msra.mxu0 %v1347
      %1557 = vmatprep.subr.mxu0 %v1352
      %1558 = vmatpush1.msra.mxu0 %v1351
      %1559 = vmatprep.subr.mxu0 %v1356
      %1560 = vmatpush1.msra.mxu0 %v1355
      %1561 = vmatprep.subr.mxu0 %v1360
      %1562 = vmatpush1.msra.mxu0 %v1359
      %1563 = vmatprep.subr.mxu0 %v1364
      %1564 = vmatpush1.msra.mxu0 %v1363
      %1565 = vmatprep.mubr.f32.mxu0 %v1497
      %1566 = vmatmul.mubr.f32.gmra.mrb[0].mxu0 %v1237
      %v1567 = vpop.f32.mrb[0].mxu0
      %v1568 = vadd.f32 0.0, %v1567
      %v1569 = vpop.f32.mrb[0].mxu0
      %v1570 = vadd.f32 0.0, %v1569
      %1571 = vdwg.mxu0
      %1572 = vmatprep.subr.mxu0 %v1368
      %1573 = vmatpush1.msra.mxu0 %v1367
      %1574 = vmatprep.subr.mxu0 %v1372
      %1575 = vmatpush1.msra.mxu0 %v1371
      %1576 = vmatprep.subr.mxu0 %v1376
      %1577 = vmatpush1.msra.mxu0 %v1375
      %1578 = vmatprep.subr.mxu0 %v1380
      %1579 = vmatpush1.msra.mxu0 %v1379
      %1580 = vmatprep.subr.mxu0 %v1384
      %1581 = vmatpush1.msra.mxu0 %v1383
      %1582 = vmatprep.subr.mxu0 %v1388
      %1583 = vmatpush1.msra.mxu0 %v1387
      %1584 = vmatprep.subr.mxu0 %v1392
      %1585 = vmatpush1.msra.mxu0 %v1391
      %1586 = vmatprep.subr.mxu0 %v1396
      %1587 = vmatpush1.msra.mxu0 %v1395
      %1588 = vmatprep.subr.mxu0 %v1400
      %1589 = vmatpush1.msra.mxu0 %v1399
      %1590 = vmatprep.subr.mxu0 %v1404
      %1591 = vmatpush1.msra.mxu0 %v1403
      %1592 = vmatprep.subr.mxu0 %v1408
      %1593 = vmatpush1.msra.mxu0 %v1407
      %1594 = vmatprep.subr.mxu0 %v1412
      %1595 = vmatpush1.msra.mxu0 %v1411
      %1596 = vmatprep.subr.mxu0 %v1416
      %1597 = vmatpush1.msra.mxu0 %v1415
      %1598 = vmatprep.subr.mxu0 %v1420
      %1599 = vmatpush1.msra.mxu0 %v1419
      %1600 = vmatprep.subr.mxu0 %v1424
      %1601 = vmatpush1.msra.mxu0 %v1423
      %1602 = vmatprep.subr.mxu0 %v1428
      %1603 = vmatpush1.msra.mxu0 %v1427
      %1604 = vmatprep.subr.mxu0 %v1432
      %1605 = vmatpush1.msra.mxu0 %v1431
      %1606 = vmatprep.subr.mxu0 %v1436
      %1607 = vmatpush1.msra.mxu0 %v1435
      %1608 = vmatprep.subr.mxu0 %v1440
      %1609 = vmatpush1.msra.mxu0 %v1439
      %1610 = vmatprep.subr.mxu0 %v1444
      %1611 = vmatpush1.msra.mxu0 %v1443
      %1612 = vmatprep.subr.mxu0 %v1448
      %1613 = vmatpush1.msra.mxu0 %v1447
      %1614 = vmatprep.subr.mxu0 %v1452
      %1615 = vmatpush1.msra.mxu0 %v1451
      %1616 = vmatprep.subr.mxu0 %v1456
      %1617 = vmatpush1.msra.mxu0 %v1455
      %1618 = vmatprep.subr.mxu0 %v1460
      %1619 = vmatpush1.msra.mxu0 %v1459
      %1620 = vmatprep.subr.mxu0 %v1464
      %1621 = vmatpush1.msra.mxu0 %v1463
      %1622 = vmatprep.subr.mxu0 %v1468
      %1623 = vmatpush1.msra.mxu0 %v1467
      %1624 = vmatprep.subr.mxu0 %v1472
      %1625 = vmatpush1.msra.mxu0 %v1471
      %1626 = vmatprep.subr.mxu0 %v1476
      %1627 = vmatpush1.msra.mxu0 %v1475
      %1628 = vmatprep.subr.mxu0 %v1480
      %1629 = vmatpush1.msra.mxu0 %v1479
      %1630 = vmatprep.subr.mxu0 %v1484
      %1631 = vmatpush1.msra.mxu0 %v1483
      %1632 = vmatprep.subr.mxu0 %v1488
      %1633 = vmatpush1.msra.mxu0 %v1487
      %1634 = vmatprep.subr.mxu0 %v1492
      %1635 = vmatpush1.msra.mxu0 %v1491
      %1636 = vmatprep.mubr.f32.mxu0 %v1498
      %1637 = vmatmul.mubr.f32.gmra.mrb[0].mxu0 %v1238
      %v1638 = vpop.f32.mrb[0].mxu0
      %v1639 = vadd.f32 %v1568, %v1638
      %v1640 = vpop.f32.mrb[0].mxu0
      %v1641 = vadd.f32 %v1570, %v1640
      %1642 = vdwg.mxu0
      %1643 = vmatprep.subr.mxu0 %v1242
      %1644 = vmatpush1.msra.mxu0 %v1241
      %1645 = vmatprep.subr.mxu0 %v1246
      %1646 = vmatpush1.msra.mxu0 %v1245
      %1647 = vmatprep.subr.mxu0 %v1250
      %1648 = vmatpush1.msra.mxu0 %v1249
      %1649 = vmatprep.subr.mxu0 %v1254
      %1650 = vmatpush1.msra.mxu0 %v1253
      %1651 = vmatprep.subr.mxu0 %v1258
      %1652 = vmatpush1.msra.mxu0 %v1257
      %1653 = vmatprep.subr.mxu0 %v1262
      %1654 = vmatpush1.msra.mxu0 %v1261
      %1655 = vmatprep.subr.mxu0 %v1266
      %1656 = vmatpush1.msra.mxu0 %v1265
      %1657 = vmatprep.subr.mxu0 %v1270
      %1658 = vmatpush1.msra.mxu0 %v1269
      %1659 = vmatprep.subr.mxu0 %v1274
      %1660 = vmatpush1.msra.mxu0 %v1273
      %1661 = vmatprep.subr.mxu0 %v1278
      %1662 = vmatpush1.msra.mxu0 %v1277
      %1663 = vmatprep.subr.mxu0 %v1282
      %1664 = vmatpush1.msra.mxu0 %v1281
      %1665 = vmatprep.subr.mxu0 %v1286
      %1666 = vmatpush1.msra.mxu0 %v1285
      %1667 = vmatprep.subr.mxu0 %v1290
      %1668 = vmatpush1.msra.mxu0 %v1289
      %1669 = vmatprep.subr.mxu0 %v1294
      %1670 = vmatpush1.msra.mxu0 %v1293
      %1671 = vmatprep.subr.mxu0 %v1298
      %1672 = vmatpush1.msra.mxu0 %v1297
      %1673 = vmatprep.subr.mxu0 %v1302
      %1674 = vmatpush1.msra.mxu0 %v1301
      %1675 = vmatprep.subr.mxu0 %v1306
      %1676 = vmatpush1.msra.mxu0 %v1305
      %1677 = vmatprep.subr.mxu0 %v1310
      %1678 = vmatpush1.msra.mxu0 %v1309
      %1679 = vmatprep.subr.mxu0 %v1314
      %1680 = vmatpush1.msra.mxu0 %v1313
      %1681 = vmatprep.subr.mxu0 %v1318
      %1682 = vmatpush1.msra.mxu0 %v1317
      %1683 = vmatprep.subr.mxu0 %v1322
      %1684 = vmatpush1.msra.mxu0 %v1321
      %1685 = vmatprep.subr.mxu0 %v1326
      %1686 = vmatpush1.msra.mxu0 %v1325
      %1687 = vmatprep.subr.mxu0 %v1330
      %1688 = vmatpush1.msra.mxu0 %v1329
      %1689 = vmatprep.subr.mxu0 %v1334
      %1690 = vmatpush1.msra.mxu0 %v1333
      %1691 = vmatprep.subr.mxu0 %v1338
      %1692 = vmatpush1.msra.mxu0 %v1337
      %1693 = vmatprep.subr.mxu0 %v1342
      %1694 = vmatpush1.msra.mxu0 %v1341
      %1695 = vmatprep.subr.mxu0 %v1346
      %1696 = vmatpush1.msra.mxu0 %v1345
      %1697 = vmatprep.subr.mxu0 %v1350
      %1698 = vmatpush1.msra.mxu0 %v1349
      %1699 = vmatprep.subr.mxu0 %v1354
      %1700 = vmatpush1.msra.mxu0 %v1353
      %1701 = vmatprep.subr.mxu0 %v1358
      %1702 = vmatpush1.msra.mxu0 %v1357
      %1703 = vmatprep.subr.mxu0 %v1362
      %1704 = vmatpush1.msra.mxu0 %v1361
      %1705 = vmatprep.subr.mxu0 %v1366
      %1706 = vmatpush1.msra.mxu0 %v1365
      %1707 = vmatprep.mubr.f32.mxu0 %v1497
      %1708 = vmatmul.mubr.f32.gmra.mrb[0].mxu0 %v1237
      %v1709 = vpop.f32.mrb[0].mxu0
      %v1710 = vadd.f32 0.0, %v1709
      %v1711 = vpop.f32.mrb[0].mxu0
      %v1712 = vadd.f32 0.0, %v1711
      %1713 = vdwg.mxu0
      %1714 = vmatprep.subr.mxu0 %v1370
      %1715 = vmatpush1.msra.mxu0 %v1369
      %1716 = vmatprep.subr.mxu0 %v1374
      %1717 = vmatpush1.msra.mxu0 %v1373
      %1718 = vmatprep.subr.mxu0 %v1378
      %1719 = vmatpush1.msra.mxu0 %v1377
      %1720 = vmatprep.subr.mxu0 %v1382
      %1721 = vmatpush1.msra.mxu0 %v1381
      %1722 = vmatprep.subr.mxu0 %v1386
      %1723 = vmatpush1.msra.mxu0 %v1385
      %1724 = vmatprep.subr.mxu0 %v1390
      %1725 = vmatpush1.msra.mxu0 %v1389
      %1726 = vmatprep.subr.mxu0 %v1394
      %1727 = vmatpush1.msra.mxu0 %v1393
      %1728 = vmatprep.subr.mxu0 %v1398
      %1729 = vmatpush1.msra.mxu0 %v1397
      %1730 = vmatprep.subr.mxu0 %v1402
      %1731 = vmatpush1.msra.mxu0 %v1401
      %1732 = vmatprep.subr.mxu0 %v1406
      %1733 = vmatpush1.msra.mxu0 %v1405
      %1734 = vmatprep.subr.mxu0 %v1410
      %1735 = vmatpush1.msra.mxu0 %v1409
      %1736 = vmatprep.subr.mxu0 %v1414
      %1737 = vmatpush1.msra.mxu0 %v1413
      %1738 = vmatprep.subr.mxu0 %v1418
      %1739 = vmatpush1.msra.mxu0 %v1417
      %1740 = vmatprep.subr.mxu0 %v1422
      %1741 = vmatpush1.msra.mxu0 %v1421
      %1742 = vmatprep.subr.mxu0 %v1426
      %1743 = vmatpush1.msra.mxu0 %v1425
      %1744 = vmatprep.subr.mxu0 %v1430
      %1745 = vmatpush1.msra.mxu0 %v1429
      %1746 = vmatprep.subr.mxu0 %v1434
      %1747 = vmatpush1.msra.mxu0 %v1433
      %1748 = vmatprep.subr.mxu0 %v1438
      %1749 = vmatpush1.msra.mxu0 %v1437
      %1750 = vmatprep.subr.mxu0 %v1442
      %1751 = vmatpush1.msra.mxu0 %v1441
      %1752 = vmatprep.subr.mxu0 %v1446
      %1753 = vmatpush1.msra.mxu0 %v1445
      %1754 = vmatprep.subr.mxu0 %v1450
      %1755 = vmatpush1.msra.mxu0 %v1449
      %1756 = vmatprep.subr.mxu0 %v1454
      %1757 = vmatpush1.msra.mxu0 %v1453
      %1758 = vmatprep.subr.mxu0 %v1458
      %1759 = vmatpush1.msra.mxu0 %v1457
      %1760 = vmatprep.subr.mxu0 %v1462
      %1761 = vmatpush1.msra.mxu0 %v1461
      %1762 = vmatprep.subr.mxu0 %v1466
      %1763 = vmatpush1.msra.mxu0 %v1465
      %1764 = vmatprep.subr.mxu0 %v1470
      %1765 = vmatpush1.msra.mxu0 %v1469
      %1766 = vmatprep.subr.mxu0 %v1474
      %1767 = vmatpush1.msra.mxu0 %v1473
      %1768 = vmatprep.subr.mxu0 %v1478
      %1769 = vmatpush1.msra.mxu0 %v1477
      %1770 = vmatprep.subr.mxu0 %v1482
      %1771 = vmatpush1.msra.mxu0 %v1481
      %1772 = vmatprep.subr.mxu0 %v1486
      %1773 = vmatpush1.msra.mxu0 %v1485
      %1774 = vmatprep.subr.mxu0 %v1490
      %1775 = vmatpush1.msra.mxu0 %v1489
      %1776 = vmatprep.subr.mxu0 %v1494
      %1777 = vmatpush1.msra.mxu0 %v1493
      %1778 = vmatprep.mubr.f32.mxu0 %v1498
      %1779 = vmatmul.mubr.f32.gmra.mrb[0].mxu0 %v1238
      %v1780 = vpop.f32.mrb[0].mxu0
      %v1781 = vadd.f32 %v1710, %v1780
      %v1782 = vpop.f32.mrb[0].mxu0
      %v1783 = vadd.f32 %v1712, %v1782
      %1784 = vdwg.mxu0
      %v1785 = vadd.f32 %v1162, %v1639
      %v1786 = vadd.f32 %v1164, %v1641
      %v1787 = vadd.f32 %v1233, %v1781
      %v1788 = vadd.f32 %v1235, %v1783
      %v1789 = vtanh.pop %v1785
      %v1790 = vtanh.pop %v1786
      %v1791 = vtanh.pop %v1787
      %v1792 = vtanh.pop %v1788
      %v1797 = vcombine.low %v1789, %v1790
      %v1798 = vcombine.low %v1791, %v1792
      %1801 = vst [vmem:[#allocation2] sm:$0xff] %v1797
      %1802 = vst [vmem:[#allocation2 + $0x8] sm:$0xff] %v1798
      %v1803 = vld [vmem:[#allocation3] sm:$0xff]
      %v1804 = vld [vmem:[#allocation3 + $0x8] sm:$0xff]
      %v1805 = vadd.f32 %v1803, %v1797
      %v1806 = vadd.f32 %v1804, %v1798
      %1807 = vst [vmem:[#allocation3] sm:$0xff] %v1805
      %1808 = vst [vmem:[#allocation3 + $0x8] sm:$0xff] %v1806
      %p1809 = scmp.eq.s32.totalorder %s35, 2
      // Predicated region
      $region105: #{siamese_forward.5} parent=99 // pred_check
        %p1810 = pneg %p1809
      $region106: #{siamese_forward.5} parent=99 // pred_check_branch
        %1812 = sbr.rel (%p1810) target = $region108
      $region107: #{siamese_forward.5} parent=99 // pred_region
        %v1813 = vld [vmem:[#allocation3] sm:$0xff]
        %v1814 = vld [vmem:[#allocation3 + $0x8] sm:$0xff]
        %v1815 = vmul.f32 %v1813, 0.33333334
        %v1816 = vmul.f32 %v1814, 0.33333334
        %v1817 = vld [vmem:[%s7] sm:$0xff]
        %v1818 = vld [vmem:[%s7 + $0x8] sm:$0xff]
        %v1819 = vld [vmem:[%s7 + $0x10] sm:$0xff]
        %v1820 = vld [vmem:[%s7 + $0x18] sm:$0xff]
        %v1821 = vld [vmem:[%s7 + $0x20] sm:$0xff]
        %v1822 = vld [vmem:[%s7 + $0x28] sm:$0xff]
        %v1823 = vld [vmem:[%s7 + $0x30] sm:$0xff]
        %v1824 = vld [vmem:[%s7 + $0x38] sm:$0xff]
        %v1825 = vld [vmem:[%s7 + $0x40] sm:$0xff]
        %v1826 = vld [vmem:[%s7 + $0x48] sm:$0xff]
        %v1827 = vld [vmem:[%s7 + $0x50] sm:$0xff]
        %v1828 = vld [vmem:[%s7 + $0x58] sm:$0xff]
        %v1829 = vld [vmem:[%s7 + $0x60] sm:$0xff]
        %v1830 = vld [vmem:[%s7 + $0x68] sm:$0xff]
        %v1831 = vld [vmem:[%s7 + $0x70] sm:$0xff]
        %v1832 = vld [vmem:[%s7 + $0x78] sm:$0xff]
        %v1833 = vld [vmem:[%s7 + $0x80] sm:$0xff]
        %v1834 = vld [vmem:[%s7 + $0x88] sm:$0xff]
        %v1835 = vld [vmem:[%s7 + $0x90] sm:$0xff]
        %v1836 = vld [vmem:[%s7 + $0x98] sm:$0xff]
        %v1837 = vld [vmem:[%s7 + $0xa0] sm:$0xff]
        %v1838 = vld [vmem:[%s7 + $0xa8] sm:$0xff]
        %v1839 = vld [vmem:[%s7 + $0xb0] sm:$0xff]
        %v1840 = vld [vmem:[%s7 + $0xb8] sm:$0xff]
        %v1841 = vld [vmem:[%s7 + $0xc0] sm:$0xff]
        %v1842 = vld [vmem:[%s7 + $0xc8] sm:$0xff]
        %v1843 = vld [vmem:[%s7 + $0xd0] sm:$0xff]
        %v1844 = vld [vmem:[%s7 + $0xd8] sm:$0xff]
        %v1845 = vld [vmem:[%s7 + $0xe0] sm:$0xff]
        %v1846 = vld [vmem:[%s7 + $0xe8] sm:$0xff]
        %v1847 = vld [vmem:[%s7 + $0xf0] sm:$0xff]
        %v1848 = vld [vmem:[%s7 + $0xf8] sm:$0xff]
        %v1849 = vld [vmem:[%s7 + $0x100] sm:$0xff]
        %v1850 = vld [vmem:[%s7 + $0x108] sm:$0xff]
        %v1851 = vld [vmem:[%s7 + $0x110] sm:$0xff]
        %v1852 = vld [vmem:[%s7 + $0x118] sm:$0xff]
        %v1853 = vld [vmem:[%s7 + $0x120] sm:$0xff]
        %v1854 = vld [vmem:[%s7 + $0x128] sm:$0xff]
        %v1855 = vld [vmem:[%s7 + $0x130] sm:$0xff]
        %v1856 = vld [vmem:[%s7 + $0x138] sm:$0xff]
        %v1857 = vld [vmem:[%s7 + $0x140] sm:$0xff]
        %v1858 = vld [vmem:[%s7 + $0x148] sm:$0xff]
        %v1859 = vld [vmem:[%s7 + $0x150] sm:$0xff]
        %v1860 = vld [vmem:[%s7 + $0x158] sm:$0xff]
        %v1861 = vld [vmem:[%s7 + $0x160] sm:$0xff]
        %v1862 = vld [vmem:[%s7 + $0x168] sm:$0xff]
        %v1863 = vld [vmem:[%s7 + $0x170] sm:$0xff]
        %v1864 = vld [vmem:[%s7 + $0x178] sm:$0xff]
        %v1865 = vld [vmem:[%s7 + $0x180] sm:$0xff]
        %v1866 = vld [vmem:[%s7 + $0x188] sm:$0xff]
        %v1867 = vld [vmem:[%s7 + $0x190] sm:$0xff]
        %v1868 = vld [vmem:[%s7 + $0x198] sm:$0xff]
        %v1869 = vld [vmem:[%s7 + $0x1a0] sm:$0xff]
        %v1870 = vld [vmem:[%s7 + $0x1a8] sm:$0xff]
        %v1871 = vld [vmem:[%s7 + $0x1b0] sm:$0xff]
        %v1872 = vld [vmem:[%s7 + $0x1b8] sm:$0xff]
        %v1873 = vld [vmem:[%s7 + $0x1c0] sm:$0xff]
        %v1874 = vld [vmem:[%s7 + $0x1c8] sm:$0xff]
        %v1875 = vld [vmem:[%s7 + $0x1d0] sm:$0xff]
        %v1876 = vld [vmem:[%s7 + $0x1d8] sm:$0xff]
        %v1877 = vld [vmem:[%s7 + $0x1e0] sm:$0xff]
        %v1878 = vld [vmem:[%s7 + $0x1e8] sm:$0xff]
        %v1879 = vld [vmem:[%s7 + $0x1f0] sm:$0xff]
        %v1880 = vld [vmem:[%s7 + $0x1f8] sm:$0xff]
        %v1881 = vld [vmem:[%s6] sm:$0xf]
        %v1882 = vld [vmem:[%s8] sm:$0x3f]
        %vm1883 = vcmask 48128
        %v1885 = vsel %vm1883, %v1881, 0
        %vm1887 = vcmask 1045504
        %v1889 = vsel %vm1887, %v1882, 0
        %1891 = vmatprep.subr.mxu0 0.0
        %1892 = vmatpush1.msra.mxu0 %v1889
        %1893 = vmatprep.subr.mxu0 0.0
        %1894 = vmatpush1.msra.mxu0 0.0
        %1895 = vmatprep.subr.mxu0 0.0
        %1896 = vmatpush1.msra.mxu0 0.0
        %1897 = vmatprep.subr.mxu0 0.0
        %1898 = vmatpush1.msra.mxu0 0.0
        %1899 = vmatprep.subr.mxu0 0.0
        %1900 = vmatpush1.msra.mxu0 0.0
        %1901 = vmatprep.subr.mxu0 0.0
        %1902 = vmatpush1.msra.mxu0 0.0
        %1903 = vmatprep.subr.mxu0 0.0
        %1904 = vmatpush1.msra.mxu0 0.0
        %1905 = vmatprep.subr.mxu0 0.0
        %1906 = vmatpush1.msra.mxu0 0.0
        %1907 = vmatprep.subr.mxu0 0.0
        %1908 = vmatpush1.msra.mxu0 0.0
        %1909 = vmatprep.subr.mxu0 0.0
        %1910 = vmatpush1.msra.mxu0 0.0
        %1911 = vmatprep.subr.mxu0 0.0
        %1912 = vmatpush1.msra.mxu0 0.0
        %1913 = vmatprep.subr.mxu0 0.0
        %1914 = vmatpush1.msra.mxu0 0.0
        %1915 = vmatprep.subr.mxu0 0.0
        %1916 = vmatpush1.msra.mxu0 0.0
        %1917 = vmatprep.subr.mxu0 0.0
        %1918 = vmatpush1.msra.mxu0 0.0
        %1919 = vmatprep.subr.mxu0 0.0
        %1920 = vmatpush1.msra.mxu0 0.0
        %1921 = vmatprep.subr.mxu0 0.0
        %1922 = vmatpush1.msra.mxu0 0.0
        %1923 = vmatprep.subr.mxu0 0.0
        %1924 = vmatpush1.msra.mxu0 0.0
        %1925 = vmatprep.subr.mxu0 0.0
        %1926 = vmatpush1.msra.mxu0 0.0
        %1927 = vmatprep.subr.mxu0 0.0
        %1928 = vmatpush1.msra.mxu0 0.0
        %1929 = vmatprep.subr.mxu0 0.0
        %1930 = vmatpush1.msra.mxu0 0.0
        %1931 = vmatprep.subr.mxu0 0.0
        %1932 = vmatpush1.msra.mxu0 0.0
        %1933 = vmatprep.subr.mxu0 0.0
        %1934 = vmatpush1.msra.mxu0 0.0
        %1935 = vmatprep.subr.mxu0 0.0
        %1936 = vmatpush1.msra.mxu0 0.0
        %1937 = vmatprep.subr.mxu0 0.0
        %1938 = vmatpush1.msra.mxu0 0.0
        %1939 = vmatprep.subr.mxu0 0.0
        %1940 = vmatpush1.msra.mxu0 0.0
        %1941 = vmatprep.subr.mxu0 0.0
        %1942 = vmatpush1.msra.mxu0 0.0
        %1943 = vmatprep.subr.mxu0 0.0
        %1944 = vmatpush1.msra.mxu0 0.0
        %1945 = vmatprep.subr.mxu0 0.0
        %1946 = vmatpush1.msra.mxu0 0.0
        %1947 = vmatprep.subr.mxu0 0.0
        %1948 = vmatpush1.msra.mxu0 0.0
        %1949 = vmatprep.subr.mxu0 0.0
        %1950 = vmatpush1.msra.mxu0 0.0
        %1951 = vmatprep.subr.mxu0 0.0
        %1952 = vmatpush1.msra.mxu0 0.0
        %1953 = vmatprep.subr.mxu0 0.0
        %1954 = vmatpush1.msra.mxu0 0.0
        %1955 = vmatprep.mubr.f32.mxu0 0.0
        %1956 = vmatmul.mubr.f32.gmra.mrb[0].mxu0 %v1885
        %v1957 = vpop.f32.mrb[0].mxu0
        %v1958 = vadd.f32 0.0, %v1957
        %v1959 = vpop.f32.mrb[0].mxu0
        %1960 = vdwg.mxu0
        %v1963 = vcombine.high %v1815, %v1815
        %v1964 = vcombine.high %v1816, %v1816
        %1967 = vmatprep.subr.mxu0 0.0
        %1968 = vmatpush1.msra.mxu0 %v1817
        %1969 = vmatprep.subr.mxu0 0.0
        %1970 = vmatpush1.msra.mxu0 %v1818
        %1971 = vmatprep.subr.mxu0 0.0
        %1972 = vmatpush1.msra.mxu0 %v1819
        %1973 = vmatprep.subr.mxu0 0.0
        %1974 = vmatpush1.msra.mxu0 %v1820
        %1975 = vmatprep.subr.mxu0 0.0
        %1976 = vmatpush1.msra.mxu0 %v1821
        %1977 = vmatprep.subr.mxu0 0.0
        %1978 = vmatpush1.msra.mxu0 %v1822
        %1979 = vmatprep.subr.mxu0 0.0
        %1980 = vmatpush1.msra.mxu0 %v1823
        %1981 = vmatprep.subr.mxu0 0.0
        %1982 = vmatpush1.msra.mxu0 %v1824
        %1983 = vmatprep.subr.mxu0 0.0
        %1984 = vmatpush1.msra.mxu0 %v1825
        %1985 = vmatprep.subr.mxu0 0.0
        %1986 = vmatpush1.msra.mxu0 %v1826
        %1987 = vmatprep.subr.mxu0 0.0
        %1988 = vmatpush1.msra.mxu0 %v1827
        %1989 = vmatprep.subr.mxu0 0.0
        %1990 = vmatpush1.msra.mxu0 %v1828
        %1991 = vmatprep.subr.mxu0 0.0
        %1992 = vmatpush1.msra.mxu0 %v1829
        %1993 = vmatprep.subr.mxu0 0.0
        %1994 = vmatpush1.msra.mxu0 %v1830
        %1995 = vmatprep.subr.mxu0 0.0
        %1996 = vmatpush1.msra.mxu0 %v1831
        %1997 = vmatprep.subr.mxu0 0.0
        %1998 = vmatpush1.msra.mxu0 %v1832
        %1999 = vmatprep.subr.mxu0 0.0
        %2000 = vmatpush1.msra.mxu0 %v1833
        %2001 = vmatprep.subr.mxu0 0.0
        %2002 = vmatpush1.msra.mxu0 %v1834
        %2003 = vmatprep.subr.mxu0 0.0
        %2004 = vmatpush1.msra.mxu0 %v1835
        %2005 = vmatprep.subr.mxu0 0.0
        %2006 = vmatpush1.msra.mxu0 %v1836
        %2007 = vmatprep.subr.mxu0 0.0
        %2008 = vmatpush1.msra.mxu0 %v1837
        %2009 = vmatprep.subr.mxu0 0.0
        %2010 = vmatpush1.msra.mxu0 %v1838
        %2011 = vmatprep.subr.mxu0 0.0
        %2012 = vmatpush1.msra.mxu0 %v1839
        %2013 = vmatprep.subr.mxu0 0.0
        %2014 = vmatpush1.msra.mxu0 %v1840
        %2015 = vmatprep.subr.mxu0 0.0
        %2016 = vmatpush1.msra.mxu0 %v1841
        %2017 = vmatprep.subr.mxu0 0.0
        %2018 = vmatpush1.msra.mxu0 %v1842
        %2019 = vmatprep.subr.mxu0 0.0
        %2020 = vmatpush1.msra.mxu0 %v1843
        %2021 = vmatprep.subr.mxu0 0.0
        %2022 = vmatpush1.msra.mxu0 %v1844
        %2023 = vmatprep.subr.mxu0 0.0
        %2024 = vmatpush1.msra.mxu0 %v1845
        %2025 = vmatprep.subr.mxu0 0.0
        %2026 = vmatpush1.msra.mxu0 %v1846
        %2027 = vmatprep.subr.mxu0 0.0
        %2028 = vmatpush1.msra.mxu0 %v1847
        %2029 = vmatprep.subr.mxu0 0.0
        %2030 = vmatpush1.msra.mxu0 %v1848
        %2031 = vmatprep.mubr.f32.mxu0 %v1963
        %2032 = vmatmul.mubr.f32.gmra.mrb[0].mxu0 %v1815
        %v2033 = vpop.f32.mrb[0].mxu0
        %v2034 = vadd.f32 %v1958, %v2033
        %v2035 = vpop.f32.mrb[0].mxu0
        %2036 = vdwg.mxu0
        %2037 = vmatprep.subr.mxu0 0.0
        %2038 = vmatpush1.msra.mxu0 %v1849
        %2039 = vmatprep.subr.mxu0 0.0
        %2040 = vmatpush1.msra.mxu0 %v1850
        %2041 = vmatprep.subr.mxu0 0.0
        %2042 = vmatpush1.msra.mxu0 %v1851
        %2043 = vmatprep.subr.mxu0 0.0
        %2044 = vmatpush1.msra.mxu0 %v1852
        %2045 = vmatprep.subr.mxu0 0.0
        %2046 = vmatpush1.msra.mxu0 %v1853
        %2047 = vmatprep.subr.mxu0 0.0
        %2048 = vmatpush1.msra.mxu0 %v1854
        %2049 = vmatprep.subr.mxu0 0.0
        %2050 = vmatpush1.msra.mxu0 %v1855
        %2051 = vmatprep.subr.mxu0 0.0
        %2052 = vmatpush1.msra.mxu0 %v1856
        %2053 = vmatprep.subr.mxu0 0.0
        %2054 = vmatpush1.msra.mxu0 %v1857
        %2055 = vmatprep.subr.mxu0 0.0
        %2056 = vmatpush1.msra.mxu0 %v1858
        %2057 = vmatprep.subr.mxu0 0.0
        %2058 = vmatpush1.msra.mxu0 %v1859
        %2059 = vmatprep.subr.mxu0 0.0
        %2060 = vmatpush1.msra.mxu0 %v1860
        %2061 = vmatprep.subr.mxu0 0.0
        %2062 = vmatpush1.msra.mxu0 %v1861
        %2063 = vmatprep.subr.mxu0 0.0
        %2064 = vmatpush1.msra.mxu0 %v1862
        %2065 = vmatprep.subr.mxu0 0.0
        %2066 = vmatpush1.msra.mxu0 %v1863
        %2067 = vmatprep.subr.mxu0 0.0
        %2068 = vmatpush1.msra.mxu0 %v1864
        %2069 = vmatprep.subr.mxu0 0.0
        %2070 = vmatpush1.msra.mxu0 %v1865
        %2071 = vmatprep.subr.mxu0 0.0
        %2072 = vmatpush1.msra.mxu0 %v1866
        %2073 = vmatprep.subr.mxu0 0.0
        %2074 = vmatpush1.msra.mxu0 %v1867
        %2075 = vmatprep.subr.mxu0 0.0
        %2076 = vmatpush1.msra.mxu0 %v1868
        %2077 = vmatprep.subr.mxu0 0.0
        %2078 = vmatpush1.msra.mxu0 %v1869
        %2079 = vmatprep.subr.mxu0 0.0
        %2080 = vmatpush1.msra.mxu0 %v1870
        %2081 = vmatprep.subr.mxu0 0.0
        %2082 = vmatpush1.msra.mxu0 %v1871
        %2083 = vmatprep.subr.mxu0 0.0
        %2084 = vmatpush1.msra.mxu0 %v1872
        %2085 = vmatprep.subr.mxu0 0.0
        %2086 = vmatpush1.msra.mxu0 %v1873
        %2087 = vmatprep.subr.mxu0 0.0
        %2088 = vmatpush1.msra.mxu0 %v1874
        %2089 = vmatprep.subr.mxu0 0.0
        %2090 = vmatpush1.msra.mxu0 %v1875
        %2091 = vmatprep.subr.mxu0 0.0
        %2092 = vmatpush1.msra.mxu0 %v1876
        %2093 = vmatprep.subr.mxu0 0.0
        %2094 = vmatpush1.msra.mxu0 %v1877
        %2095 = vmatprep.subr.mxu0 0.0
        %2096 = vmatpush1.msra.mxu0 %v1878
        %2097 = vmatprep.subr.mxu0 0.0
        %2098 = vmatpush1.msra.mxu0 %v1879
        %2099 = vmatprep.subr.mxu0 0.0
        %2100 = vmatpush1.msra.mxu0 %v1880
        %2101 = vmatprep.mubr.f32.mxu0 %v1964
        %2102 = vmatmul.mubr.f32.gmra.mrb[0].mxu0 %v1816
        %v2103 = vpop.f32.mrb[0].mxu0
        %v2104 = vadd.f32 %v2034, %v2103
        %v2105 = vpop.f32.mrb[0].mxu0
        %2106 = vdwg.mxu0
        %v2107 = vld [vmem:[%s9] sm:$0x1]
        %v2109 = vlaneseq
        %v2110 = vshrl.u32 %v2109, 7
        %v2111 = vsub.s32 0, %v2110
        %v2112 = vrot.slane %v2107, %v2111
        %v2114 = vadd.f32 %v2104, %v2112
        %v2115 = vld [vmem:[%s10] sm:$0xff]
        %v2116 = vld [vmem:[%s10 + $0x8] sm:$0xff]
        %v2117 = vld [vmem:[%s10 + $0x10] sm:$0xff]
        %v2118 = vld [vmem:[%s10 + $0x18] sm:$0xff]
        %v2119 = vld [vmem:[%s10 + $0x20] sm:$0xff]
        %v2120 = vld [vmem:[%s10 + $0x28] sm:$0xff]
        %v2121 = vld [vmem:[%s10 + $0x30] sm:$0xff]
        %v2122 = vld [vmem:[%s10 + $0x38] sm:$0xff]
        %v2123 = vld [vmem:[%s10 + $0x40] sm:$0xff]
        %v2124 = vld [vmem:[%s10 + $0x48] sm:$0xff]
        %v2125 = vld [vmem:[%s10 + $0x50] sm:$0xff]
        %v2126 = vld [vmem:[%s10 + $0x58] sm:$0xff]
        %v2127 = vld [vmem:[%s10 + $0x60] sm:$0xff]
        %v2128 = vld [vmem:[%s10 + $0x68] sm:$0xff]
        %v2129 = vld [vmem:[%s10 + $0x70] sm:$0xff]
        %v2130 = vld [vmem:[%s10 + $0x78] sm:$0xff]
        %v2131 = vld [vmem:[%s11] sm:$0x1]
        %v2133 = vlaneseq
        %v2134 = vshrl.u32 %v2133, 7
        %v2135 = vsub.s32 0, %v2134
        %v2136 = vrot.slane %v2131, %v2135
        %2138 = vmatprep.subr.mxu0 0.0
        %2139 = vmatpush1.msra.mxu0 %v2115
        %2140 = vmatprep.subr.mxu0 0.0
        %2141 = vmatpush1.msra.mxu0 %v2116
        %2142 = vmatprep.subr.mxu0 0.0
        %2143 = vmatpush1.msra.mxu0 %v2117
        %2144 = vmatprep.subr.mxu0 0.0
        %2145 = vmatpush1.msra.mxu0 %v2118
        %2146 = vmatprep.subr.mxu0 0.0
        %2147 = vmatpush1.msra.mxu0 %v2119
        %2148 = vmatprep.subr.mxu0 0.0
        %2149 = vmatpush1.msra.mxu0 %v2120
        %2150 = vmatprep.subr.mxu0 0.0
        %2151 = vmatpush1.msra.mxu0 %v2121
        %2152 = vmatprep.subr.mxu0 0.0
        %2153 = vmatpush1.msra.mxu0 %v2122
        %2154 = vmatprep.subr.mxu0 0.0
        %2155 = vmatpush1.msra.mxu0 %v2123
        %2156 = vmatprep.subr.mxu0 0.0
        %2157 = vmatpush1.msra.mxu0 %v2124
        %2158 = vmatprep.subr.mxu0 0.0
        %2159 = vmatpush1.msra.mxu0 %v2125
        %2160 = vmatprep.subr.mxu0 0.0
        %2161 = vmatpush1.msra.mxu0 %v2126
        %2162 = vmatprep.subr.mxu0 0.0
        %2163 = vmatpush1.msra.mxu0 %v2127
        %2164 = vmatprep.subr.mxu0 0.0
        %2165 = vmatpush1.msra.mxu0 %v2128
        %2166 = vmatprep.subr.mxu0 0.0
        %2167 = vmatpush1.msra.mxu0 %v2129
        %2168 = vmatprep.subr.mxu0 0.0
        %2169 = vmatpush1.msra.mxu0 %v2130
        %2170 = vmatprep.subr.mxu0 0.0
        %2171 = vmatpush1.msra.mxu0 0.0
        %2172 = vmatprep.subr.mxu0 0.0
        %2173 = vmatpush1.msra.mxu0 0.0
        %2174 = vmatprep.subr.mxu0 0.0
        %2175 = vmatpush1.msra.mxu0 0.0
        %2176 = vmatprep.subr.mxu0 0.0
        %2177 = vmatpush1.msra.mxu0 0.0
        %2178 = vmatprep.subr.mxu0 0.0
        %2179 = vmatpush1.msra.mxu0 0.0
        %2180 = vmatprep.subr.mxu0 0.0
        %2181 = vmatpush1.msra.mxu0 0.0
        %2182 = vmatprep.subr.mxu0 0.0
        %2183 = vmatpush1.msra.mxu0 0.0
        %2184 = vmatprep.subr.mxu0 0.0
        %2185 = vmatpush1.msra.mxu0 0.0
        %2186 = vmatprep.subr.mxu0 0.0
        %2187 = vmatpush1.msra.mxu0 0.0
        %2188 = vmatprep.subr.mxu0 0.0
        %2189 = vmatpush1.msra.mxu0 0.0
        %2190 = vmatprep.subr.mxu0 0.0
        %2191 = vmatpush1.msra.mxu0 0.0
        %2192 = vmatprep.subr.mxu0 0.0
        %2193 = vmatpush1.msra.mxu0 0.0
        %2194 = vmatprep.subr.mxu0 0.0
        %2195 = vmatpush1.msra.mxu0 0.0
        %2196 = vmatprep.subr.mxu0 0.0
        %2197 = vmatpush1.msra.mxu0 0.0
        %2198 = vmatprep.subr.mxu0 0.0
        %2199 = vmatpush1.msra.mxu0 0.0
        %2200 = vmatprep.subr.mxu0 0.0
        %2201 = vmatpush1.msra.mxu0 0.0
        %2202 = vmatprep.mubr.f32.mxu0 0.0
        %2203 = vmatmul.mubr.f32.gmra.mrb[0].mxu0 %v2114
        %v2204 = vpop.f32.mrb[0].mxu0
        %v2205 = vadd.f32 %v2136, %v2204
        %v2206 = vpop.f32.mrb[0].mxu0
        %2207 = vdwg.mxu0
        %vm2208 = vcmask 125952
        %2209 = vst.msk [vmem:[%s20] sm:$0xf] %vm2208, %v2205
        %v2210 = vld [vmem:[%s12] sm:$0x3]
        %v2211 = vld [vmem:[%s13] sm:$0x3]
        %v2212 = vsub.f32 %v2210, %v2211
        %v2213 = vand.u32 2147483647, %v2212
        %v2214 = vld [vmem:[%s14] sm:$0xff]
        %v2215 = vld [vmem:[%s14 + $0x8] sm:$0xff]
        %v2216 = vld [vmem:[%s15] sm:$0x1]
        %2218 = vset.pattern.permute.xlu0 0
        %2219 = vperm.xlu0 %2218, %v2213
        %v2220 = vpop.permute.xlu0 %2219
        %v2223 = vlaneseq
        %v2224 = vshrl.u32 %v2223, 7
        %v2225 = vsub.s32 0, %v2224
        %v2226 = vrot.slane %v2216, %v2225
        %v2228 = vmul.f32 %v2220, %v2226
        %vm2229 = vcmask 130048
        %v2231 = vsel %vm2229, %v2205, 0
        %2233 = vmatprep.subr.mxu0 0.0
        %2234 = vmatpush1.msra.mxu0 %v2214
        %2235 = vmatprep.subr.mxu0 0.0
        %2236 = vmatpush1.msra.mxu0 %v2215
        %2237 = vmatprep.subr.mxu0 0.0
        %2238 = vmatpush1.msra.mxu0 0.0
        %2239 = vmatprep.subr.mxu0 0.0
        %2240 = vmatpush1.msra.mxu0 0.0
        %2241 = vmatprep.subr.mxu0 0.0
        %2242 = vmatpush1.msra.mxu0 0.0
        %2243 = vmatprep.subr.mxu0 0.0
        %2244 = vmatpush1.msra.mxu0 0.0
        %2245 = vmatprep.subr.mxu0 0.0
        %2246 = vmatpush1.msra.mxu0 0.0
        %2247 = vmatprep.subr.mxu0 0.0
        %2248 = vmatpush1.msra.mxu0 0.0
        %2249 = vmatprep.subr.mxu0 0.0
        %2250 = vmatpush1.msra.mxu0 0.0
        %2251 = vmatprep.subr.mxu0 0.0
        %2252 = vmatpush1.msra.mxu0 0.0
        %2253 = vmatprep.subr.mxu0 0.0
        %2254 = vmatpush1.msra.mxu0 0.0
        %2255 = vmatprep.subr.mxu0 0.0
        %2256 = vmatpush1.msra.mxu0 0.0
        %2257 = vmatprep.subr.mxu0 0.0
        %2258 = vmatpush1.msra.mxu0 0.0
        %2259 = vmatprep.subr.mxu0 0.0
        %2260 = vmatpush1.msra.mxu0 0.0
        %2261 = vmatprep.subr.mxu0 0.0
        %2262 = vmatpush1.msra.mxu0 0.0
        %2263 = vmatprep.subr.mxu0 0.0
        %2264 = vmatpush1.msra.mxu0 0.0
        %2265 = vmatprep.subr.mxu0 0.0
        %2266 = vmatpush1.msra.mxu0 0.0
        %2267 = vmatprep.subr.mxu0 0.0
        %2268 = vmatpush1.msra.mxu0 0.0
        %2269 = vmatprep.subr.mxu0 0.0
        %2270 = vmatpush1.msra.mxu0 0.0
        %2271 = vmatprep.subr.mxu0 0.0
        %2272 = vmatpush1.msra.mxu0 0.0
        %2273 = vmatprep.subr.mxu0 0.0
        %2274 = vmatpush1.msra.mxu0 0.0
        %2275 = vmatprep.subr.mxu0 0.0
        %2276 = vmatpush1.msra.mxu0 0.0
        %2277 = vmatprep.subr.mxu0 0.0
        %2278 = vmatpush1.msra.mxu0 0.0
        %2279 = vmatprep.subr.mxu0 0.0
        %2280 = vmatpush1.msra.mxu0 0.0
        %2281 = vmatprep.subr.mxu0 0.0
        %2282 = vmatpush1.msra.mxu0 0.0
        %2283 = vmatprep.subr.mxu0 0.0
        %2284 = vmatpush1.msra.mxu0 0.0
        %2285 = vmatprep.subr.mxu0 0.0
        %2286 = vmatpush1.msra.mxu0 0.0
        %2287 = vmatprep.subr.mxu0 0.0
        %2288 = vmatpush1.msra.mxu0 0.0
        %2289 = vmatprep.subr.mxu0 0.0
        %2290 = vmatpush1.msra.mxu0 0.0
        %2291 = vmatprep.subr.mxu0 0.0
        %2292 = vmatpush1.msra.mxu0 0.0
        %2293 = vmatprep.subr.mxu0 0.0
        %2294 = vmatpush1.msra.mxu0 0.0
        %2295 = vmatprep.subr.mxu0 0.0
        %2296 = vmatpush1.msra.mxu0 0.0
        %2297 = vmatprep.mubr.f32.mxu0 0.0
        %2298 = vmatmul.mubr.f32.gmra.mrb[0].mxu0 %v2231
        %v2299 = vpop.f32.mrb[0].mxu0
        %v2300 = vadd.f32 %v2228, %v2299
        %v2301 = vpop.f32.mrb[0].mxu0
        %2302 = vdwg.mxu0
        %v2303 = vld [vmem:[%s16] sm:$0xff]
        %v2304 = vld [vmem:[%s16 + $0x8] sm:$0xff]
        %v2305 = vrot.slane %v2205, 2
        %v2306 = vsel %vm2229, %v2305, 0
        %2308 = vmatprep.subr.mxu0 0.0
        %2309 = vmatpush1.msra.mxu0 %v2303
        %2310 = vmatprep.subr.mxu0 0.0
        %2311 = vmatpush1.msra.mxu0 %v2304
        %2312 = vmatprep.subr.mxu0 0.0
        %2313 = vmatpush1.msra.mxu0 0.0
        %2314 = vmatprep.subr.mxu0 0.0
        %2315 = vmatpush1.msra.mxu0 0.0
        %2316 = vmatprep.subr.mxu0 0.0
        %2317 = vmatpush1.msra.mxu0 0.0
        %2318 = vmatprep.subr.mxu0 0.0
        %2319 = vmatpush1.msra.mxu0 0.0
        %2320 = vmatprep.subr.mxu0 0.0
        %2321 = vmatpush1.msra.mxu0 0.0
        %2322 = vmatprep.subr.mxu0 0.0
        %2323 = vmatpush1.msra.mxu0 0.0
        %2324 = vmatprep.subr.mxu0 0.0
        %2325 = vmatpush1.msra.mxu0 0.0
        %2326 = vmatprep.subr.mxu0 0.0
        %2327 = vmatpush1.msra.mxu0 0.0
        %2328 = vmatprep.subr.mxu0 0.0
        %2329 = vmatpush1.msra.mxu0 0.0
        %2330 = vmatprep.subr.mxu0 0.0
        %2331 = vmatpush1.msra.mxu0 0.0
        %2332 = vmatprep.subr.mxu0 0.0
        %2333 = vmatpush1.msra.mxu0 0.0
        %2334 = vmatprep.subr.mxu0 0.0
        %2335 = vmatpush1.msra.mxu0 0.0
        %2336 = vmatprep.subr.mxu0 0.0
        %2337 = vmatpush1.msra.mxu0 0.0
        %2338 = vmatprep.subr.mxu0 0.0
        %2339 = vmatpush1.msra.mxu0 0.0
        %2340 = vmatprep.subr.mxu0 0.0
        %2341 = vmatpush1.msra.mxu0 0.0
        %2342 = vmatprep.subr.mxu0 0.0
        %2343 = vmatpush1.msra.mxu0 0.0
        %2344 = vmatprep.subr.mxu0 0.0
        %2345 = vmatpush1.msra.mxu0 0.0
        %2346 = vmatprep.subr.mxu0 0.0
        %2347 = vmatpush1.msra.mxu0 0.0
        %2348 = vmatprep.subr.mxu0 0.0
        %2349 = vmatpush1.msra.mxu0 0.0
        %2350 = vmatprep.subr.mxu0 0.0
        %2351 = vmatpush1.msra.mxu0 0.0
        %2352 = vmatprep.subr.mxu0 0.0
        %2353 = vmatpush1.msra.mxu0 0.0
        %2354 = vmatprep.subr.mxu0 0.0
        %2355 = vmatpush1.msra.mxu0 0.0
        %2356 = vmatprep.subr.mxu0 0.0
        %2357 = vmatpush1.msra.mxu0 0.0
        %2358 = vmatprep.subr.mxu0 0.0
        %2359 = vmatpush1.msra.mxu0 0.0
        %2360 = vmatprep.subr.mxu0 0.0
        %2361 = vmatpush1.msra.mxu0 0.0
        %2362 = vmatprep.subr.mxu0 0.0
        %2363 = vmatpush1.msra.mxu0 0.0
        %2364 = vmatprep.subr.mxu0 0.0
        %2365 = vmatpush1.msra.mxu0 0.0
        %2366 = vmatprep.subr.mxu0 0.0
        %2367 = vmatpush1.msra.mxu0 0.0
        %2368 = vmatprep.subr.mxu0 0.0
        %2369 = vmatpush1.msra.mxu0 0.0
        %2370 = vmatprep.subr.mxu0 0.0
        %2371 = vmatpush1.msra.mxu0 0.0
        %2372 = vmatprep.mubr.f32.mxu0 0.0
        %2373 = vmatmul.mubr.f32.gmra.mrb[0].mxu0 %v2306
        %v2374 = vpop.f32.mrb[0].mxu0
        %v2375 = vadd.f32 0.0, %v2374
        %v2376 = vpop.f32.mrb[0].mxu0
        %2377 = vdwg.mxu0
        %v2378 = vadd.f32 %v2300, %v2375
        %v2379 = vld [vmem:[%s17] sm:$0x1]
        %v2381 = vlaneseq
        %v2382 = vshrl.u32 %v2381, 7
        %v2383 = vsub.s32 0, %v2382
        %v2384 = vrot.slane %v2379, %v2383
        %v2386 = vadd.f32 %v2378, %v2384
        %v2387 = vxor.u32 %v2386, 2147483648
        %v2388 = vmul.f32 %v2387, 1.442695
        %v2389 = vpow.pop %v2388
        %v2390 = vadd.f32 %v2389, 1.0
        %v2391 = vrcp.pop %v2390
        %v2392 = vmul.f32 1.0, %v2391
        %v2393 = vld [vmem:[%s18] sm:$0xff]
        %v2394 = vld [vmem:[%s18 + $0x8] sm:$0xff]
        %v2395 = vld [vmem:[%s18 + $0x10] sm:$0xff]
        %v2396 = vld [vmem:[%s18 + $0x18] sm:$0xff]
        %v2397 = vld [vmem:[%s18 + $0x20] sm:$0xff]
        %v2398 = vld [vmem:[%s18 + $0x28] sm:$0xff]
        %v2399 = vld [vmem:[%s18 + $0x30] sm:$0xff]
        %v2400 = vld [vmem:[%s18 + $0x38] sm:$0xff]
        %v2401 = vld [vmem:[#allocation4] sm:$0x1]
        %v2403 = vlaneseq
        %v2404 = vshrl.u32 %v2403, 7
        %v2405 = vsub.s32 0, %v2404
        %v2406 = vrot.slane %v2401, %v2405
        %vm2408 = vcmask 523264
        %v2410 = vsel %vm2408, %v2392, 0
        %2412 = vmatprep.subr.mxu0 0.0
        %2413 = vmatpush1.msra.mxu0 %v2393
        %2414 = vmatprep.subr.mxu0 0.0
        %2415 = vmatpush1.msra.mxu0 %v2394
        %2416 = vmatprep.subr.mxu0 0.0
        %2417 = vmatpush1.msra.mxu0 %v2395
        %2418 = vmatprep.subr.mxu0 0.0
        %2419 = vmatpush1.msra.mxu0 %v2396
        %2420 = vmatprep.subr.mxu0 0.0
        %2421 = vmatpush1.msra.mxu0 %v2397
        %2422 = vmatprep.subr.mxu0 0.0
        %2423 = vmatpush1.msra.mxu0 %v2398
        %2424 = vmatprep.subr.mxu0 0.0
        %2425 = vmatpush1.msra.mxu0 %v2399
        %2426 = vmatprep.subr.mxu0 0.0
        %2427 = vmatpush1.msra.mxu0 %v2400
        %2428 = vmatprep.subr.mxu0 0.0
        %2429 = vmatpush1.msra.mxu0 0.0
        %2430 = vmatprep.subr.mxu0 0.0
        %2431 = vmatpush1.msra.mxu0 0.0
        %2432 = vmatprep.subr.mxu0 0.0
        %2433 = vmatpush1.msra.mxu0 0.0
        %2434 = vmatprep.subr.mxu0 0.0
        %2435 = vmatpush1.msra.mxu0 0.0
        %2436 = vmatprep.subr.mxu0 0.0
        %2437 = vmatpush1.msra.mxu0 0.0
        %2438 = vmatprep.subr.mxu0 0.0
        %2439 = vmatpush1.msra.mxu0 0.0
        %2440 = vmatprep.subr.mxu0 0.0
        %2441 = vmatpush1.msra.mxu0 0.0
        %2442 = vmatprep.subr.mxu0 0.0
        %2443 = vmatpush1.msra.mxu0 0.0
        %2444 = vmatprep.subr.mxu0 0.0
        %2445 = vmatpush1.msra.mxu0 0.0
        %2446 = vmatprep.subr.mxu0 0.0
        %2447 = vmatpush1.msra.mxu0 0.0
        %2448 = vmatprep.subr.mxu0 0.0
        %2449 = vmatpush1.msra.mxu0 0.0
        %2450 = vmatprep.subr.mxu0 0.0
        %2451 = vmatpush1.msra.mxu0 0.0
        %2452 = vmatprep.subr.mxu0 0.0
        %2453 = vmatpush1.msra.mxu0 0.0
        %2454 = vmatprep.subr.mxu0 0.0
        %2455 = vmatpush1.msra.mxu0 0.0
        %2456 = vmatprep.subr.mxu0 0.0
        %2457 = vmatpush1.msra.mxu0 0.0
        %2458 = vmatprep.subr.mxu0 0.0
        %2459 = vmatpush1.msra.mxu0 0.0
        %2460 = vmatprep.subr.mxu0 0.0
        %2461 = vmatpush1.msra.mxu0 0.0
        %2462 = vmatprep.subr.mxu0 0.0
        %2463 = vmatpush1.msra.mxu0 0.0
        %2464 = vmatprep.subr.mxu0 0.0
        %2465 = vmatpush1.msra.mxu0 0.0
        %2466 = vmatprep.subr.mxu0 0.0
        %2467 = vmatpush1.msra.mxu0 0.0
        %2468 = vmatprep.subr.mxu0 0.0
        %2469 = vmatpush1.msra.mxu0 0.0
        %2470 = vmatprep.subr.mxu0 0.0
        %2471 = vmatpush1.msra.mxu0 0.0
        %2472 = vmatprep.subr.mxu0 0.0
        %2473 = vmatpush1.msra.mxu0 0.0
        %2474 = vmatprep.subr.mxu0 0.0
        %2475 = vmatpush1.msra.mxu0 0.0
        %2476 = vmatprep.mubr.f32.mxu0 0.0
        %2477 = vmatmul.mubr.f32.gmra.mrb[0].mxu0 %v2410
        %v2478 = vpop.f32.mrb[0].mxu0
        %v2479 = vadd.f32 %v2406, %v2478
        %v2480 = vpop.f32.mrb[0].mxu0
        %2481 = vdwg.mxu0
        %v2482 = vxor.u32 %v2479, 2147483648
        %v2483 = vmul.f32 %v2482, 1.442695
        %v2484 = vpow.pop %v2483
        %v2485 = vadd.f32 %v2484, 1.0
        %v2486 = vrcp.pop %v2485
        %v2487 = vmul.f32 1.0, %v2486
        %vm2488 = vcmask 1024
        %2489 = vst.msk [vmem:[%s21] sm:$0x3] %vm2488, %v2487
      $region108: #{siamese_forward.5} parent=99 // pred_fallthru
        _
      // Predicated region
      $region109: #{siamese_forward.5} parent=99 // pred_check
        %p2490 = pneg %p473
      $region110: #{siamese_forward.5} parent=99 // pred_check_branch
        %2492 = sbr.rel (%p2490) target = $region112
      $region111: #{siamese_forward.5} parent=99 // pred_region
        _
      $region112: #{siamese_forward.5} parent=99 // pred_fallthru
        _
      // Predicated region
      $region113: #{siamese_forward.5} parent=99 // pred_check
        %p2493 = pneg %p494
      $region114: #{siamese_forward.5} parent=99 // pred_check_branch
        %2495 = sbr.rel (%p2493) target = $region116
      $region115: #{siamese_forward.5} parent=99 // pred_region
        _
      $region116: #{siamese_forward.5} parent=99 // pred_fallthru
        _
      // Predicated region
      $region117: #{siamese_forward.5} parent=99 // pred_check
        %p2496 = pneg %p473
      $region118: #{siamese_forward.5} parent=99 // pred_check_branch
        %2498 = sbr.rel (%p2496) target = $region120
      $region119: #{siamese_forward.5} parent=99 // pred_region
        _
      $region120: #{siamese_forward.5} parent=99 // pred_fallthru
        _
      // Predicated region
      $region121: #{siamese_forward.5} parent=99 // pred_check
        %p2499 = pneg %p494
      $region122: #{siamese_forward.5} parent=99 // pred_check_branch
        %2501 = sbr.rel (%p2499) target = $region124
      $region123: #{siamese_forward.5} parent=99 // pred_region
        _
      $region124: #{siamese_forward.5} parent=99 // pred_fallthru
        _
    $region100: #{siamese_forward.5} parent=5 // pred_fallthru
      _
    %p2502 = scmp.le.s32.totalorder 2, %s30
    // Predicated region
    $region125: #{siamese_forward.5} parent=5 // pred_check
      %p2503 = pneg %p2502
    $region126: #{siamese_forward.5} parent=5 // pred_check_branch
      %2505 = sbr.rel (%p2503) target = $region128
    $region127: #{siamese_forward.5} parent=5 // pred_region
      %s2506 = ssub.s32 %s30, 2
    $region128: #{siamese_forward.5} parent=5 // pred_fallthru
      _
  $region6: #{siamese_forward.5} parent=0 // loop_footer
    %s34 = sadd.s32 1, %s30
  $region7: #{siamese_forward.5} parent=0 // loop_footer_branch
    %29 = sbr.rel target = $region3
  $region8: #{siamese_forward.5} parent=0 // loop_exit
    _

</llo_original>
